<compile_context>
chip_gen: v6e
topology: v6e:2x2x1
jax: 0.10.0
libtpu: 0.0.40
codegen_flags: <defaults>
</compile_context>

<pallas_src>
import functools

import jax
import jax.numpy as jnp
from jax.experimental import pallas as pl
from jax.experimental.pallas import tpu as pltpu

_VMEM = pl.BlockSpec(memory_space=pltpu.MemorySpace.VMEM)
_BN_EPS = 1e-5


# ---------------------------------------------------------------------------
# Pallas kernels
# ---------------------------------------------------------------------------
def _bnrelu_conv_kernel(x_ref, s_ref, t_ref, w_ref, b_ref, o_ref, *, relu_out):
    """y = [relu]( relu(x*scale+shift) @ W + b );  x: (tile_m, 9*Cin) tap tensor."""
    a = jnp.maximum(x_ref[...] * s_ref[...] + t_ref[...], 0.0).astype(jnp.bfloat16)
    y = jnp.dot(a, w_ref[...], preferred_element_type=jnp.float32) + b_ref[...]
    if relu_out:
        y = jnp.maximum(y, 0.0)
    o_ref[...] = y


def _conv_kernel(x_ref, w_ref, b_ref, o_ref, *, relu_out):
    """y = [relu](x @ W + b) — wide-K conv, input already activated/non-negative."""
    y = jnp.dot(x_ref[...].astype(jnp.bfloat16), w_ref[...],
                preferred_element_type=jnp.float32) + b_ref[...]
    if relu_out:
        y = jnp.maximum(y, 0.0)
    o_ref[...] = y


def _conv_conv_kernel(x_ref, w1_ref, b1_ref, w2_ref, b2_ref, o_ref):
    """y = relu(x @ W1 + b1) @ W2 + b2  (3x3 conv + ReLU fused with the last 1x1)."""
    h = jnp.dot(x_ref[...].astype(jnp.bfloat16), w1_ref[...],
                preferred_element_type=jnp.float32) + b1_ref[...]
    h = jnp.maximum(h, 0.0).astype(jnp.bfloat16)
    o_ref[...] = jnp.dot(h, w2_ref[...], preferred_element_type=jnp.float32) + b2_ref[...]


def _dense_tail_avgpool_kernel(x_ref, s_ref, t_ref, w_ref, b_ref,
                               prev_ref, wta_ref, wtb_ref, bt_ref, o_ref):
    """Dense-block layer (BN+ReLU+3x3 conv) + AvgPool2d(2) + (BN-folded) 1x1 conv.

    x_ref:   (4, Mo, 9*Cin)  tap tensors of the 4 positions of each 2x2 window
    prev_ref:(4, Mo, Cprev)  raw concatenated earlier features (same windows)
    out = avgpool(cat(prev, conv)) @ [wta; wtb] + bt        -> (Mo, Ct)
    """
    acc = jnp.dot(jnp.maximum(x_ref[0] * s_ref[...] + t_ref[...], 0.0).astype(jnp.bfloat16),
                  w_ref[...], preferred_element_type=jnp.float32)
    for q in range(1, 4):
        a = jnp.maximum(x_ref[q] * s_ref[...] + t_ref[...], 0.0).astype(jnp.bfloat16)
        acc = acc + jnp.dot(a, w_ref[...], preferred_element_type=jnp.float32)
    h_avg = acc * 0.25 + b_ref[...]                                   # avgpool of conv out
    p_avg = (prev_ref[0] + prev_ref[1] + prev_ref[2] + prev_ref[3]) * 0.25
    o_ref[...] = (jnp.dot(p_avg.astype(jnp.bfloat16), wta_ref[...],
                          preferred_element_type=jnp.float32)
                  + jnp.dot(h_avg.astype(jnp.bfloat16), wtb_ref[...],
                            preferred_element_type=jnp.float32)
                  + bt_ref[...])


def _dense_tail_maxpool_kernel(x_ref, s_ref, t_ref, w_ref, b_ref,
                               prev_ref, op_ref, oh_ref):
    """Dense-block layer (BN+ReLU+3x3 conv) + MaxPool2d(2) over 2x2 windows."""
    hmax = None
    for q in range(4):
        a = jnp.maximum(x_ref[q] * s_ref[...] + t_ref[...], 0.0).astype(jnp.bfloat16)
        hq = jnp.dot(a, w_ref[...], preferred_element_type=jnp.float32)
        hmax = hq if hmax is None else jnp.maximum(hmax, hq)
    oh_ref[...] = hmax + b_ref[...]
    op_ref[...] = jnp.maximum(jnp.maximum(prev_ref[0], prev_ref[1]),
                              jnp.maximum(prev_ref[2], prev_ref[3]))


def _aspp_deconv_kernel(t1_ref, m_ref,
                        wb1_ref, bb1_ref, wc2_ref, bb2_ref, wc3_ref, bb3_ref,
                        wf1_ref, wf2_ref, wf3_ref, bf_ref,
                        wd_ref, bd_ref, o_ref):
    """ASPP (3 branches + ReLU + final 1x1) + ConvTranspose2d(2,2) + folded BN + ReLU.

    Branches with dilation 6/18 at 4x4 spatial see only zero padding on the
    non-centre taps, so they are exact 1x1 convs with the centre-tap weights.
    """
    mb = m_ref[...].astype(jnp.bfloat16)
    r1 = jnp.maximum(jnp.dot(t1_ref[...].astype(jnp.bfloat16), wb1_ref[...],
                             preferred_element_type=jnp.float32) + bb1_ref[...], 0.0)
    r2 = jnp.maximum(jnp.dot(mb, wc2_ref[...],
                             preferred_element_type=jnp.float32) + bb2_ref[...], 0.0)
    r3 = jnp.maximum(jnp.dot(mb, wc3_ref[...],
                             preferred_element_type=jnp.float32) + bb3_ref[...], 0.0)
    y = (jnp.dot(r1.astype(jnp.bfloat16), wf1_ref[...], preferred_element_type=jnp.float32)
         + jnp.dot(r2.astype(jnp.bfloat16), wf2_ref[...], preferred_element_type=jnp.float32)
         + jnp.dot(r3.astype(jnp.bfloat16), wf3_ref[...], preferred_element_type=jnp.float32)
         + bf_ref[...])
    yb = y.astype(jnp.bfloat16)
    for t in range(4):
        o_ref[t] = jnp.maximum(
            jnp.dot(yb, wd_ref[t], preferred_element_type=jnp.float32) + bd_ref[...], 0.0)


# ---------------------------------------------------------------------------
# pallas_call wrappers / glue (layout only — no math)
# ---------------------------------------------------------------------------
def _grid_call(kernel_fn, row_arg, bcast_args, out_cols, *, tile_m=256):
    """Run a (M,K)-row kernel over a 1-D 'parallel' grid tiling M."""
    M, K = row_arg.shape
    tile = min(tile_m, M)
    assert M % tile == 0, (M, tile)
    in_specs = [pl.BlockSpec((tile, K), lambda i: (i, 0))]
    for a in bcast_args:
        in_specs.append(pl.BlockSpec(a.shape, lambda i, nd=a.ndim: (0,) * nd))
    return pl.pallas_call(
        kernel_fn,
        grid=(M // tile,),
        out_shape=jax.ShapeDtypeStruct((M, out_cols), jnp.float32),
        in_specs=in_specs,
        out_specs=pl.BlockSpec((tile, out_cols), lambda i: (i, 0)),
        compiler_params=pltpu.CompilerParams(dimension_semantics=("parallel",)),
    )(row_arg, *bcast_args)


def _taps3x3(x, pad_value=None):
    """x: (N,H,W,C) -> (N,H,W,9*C): the 9 shifted 3x3 taps concatenated on channels.

    pad_value (per-channel) is the BN-neutral border value; None -> zero padding.
    """
    N, H, W, C = x.shape
    if pad_value is None:
        xp = jnp.pad(x, ((0, 0), (1, 1), (1, 1), (0, 0)))
    else:
        v = pad_value.reshape(1, 1, 1, C)
        xp = jnp.pad(x - v, ((0, 0), (1, 1), (1, 1), (0, 0))) + v
    taps = [xp[:, kh:kh + H, kw:kw + W, :] for kh in range(3) for kw in range(3)]
    return jnp.concatenate(taps, axis=-1)


def _window_split(x):
    """(N,H,W,C) -> (4, N*(H//2)*(W//2), C): the 4 positions of every 2x2 window."""
    N, H, W, C = x.shape
    x = x.reshape(N, H // 2, 2, W // 2, 2, C).transpose(2, 4, 0, 1, 3, 5)
    return x.reshape(4, N * (H // 2) * (W // 2), C)


# ---------------------------------------------------------------------------
# Deterministic synthetic parameters + inference-time folding
# ---------------------------------------------------------------------------
def _conv_init(key, cin, cout, k):
    kw, kb = jax.random.split(key)
    fan_in = cin * k * k
    w = jax.random.normal(kw, (k * k, cin, cout), jnp.float32) / jnp.sqrt(float(fan_in))
    b = 0.01 * jax.random.normal(kb, (cout,), jnp.float32)
    return {"w": w, "b": b}


def _bn_init(key, c):
    k1, k2, k3, k4 = jax.random.split(key, 4)
    return {"gamma": 1.0 + 0.1 * jax.random.normal(k1, (c,), jnp.float32),
            "beta": 0.1 * jax.random.normal(k2, (c,), jnp.float32),
            "mean": 0.1 * jax.random.normal(k3, (c,), jnp.float32),
            "var": 1.0 + 0.5 * jax.random.uniform(k4, (c,), jnp.float32)}


def init_fcn_params(key, channels_in, channels_out):
    assert channels_in == 3, "module hard-codes ASPP(49,49)/skip_conv(35,.) -> channels_in=3"
    keys = iter(jax.random.split(key, 64))
    growth = 16

    def dense_block(cin, num_layers):
        layers, c = [], cin
        for _ in range(num_layers):
            layers.append({"bn": _bn_init(next(keys), c),
                           "conv": _conv_init(next(keys), c, growth, 3)})
            c += growth
        return layers, c

    p = {}
    p["db1"], c1 = dense_block(channels_in, 2)                  # 35 channels
    ct = c1 // 2                                                # 17 channels
    p["trans"] = {"bn": _bn_init(next(keys), c1),
                  "conv": _conv_init(next(keys), c1, ct, 1)}
    p["db2"], c2 = dense_block(ct, 2)                           # 49 channels
    p["aspp"] = {"branches": [_conv_init(next(keys), c2, c2, 3) for _ in range(3)],
                 "final": _conv_init(next(keys), 3 * c2, c2, 1)}
    kT, kTb = jax.random.split(next(keys))
    p["deconv"] = {"w": jax.random.normal(kT, (4, c2, 128), jnp.float32) / jnp.sqrt(4.0 * c2),
                   "b": 0.01 * jax.random.normal(kTb, (128,), jnp.float32)}
    p["dec_bn"] = _bn_init(next(keys), 128)
    p["dc1"] = _conv_init(next(keys), 128, 128, 3)
    p["dc2"] = _conv_init(next(keys), 128, 128, 3)
    # skip_conv and decoders[4] (ConvTranspose2d(128,64,2,2)) exist in __init__
    # but forward() never runs them (zip truncation) -> intentionally omitted.
    p["last"] = _conv_init(next(keys), 128, channels_out, 1)
    return p


def _bn_scale_shift(bn, eps=_BN_EPS):
    scale = bn["gamma"] / jnp.sqrt(bn["var"] + eps)
    shift = bn["beta"] - bn["mean"] * scale
    return scale, shift


def prepare_params(p):
    """Fold eval-BN into the adjacent linear layers, flatten 3x3 tap weights to
    wide-K (9*Cin, Cout), and pre-cast every MXU operand to bf16."""
    def dense_layer(layer):
        s, t = _bn_scale_shift(layer["bn"])
        cin = s.shape[0]
        return {"pad_v": -t / s,                              # relu(pad*scale+shift)==0
                "scale": jnp.tile(s, 9).reshape(1, -1),
                "shift": jnp.tile(t, 9).reshape(1, -1),
                "w": layer["conv"]["w"].reshape(9 * cin, -1).astype(jnp.bfloat16),
                "b": layer["conv"]["b"].reshape(1, -1)}

    q = {"db1": [dense_layer(l) for l in p["db1"]],
         "db2": [dense_layer(l) for l in p["db2"]]}

    # Transition: BN (no ReLU) folded into the 1x1 conv, split by [cat(x,h1) | h2].
    ts, tt = _bn_scale_shift(p["trans"]["bn"])
    wt = p["trans"]["conv"]["w"][0]                           # (35, 17)
    wt_f = ts[:, None] * wt
    q["trans"] = {"wa": wt_f[:19].astype(jnp.bfloat16),
                  "wb": wt_f[19:].astype(jnp.bfloat16),
                  "b": (p["trans"]["conv"]["b"] + tt @ wt).reshape(1, -1)}

    # ASPP: branch d=1 full 3x3 (wide-K); d=6/18 reduced to the centre tap.
    br = p["aspp"]["branches"]
    wf = p["aspp"]["final"]["w"][0]                           # (147, 49)
    q["aspp"] = {
        "wb1": br[0]["w"].reshape(-1, br[0]["w"].shape[-1]).astype(jnp.bfloat16),
        "bb1": br[0]["b"].reshape(1, -1),
        "wc2": br[1]["w"][4].astype(jnp.bfloat16), "bb2": br[1]["b"].reshape(1, -1),
        "wc3": br[2]["w"][4].astype(jnp.bfloat16), "bb3": br[2]["b"].reshape(1, -1),
        "wf1": wf[:49].astype(jnp.bfloat16),
        "wf2": wf[49:98].astype(jnp.bfloat16),
        "wf3": wf[98:].astype(jnp.bfloat16),
        "bf": p["aspp"]["final"]["b"].reshape(1, -1)}

    # ConvTranspose2d(49,128,2,2) with the following BatchNorm folded in.
    ds_, dt_ = _bn_scale_shift(p["dec_bn"])
    q["deconv"] = {"w": (p["deconv"]["w"] * ds_[None, None, :]).astype(jnp.bfloat16),
                   "b": (p["deconv"]["b"] * ds_ + dt_).reshape(1, -1)}

    def plain_conv(c):
        return {"w": c["w"].reshape(-1, c["w"].shape[-1]).astype(jnp.bfloat16),
                "b": c["b"].reshape(1, -1)}

    q["dc1"] = plain_conv(p["dc1"])
    q["dc2"] = plain_conv(p["dc2"])
    q["last"] = plain_conv(p["last"])
    return q


# ---------------------------------------------------------------------------
# Forward pass (mirrors FCN.forward exactly) — 7 pallas_call launches total
# ---------------------------------------------------------------------------
def fcn_forward(prm, x_nchw):
    x = jnp.transpose(x_nchw, (0, 2, 3, 1)).astype(jnp.float32)      # NCHW -> NHWC
    N, H, W, _ = x.shape

    # -- dense block 1, layer 1: BN+ReLU+Conv3x3(3->16) ------------------------
    l = prm["db1"][0]
    taps = _taps3x3(x, l["pad_v"]).reshape(N * H * W, -1)
    h1 = _grid_call(functools.partial(_bnrelu_conv_kernel, relu_out=False),
                    taps, (l["scale"], l["shift"], l["w"], l["b"]),
                    out_cols=l["w"].shape[-1]).reshape(N, H, W, -1)
    # TODO(synk): nn.Dropout(0.5) is identity in eval/inference mode.

    # -- dense block 1 layer 2 + transition (BN-folded 1x1) + AvgPool2d(2) -----
    l, tr = prm["db1"][1], prm["trans"]
    d1 = jnp.concatenate([x, h1], axis=-1)                           # (N,16,16,19)
    taps_q = _window_split(_taps3x3(d1, l["pad_v"]))                 # (4,128,171)
    prev_q = _window_split(d1)                                       # (4,128, 19)
    H2, W2 = H // 2, W // 2
    p = pl.pallas_call(
        _dense_tail_avgpool_kernel,
        out_shape=jax.ShapeDtypeStruct((N * H2 * W2, tr["b"].shape[-1]), jnp.float32),
        in_specs=[_VMEM] * 9, out_specs=_VMEM,
    )(taps_q, l["scale"], l["shift"], l["w"], l["b"],
      prev_q, tr["wa"], tr["wb"], tr["b"]).reshape(N, H2, W2, -1)    # (N,8,8,17)

    # -- dense block 2, layer 1: BN+ReLU+Conv3x3(17->16) ------------------------
    l = prm["db2"][0]
    taps = _taps3x3(p, l["pad_v"]).reshape(N * H2 * W2, -1)
    h3 = _grid_call(functools.partial(_bnrelu_conv_kernel, relu_out=False),
                    taps, (l["scale"], l["shift"], l["w"], l["b"]),
                    out_cols=l["w"].shape[-1]).reshape(N, H2, W2, -1)

    # -- dense block 2 layer 2 + MaxPool2d(2) -----------------------------------
    l = prm["db2"][1]
    d2 = jnp.concatenate([p, h3], axis=-1)                           # (N,8,8,33)
    taps_q = _window_split(_taps3x3(d2, l["pad_v"]))                 # (4,32,297)
    prev_q = _window_split(d2)                                       # (4,32, 33)
    H4, W4 = H2 // 2, W2 // 2
    M4 = N * H4 * W4
    mp, mh = pl.pallas_call(
        _dense_tail_maxpool_kernel,
        out_shape=(jax.ShapeDtypeStruct((M4, d2.shape[-1]), jnp.float32),
                   jax.ShapeDtypeStruct((M4, l["w"].shape[-1]), jnp.float32)),
        in_specs=[_VMEM] * 6, out_specs=(_VMEM, _VMEM),
    )(taps_q, l["scale"], l["shift"], l["w"], l["b"], prev_q)
    m = jnp.concatenate([mp, mh], axis=-1).reshape(N, H4, W4, -1)    # (N,4,4,49)

    # -- ASPP + ConvTranspose2d(49->128,2,2) + folded BN + ReLU, one kernel -----
    assert H4 <= 6 and W4 <= 6, "centre-tap ASPP shortcut requires dilation >= spatial size"
    a, dc = prm["aspp"], prm["deconv"]
    taps1 = _taps3x3(m).reshape(M4, -1)                              # (32,441), zero pad
    dec = pl.pallas_call(
        _aspp_deconv_kernel,
        out_shape=jax.ShapeDtypeStruct((4, M4, dc["b"].shape[-1]), jnp.float32),
        in_specs=[_VMEM] * 14, out_specs=_VMEM,
    )(taps1, m.reshape(M4, -1),
      a["wb1"], a["bb1"], a["wc2"], a["bb2"], a["wc3"], a["bb3"],
      a["wf1"], a["wf2"], a["wf3"], a["bf"], dc["w"], dc["b"])
    # glue: interleave the 4 deconv taps -> z[n, 2i+dy, 2j+dx, :] = dec[2*dy+dx, (n,i,j), :]
    z = (dec.reshape(2, 2, N, H4, W4, -1)
            .transpose(2, 3, 0, 4, 1, 5)
            .reshape(N, H2, W2, -1))                                 # (N,8,8,128)

    # -- decoder DoubleConvolution + last 1x1 conv ------------------------------
    taps = _taps3x3(z).reshape(N * H2 * W2, -1)                      # (128, 1152)
    c1 = _grid_call(functools.partial(_conv_kernel, relu_out=True),
                    taps, (prm["dc1"]["w"], prm["dc1"]["b"]),
                    out_cols=prm["dc1"]["w"].shape[-1]).reshape(N, H2, W2, -1)
    taps = _taps3x3(c1).reshape(N * H2 * W2, -1)
    out = _grid_call(_conv_conv_kernel,
                     taps, (prm["dc2"]["w"], prm["dc2"]["b"],
                            prm["last"]["w"], prm["last"]["b"]),
                     out_cols=prm["last"]["w"].shape[-1]).reshape(N, H2, W2, -1)
    return jnp.transpose(out, (0, 3, 1, 2))                          # NHWC -> NCHW


# ---------------------------------------------------------------------------
if __name__ == "__main__":
    key = jax.random.PRNGKey(0)
    pkey, xkey = jax.random.split(key)

    channels_in, channels_out = 3, 4
    raw_params = init_fcn_params(pkey, channels_in, channels_out)
    prm = prepare_params(raw_params)

    x = jax.random.normal(xkey, (2, channels_in, 16, 16), jnp.float32)   # NCHW
    fwd = jax.jit(functools.partial(fcn_forward, prm))
    out = fwd(x)
    jax.block_until_ready(out)

    assert out.shape == (2, channels_out, 8, 8), out.shape
    assert bool(jnp.all(jnp.isfinite(out)))
    print("KERNEL_OK")
</pallas_src>

<mosaic_0001>
module attributes {stable_mosaic.version = 11 : i64} {
  func.func @_bnrelu_conv_kernel(%arg0: i32, %arg1: memref<256x27xf32, #tpu.memory_space<vmem>>, %arg2: memref<1x27xf32, #tpu.memory_space<vmem>>, %arg3: memref<1x27xf32, #tpu.memory_space<vmem>>, %arg4: memref<27x16xbf16, #tpu.memory_space<vmem>>, %arg5: memref<1x16xf32, #tpu.memory_space<vmem>>, %arg6: memref<256x16xf32, #tpu.memory_space<vmem>>) attributes {dimension_semantics = [#tpu.dimension_semantics<parallel>], iteration_bounds = array<i64: 2>, scalar_prefetch = 0 : i64, scratch_operands = 0 : i64, tpu.core_type = #tpu.core_type<tc>, window_params = [{transform_indices = @transform_0, window_bounds = array<i64: 256, 27>}, {pipeline_mode = #tpu.pipeline_mode<synchronous>, transform_indices = @transform_1, window_bounds = array<i64: 1, 27>}, {pipeline_mode = #tpu.pipeline_mode<synchronous>, transform_indices = @transform_2, window_bounds = array<i64: 1, 27>}, {pipeline_mode = #tpu.pipeline_mode<synchronous>, transform_indices = @transform_3, window_bounds = array<i64: 27, 16>}, {pipeline_mode = #tpu.pipeline_mode<synchronous>, transform_indices = @transform_4, window_bounds = array<i64: 1, 16>}, {transform_indices = @transform_5, window_bounds = array<i64: 256, 16>}]} {
    %c0 = arith.constant 0 : index
    %c0_0 = arith.constant 0 : index
    %0 = vector.load %arg1[%c0, %c0_0] : memref<256x27xf32, #tpu.memory_space<vmem>>, vector<256x27xf32>
    %c0_1 = arith.constant 0 : index
    %c0_2 = arith.constant 0 : index
    %1 = vector.load %arg2[%c0_1, %c0_2] : memref<1x27xf32, #tpu.memory_space<vmem>>, vector<1x27xf32>
    %2 = vector.broadcast %1 : vector<1x27xf32> to vector<256x27xf32>
    %3 = arith.mulf %0, %2 : vector<256x27xf32>
    %c0_3 = arith.constant 0 : index
    %c0_4 = arith.constant 0 : index
    %4 = vector.load %arg3[%c0_3, %c0_4] : memref<1x27xf32, #tpu.memory_space<vmem>>, vector<1x27xf32>
    %5 = vector.broadcast %4 : vector<1x27xf32> to vector<256x27xf32>
    %6 = arith.addf %3, %5 : vector<256x27xf32>
    %cst = arith.constant 0.000000e+00 : f32
    %7 = vector.broadcast %cst : f32 to vector<256x27xf32>
    %8 = arith.maximumf %6, %7 : vector<256x27xf32>
    %9 = arith.truncf %8 : vector<256x27xf32> to vector<256x27xbf16>
    %c0_5 = arith.constant 0 : index
    %c0_6 = arith.constant 0 : index
    %10 = vector.load %arg4[%c0_5, %c0_6] : memref<27x16xbf16, #tpu.memory_space<vmem>>, vector<27x16xbf16>
    %cst_7 = arith.constant dense<0.000000e+00> : vector<256x16xf32>
    %11 = tpu.matmul %9, %10, %cst_7 {dimension_numbers = #tpu.dot_dimension_numbers<[1], [0], [0], [1], [0, 0, 1, 1], [], []>} : vector<256x27xbf16>, vector<27x16xbf16>, vector<256x16xf32> -> vector<256x16xf32>
    %c0_8 = arith.constant 0 : index
    %c0_9 = arith.constant 0 : index
    %12 = vector.load %arg5[%c0_8, %c0_9] : memref<1x16xf32, #tpu.memory_space<vmem>>, vector<1x16xf32>
    %13 = vector.broadcast %12 : vector<1x16xf32> to vector<256x16xf32>
    %14 = arith.addf %11, %13 : vector<256x16xf32>
    %c0_10 = arith.constant 0 : index
    %c0_11 = arith.constant 0 : index
    %15 = vector.load %arg6[%c0_10, %c0_11] : memref<256x16xf32, #tpu.memory_space<vmem>>, vector<256x16xf32>
    tpu.vector_store %arg6[%c0_10, %c0_11], %14 {strides = array<i32>} : memref<256x16xf32, #tpu.memory_space<vmem>>, vector<256x16xf32>,
    return
  }
  func.func @transform_0(%arg0: i32) -> (i32, i32) {
    %c0_i32 = arith.constant 0 : i32
    %c0_i32_0 = arith.constant 0 : i32
    return %arg0, %c0_i32 : i32, i32
  }
  func.func @transform_1(%arg0: i32) -> (i32, i32) {
    %c0_i32 = arith.constant 0 : i32
    %c0_i32_0 = arith.constant 0 : i32
    %c0_i32_1 = arith.constant 0 : i32
    return %c0_i32, %c0_i32_0 : i32, i32
  }
  func.func @transform_2(%arg0: i32) -> (i32, i32) {
    %c0_i32 = arith.constant 0 : i32
    %c0_i32_0 = arith.constant 0 : i32
    %c0_i32_1 = arith.constant 0 : i32
    return %c0_i32, %c0_i32_0 : i32, i32
  }
  func.func @transform_3(%arg0: i32) -> (i32, i32) {
    %c0_i32 = arith.constant 0 : i32
    %c0_i32_0 = arith.constant 0 : i32
    %c0_i32_1 = arith.constant 0 : i32
    return %c0_i32, %c0_i32_0 : i32, i32
  }
  func.func @transform_4(%arg0: i32) -> (i32, i32) {
    %c0_i32 = arith.constant 0 : i32
    %c0_i32_0 = arith.constant 0 : i32
    %c0_i32_1 = arith.constant 0 : i32
    return %c0_i32, %c0_i32_0 : i32, i32
  }
  func.func @transform_5(%arg0: i32) -> (i32, i32) {
    %c0_i32 = arith.constant 0 : i32
    %c0_i32_0 = arith.constant 0 : i32
    return %arg0, %c0_i32 : i32, i32
  }
}

module attributes {stable_mosaic.version = 11 : i64} {
  func.func @_dense_tail_avgpool_kernel(%arg0: memref<4x128x171xf32, #tpu.memory_space<vmem>>, %arg1: memref<1x171xf32, #tpu.memory_space<vmem>>, %arg2: memref<1x171xf32, #tpu.memory_space<vmem>>, %arg3: memref<171x16xbf16, #tpu.memory_space<vmem>>, %arg4: memref<1x16xf32, #tpu.memory_space<vmem>>, %arg5: memref<4x128x19xf32, #tpu.memory_space<vmem>>, %arg6: memref<19x17xbf16, #tpu.memory_space<vmem>>, %arg7: memref<16x17xbf16, #tpu.memory_space<vmem>>, %arg8: memref<1x17xf32, #tpu.memory_space<vmem>>, %arg9: memref<128x17xf32, #tpu.memory_space<vmem>>) attributes {dimension_semantics = [], scalar_prefetch = 0 : i64, scratch_operands = 0 : i64, tpu.core_type = #tpu.core_type<tc>} {
    %c0 = arith.constant 0 : index
    %c0_0 = arith.constant 0 : index
    %c0_1 = arith.constant 0 : index
    %0 = vector.load %arg0[%c0, %c0_0, %c0_1] : memref<4x128x171xf32, #tpu.memory_space<vmem>>, vector<1x128x171xf32>
    %1 = vector.shape_cast %0 : vector<1x128x171xf32> to vector<128x171xf32>
    %c0_2 = arith.constant 0 : index
    %c0_3 = arith.constant 0 : index
    %2 = vector.load %arg1[%c0_2, %c0_3] : memref<1x171xf32, #tpu.memory_space<vmem>>, vector<1x171xf32>
    %3 = vector.broadcast %2 : vector<1x171xf32> to vector<128x171xf32>
    %4 = arith.mulf %1, %3 : vector<128x171xf32>
    %c0_4 = arith.constant 0 : index
    %c0_5 = arith.constant 0 : index
    %5 = vector.load %arg2[%c0_4, %c0_5] : memref<1x171xf32, #tpu.memory_space<vmem>>, vector<1x171xf32>
    %6 = vector.broadcast %5 : vector<1x171xf32> to vector<128x171xf32>
    %7 = arith.addf %4, %6 : vector<128x171xf32>
    %cst = arith.constant 0.000000e+00 : f32
    %8 = vector.broadcast %cst : f32 to vector<128x171xf32>
    %9 = arith.maximumf %7, %8 : vector<128x171xf32>
    %10 = arith.truncf %9 : vector<128x171xf32> to vector<128x171xbf16>
    %c0_6 = arith.constant 0 : index
    %c0_7 = arith.constant 0 : index
    %11 = vector.load %arg3[%c0_6, %c0_7] : memref<171x16xbf16, #tpu.memory_space<vmem>>, vector<171x16xbf16>
    %cst_8 = arith.constant dense<0.000000e+00> : vector<128x16xf32>
    %12 = tpu.matmul %10, %11, %cst_8 {dimension_numbers = #tpu.dot_dimension_numbers<[1], [0], [0], [1], [0, 0, 1, 1], [], []>} : vector<128x171xbf16>, vector<171x16xbf16>, vector<128x16xf32> -> vector<128x16xf32>
    %c1 = arith.constant 1 : index
    %c0_9 = arith.constant 0 : index
    %c0_10 = arith.constant 0 : index
    %13 = vector.load %arg0[%c1, %c0_9, %c0_10] : memref<4x128x171xf32, #tpu.memory_space<vmem>>, vector<1x128x171xf32>
    %14 = vector.shape_cast %13 : vector<1x128x171xf32> to vector<128x171xf32>
    %c0_11 = arith.constant 0 : index
    %c0_12 = arith.constant 0 : index
    %15 = vector.load %arg1[%c0_11, %c0_12] : memref<1x171xf32, #tpu.memory_space<vmem>>, vector<1x171xf32>
    %16 = vector.broadcast %15 : vector<1x171xf32> to vector<128x171xf32>
    %17 = arith.mulf %14, %16 : vector<128x171xf32>
    %c0_13 = arith.constant 0 : index
    %c0_14 = arith.constant 0 : index
    %18 = vector.load %arg2[%c0_13, %c0_14] : memref<1x171xf32, #tpu.memory_space<vmem>>, vector<1x171xf32>
    %19 = vector.broadcast %18 : vector<1x171xf32> to vector<128x171xf32>
    %20 = arith.addf %17, %19 : vector<128x171xf32>
    %cst_15 = arith.constant 0.000000e+00 : f32
    %21 = vector.broadcast %cst_15 : f32 to vector<128x171xf32>
    %22 = arith.maximumf %20, %21 : vector<128x171xf32>
    %23 = arith.truncf %22 : vector<128x171xf32> to vector<128x171xbf16>
    %c0_16 = arith.constant 0 : index
    %c0_17 = arith.constant 0 : index
    %24 = vector.load %arg3[%c0_16, %c0_17] : memref<171x16xbf16, #tpu.memory_space<vmem>>, vector<171x16xbf16>
    %cst_18 = arith.constant dense<0.000000e+00> : vector<128x16xf32>
    %25 = tpu.matmul %23, %24, %cst_18 {dimension_numbers = #tpu.dot_dimension_numbers<[1], [0], [0], [1], [0, 0, 1, 1], [], []>} : vector<128x171xbf16>, vector<171x16xbf16>, vector<128x16xf32> -> vector<128x16xf32>
    %26 = arith.addf %12, %25 : vector<128x16xf32>
    %c2 = arith.constant 2 : index
    %c0_19 = arith.constant 0 : index
    %c0_20 = arith.constant 0 : index
    %27 = vector.load %arg0[%c2, %c0_19, %c0_20] : memref<4x128x171xf32, #tpu.memory_space<vmem>>, vector<1x128x171xf32>
    %28 = vector.shape_cast %27 : vector<1x128x171xf32> to vector<128x171xf32>
    %c0_21 = arith.constant 0 : index
    %c0_22 = arith.constant 0 : index
    %29 = vector.load %arg1[%c0_21, %c0_22] : memref<1x171xf32, #tpu.memory_space<vmem>>, vector<1x171xf32>
    %30 = vector.broadcast %29 : vector<1x171xf32> to vector<128x171xf32>
    %31 = arith.mulf %28, %30 : vector<128x171xf32>
    %c0_23 = arith.constant 0 : index
    %c0_24 = arith.constant 0 : index
    %32 = vector.load %arg2[%c0_23, %c0_24] : memref<1x171xf32, #tpu.memory_space<vmem>>, vector<1x171xf32>
    %33 = vector.broadcast %32 : vector<1x171xf32> to vector<128x171xf32>
    %34 = arith.addf %31, %33 : vector<128x171xf32>
    %cst_25 = arith.constant 0.000000e+00 : f32
    %35 = vector.broadcast %cst_25 : f32 to vector<128x171xf32>
    %36 = arith.maximumf %34, %35 : vector<128x171xf32>
    %37 = arith.truncf %36 : vector<128x171xf32> to vector<128x171xbf16>
    %c0_26 = arith.constant 0 : index
    %c0_27 = arith.constant 0 : index
    %38 = vector.load %arg3[%c0_26, %c0_27] : memref<171x16xbf16, #tpu.memory_space<vmem>>, vector<171x16xbf16>
    %cst_28 = arith.constant dense<0.000000e+00> : vector<128x16xf32>
    %39 = tpu.matmul %37, %38, %cst_28 {dimension_numbers = #tpu.dot_dimension_numbers<[1], [0], [0], [1], [0, 0, 1, 1], [], []>} : vector<128x171xbf16>, vector<171x16xbf16>, vector<128x16xf32> -> vector<128x16xf32>
    %40 = arith.addf %26, %39 : vector<128x16xf32>
    %c3 = arith.constant 3 : index
    %c0_29 = arith.constant 0 : index
    %c0_30 = arith.constant 0 : index
    %41 = vector.load %arg0[%c3, %c0_29, %c0_30] : memref<4x128x171xf32, #tpu.memory_space<vmem>>, vector<1x128x171xf32>
    %42 = vector.shape_cast %41 : vector<1x128x171xf32> to vector<128x171xf32>
    %c0_31 = arith.constant 0 : index
    %c0_32 = arith.constant 0 : index
    %43 = vector.load %arg1[%c0_31, %c0_32] : memref<1x171xf32, #tpu.memory_space<vmem>>, vector<1x171xf32>
    %44 = vector.broadcast %43 : vector<1x171xf32> to vector<128x171xf32>
    %45 = arith.mulf %42, %44 : vector<128x171xf32>
    %c0_33 = arith.constant 0 : index
    %c0_34 = arith.constant 0 : index
    %46 = vector.load %arg2[%c0_33, %c0_34] : memref<1x171xf32, #tpu.memory_space<vmem>>, vector<1x171xf32>
    %47 = vector.broadcast %46 : vector<1x171xf32> to vector<128x171xf32>
    %48 = arith.addf %45, %47 : vector<128x171xf32>
    %cst_35 = arith.constant 0.000000e+00 : f32
    %49 = vector.broadcast %cst_35 : f32 to vector<128x171xf32>
    %50 = arith.maximumf %48, %49 : vector<128x171xf32>
    %51 = arith.truncf %50 : vector<128x171xf32> to vector<128x171xbf16>
    %c0_36 = arith.constant 0 : index
    %c0_37 = arith.constant 0 : index
    %52 = vector.load %arg3[%c0_36, %c0_37] : memref<171x16xbf16, #tpu.memory_space<vmem>>, vector<171x16xbf16>
    %cst_38 = arith.constant dense<0.000000e+00> : vector<128x16xf32>
    %53 = tpu.matmul %51, %52, %cst_38 {dimension_numbers = #tpu.dot_dimension_numbers<[1], [0], [0], [1], [0, 0, 1, 1], [], []>} : vector<128x171xbf16>, vector<171x16xbf16>, vector<128x16xf32> -> vector<128x16xf32>
    %54 = arith.addf %40, %53 : vector<128x16xf32>
    %cst_39 = arith.constant 2.500000e-01 : f32
    %55 = vector.broadcast %cst_39 : f32 to vector<128x16xf32>
    %56 = arith.mulf %54, %55 : vector<128x16xf32>
    %c0_40 = arith.constant 0 : index
    %c0_41 = arith.constant 0 : index
    %57 = vector.load %arg4[%c0_40, %c0_41] : memref<1x16xf32, #tpu.memory_space<vmem>>, vector<1x16xf32>
    %58 = vector.broadcast %57 : vector<1x16xf32> to vector<128x16xf32>
    %59 = arith.addf %56, %58 : vector<128x16xf32>
    %c0_42 = arith.constant 0 : index
    %c0_43 = arith.constant 0 : index
    %c0_44 = arith.constant 0 : index
    %60 = vector.load %arg5[%c0_42, %c0_43, %c0_44] : memref<4x128x19xf32, #tpu.memory_space<vmem>>, vector<1x128x19xf32>
    %61 = vector.shape_cast %60 : vector<1x128x19xf32> to vector<128x19xf32>
    %c1_45 = arith.constant 1 : index
    %c0_46 = arith.constant 0 : index
    %c0_47 = arith.constant 0 : index
    %62 = vector.load %arg5[%c1_45, %c0_46, %c0_47] : memref<4x128x19xf32, #tpu.memory_space<vmem>>, vector<1x128x19xf32>
    %63 = vector.shape_cast %62 : vector<1x128x19xf32> to vector<128x19xf32>
    %64 = arith.addf %61, %63 : vector<128x19xf32>
    %c2_48 = arith.constant 2 : index
    %c0_49 = arith.constant 0 : index
    %c0_50 = arith.constant 0 : index
    %65 = vector.load %arg5[%c2_48, %c0_49, %c0_50] : memref<4x128x19xf32, #tpu.memory_space<vmem>>, vector<1x128x19xf32>
    %66 = vector.shape_cast %65 : vector<1x128x19xf32> to vector<128x19xf32>
    %67 = arith.addf %64, %66 : vector<128x19xf32>
    %c3_51 = arith.constant 3 : index
    %c0_52 = arith.constant 0 : index
    %c0_53 = arith.constant 0 : index
    %68 = vector.load %arg5[%c3_51, %c0_52, %c0_53] : memref<4x128x19xf32, #tpu.memory_space<vmem>>, vector<1x128x19xf32>
    %69 = vector.shape_cast %68 : vector<1x128x19xf32> to vector<128x19xf32>
    %70 = arith.addf %67, %69 : vector<128x19xf32>
    %cst_54 = arith.constant 2.500000e-01 : f32
    %71 = vector.broadcast %cst_54 : f32 to vector<128x19xf32>
    %72 = arith.mulf %70, %71 : vector<128x19xf32>
    %73 = arith.truncf %72 : vector<128x19xf32> to vector<128x19xbf16>
    %c0_55 = arith.constant 0 : index
    %c0_56 = arith.constant 0 : index
    %74 = vector.load %arg6[%c0_55, %c0_56] : memref<19x17xbf16, #tpu.memory_space<vmem>>, vector<19x17xbf16>
    %cst_57 = arith.constant dense<0.000000e+00> : vector<128x17xf32>
    %75 = tpu.matmul %73, %74, %cst_57 {dimension_numbers = #tpu.dot_dimension_numbers<[1], [0], [0], [1], [0, 0, 1, 1], [], []>} : vector<128x19xbf16>, vector<19x17xbf16>, vector<128x17xf32> -> vector<128x17xf32>
    %76 = arith.truncf %59 : vector<128x16xf32> to vector<128x16xbf16>
    %c0_58 = arith.constant 0 : index
    %c0_59 = arith.constant 0 : index
    %77 = vector.load %arg7[%c0_58, %c0_59] : memref<16x17xbf16, #tpu.memory_space<vmem>>, vector<16x17xbf16>
    %cst_60 = arith.constant dense<0.000000e+00> : vector<128x17xf32>
    %78 = tpu.matmul %76, %77, %cst_60 {dimension_numbers = #tpu.dot_dimension_numbers<[1], [0], [0], [1], [0, 0, 1, 1], [], []>} : vector<128x16xbf16>, vector<16x17xbf16>, vector<128x17xf32> -> vector<128x17xf32>
    %79 = arith.addf %75, %78 : vector<128x17xf32>
    %c0_61 = arith.constant 0 : index
    %c0_62 = arith.constant 0 : index
    %80 = vector.load %arg8[%c0_61, %c0_62] : memref<1x17xf32, #tpu.memory_space<vmem>>, vector<1x17xf32>
    %81 = vector.broadcast %80 : vector<1x17xf32> to vector<128x17xf32>
    %82 = arith.addf %79, %81 : vector<128x17xf32>
    %c0_63 = arith.constant 0 : index
    %c0_64 = arith.constant 0 : index
    %83 = vector.load %arg9[%c0_63, %c0_64] : memref<128x17xf32, #tpu.memory_space<vmem>>, vector<128x17xf32>
    tpu.vector_store %arg9[%c0_63, %c0_64], %82 {strides = array<i32>} : memref<128x17xf32, #tpu.memory_space<vmem>>, vector<128x17xf32>,
    return
  }
}

module attributes {stable_mosaic.version = 11 : i64} {
  func.func @_bnrelu_conv_kernel(%arg0: i32, %arg1: memref<128x153xf32, #tpu.memory_space<vmem>>, %arg2: memref<1x153xf32, #tpu.memory_space<vmem>>, %arg3: memref<1x153xf32, #tpu.memory_space<vmem>>, %arg4: memref<153x16xbf16, #tpu.memory_space<vmem>>, %arg5: memref<1x16xf32, #tpu.memory_space<vmem>>, %arg6: memref<128x16xf32, #tpu.memory_space<vmem>>) attributes {dimension_semantics = [#tpu.dimension_semantics<parallel>], iteration_bounds = array<i64: 1>, scalar_prefetch = 0 : i64, scratch_operands = 0 : i64, tpu.core_type = #tpu.core_type<tc>, window_params = [{transform_indices = @transform_0, window_bounds = array<i64: 128, 153>}, {pipeline_mode = #tpu.pipeline_mode<synchronous>, transform_indices = @transform_1, window_bounds = array<i64: 1, 153>}, {pipeline_mode = #tpu.pipeline_mode<synchronous>, transform_indices = @transform_2, window_bounds = array<i64: 1, 153>}, {pipeline_mode = #tpu.pipeline_mode<synchronous>, transform_indices = @transform_3, window_bounds = array<i64: 153, 16>}, {pipeline_mode = #tpu.pipeline_mode<synchronous>, transform_indices = @transform_4, window_bounds = array<i64: 1, 16>}, {transform_indices = @transform_5, window_bounds = array<i64: 128, 16>}]} {
    %c0 = arith.constant 0 : index
    %c0_0 = arith.constant 0 : index
    %0 = vector.load %arg1[%c0, %c0_0] : memref<128x153xf32, #tpu.memory_space<vmem>>, vector<128x153xf32>
    %c0_1 = arith.constant 0 : index
    %c0_2 = arith.constant 0 : index
    %1 = vector.load %arg2[%c0_1, %c0_2] : memref<1x153xf32, #tpu.memory_space<vmem>>, vector<1x153xf32>
    %2 = vector.broadcast %1 : vector<1x153xf32> to vector<128x153xf32>
    %3 = arith.mulf %0, %2 : vector<128x153xf32>
    %c0_3 = arith.constant 0 : index
    %c0_4 = arith.constant 0 : index
    %4 = vector.load %arg3[%c0_3, %c0_4] : memref<1x153xf32, #tpu.memory_space<vmem>>, vector<1x153xf32>
    %5 = vector.broadcast %4 : vector<1x153xf32> to vector<128x153xf32>
    %6 = arith.addf %3, %5 : vector<128x153xf32>
    %cst = arith.constant 0.000000e+00 : f32
    %7 = vector.broadcast %cst : f32 to vector<128x153xf32>
    %8 = arith.maximumf %6, %7 : vector<128x153xf32>
    %9 = arith.truncf %8 : vector<128x153xf32> to vector<128x153xbf16>
    %c0_5 = arith.constant 0 : index
    %c0_6 = arith.constant 0 : index
    %10 = vector.load %arg4[%c0_5, %c0_6] : memref<153x16xbf16, #tpu.memory_space<vmem>>, vector<153x16xbf16>
    %cst_7 = arith.constant dense<0.000000e+00> : vector<128x16xf32>
    %11 = tpu.matmul %9, %10, %cst_7 {dimension_numbers = #tpu.dot_dimension_numbers<[1], [0], [0], [1], [0, 0, 1, 1], [], []>} : vector<128x153xbf16>, vector<153x16xbf16>, vector<128x16xf32> -> vector<128x16xf32>
    %c0_8 = arith.constant 0 : index
    %c0_9 = arith.constant 0 : index
    %12 = vector.load %arg5[%c0_8, %c0_9] : memref<1x16xf32, #tpu.memory_space<vmem>>, vector<1x16xf32>
    %13 = vector.broadcast %12 : vector<1x16xf32> to vector<128x16xf32>
    %14 = arith.addf %11, %13 : vector<128x16xf32>
    %c0_10 = arith.constant 0 : index
    %c0_11 = arith.constant 0 : index
    %15 = vector.load %arg6[%c0_10, %c0_11] : memref<128x16xf32, #tpu.memory_space<vmem>>, vector<128x16xf32>
    tpu.vector_store %arg6[%c0_10, %c0_11], %14 {strides = array<i32>} : memref<128x16xf32, #tpu.memory_space<vmem>>, vector<128x16xf32>,
    return
  }
  func.func @transform_0(%arg0: i32) -> (i32, i32) {
    %c0_i32 = arith.constant 0 : i32
    %c0_i32_0 = arith.constant 0 : i32
    return %arg0, %c0_i32 : i32, i32
  }
  func.func @transform_1(%arg0: i32) -> (i32, i32) {
    %c0_i32 = arith.constant 0 : i32
    %c0_i32_0 = arith.constant 0 : i32
    %c0_i32_1 = arith.constant 0 : i32
    return %c0_i32, %c0_i32_0 : i32, i32
  }
  func.func @transform_2(%arg0: i32) -> (i32, i32) {
    %c0_i32 = arith.constant 0 : i32
    %c0_i32_0 = arith.constant 0 : i32
    %c0_i32_1 = arith.constant 0 : i32
    return %c0_i32, %c0_i32_0 : i32, i32
  }
  func.func @transform_3(%arg0: i32) -> (i32, i32) {
    %c0_i32 = arith.constant 0 : i32
    %c0_i32_0 = arith.constant 0 : i32
    %c0_i32_1 = arith.constant 0 : i32
    return %c0_i32, %c0_i32_0 : i32, i32
  }
  func.func @transform_4(%arg0: i32) -> (i32, i32) {
    %c0_i32 = arith.constant 0 : i32
    %c0_i32_0 = arith.constant 0 : i32
    %c0_i32_1 = arith.constant 0 : i32
    return %c0_i32, %c0_i32_0 : i32, i32
  }
  func.func @transform_5(%arg0: i32) -> (i32, i32) {
    %c0_i32 = arith.constant 0 : i32
    %c0_i32_0 = arith.constant 0 : i32
    return %arg0, %c0_i32 : i32, i32
  }
}

module attributes {stable_mosaic.version = 11 : i64} {
  func.func @_dense_tail_maxpool_kernel(%arg0: memref<4x32x297xf32, #tpu.memory_space<vmem>>, %arg1: memref<1x297xf32, #tpu.memory_space<vmem>>, %arg2: memref<1x297xf32, #tpu.memory_space<vmem>>, %arg3: memref<297x16xbf16, #tpu.memory_space<vmem>>, %arg4: memref<1x16xf32, #tpu.memory_space<vmem>>, %arg5: memref<4x32x33xf32, #tpu.memory_space<vmem>>, %arg6: memref<32x33xf32, #tpu.memory_space<vmem>>, %arg7: memref<32x16xf32, #tpu.memory_space<vmem>>) attributes {dimension_semantics = [], scalar_prefetch = 0 : i64, scratch_operands = 0 : i64, tpu.core_type = #tpu.core_type<tc>} {
    %c0 = arith.constant 0 : index
    %c0_0 = arith.constant 0 : index
    %c0_1 = arith.constant 0 : index
    %0 = vector.load %arg0[%c0, %c0_0, %c0_1] : memref<4x32x297xf32, #tpu.memory_space<vmem>>, vector<1x32x297xf32>
    %1 = vector.shape_cast %0 : vector<1x32x297xf32> to vector<32x297xf32>
    %c0_2 = arith.constant 0 : index
    %c0_3 = arith.constant 0 : index
    %2 = vector.load %arg1[%c0_2, %c0_3] : memref<1x297xf32, #tpu.memory_space<vmem>>, vector<1x297xf32>
    %3 = vector.broadcast %2 : vector<1x297xf32> to vector<32x297xf32>
    %4 = arith.mulf %1, %3 : vector<32x297xf32>
    %c0_4 = arith.constant 0 : index
    %c0_5 = arith.constant 0 : index
    %5 = vector.load %arg2[%c0_4, %c0_5] : memref<1x297xf32, #tpu.memory_space<vmem>>, vector<1x297xf32>
    %6 = vector.broadcast %5 : vector<1x297xf32> to vector<32x297xf32>
    %7 = arith.addf %4, %6 : vector<32x297xf32>
    %cst = arith.constant 0.000000e+00 : f32
    %8 = vector.broadcast %cst : f32 to vector<32x297xf32>
    %9 = arith.maximumf %7, %8 : vector<32x297xf32>
    %10 = arith.truncf %9 : vector<32x297xf32> to vector<32x297xbf16>
    %c0_6 = arith.constant 0 : index
    %c0_7 = arith.constant 0 : index
    %11 = vector.load %arg3[%c0_6, %c0_7] : memref<297x16xbf16, #tpu.memory_space<vmem>>, vector<297x16xbf16>
    %cst_8 = arith.constant dense<0.000000e+00> : vector<32x16xf32>
    %12 = tpu.matmul %10, %11, %cst_8 {dimension_numbers = #tpu.dot_dimension_numbers<[1], [0], [0], [1], [0, 0, 1, 1], [], []>} : vector<32x297xbf16>, vector<297x16xbf16>, vector<32x16xf32> -> vector<32x16xf32>
    %c1 = arith.constant 1 : index
    %c0_9 = arith.constant 0 : index
    %c0_10 = arith.constant 0 : index
    %13 = vector.load %arg0[%c1, %c0_9, %c0_10] : memref<4x32x297xf32, #tpu.memory_space<vmem>>, vector<1x32x297xf32>
    %14 = vector.shape_cast %13 : vector<1x32x297xf32> to vector<32x297xf32>
    %c0_11 = arith.constant 0 : index
    %c0_12 = arith.constant 0 : index
    %15 = vector.load %arg1[%c0_11, %c0_12] : memref<1x297xf32, #tpu.memory_space<vmem>>, vector<1x297xf32>
    %16 = vector.broadcast %15 : vector<1x297xf32> to vector<32x297xf32>
    %17 = arith.mulf %14, %16 : vector<32x297xf32>
    %c0_13 = arith.constant 0 : index
    %c0_14 = arith.constant 0 : index
    %18 = vector.load %arg2[%c0_13, %c0_14] : memref<1x297xf32, #tpu.memory_space<vmem>>, vector<1x297xf32>
    %19 = vector.broadcast %18 : vector<1x297xf32> to vector<32x297xf32>
    %20 = arith.addf %17, %19 : vector<32x297xf32>
    %cst_15 = arith.constant 0.000000e+00 : f32
    %21 = vector.broadcast %cst_15 : f32 to vector<32x297xf32>
    %22 = arith.maximumf %20, %21 : vector<32x297xf32>
    %23 = arith.truncf %22 : vector<32x297xf32> to vector<32x297xbf16>
    %c0_16 = arith.constant 0 : index
    %c0_17 = arith.constant 0 : index
    %24 = vector.load %arg3[%c0_16, %c0_17] : memref<297x16xbf16, #tpu.memory_space<vmem>>, vector<297x16xbf16>
    %cst_18 = arith.constant dense<0.000000e+00> : vector<32x16xf32>
    %25 = tpu.matmul %23, %24, %cst_18 {dimension_numbers = #tpu.dot_dimension_numbers<[1], [0], [0], [1], [0, 0, 1, 1], [], []>} : vector<32x297xbf16>, vector<297x16xbf16>, vector<32x16xf32> -> vector<32x16xf32>
    %26 = arith.maximumf %12, %25 : vector<32x16xf32>
    %c2 = arith.constant 2 : index
    %c0_19 = arith.constant 0 : index
    %c0_20 = arith.constant 0 : index
    %27 = vector.load %arg0[%c2, %c0_19, %c0_20] : memref<4x32x297xf32, #tpu.memory_space<vmem>>, vector<1x32x297xf32>
    %28 = vector.shape_cast %27 : vector<1x32x297xf32> to vector<32x297xf32>
    %c0_21 = arith.constant 0 : index
    %c0_22 = arith.constant 0 : index
    %29 = vector.load %arg1[%c0_21, %c0_22] : memref<1x297xf32, #tpu.memory_space<vmem>>, vector<1x297xf32>
    %30 = vector.broadcast %29 : vector<1x297xf32> to vector<32x297xf32>
    %31 = arith.mulf %28, %30 : vector<32x297xf32>
    %c0_23 = arith.constant 0 : index
    %c0_24 = arith.constant 0 : index
    %32 = vector.load %arg2[%c0_23, %c0_24] : memref<1x297xf32, #tpu.memory_space<vmem>>, vector<1x297xf32>
    %33 = vector.broadcast %32 : vector<1x297xf32> to vector<32x297xf32>
    %34 = arith.addf %31, %33 : vector<32x297xf32>
    %cst_25 = arith.constant 0.000000e+00 : f32
    %35 = vector.broadcast %cst_25 : f32 to vector<32x297xf32>
    %36 = arith.maximumf %34, %35 : vector<32x297xf32>
    %37 = arith.truncf %36 : vector<32x297xf32> to vector<32x297xbf16>
    %c0_26 = arith.constant 0 : index
    %c0_27 = arith.constant 0 : index
    %38 = vector.load %arg3[%c0_26, %c0_27] : memref<297x16xbf16, #tpu.memory_space<vmem>>, vector<297x16xbf16>
    %cst_28 = arith.constant dense<0.000000e+00> : vector<32x16xf32>
    %39 = tpu.matmul %37, %38, %cst_28 {dimension_numbers = #tpu.dot_dimension_numbers<[1], [0], [0], [1], [0, 0, 1, 1], [], []>} : vector<32x297xbf16>, vector<297x16xbf16>, vector<32x16xf32> -> vector<32x16xf32>
    %40 = arith.maximumf %26, %39 : vector<32x16xf32>
    %c3 = arith.constant 3 : index
    %c0_29 = arith.constant 0 : index
    %c0_30 = arith.constant 0 : index
    %41 = vector.load %arg0[%c3, %c0_29, %c0_30] : memref<4x32x297xf32, #tpu.memory_space<vmem>>, vector<1x32x297xf32>
    %42 = vector.shape_cast %41 : vector<1x32x297xf32> to vector<32x297xf32>
    %c0_31 = arith.constant 0 : index
    %c0_32 = arith.constant 0 : index
    %43 = vector.load %arg1[%c0_31, %c0_32] : memref<1x297xf32, #tpu.memory_space<vmem>>, vector<1x297xf32>
    %44 = vector.broadcast %43 : vector<1x297xf32> to vector<32x297xf32>
    %45 = arith.mulf %42, %44 : vector<32x297xf32>
    %c0_33 = arith.constant 0 : index
    %c0_34 = arith.constant 0 : index
    %46 = vector.load %arg2[%c0_33, %c0_34] : memref<1x297xf32, #tpu.memory_space<vmem>>, vector<1x297xf32>
    %47 = vector.broadcast %46 : vector<1x297xf32> to vector<32x297xf32>
    %48 = arith.addf %45, %47 : vector<32x297xf32>
    %cst_35 = arith.constant 0.000000e+00 : f32
    %49 = vector.broadcast %cst_35 : f32 to vector<32x297xf32>
    %50 = arith.maximumf %48, %49 : vector<32x297xf32>
    %51 = arith.truncf %50 : vector<32x297xf32> to vector<32x297xbf16>
    %c0_36 = arith.constant 0 : index
    %c0_37 = arith.constant 0 : index
    %52 = vector.load %arg3[%c0_36, %c0_37] : memref<297x16xbf16, #tpu.memory_space<vmem>>, vector<297x16xbf16>
    %cst_38 = arith.constant dense<0.000000e+00> : vector<32x16xf32>
    %53 = tpu.matmul %51, %52, %cst_38 {dimension_numbers = #tpu.dot_dimension_numbers<[1], [0], [0], [1], [0, 0, 1, 1], [], []>} : vector<32x297xbf16>, vector<297x16xbf16>, vector<32x16xf32> -> vector<32x16xf32>
    %54 = arith.maximumf %40, %53 : vector<32x16xf32>
    %c0_39 = arith.constant 0 : index
    %c0_40 = arith.constant 0 : index
    %55 = vector.load %arg4[%c0_39, %c0_40] : memref<1x16xf32, #tpu.memory_space<vmem>>, vector<1x16xf32>
    %56 = vector.broadcast %55 : vector<1x16xf32> to vector<32x16xf32>
    %57 = arith.addf %54, %56 : vector<32x16xf32>
    %c0_41 = arith.constant 0 : index
    %c0_42 = arith.constant 0 : index
    %58 = vector.load %arg7[%c0_41, %c0_42] : memref<32x16xf32, #tpu.memory_space<vmem>>, vector<32x16xf32>
    tpu.vector_store %arg7[%c0_41, %c0_42], %57 {strides = array<i32>} : memref<32x16xf32, #tpu.memory_space<vmem>>, vector<32x16xf32>,
    %c0_43 = arith.constant 0 : index
    %c0_44 = arith.constant 0 : index
    %c0_45 = arith.constant 0 : index
    %59 = vector.load %arg5[%c0_43, %c0_44, %c0_45] : memref<4x32x33xf32, #tpu.memory_space<vmem>>, vector<1x32x33xf32>
    %60 = vector.shape_cast %59 : vector<1x32x33xf32> to vector<32x33xf32>
    %c1_46 = arith.constant 1 : index
    %c0_47 = arith.constant 0 : index
    %c0_48 = arith.constant 0 : index
    %61 = vector.load %arg5[%c1_46, %c0_47, %c0_48] : memref<4x32x33xf32, #tpu.memory_space<vmem>>, vector<1x32x33xf32>
    %62 = vector.shape_cast %61 : vector<1x32x33xf32> to vector<32x33xf32>
    %63 = arith.maximumf %60, %62 : vector<32x33xf32>
    %c2_49 = arith.constant 2 : index
    %c0_50 = arith.constant 0 : index
    %c0_51 = arith.constant 0 : index
    %64 = vector.load %arg5[%c2_49, %c0_50, %c0_51] : memref<4x32x33xf32, #tpu.memory_space<vmem>>, vector<1x32x33xf32>
    %65 = vector.shape_cast %64 : vector<1x32x33xf32> to vector<32x33xf32>
    %c3_52 = arith.constant 3 : index
    %c0_53 = arith.constant 0 : index
    %c0_54 = arith.constant 0 : index
    %66 = vector.load %arg5[%c3_52, %c0_53, %c0_54] : memref<4x32x33xf32, #tpu.memory_space<vmem>>, vector<1x32x33xf32>
    %67 = vector.shape_cast %66 : vector<1x32x33xf32> to vector<32x33xf32>
    %68 = arith.maximumf %65, %67 : vector<32x33xf32>
    %69 = arith.maximumf %63, %68 : vector<32x33xf32>
    %c0_55 = arith.constant 0 : index
    %c0_56 = arith.constant 0 : index
    %70 = vector.load %arg6[%c0_55, %c0_56] : memref<32x33xf32, #tpu.memory_space<vmem>>, vector<32x33xf32>
    tpu.vector_store %arg6[%c0_55, %c0_56], %69 {strides = array<i32>} : memref<32x33xf32, #tpu.memory_space<vmem>>, vector<32x33xf32>,
    return
  }
}

module attributes {stable_mosaic.version = 11 : i64} {
  func.func @_aspp_deconv_kernel(%arg0: memref<32x441xf32, #tpu.memory_space<vmem>>, %arg1: memref<32x49xf32, #tpu.memory_space<vmem>>, %arg2: memref<441x49xbf16, #tpu.memory_space<vmem>>, %arg3: memref<1x49xf32, #tpu.memory_space<vmem>>, %arg4: memref<49x49xbf16, #tpu.memory_space<vmem>>, %arg5: memref<1x49xf32, #tpu.memory_space<vmem>>, %arg6: memref<49x49xbf16, #tpu.memory_space<vmem>>, %arg7: memref<1x49xf32, #tpu.memory_space<vmem>>, %arg8: memref<49x49xbf16, #tpu.memory_space<vmem>>, %arg9: memref<49x49xbf16, #tpu.memory_space<vmem>>, %arg10: memref<49x49xbf16, #tpu.memory_space<vmem>>, %arg11: memref<1x49xf32, #tpu.memory_space<vmem>>, %arg12: memref<4x49x128xbf16, #tpu.memory_space<vmem>>, %arg13: memref<1x128xf32, #tpu.memory_space<vmem>>, %arg14: memref<4x32x128xf32, #tpu.memory_space<vmem>>) attributes {dimension_semantics = [], scalar_prefetch = 0 : i64, scratch_operands = 0 : i64, tpu.core_type = #tpu.core_type<tc>} {
    %c0 = arith.constant 0 : index
    %c0_0 = arith.constant 0 : index
    %0 = vector.load %arg1[%c0, %c0_0] : memref<32x49xf32, #tpu.memory_space<vmem>>, vector<32x49xf32>
    %1 = arith.truncf %0 : vector<32x49xf32> to vector<32x49xbf16>
    %c0_1 = arith.constant 0 : index
    %c0_2 = arith.constant 0 : index
    %2 = vector.load %arg0[%c0_1, %c0_2] : memref<32x441xf32, #tpu.memory_space<vmem>>, vector<32x441xf32>
    %3 = arith.truncf %2 : vector<32x441xf32> to vector<32x441xbf16>
    %c0_3 = arith.constant 0 : index
    %c0_4 = arith.constant 0 : index
    %4 = vector.load %arg2[%c0_3, %c0_4] : memref<441x49xbf16, #tpu.memory_space<vmem>>, vector<441x49xbf16>
    %cst = arith.constant dense<0.000000e+00> : vector<32x49xf32>
    %5 = tpu.matmul %3, %4, %cst {dimension_numbers = #tpu.dot_dimension_numbers<[1], [0], [0], [1], [0, 0, 1, 1], [], []>} : vector<32x441xbf16>, vector<441x49xbf16>, vector<32x49xf32> -> vector<32x49xf32>
    %c0_5 = arith.constant 0 : index
    %c0_6 = arith.constant 0 : index
    %6 = vector.load %arg3[%c0_5, %c0_6] : memref<1x49xf32, #tpu.memory_space<vmem>>, vector<1x49xf32>
    %7 = vector.broadcast %6 : vector<1x49xf32> to vector<32x49xf32>
    %8 = arith.addf %5, %7 : vector<32x49xf32>
    %cst_7 = arith.constant 0.000000e+00 : f32
    %9 = vector.broadcast %cst_7 : f32 to vector<32x49xf32>
    %10 = arith.maximumf %8, %9 : vector<32x49xf32>
    %c0_8 = arith.constant 0 : index
    %c0_9 = arith.constant 0 : index
    %11 = vector.load %arg4[%c0_8, %c0_9] : memref<49x49xbf16, #tpu.memory_space<vmem>>, vector<49x49xbf16>
    %cst_10 = arith.constant dense<0.000000e+00> : vector<32x49xf32>
    %12 = tpu.matmul %1, %11, %cst_10 {dimension_numbers = #tpu.dot_dimension_numbers<[1], [0], [0], [1], [0, 0, 1, 1], [], []>} : vector<32x49xbf16>, vector<49x49xbf16>, vector<32x49xf32> -> vector<32x49xf32>
    %c0_11 = arith.constant 0 : index
    %c0_12 = arith.constant 0 : index
    %13 = vector.load %arg5[%c0_11, %c0_12] : memref<1x49xf32, #tpu.memory_space<vmem>>, vector<1x49xf32>
    %14 = vector.broadcast %13 : vector<1x49xf32> to vector<32x49xf32>
    %15 = arith.addf %12, %14 : vector<32x49xf32>
    %cst_13 = arith.constant 0.000000e+00 : f32
    %16 = vector.broadcast %cst_13 : f32 to vector<32x49xf32>
    %17 = arith.maximumf %15, %16 : vector<32x49xf32>
    %c0_14 = arith.constant 0 : index
    %c0_15 = arith.constant 0 : index
    %18 = vector.load %arg6[%c0_14, %c0_15] : memref<49x49xbf16, #tpu.memory_space<vmem>>, vector<49x49xbf16>
    %cst_16 = arith.constant dense<0.000000e+00> : vector<32x49xf32>
    %19 = tpu.matmul %1, %18, %cst_16 {dimension_numbers = #tpu.dot_dimension_numbers<[1], [0], [0], [1], [0, 0, 1, 1], [], []>} : vector<32x49xbf16>, vector<49x49xbf16>, vector<32x49xf32> -> vector<32x49xf32>
    %c0_17 = arith.constant 0 : index
    %c0_18 = arith.constant 0 : index
    %20 = vector.load %arg7[%c0_17, %c0_18] : memref<1x49xf32, #tpu.memory_space<vmem>>, vector<1x49xf32>
    %21 = vector.broadcast %20 : vector<1x49xf32> to vector<32x49xf32>
    %22 = arith.addf %19, %21 : vector<32x49xf32>
    %cst_19 = arith.constant 0.000000e+00 : f32
    %23 = vector.broadcast %cst_19 : f32 to vector<32x49xf32>
    %24 = arith.maximumf %22, %23 : vector<32x49xf32>
    %25 = arith.truncf %10 : vector<32x49xf32> to vector<32x49xbf16>
    %c0_20 = arith.constant 0 : index
    %c0_21 = arith.constant 0 : index
    %26 = vector.load %arg8[%c0_20, %c0_21] : memref<49x49xbf16, #tpu.memory_space<vmem>>, vector<49x49xbf16>
    %cst_22 = arith.constant dense<0.000000e+00> : vector<32x49xf32>
    %27 = tpu.matmul %25, %26, %cst_22 {dimension_numbers = #tpu.dot_dimension_numbers<[1], [0], [0], [1], [0, 0, 1, 1], [], []>} : vector<32x49xbf16>, vector<49x49xbf16>, vector<32x49xf32> -> vector<32x49xf32>
    %28 = arith.truncf %17 : vector<32x49xf32> to vector<32x49xbf16>
    %c0_23 = arith.constant 0 : index
    %c0_24 = arith.constant 0 : index
    %29 = vector.load %arg9[%c0_23, %c0_24] : memref<49x49xbf16, #tpu.memory_space<vmem>>, vector<49x49xbf16>
    %cst_25 = arith.constant dense<0.000000e+00> : vector<32x49xf32>
    %30 = tpu.matmul %28, %29, %cst_25 {dimension_numbers = #tpu.dot_dimension_numbers<[1], [0], [0], [1], [0, 0, 1, 1], [], []>} : vector<32x49xbf16>, vector<49x49xbf16>, vector<32x49xf32> -> vector<32x49xf32>
    %31 = arith.addf %27, %30 : vector<32x49xf32>
    %32 = arith.truncf %24 : vector<32x49xf32> to vector<32x49xbf16>
    %c0_26 = arith.constant 0 : index
    %c0_27 = arith.constant 0 : index
    %33 = vector.load %arg10[%c0_26, %c0_27] : memref<49x49xbf16, #tpu.memory_space<vmem>>, vector<49x49xbf16>
    %cst_28 = arith.constant dense<0.000000e+00> : vector<32x49xf32>
    %34 = tpu.matmul %32, %33, %cst_28 {dimension_numbers = #tpu.dot_dimension_numbers<[1], [0], [0], [1], [0, 0, 1, 1], [], []>} : vector<32x49xbf16>, vector<49x49xbf16>, vector<32x49xf32> -> vector<32x49xf32>
    %35 = arith.addf %31, %34 : vector<32x49xf32>
    %c0_29 = arith.constant 0 : index
    %c0_30 = arith.constant 0 : index
    %36 = vector.load %arg11[%c0_29, %c0_30] : memref<1x49xf32, #tpu.memory_space<vmem>>, vector<1x49xf32>
    %37 = vector.broadcast %36 : vector<1x49xf32> to vector<32x49xf32>
    %38 = arith.addf %35, %37 : vector<32x49xf32>
    %39 = arith.truncf %38 : vector<32x49xf32> to vector<32x49xbf16>
    %c0_31 = arith.constant 0 : index
    %c0_32 = arith.constant 0 : index
    %c0_33 = arith.constant 0 : index
    %40 = vector.load %arg12[%c0_31, %c0_32, %c0_33] : memref<4x49x128xbf16, #tpu.memory_space<vmem>>, vector<1x49x128xbf16>
    %41 = vector.shape_cast %40 : vector<1x49x128xbf16> to vector<49x128xbf16>
    %cst_34 = arith.constant dense<0.000000e+00> : vector<32x128xf32>
    %42 = tpu.matmul %39, %41, %cst_34 {dimension_numbers = #tpu.dot_dimension_numbers<[1], [0], [0], [1], [0, 0, 1, 1], [], []>} : vector<32x49xbf16>, vector<49x128xbf16>, vector<32x128xf32> -> vector<32x128xf32>
    %c0_35 = arith.constant 0 : index
    %c0_36 = arith.constant 0 : index
    %43 = vector.load %arg13[%c0_35, %c0_36] : memref<1x128xf32, #tpu.memory_space<vmem>>, vector<1x128xf32>
    %44 = vector.broadcast %43 : vector<1x128xf32> to vector<32x128xf32>
    %45 = arith.addf %42, %44 : vector<32x128xf32>
    %cst_37 = arith.constant 0.000000e+00 : f32
    %46 = vector.broadcast %cst_37 : f32 to vector<32x128xf32>
    %47 = arith.maximumf %45, %46 : vector<32x128xf32>
    %c0_38 = arith.constant 0 : index
    %c0_39 = arith.constant 0 : index
    %c0_40 = arith.constant 0 : index
    %48 = vector.load %arg14[%c0_38, %c0_39, %c0_40] : memref<4x32x128xf32, #tpu.memory_space<vmem>>, vector<1x32x128xf32>
    %49 = vector.shape_cast %48 : vector<1x32x128xf32> to vector<32x128xf32>
    %50 = vector.shape_cast %47 : vector<32x128xf32> to vector<1x32x128xf32>
    tpu.vector_store %arg14[%c0_38, %c0_39, %c0_40], %50 {strides = array<i32>} : memref<4x32x128xf32, #tpu.memory_space<vmem>>, vector<1x32x128xf32>,
    %c1 = arith.constant 1 : index
    %c0_41 = arith.constant 0 : index
    %c0_42 = arith.constant 0 : index
    %51 = vector.load %arg12[%c1, %c0_41, %c0_42] : memref<4x49x128xbf16, #tpu.memory_space<vmem>>, vector<1x49x128xbf16>
    %52 = vector.shape_cast %51 : vector<1x49x128xbf16> to vector<49x128xbf16>
    %cst_43 = arith.constant dense<0.000000e+00> : vector<32x128xf32>
    %53 = tpu.matmul %39, %52, %cst_43 {dimension_numbers = #tpu.dot_dimension_numbers<[1], [0], [0], [1], [0, 0, 1, 1], [], []>} : vector<32x49xbf16>, vector<49x128xbf16>, vector<32x128xf32> -> vector<32x128xf32>
    %c0_44 = arith.constant 0 : index
    %c0_45 = arith.constant 0 : index
    %54 = vector.load %arg13[%c0_44, %c0_45] : memref<1x128xf32, #tpu.memory_space<vmem>>, vector<1x128xf32>
    %55 = vector.broadcast %54 : vector<1x128xf32> to vector<32x128xf32>
    %56 = arith.addf %53, %55 : vector<32x128xf32>
    %cst_46 = arith.constant 0.000000e+00 : f32
    %57 = vector.broadcast %cst_46 : f32 to vector<32x128xf32>
    %58 = arith.maximumf %56, %57 : vector<32x128xf32>
    %c1_47 = arith.constant 1 : index
    %c0_48 = arith.constant 0 : index
    %c0_49 = arith.constant 0 : index
    %59 = vector.load %arg14[%c1_47, %c0_48, %c0_49] : memref<4x32x128xf32, #tpu.memory_space<vmem>>, vector<1x32x128xf32>
    %60 = vector.shape_cast %59 : vector<1x32x128xf32> to vector<32x128xf32>
    %61 = vector.shape_cast %58 : vector<32x128xf32> to vector<1x32x128xf32>
    tpu.vector_store %arg14[%c1_47, %c0_48, %c0_49], %61 {strides = array<i32>} : memref<4x32x128xf32, #tpu.memory_space<vmem>>, vector<1x32x128xf32>,
    %c2 = arith.constant 2 : index
    %c0_50 = arith.constant 0 : index
    %c0_51 = arith.constant 0 : index
    %62 = vector.load %arg12[%c2, %c0_50, %c0_51] : memref<4x49x128xbf16, #tpu.memory_space<vmem>>, vector<1x49x128xbf16>
    %63 = vector.shape_cast %62 : vector<1x49x128xbf16> to vector<49x128xbf16>
    %cst_52 = arith.constant dense<0.000000e+00> : vector<32x128xf32>
    %64 = tpu.matmul %39, %63, %cst_52 {dimension_numbers = #tpu.dot_dimension_numbers<[1], [0], [0], [1], [0, 0, 1, 1], [], []>} : vector<32x49xbf16>, vector<49x128xbf16>, vector<32x128xf32> -> vector<32x128xf32>
    %c0_53 = arith.constant 0 : index
    %c0_54 = arith.constant 0 : index
    %65 = vector.load %arg13[%c0_53, %c0_54] : memref<1x128xf32, #tpu.memory_space<vmem>>, vector<1x128xf32>
    %66 = vector.broadcast %65 : vector<1x128xf32> to vector<32x128xf32>
    %67 = arith.addf %64, %66 : vector<32x128xf32>
    %cst_55 = arith.constant 0.000000e+00 : f32
    %68 = vector.broadcast %cst_55 : f32 to vector<32x128xf32>
    %69 = arith.maximumf %67, %68 : vector<32x128xf32>
    %c2_56 = arith.constant 2 : index
    %c0_57 = arith.constant 0 : index
    %c0_58 = arith.constant 0 : index
    %70 = vector.load %arg14[%c2_56, %c0_57, %c0_58] : memref<4x32x128xf32, #tpu.memory_space<vmem>>, vector<1x32x128xf32>
    %71 = vector.shape_cast %70 : vector<1x32x128xf32> to vector<32x128xf32>
    %72 = vector.shape_cast %69 : vector<32x128xf32> to vector<1x32x128xf32>
    tpu.vector_store %arg14[%c2_56, %c0_57, %c0_58], %72 {strides = array<i32>} : memref<4x32x128xf32, #tpu.memory_space<vmem>>, vector<1x32x128xf32>,
    %c3 = arith.constant 3 : index
    %c0_59 = arith.constant 0 : index
    %c0_60 = arith.constant 0 : index
    %73 = vector.load %arg12[%c3, %c0_59, %c0_60] : memref<4x49x128xbf16, #tpu.memory_space<vmem>>, vector<1x49x128xbf16>
    %74 = vector.shape_cast %73 : vector<1x49x128xbf16> to vector<49x128xbf16>
    %cst_61 = arith.constant dense<0.000000e+00> : vector<32x128xf32>
    %75 = tpu.matmul %39, %74, %cst_61 {dimension_numbers = #tpu.dot_dimension_numbers<[1], [0], [0], [1], [0, 0, 1, 1], [], []>} : vector<32x49xbf16>, vector<49x128xbf16>, vector<32x128xf32> -> vector<32x128xf32>
    %c0_62 = arith.constant 0 : index
    %c0_63 = arith.constant 0 : index
    %76 = vector.load %arg13[%c0_62, %c0_63] : memref<1x128xf32, #tpu.memory_space<vmem>>, vector<1x128xf32>
    %77 = vector.broadcast %76 : vector<1x128xf32> to vector<32x128xf32>
    %78 = arith.addf %75, %77 : vector<32x128xf32>
    %cst_64 = arith.constant 0.000000e+00 : f32
    %79 = vector.broadcast %cst_64 : f32 to vector<32x128xf32>
    %80 = arith.maximumf %78, %79 : vector<32x128xf32>
    %c3_65 = arith.constant 3 : index
    %c0_66 = arith.constant 0 : index
    %c0_67 = arith.constant 0 : index
    %81 = vector.load %arg14[%c3_65, %c0_66, %c0_67] : memref<4x32x128xf32, #tpu.memory_space<vmem>>, vector<1x32x128xf32>
    %82 = vector.shape_cast %81 : vector<1x32x128xf32> to vector<32x128xf32>
    %83 = vector.shape_cast %80 : vector<32x128xf32> to vector<1x32x128xf32>
    tpu.vector_store %arg14[%c3_65, %c0_66, %c0_67], %83 {strides = array<i32>} : memref<4x32x128xf32, #tpu.memory_space<vmem>>, vector<1x32x128xf32>,
    return
  }
}

module attributes {stable_mosaic.version = 11 : i64} {
  func.func @_conv_kernel(%arg0: i32, %arg1: memref<128x1152xf32, #tpu.memory_space<vmem>>, %arg2: memref<1152x128xbf16, #tpu.memory_space<vmem>>, %arg3: memref<1x128xf32, #tpu.memory_space<vmem>>, %arg4: memref<128x128xf32, #tpu.memory_space<vmem>>) attributes {dimension_semantics = [#tpu.dimension_semantics<parallel>], iteration_bounds = array<i64: 1>, scalar_prefetch = 0 : i64, scratch_operands = 0 : i64, tpu.core_type = #tpu.core_type<tc>, window_params = [{transform_indices = @transform_0, window_bounds = array<i64: 128, 1152>}, {pipeline_mode = #tpu.pipeline_mode<synchronous>, transform_indices = @transform_1, window_bounds = array<i64: 1152, 128>}, {pipeline_mode = #tpu.pipeline_mode<synchronous>, transform_indices = @transform_2, window_bounds = array<i64: 1, 128>}, {transform_indices = @transform_3, window_bounds = array<i64: 128, 128>}]} {
    %c0 = arith.constant 0 : index
    %c0_0 = arith.constant 0 : index
    %0 = vector.load %arg1[%c0, %c0_0] : memref<128x1152xf32, #tpu.memory_space<vmem>>, vector<128x1152xf32>
    %1 = arith.truncf %0 : vector<128x1152xf32> to vector<128x1152xbf16>
    %c0_1 = arith.constant 0 : index
    %c0_2 = arith.constant 0 : index
    %2 = vector.load %arg2[%c0_1, %c0_2] : memref<1152x128xbf16, #tpu.memory_space<vmem>>, vector<1152x128xbf16>
    %cst = arith.constant dense<0.000000e+00> : vector<128x128xf32>
    %3 = tpu.matmul %1, %2, %cst {dimension_numbers = #tpu.dot_dimension_numbers<[1], [0], [0], [1], [0, 0, 1, 1], [], []>} : vector<128x1152xbf16>, vector<1152x128xbf16>, vector<128x128xf32> -> vector<128x128xf32>
    %c0_3 = arith.constant 0 : index
    %c0_4 = arith.constant 0 : index
    %4 = vector.load %arg3[%c0_3, %c0_4] : memref<1x128xf32, #tpu.memory_space<vmem>>, vector<1x128xf32>
    %5 = vector.broadcast %4 : vector<1x128xf32> to vector<128x128xf32>
    %6 = arith.addf %3, %5 : vector<128x128xf32>
    %cst_5 = arith.constant 0.000000e+00 : f32
    %7 = vector.broadcast %cst_5 : f32 to vector<128x128xf32>
    %8 = arith.maximumf %6, %7 : vector<128x128xf32>
    %c0_6 = arith.constant 0 : index
    %c0_7 = arith.constant 0 : index
    %9 = vector.load %arg4[%c0_6, %c0_7] : memref<128x128xf32, #tpu.memory_space<vmem>>, vector<128x128xf32>
    tpu.vector_store %arg4[%c0_6, %c0_7], %8 {strides = array<i32>} : memref<128x128xf32, #tpu.memory_space<vmem>>, vector<128x128xf32>,
    return
  }
  func.func @transform_0(%arg0: i32) -> (i32, i32) {
    %c0_i32 = arith.constant 0 : i32
    %c0_i32_0 = arith.constant 0 : i32
    return %arg0, %c0_i32 : i32, i32
  }
  func.func @transform_1(%arg0: i32) -> (i32, i32) {
    %c0_i32 = arith.constant 0 : i32
    %c0_i32_0 = arith.constant 0 : i32
    %c0_i32_1 = arith.constant 0 : i32
    return %c0_i32, %c0_i32_0 : i32, i32
  }
  func.func @transform_2(%arg0: i32) -> (i32, i32) {
    %c0_i32 = arith.constant 0 : i32
    %c0_i32_0 = arith.constant 0 : i32
    %c0_i32_1 = arith.constant 0 : i32
    return %c0_i32, %c0_i32_0 : i32, i32
  }
  func.func @transform_3(%arg0: i32) -> (i32, i32) {
    %c0_i32 = arith.constant 0 : i32
    %c0_i32_0 = arith.constant 0 : i32
    return %arg0, %c0_i32 : i32, i32
  }
}

module attributes {stable_mosaic.version = 11 : i64} {
  func.func @_conv_conv_kernel(%arg0: i32, %arg1: memref<128x1152xf32, #tpu.memory_space<vmem>>, %arg2: memref<1152x128xbf16, #tpu.memory_space<vmem>>, %arg3: memref<1x128xf32, #tpu.memory_space<vmem>>, %arg4: memref<128x4xbf16, #tpu.memory_space<vmem>>, %arg5: memref<1x4xf32, #tpu.memory_space<vmem>>, %arg6: memref<128x4xf32, #tpu.memory_space<vmem>>) attributes {dimension_semantics = [#tpu.dimension_semantics<parallel>], iteration_bounds = array<i64: 1>, scalar_prefetch = 0 : i64, scratch_operands = 0 : i64, tpu.core_type = #tpu.core_type<tc>, window_params = [{transform_indices = @transform_0, window_bounds = array<i64: 128, 1152>}, {pipeline_mode = #tpu.pipeline_mode<synchronous>, transform_indices = @transform_1, window_bounds = array<i64: 1152, 128>}, {pipeline_mode = #tpu.pipeline_mode<synchronous>, transform_indices = @transform_2, window_bounds = array<i64: 1, 128>}, {pipeline_mode = #tpu.pipeline_mode<synchronous>, transform_indices = @transform_3, window_bounds = array<i64: 128, 4>}, {pipeline_mode = #tpu.pipeline_mode<synchronous>, transform_indices = @transform_4, window_bounds = array<i64: 1, 4>}, {transform_indices = @transform_5, window_bounds = array<i64: 128, 4>}]} {
    %c0 = arith.constant 0 : index
    %c0_0 = arith.constant 0 : index
    %0 = vector.load %arg1[%c0, %c0_0] : memref<128x1152xf32, #tpu.memory_space<vmem>>, vector<128x1152xf32>
    %1 = arith.truncf %0 : vector<128x1152xf32> to vector<128x1152xbf16>
    %c0_1 = arith.constant 0 : index
    %c0_2 = arith.constant 0 : index
    %2 = vector.load %arg2[%c0_1, %c0_2] : memref<1152x128xbf16, #tpu.memory_space<vmem>>, vector<1152x128xbf16>
    %cst = arith.constant dense<0.000000e+00> : vector<128x128xf32>
    %3 = tpu.matmul %1, %2, %cst {dimension_numbers = #tpu.dot_dimension_numbers<[1], [0], [0], [1], [0, 0, 1, 1], [], []>} : vector<128x1152xbf16>, vector<1152x128xbf16>, vector<128x128xf32> -> vector<128x128xf32>
    %c0_3 = arith.constant 0 : index
    %c0_4 = arith.constant 0 : index
    %4 = vector.load %arg3[%c0_3, %c0_4] : memref<1x128xf32, #tpu.memory_space<vmem>>, vector<1x128xf32>
    %5 = vector.broadcast %4 : vector<1x128xf32> to vector<128x128xf32>
    %6 = arith.addf %3, %5 : vector<128x128xf32>
    %cst_5 = arith.constant 0.000000e+00 : f32
    %7 = vector.broadcast %cst_5 : f32 to vector<128x128xf32>
    %8 = arith.maximumf %6, %7 : vector<128x128xf32>
    %9 = arith.truncf %8 : vector<128x128xf32> to vector<128x128xbf16>
    %c0_6 = arith.constant 0 : index
    %c0_7 = arith.constant 0 : index
    %10 = vector.load %arg4[%c0_6, %c0_7] : memref<128x4xbf16, #tpu.memory_space<vmem>>, vector<128x4xbf16>
    %cst_8 = arith.constant dense<0.000000e+00> : vector<128x4xf32>
    %11 = tpu.matmul %9, %10, %cst_8 {dimension_numbers = #tpu.dot_dimension_numbers<[1], [0], [0], [1], [0, 0, 1, 1], [], []>} : vector<128x128xbf16>, vector<128x4xbf16>, vector<128x4xf32> -> vector<128x4xf32>
    %c0_9 = arith.constant 0 : index
    %c0_10 = arith.constant 0 : index
    %12 = vector.load %arg5[%c0_9, %c0_10] : memref<1x4xf32, #tpu.memory_space<vmem>>, vector<1x4xf32>
    %13 = vector.broadcast %12 : vector<1x4xf32> to vector<128x4xf32>
    %14 = arith.addf %11, %13 : vector<128x4xf32>
    %c0_11 = arith.constant 0 : index
    %c0_12 = arith.constant 0 : index
    %15 = vector.load %arg6[%c0_11, %c0_12] : memref<128x4xf32, #tpu.memory_space<vmem>>, vector<128x4xf32>
    tpu.vector_store %arg6[%c0_11, %c0_12], %14 {strides = array<i32>} : memref<128x4xf32, #tpu.memory_space<vmem>>, vector<128x4xf32>,
    return
  }
  func.func @transform_0(%arg0: i32) -> (i32, i32) {
    %c0_i32 = arith.constant 0 : i32
    %c0_i32_0 = arith.constant 0 : i32
    return %arg0, %c0_i32 : i32, i32
  }
  func.func @transform_1(%arg0: i32) -> (i32, i32) {
    %c0_i32 = arith.constant 0 : i32
    %c0_i32_0 = arith.constant 0 : i32
    %c0_i32_1 = arith.constant 0 : i32
    return %c0_i32, %c0_i32_0 : i32, i32
  }
  func.func @transform_2(%arg0: i32) -> (i32, i32) {
    %c0_i32 = arith.constant 0 : i32
    %c0_i32_0 = arith.constant 0 : i32
    %c0_i32_1 = arith.constant 0 : i32
    return %c0_i32, %c0_i32_0 : i32, i32
  }
  func.func @transform_3(%arg0: i32) -> (i32, i32) {
    %c0_i32 = arith.constant 0 : i32
    %c0_i32_0 = arith.constant 0 : i32
    %c0_i32_1 = arith.constant 0 : i32
    return %c0_i32, %c0_i32_0 : i32, i32
  }
  func.func @transform_4(%arg0: i32) -> (i32, i32) {
    %c0_i32 = arith.constant 0 : i32
    %c0_i32_0 = arith.constant 0 : i32
    %c0_i32_1 = arith.constant 0 : i32
    return %c0_i32, %c0_i32_0 : i32, i32
  }
  func.func @transform_5(%arg0: i32) -> (i32, i32) {
    %c0_i32 = arith.constant 0 : i32
    %c0_i32_0 = arith.constant 0 : i32
    return %arg0, %c0_i32 : i32, i32
  }
}

</mosaic_0001>

<llo_original>
// kernel: fcn_forward.7
$region0: #{fcn_forward.7}
  #allocation0 [shape = 'u32[]', space=smem, size = 0x4, offset = 0x4, fixed_abs, tag = 'smem constant byte address 0x4 - core index']
  #allocation1 [shape = 'u32[144,128]{1,0:T(1,128)}', space=vmem, size = 0x12000, scoped, tag = 'internal scratch']
  %s0 = inlined_call_operand.vmem [shape: f32[512,27], index: 0, kind: input, shape index: {}]
  %s1 = inlined_call_operand.vmem [shape: f32[1,27], index: 1, kind: input, shape index: {}]
  %s2 = inlined_call_operand.vmem [shape: f32[1,27], index: 2, kind: input, shape index: {}]
  %s3 = inlined_call_operand.vmem [shape: bf16[27,16], index: 3, kind: input, shape index: {}]
  %s4 = inlined_call_operand.vmem [shape: f32[1,16], index: 4, kind: input, shape index: {}]
  %s5 = inlined_call_operand.vmem [shape: f32[512,16], index: 5, kind: output, shape index: {}]
  %s6 = sld [smem:[#allocation0]]
  $region53: #{fcn_forward.7} parent=0
    _
  %s8 = ssub.s32 1, %s6
  %s9 = scalar_select 0, %s8, %s6
  loop: start=0, step=1, limit=4
  $region2: #{fcn_forward.7} parent=0 // loop_pre_header
    _
  $region3: #{fcn_forward.7} parent=0 // loop_header
    %s11 = sphi 0, %s15
    %p12 = scmp.ge.s32.totalorder %s11, 4
    %s21 = sphi 0, %s23
    %s24 = sphi 0, %s21
    %s25 = sphi 0, %s24
    %s41 = sphi 0, %s25
    %s45 = sphi 0, %s45
    %s47 = sphi 0, %s45
    %s48 = sphi 0, %s47
    %s62 = sphi 0, %s48
    %s66 = sphi 0, %s66
    %s68 = sphi 0, %s66
    %s69 = sphi 0, %s68
    %s83 = sphi 0, %s69
    %s87 = sphi 0, %s87
    %s89 = sphi 0, %s87
    %s90 = sphi 0, %s89
    %s104 = sphi 0, %s90
    %s108 = sphi 0, %s108
    %s110 = sphi 0, %s108
    %s111 = sphi 0, %s110
    %s125 = sphi 0, %s111
    %s131 = sphi 0, %s133
    %s134 = sphi 0, %s131
    %s135 = sphi 0, %s134
    %s151 = sphi 0, %s135
  $region4: #{fcn_forward.7} parent=0 // loop_header_branch
    %14 = sbr.rel (%p12) target = $region8
  $region5: #{fcn_forward.7} parent=0 // loop_body
    %s16 = ssub.s32 %s11, 1
    %s17 = ssub.s32 %s11, 2
    %s18 = sadd.s32 %s11, 1
    %s19 = ssub.s32 %s11, %s18
    %p20 = scmp.eq.s32.totalorder %s19, 0
    %s22 = sadd.s32 %s21, 1
    %s23 = scalar_select %p20, %s21, %s22
    %p26 = pneg %p20
    %p27 = scmp.eq.s32.totalorder %s11, 1
    %p28 = por %p26, %p27
    %p29 = scmp.ne.s32.totalorder %s21, %s24
    %p30 = scmp.eq.s32.totalorder %s11, 0
    %p31 = por %p29, %p30
    %p32 = scmp.ne.s32.totalorder %s21, %s24
    %p33 = scmp.eq.s32.totalorder %s16, 1
    %p34 = por %p32, %p33
    %p35 = scmp.ne.s32.totalorder %s24, %s25
    %p36 = scmp.eq.s32.totalorder %s16, 0
    %p37 = por %p35, %p36
    %p38 = scmp.ne.s32.totalorder %s24, %s25
    %p39 = scmp.eq.s32.totalorder %s17, 1
    %p40 = por %p38, %p39
    %p42 = scmp.ne.s32.totalorder %s25, %s41
    %p43 = scmp.eq.s32.totalorder %s17, 0
    %p44 = por %p42, %p43
    %s46 = sadd.s32 %s45, 1
    %p49 = scmp.eq.s32.totalorder %s11, 1
    %p50 = scmp.ne.s32.totalorder %s45, %s47
    %p51 = scmp.eq.s32.totalorder %s11, 0
    %p52 = por %p50, %p51
    %p53 = scmp.ne.s32.totalorder %s45, %s47
    %p54 = scmp.eq.s32.totalorder %s16, 1
    %p55 = por %p53, %p54
    %p56 = scmp.ne.s32.totalorder %s47, %s48
    %p57 = scmp.eq.s32.totalorder %s16, 0
    %p58 = por %p56, %p57
    %p59 = scmp.ne.s32.totalorder %s47, %s48
    %p60 = scmp.eq.s32.totalorder %s17, 1
    %p61 = por %p59, %p60
    %p63 = scmp.ne.s32.totalorder %s48, %s62
    %p64 = scmp.eq.s32.totalorder %s17, 0
    %p65 = por %p63, %p64
    %s67 = sadd.s32 %s66, 1
    %p70 = scmp.eq.s32.totalorder %s11, 1
    %p71 = scmp.ne.s32.totalorder %s66, %s68
    %p72 = scmp.eq.s32.totalorder %s11, 0
    %p73 = por %p71, %p72
    %p74 = scmp.ne.s32.totalorder %s66, %s68
    %p75 = scmp.eq.s32.totalorder %s16, 1
    %p76 = por %p74, %p75
    %p77 = scmp.ne.s32.totalorder %s68, %s69
    %p78 = scmp.eq.s32.totalorder %s16, 0
    %p79 = por %p77, %p78
    %p80 = scmp.ne.s32.totalorder %s68, %s69
    %p81 = scmp.eq.s32.totalorder %s17, 1
    %p82 = por %p80, %p81
    %p84 = scmp.ne.s32.totalorder %s69, %s83
    %p85 = scmp.eq.s32.totalorder %s17, 0
    %p86 = por %p84, %p85
    %s88 = sadd.s32 %s87, 1
    %p91 = scmp.eq.s32.totalorder %s11, 1
    %p92 = scmp.ne.s32.totalorder %s87, %s89
    %p93 = scmp.eq.s32.totalorder %s11, 0
    %p94 = por %p92, %p93
    %p95 = scmp.ne.s32.totalorder %s87, %s89
    %p96 = scmp.eq.s32.totalorder %s16, 1
    %p97 = por %p95, %p96
    %p98 = scmp.ne.s32.totalorder %s89, %s90
    %p99 = scmp.eq.s32.totalorder %s16, 0
    %p100 = por %p98, %p99
    %p101 = scmp.ne.s32.totalorder %s89, %s90
    %p102 = scmp.eq.s32.totalorder %s17, 1
    %p103 = por %p101, %p102
    %p105 = scmp.ne.s32.totalorder %s90, %s104
    %p106 = scmp.eq.s32.totalorder %s17, 0
    %p107 = por %p105, %p106
    %s109 = sadd.s32 %s108, 1
    %p112 = scmp.eq.s32.totalorder %s11, 1
    %p113 = scmp.ne.s32.totalorder %s108, %s110
    %p114 = scmp.eq.s32.totalorder %s11, 0
    %p115 = por %p113, %p114
    %p116 = scmp.ne.s32.totalorder %s108, %s110
    %p117 = scmp.eq.s32.totalorder %s16, 1
    %p118 = por %p116, %p117
    %p119 = scmp.ne.s32.totalorder %s110, %s111
    %p120 = scmp.eq.s32.totalorder %s16, 0
    %p121 = por %p119, %p120
    %p122 = scmp.ne.s32.totalorder %s110, %s111
    %p123 = scmp.eq.s32.totalorder %s17, 1
    %p124 = por %p122, %p123
    %p126 = scmp.ne.s32.totalorder %s111, %s125
    %p127 = scmp.eq.s32.totalorder %s17, 0
    %p128 = por %p126, %p127
    %s129 = ssub.s32 %s11, %s18
    %p130 = scmp.eq.s32.totalorder %s129, 0
    %s132 = sadd.s32 %s131, 1
    %s133 = scalar_select %p130, %s131, %s132
    %p136 = pneg %p130
    %p137 = scmp.eq.s32.totalorder %s11, 1
    %p138 = por %p136, %p137
    %p139 = scmp.ne.s32.totalorder %s131, %s134
    %p140 = scmp.eq.s32.totalorder %s11, 0
    %p141 = por %p139, %p140
    %p142 = scmp.ne.s32.totalorder %s131, %s134
    %p143 = scmp.eq.s32.totalorder %s16, 1
    %p144 = por %p142, %p143
    %p145 = scmp.ne.s32.totalorder %s134, %s135
    %p146 = scmp.eq.s32.totalorder %s16, 0
    %p147 = por %p145, %p146
    %p148 = scmp.ne.s32.totalorder %s134, %s135
    %p149 = scmp.eq.s32.totalorder %s17, 1
    %p150 = por %p148, %p149
    %p152 = scmp.ne.s32.totalorder %s135, %s151
    %p153 = scmp.eq.s32.totalorder %s17, 0
    %p154 = por %p152, %p153
    %p155 = scmp.le.s32.totalorder 1, %s11
    %p156 = scmp.lt.s32.totalorder %s11, 3
    %p157 = pnand %p155, %p156
    %p158 = pneg %p157
    // Predicated region
    $region9: #{fcn_forward.7} parent=5 // pred_check
      _
    $region10: #{fcn_forward.7} parent=5 // pred_check_branch
      %160 = sbr.rel (%p157) target = $region12
    $region11: #{fcn_forward.7} parent=5 // pred_region
      %s161 = ssub.s32 %s11, 1
      // Predicated region
      $region13: #{fcn_forward.7} parent=11 // pred_check
        %p162 = pneg %p58
      $region14: #{fcn_forward.7} parent=11 // pred_check_branch
        %164 = sbr.rel (%p162) target = $region16
      $region15: #{fcn_forward.7} parent=11 // pred_region
        _
      $region16: #{fcn_forward.7} parent=11 // pred_fallthru
        _
      // Predicated region
      $region17: #{fcn_forward.7} parent=11 // pred_check
        %p165 = pneg %p79
      $region18: #{fcn_forward.7} parent=11 // pred_check_branch
        %167 = sbr.rel (%p165) target = $region20
      $region19: #{fcn_forward.7} parent=11 // pred_region
        _
      $region20: #{fcn_forward.7} parent=11 // pred_fallthru
        _
      // Predicated region
      $region21: #{fcn_forward.7} parent=11 // pred_check
        %p168 = pneg %p100
      $region22: #{fcn_forward.7} parent=11 // pred_check_branch
        %170 = sbr.rel (%p168) target = $region24
      $region23: #{fcn_forward.7} parent=11 // pred_region
        _
      $region24: #{fcn_forward.7} parent=11 // pred_fallthru
        _
      // Predicated region
      $region25: #{fcn_forward.7} parent=11 // pred_check
        %p171 = pneg %p121
      $region26: #{fcn_forward.7} parent=11 // pred_check_branch
        %173 = sbr.rel (%p171) target = $region28
      $region27: #{fcn_forward.7} parent=11 // pred_region
        _
      $region28: #{fcn_forward.7} parent=11 // pred_fallthru
        _
    $region12: #{fcn_forward.7} parent=5 // pred_fallthru
      _
    %p174 = scmp.lt.s32.totalorder %s11, 2
    // Predicated region
    $region29: #{fcn_forward.7} parent=5 // pred_check
      %p175 = pneg %p174
    $region30: #{fcn_forward.7} parent=5 // pred_check_branch
      %177 = sbr.rel (%p175) target = $region32
    $region31: #{fcn_forward.7} parent=5 // pred_region
      // Predicated region
      $region33: #{fcn_forward.7} parent=31 // pred_check
        %p178 = pneg %p31
      $region34: #{fcn_forward.7} parent=31 // pred_check_branch
        %180 = sbr.rel (%p178) target = $region36
      $region35: #{fcn_forward.7} parent=31 // pred_region
        %s181 = smul.u32 32, %s11
        %p182 = scmp.lt.s32.totalorder %s181, 63
        %s183 = scalar_select %p182, %s181, 63
        %s184 = smul.addr %s183, 8
        %s185 = scalar_lea.vmem %s0, %s184
        %s186 = smul.u32 32, %s11
      $region36: #{fcn_forward.7} parent=31 // pred_fallthru
        _
    $region32: #{fcn_forward.7} parent=5 // pred_fallthru
      _
    %p187 = scmp.le.s32.totalorder 1, %s11
    %p188 = scmp.lt.s32.totalorder %s11, 3
    %p189 = pnand %p187, %p188
    %p190 = pneg %p189
    // Predicated region
    $region37: #{fcn_forward.7} parent=5 // pred_check
      _
    $region38: #{fcn_forward.7} parent=5 // pred_check_branch
      %192 = sbr.rel (%p189) target = $region40
    $region39: #{fcn_forward.7} parent=5 // pred_region
      %s193 = ssub.s32 %s11, 1
      %s194 = smul.u32 32, %s16
      %p195 = scmp.lt.s32.totalorder %s194, 63
      %s196 = scalar_select %p195, %s194, 63
      %s197 = smul.addr %s196, 8
      %s198 = scalar_lea.vmem %s0, %s197
      %p199 = pneg %p37
      %p200 = pneg %p34
      %p201 = pneg %p58
      %p202 = pneg %p55
      %p203 = pneg %p79
      %p204 = pneg %p76
      %p205 = pneg %p100
      %p206 = pneg %p97
      %p207 = pneg %p121
      %p208 = pneg %p118
      %p209 = pneg %p147
      %p210 = pneg %p144
      %s211 = smul.u32 32, %s16
      %p212 = scmp.lt.s32.totalorder %s211, 63
      %s213 = scalar_select %p212, %s211, 63
      %s214 = smul.addr %s213, 8
      %s215 = scalar_lea.vmem %s5, %s214
      %s216 = smul.u32 32, %s16
      %p217 = scmp.lt.s32.totalorder %s216, 63
      %s218 = scalar_select %p217, %s216, 63
      %s219 = smul.addr %s218, 8
      %s220 = scalar_lea.vmem %s0, %s219
      %s221 = smul.u32 32, %s16
      %s222 = smul.u32 32, %s16
      %p223 = scmp.lt.s32.totalorder %s222, 63
      %s224 = scalar_select %p223, %s222, 63
      %s225 = smul.addr %s224, 8
      %s226 = scalar_lea.vmem %s5, %s225
      %s227 = smul.u32 32, %s16
      %v229 = vld [vmem:[%s220] sm:$0xff]
      %v230 = vld [vmem:[%s220 + $0x8] sm:$0xff]
      %v231 = vld [vmem:[%s220 + $0x10] sm:$0xff]
      %v232 = vld [vmem:[%s220 + $0x18] sm:$0xff]
      %v233 = vld [vmem:[%s220 + $0x20] sm:$0xff]
      %v234 = vld [vmem:[%s220 + $0x28] sm:$0xff]
      %v235 = vld [vmem:[%s220 + $0x30] sm:$0xff]
      %v236 = vld [vmem:[%s220 + $0x38] sm:$0xff]
      %v237 = vld [vmem:[%s220 + $0x40] sm:$0xff]
      %v238 = vld [vmem:[%s220 + $0x48] sm:$0xff]
      %v239 = vld [vmem:[%s220 + $0x50] sm:$0xff]
      %v240 = vld [vmem:[%s220 + $0x58] sm:$0xff]
      %v241 = vld [vmem:[%s220 + $0x60] sm:$0xff]
      %v242 = vld [vmem:[%s220 + $0x68] sm:$0xff]
      %v243 = vld [vmem:[%s220 + $0x70] sm:$0xff]
      %v244 = vld [vmem:[%s220 + $0x78] sm:$0xff]
      %v245 = vld [vmem:[%s220 + $0x80] sm:$0xff]
      %v246 = vld [vmem:[%s220 + $0x88] sm:$0xff]
      %v247 = vld [vmem:[%s220 + $0x90] sm:$0xff]
      %v248 = vld [vmem:[%s220 + $0x98] sm:$0xff]
      %v249 = vld [vmem:[%s220 + $0xa0] sm:$0xff]
      %v250 = vld [vmem:[%s220 + $0xa8] sm:$0xff]
      %v251 = vld [vmem:[%s220 + $0xb0] sm:$0xff]
      %v252 = vld [vmem:[%s220 + $0xb8] sm:$0xff]
      %v253 = vld [vmem:[%s220 + $0xc0] sm:$0xff]
      %v254 = vld [vmem:[%s220 + $0xc8] sm:$0xff]
      %v255 = vld [vmem:[%s220 + $0xd0] sm:$0xff]
      %v256 = vld [vmem:[%s220 + $0xd8] sm:$0xff]
      %v257 = vld [vmem:[%s220 + $0xe0] sm:$0xff]
      %v258 = vld [vmem:[%s220 + $0xe8] sm:$0xff]
      %v259 = vld [vmem:[%s220 + $0xf0] sm:$0xff]
      %v260 = vld [vmem:[%s220 + $0xf8] sm:$0xff]
      %v261 = vld [vmem:[%s1] sm:$0x1]
      %v263 = vlaneseq
      %v264 = vshrl.u32 %v263, 7
      %v265 = vsub.s32 0, %v264
      %v266 = vrot.slane %v261, %v265
      %v268 = vmul.f32 %v229, %v266
      %v269 = vmul.f32 %v230, %v266
      %v270 = vmul.f32 %v231, %v266
      %v271 = vmul.f32 %v232, %v266
      %v272 = vmul.f32 %v233, %v266
      %v273 = vmul.f32 %v234, %v266
      %v274 = vmul.f32 %v235, %v266
      %v275 = vmul.f32 %v236, %v266
      %v276 = vmul.f32 %v237, %v266
      %v277 = vmul.f32 %v238, %v266
      %v278 = vmul.f32 %v239, %v266
      %v279 = vmul.f32 %v240, %v266
      %v280 = vmul.f32 %v241, %v266
      %v281 = vmul.f32 %v242, %v266
      %v282 = vmul.f32 %v243, %v266
      %v283 = vmul.f32 %v244, %v266
      %v284 = vmul.f32 %v245, %v266
      %v285 = vmul.f32 %v246, %v266
      %v286 = vmul.f32 %v247, %v266
      %v287 = vmul.f32 %v248, %v266
      %v288 = vmul.f32 %v249, %v266
      %v289 = vmul.f32 %v250, %v266
      %v290 = vmul.f32 %v251, %v266
      %v291 = vmul.f32 %v252, %v266
      %v292 = vmul.f32 %v253, %v266
      %v293 = vmul.f32 %v254, %v266
      %v294 = vmul.f32 %v255, %v266
      %v295 = vmul.f32 %v256, %v266
      %v296 = vmul.f32 %v257, %v266
      %v297 = vmul.f32 %v258, %v266
      %v298 = vmul.f32 %v259, %v266
      %v299 = vmul.f32 %v260, %v266
      %v300 = vld [vmem:[%s2] sm:$0x1]
      %v302 = vlaneseq
      %v303 = vshrl.u32 %v302, 7
      %v304 = vsub.s32 0, %v303
      %v305 = vrot.slane %v300, %v304
      %v307 = vadd.f32 %v268, %v305
      %v308 = vadd.f32 %v269, %v305
      %v309 = vadd.f32 %v270, %v305
      %v310 = vadd.f32 %v271, %v305
      %v311 = vadd.f32 %v272, %v305
      %v312 = vadd.f32 %v273, %v305
      %v313 = vadd.f32 %v274, %v305
      %v314 = vadd.f32 %v275, %v305
      %v315 = vadd.f32 %v276, %v305
      %v316 = vadd.f32 %v277, %v305
      %v317 = vadd.f32 %v278, %v305
      %v318 = vadd.f32 %v279, %v305
      %v319 = vadd.f32 %v280, %v305
      %v320 = vadd.f32 %v281, %v305
      %v321 = vadd.f32 %v282, %v305
      %v322 = vadd.f32 %v283, %v305
      %v323 = vadd.f32 %v284, %v305
      %v324 = vadd.f32 %v285, %v305
      %v325 = vadd.f32 %v286, %v305
      %v326 = vadd.f32 %v287, %v305
      %v327 = vadd.f32 %v288, %v305
      %v328 = vadd.f32 %v289, %v305
      %v329 = vadd.f32 %v290, %v305
      %v330 = vadd.f32 %v291, %v305
      %v331 = vadd.f32 %v292, %v305
      %v332 = vadd.f32 %v293, %v305
      %v333 = vadd.f32 %v294, %v305
      %v334 = vadd.f32 %v295, %v305
      %v335 = vadd.f32 %v296, %v305
      %v336 = vadd.f32 %v297, %v305
      %v337 = vadd.f32 %v298, %v305
      %v338 = vadd.f32 %v299, %v305
      %v339 = vmax.f32 %v307, 0.0
      %v340 = vmax.f32 %v308, 0.0
      %v341 = vmax.f32 %v309, 0.0
      %v342 = vmax.f32 %v310, 0.0
      %v343 = vmax.f32 %v311, 0.0
      %v344 = vmax.f32 %v312, 0.0
      %v345 = vmax.f32 %v313, 0.0
      %v346 = vmax.f32 %v314, 0.0
      %v347 = vmax.f32 %v315, 0.0
      %v348 = vmax.f32 %v316, 0.0
      %v349 = vmax.f32 %v317, 0.0
      %v350 = vmax.f32 %v318, 0.0
      %v351 = vmax.f32 %v319, 0.0
      %v352 = vmax.f32 %v320, 0.0
      %v353 = vmax.f32 %v321, 0.0
      %v354 = vmax.f32 %v322, 0.0
      %v355 = vmax.f32 %v323, 0.0
      %v356 = vmax.f32 %v324, 0.0
      %v357 = vmax.f32 %v325, 0.0
      %v358 = vmax.f32 %v326, 0.0
      %v359 = vmax.f32 %v327, 0.0
      %v360 = vmax.f32 %v328, 0.0
      %v361 = vmax.f32 %v329, 0.0
      %v362 = vmax.f32 %v330, 0.0
      %v363 = vmax.f32 %v331, 0.0
      %v364 = vmax.f32 %v332, 0.0
      %v365 = vmax.f32 %v333, 0.0
      %v366 = vmax.f32 %v334, 0.0
      %v367 = vmax.f32 %v335, 0.0
      %v368 = vmax.f32 %v336, 0.0
      %v369 = vmax.f32 %v337, 0.0
      %v370 = vmax.f32 %v338, 0.0
      %v371 = vpack.c.bf16 %v340, %v339
      %v372 = vpack.c.bf16 %v342, %v341
      %v373 = vpack.c.bf16 %v344, %v343
      %v374 = vpack.c.bf16 %v346, %v345
      %v375 = vpack.c.bf16 %v348, %v347
      %v376 = vpack.c.bf16 %v350, %v349
      %v377 = vpack.c.bf16 %v352, %v351
      %v378 = vpack.c.bf16 %v354, %v353
      %v379 = vpack.c.bf16 %v356, %v355
      %v380 = vpack.c.bf16 %v358, %v357
      %v381 = vpack.c.bf16 %v360, %v359
      %v382 = vpack.c.bf16 %v362, %v361
      %v383 = vpack.c.bf16 %v364, %v363
      %v384 = vpack.c.bf16 %v366, %v365
      %v385 = vpack.c.bf16 %v368, %v367
      %v386 = vpack.c.bf16 %v370, %v369
      %v387 = vld [vmem:[%s3] sm:$0xf]
      %v388 = vld [vmem:[%s3 + $0x4] sm:$0xf]
      %v389 = vld [vmem:[%s3 + $0x8] sm:$0xf]
      %v390 = vld [vmem:[%s3 + $0xc] sm:$0x3]
      %v391 = vld [vmem:[%s4] sm:$0x1]
      %v393 = vlaneseq
      %v394 = vshrl.u32 %v393, 7
      %v395 = vsub.s32 0, %v394
      %v396 = vrot.slane %v391, %v395
      %v402 = vunpack.c.l.b16 %v387
      %v403 = vunpack.c.l.b16 %v388
      %v404 = vunpack.c.l.b16 %v389
      %v405 = vunpack.c.l.b16 %v390
      %v406 = vpack.c.b16 %v403, %v402
      %v407 = vpack.c.b16 %v405, %v404
      %vm409 = vcmask 220160
      %v411 = vsel %vm409, %v371, 0
      %v414 = vsel %vm409, %v372, 0
      %v417 = vsel %vm409, %v373, 0
      %v420 = vsel %vm409, %v374, 0
      %v423 = vsel %vm409, %v375, 0
      %v426 = vsel %vm409, %v376, 0
      %v429 = vsel %vm409, %v377, 0
      %v432 = vsel %vm409, %v378, 0
      %v435 = vsel %vm409, %v379, 0
      %v438 = vsel %vm409, %v380, 0
      %v441 = vsel %vm409, %v381, 0
      %v444 = vsel %vm409, %v382, 0
      %v447 = vsel %vm409, %v383, 0
      %v450 = vsel %vm409, %v384, 0
      %v453 = vsel %vm409, %v385, 0
      %v456 = vsel %vm409, %v386, 0
      %vm458 = vcmask 1044480
      %vm459 = vcmask 1045504
      %v460 = vsel %vm458, 4294967295, 65535
      %v461 = vsel %vm459, %v460, 0
      %v463 = vand.u32 %v407, %v461
      %465 = vmatprep.subr.bf16.mxu0 0
      %466 = vmatpush1.bf16.msra.mxu0 0
      %467 = vmatprep.subr.bf16.mxu0 0
      %468 = vmatpush1.bf16.msra.mxu0 0
      %469 = vmatprep.subr.bf16.mxu0 0
      %470 = vmatpush1.bf16.msra.mxu0 0
      %471 = vmatprep.subr.bf16.mxu0 0
      %472 = vmatpush1.bf16.msra.mxu0 0
      %473 = vmatprep.subr.bf16.mxu0 0
      %474 = vmatpush1.bf16.msra.mxu0 0
      %475 = vmatprep.subr.bf16.mxu0 0
      %476 = vmatpush1.bf16.msra.mxu0 0
      %477 = vmatprep.subr.bf16.mxu0 0
      %478 = vmatpush1.bf16.msra.mxu0 %v463
      %479 = vmatprep.subr.bf16.mxu0 0
      %480 = vmatpush1.bf16.msra.mxu0 %v406
      %481 = vmatprep.subr.bf16.mxu0 0
      %482 = vmatpush2.bf16.msra.mxu0 0
      %483 = vmatprep.subr.bf16.mxu0 0
      %484 = vmatpush2.bf16.msra.mxu0 0
      %485 = vmatprep.subr.bf16.mxu0 0
      %486 = vmatpush2.bf16.msra.mxu0 0
      %487 = vmatprep.subr.bf16.mxu0 0
      %488 = vmatpush2.bf16.msra.mxu0 0
      %489 = vmatprep.subr.bf16.mxu0 0
      %490 = vmatpush2.bf16.msra.mxu0 0
      %491 = vmatprep.subr.bf16.mxu0 0
      %492 = vmatpush2.bf16.msra.mxu0 0
      %493 = vmatprep.subr.bf16.mxu0 0
      %494 = vmatpush2.bf16.msra.mxu0 0
      %495 = vmatprep.subr.bf16.mxu0 0
      %496 = vmatpush2.bf16.msra.mxu0 0
      %497 = vmatprep.mubr.bf16.mxu0 0
      %498 = vmatmul.mubr.bf16.gmra.mxu0 %v411
      %v499 = vpop.f32.mrf.mxu0
      %v500 = vadd.f32 %v396, %v499
      %v501 = vpop.f32.mrf.mxu0
      %v502 = vpop.f32.mrf.mxu0
      %v503 = vadd.f32 %v396, %v502
      %v504 = vpop.f32.mrf.mxu0
      %505 = vmatprep.mubr.bf16.mxu0 0
      %506 = vmatmul.mubr.bf16.gmra.mxu0 %v414
      %v507 = vpop.f32.mrf.mxu0
      %v508 = vadd.f32 %v396, %v507
      %v509 = vpop.f32.mrf.mxu0
      %v510 = vpop.f32.mrf.mxu0
      %v511 = vadd.f32 %v396, %v510
      %v512 = vpop.f32.mrf.mxu0
      %513 = vmatprep.mubr.bf16.mxu0 0
      %514 = vmatmul.mubr.bf16.gmra.mxu0 %v417
      %v515 = vpop.f32.mrf.mxu0
      %v516 = vadd.f32 %v396, %v515
      %v517 = vpop.f32.mrf.mxu0
      %v518 = vpop.f32.mrf.mxu0
      %v519 = vadd.f32 %v396, %v518
      %v520 = vpop.f32.mrf.mxu0
      %521 = vmatprep.mubr.bf16.mxu0 0
      %522 = vmatmul.mubr.bf16.gmra.mxu0 %v420
      %v523 = vpop.f32.mrf.mxu0
      %v524 = vadd.f32 %v396, %v523
      %v525 = vpop.f32.mrf.mxu0
      %v526 = vpop.f32.mrf.mxu0
      %v527 = vadd.f32 %v396, %v526
      %v528 = vpop.f32.mrf.mxu0
      %529 = vmatprep.mubr.bf16.mxu0 0
      %530 = vmatmul.mubr.bf16.gmra.mxu0 %v423
      %v531 = vpop.f32.mrf.mxu0
      %v532 = vadd.f32 %v396, %v531
      %v533 = vpop.f32.mrf.mxu0
      %v534 = vpop.f32.mrf.mxu0
      %v535 = vadd.f32 %v396, %v534
      %v536 = vpop.f32.mrf.mxu0
      %537 = vmatprep.mubr.bf16.mxu0 0
      %538 = vmatmul.mubr.bf16.gmra.mxu0 %v426
      %v539 = vpop.f32.mrf.mxu0
      %v540 = vadd.f32 %v396, %v539
      %v541 = vpop.f32.mrf.mxu0
      %v542 = vpop.f32.mrf.mxu0
      %v543 = vadd.f32 %v396, %v542
      %v544 = vpop.f32.mrf.mxu0
      %545 = vmatprep.mubr.bf16.mxu0 0
      %546 = vmatmul.mubr.bf16.gmra.mxu0 %v429
      %v547 = vpop.f32.mrf.mxu0
      %v548 = vadd.f32 %v396, %v547
      %v549 = vpop.f32.mrf.mxu0
      %v550 = vpop.f32.mrf.mxu0
      %v551 = vadd.f32 %v396, %v550
      %v552 = vpop.f32.mrf.mxu0
      %553 = vmatprep.mubr.bf16.mxu0 0
      %554 = vmatmul.mubr.bf16.gmra.mxu0 %v432
      %v555 = vpop.f32.mrf.mxu0
      %v556 = vadd.f32 %v396, %v555
      %v557 = vpop.f32.mrf.mxu0
      %v558 = vpop.f32.mrf.mxu0
      %v559 = vadd.f32 %v396, %v558
      %v560 = vpop.f32.mrf.mxu0
      %561 = vmatprep.mubr.bf16.mxu0 0
      %562 = vmatmul.mubr.bf16.gmra.mxu0 %v435
      %v563 = vpop.f32.mrf.mxu0
      %v564 = vadd.f32 %v396, %v563
      %v565 = vpop.f32.mrf.mxu0
      %v566 = vpop.f32.mrf.mxu0
      %v567 = vadd.f32 %v396, %v566
      %v568 = vpop.f32.mrf.mxu0
      %569 = vmatprep.mubr.bf16.mxu0 0
      %570 = vmatmul.mubr.bf16.gmra.mxu0 %v438
      %v571 = vpop.f32.mrf.mxu0
      %v572 = vadd.f32 %v396, %v571
      %v573 = vpop.f32.mrf.mxu0
      %v574 = vpop.f32.mrf.mxu0
      %v575 = vadd.f32 %v396, %v574
      %v576 = vpop.f32.mrf.mxu0
      %577 = vmatprep.mubr.bf16.mxu0 0
      %578 = vmatmul.mubr.bf16.gmra.mxu0 %v441
      %v579 = vpop.f32.mrf.mxu0
      %v580 = vadd.f32 %v396, %v579
      %v581 = vpop.f32.mrf.mxu0
      %v582 = vpop.f32.mrf.mxu0
      %v583 = vadd.f32 %v396, %v582
      %v584 = vpop.f32.mrf.mxu0
      %585 = vmatprep.mubr.bf16.mxu0 0
      %586 = vmatmul.mubr.bf16.gmra.mxu0 %v444
      %v587 = vpop.f32.mrf.mxu0
      %v588 = vadd.f32 %v396, %v587
      %v589 = vpop.f32.mrf.mxu0
      %v590 = vpop.f32.mrf.mxu0
      %v591 = vadd.f32 %v396, %v590
      %v592 = vpop.f32.mrf.mxu0
      %593 = vmatprep.mubr.bf16.mxu0 0
      %594 = vmatmul.mubr.bf16.gmra.mxu0 %v447
      %v595 = vpop.f32.mrf.mxu0
      %v596 = vadd.f32 %v396, %v595
      %v597 = vpop.f32.mrf.mxu0
      %v598 = vpop.f32.mrf.mxu0
      %v599 = vadd.f32 %v396, %v598
      %v600 = vpop.f32.mrf.mxu0
      %601 = vmatprep.mubr.bf16.mxu0 0
      %602 = vmatmul.mubr.bf16.gmra.mxu0 %v450
      %v603 = vpop.f32.mrf.mxu0
      %v604 = vadd.f32 %v396, %v603
      %v605 = vpop.f32.mrf.mxu0
      %v606 = vpop.f32.mrf.mxu0
      %v607 = vadd.f32 %v396, %v606
      %v608 = vpop.f32.mrf.mxu0
      %609 = vmatprep.mubr.bf16.mxu0 0
      %610 = vmatmul.mubr.bf16.gmra.mxu0 %v453
      %v611 = vpop.f32.mrf.mxu0
      %v612 = vadd.f32 %v396, %v611
      %v613 = vpop.f32.mrf.mxu0
      %v614 = vpop.f32.mrf.mxu0
      %v615 = vadd.f32 %v396, %v614
      %v616 = vpop.f32.mrf.mxu0
      %617 = vmatprep.mubr.bf16.mxu0 0
      %618 = vmatmul.mubr.bf16.gmra.mxu0 %v456
      %v619 = vpop.f32.mrf.mxu0
      %v620 = vadd.f32 %v396, %v619
      %v621 = vpop.f32.mrf.mxu0
      %v622 = vpop.f32.mrf.mxu0
      %v623 = vadd.f32 %v396, %v622
      %v624 = vpop.f32.mrf.mxu0
      %625 = vdwg.mxu0
      %vm626 = vcmask 130048
      %627 = vst.msk [vmem:[%s226] sm:$0xff] %vm626, %v500
      %628 = vst.msk [vmem:[%s226 + $0x8] sm:$0xff] %vm626, %v503
      %629 = vst.msk [vmem:[%s226 + $0x10] sm:$0xff] %vm626, %v508
      %630 = vst.msk [vmem:[%s226 + $0x18] sm:$0xff] %vm626, %v511
      %631 = vst.msk [vmem:[%s226 + $0x20] sm:$0xff] %vm626, %v516
      %632 = vst.msk [vmem:[%s226 + $0x28] sm:$0xff] %vm626, %v519
      %633 = vst.msk [vmem:[%s226 + $0x30] sm:$0xff] %vm626, %v524
      %634 = vst.msk [vmem:[%s226 + $0x38] sm:$0xff] %vm626, %v527
      %635 = vst.msk [vmem:[%s226 + $0x40] sm:$0xff] %vm626, %v532
      %636 = vst.msk [vmem:[%s226 + $0x48] sm:$0xff] %vm626, %v535
      %637 = vst.msk [vmem:[%s226 + $0x50] sm:$0xff] %vm626, %v540
      %638 = vst.msk [vmem:[%s226 + $0x58] sm:$0xff] %vm626, %v543
      %639 = vst.msk [vmem:[%s226 + $0x60] sm:$0xff] %vm626, %v548
      %640 = vst.msk [vmem:[%s226 + $0x68] sm:$0xff] %vm626, %v551
      %641 = vst.msk [vmem:[%s226 + $0x70] sm:$0xff] %vm626, %v556
      %642 = vst.msk [vmem:[%s226 + $0x78] sm:$0xff] %vm626, %v559
      %643 = vst.msk [vmem:[%s226 + $0x80] sm:$0xff] %vm626, %v564
      %644 = vst.msk [vmem:[%s226 + $0x88] sm:$0xff] %vm626, %v567
      %645 = vst.msk [vmem:[%s226 + $0x90] sm:$0xff] %vm626, %v572
      %646 = vst.msk [vmem:[%s226 + $0x98] sm:$0xff] %vm626, %v575
      %647 = vst.msk [vmem:[%s226 + $0xa0] sm:$0xff] %vm626, %v580
      %648 = vst.msk [vmem:[%s226 + $0xa8] sm:$0xff] %vm626, %v583
      %649 = vst.msk [vmem:[%s226 + $0xb0] sm:$0xff] %vm626, %v588
      %650 = vst.msk [vmem:[%s226 + $0xb8] sm:$0xff] %vm626, %v591
      %651 = vst.msk [vmem:[%s226 + $0xc0] sm:$0xff] %vm626, %v596
      %652 = vst.msk [vmem:[%s226 + $0xc8] sm:$0xff] %vm626, %v599
      %653 = vst.msk [vmem:[%s226 + $0xd0] sm:$0xff] %vm626, %v604
      %654 = vst.msk [vmem:[%s226 + $0xd8] sm:$0xff] %vm626, %v607
      %655 = vst.msk [vmem:[%s226 + $0xe0] sm:$0xff] %vm626, %v612
      %656 = vst.msk [vmem:[%s226 + $0xe8] sm:$0xff] %vm626, %v615
      %657 = vst.msk [vmem:[%s226 + $0xf0] sm:$0xff] %vm626, %v620
      %658 = vst.msk [vmem:[%s226 + $0xf8] sm:$0xff] %vm626, %v623
      %s659 = smul.u32 32, %s16
      %p660 = scmp.lt.s32.totalorder %s659, 63
      %s661 = scalar_select %p660, %s659, 63
      %s662 = smul.addr %s661, 8
      %s663 = scalar_lea.vmem %s5, %s662
      // Predicated region
      $region41: #{fcn_forward.7} parent=39 // pred_check
        %p664 = pneg %p144
      $region42: #{fcn_forward.7} parent=39 // pred_check_branch
        %666 = sbr.rel (%p664) target = $region44
      $region43: #{fcn_forward.7} parent=39 // pred_region
        %s667 = smul.u32 32, %s16
      $region44: #{fcn_forward.7} parent=39 // pred_fallthru
        _
    $region40: #{fcn_forward.7} parent=5 // pred_fallthru
      _
    %p668 = scmp.le.s32.totalorder 2, %s11
    // Predicated region
    $region45: #{fcn_forward.7} parent=5 // pred_check
      %p669 = pneg %p668
    $region46: #{fcn_forward.7} parent=5 // pred_check_branch
      %671 = sbr.rel (%p669) target = $region48
    $region47: #{fcn_forward.7} parent=5 // pred_region
      %s672 = ssub.s32 %s11, 2
      // Predicated region
      $region49: #{fcn_forward.7} parent=47 // pred_check
        %p673 = pneg %p150
      $region50: #{fcn_forward.7} parent=47 // pred_check_branch
        %675 = sbr.rel (%p673) target = $region52
      $region51: #{fcn_forward.7} parent=47 // pred_region
        %s676 = smul.u32 32, %s17
        %p677 = scmp.lt.s32.totalorder %s676, 63
        %s678 = scalar_select %p677, %s676, 63
        %s679 = smul.addr %s678, 8
        %s680 = scalar_lea.vmem %s5, %s679
      $region52: #{fcn_forward.7} parent=47 // pred_fallthru
        _
    $region48: #{fcn_forward.7} parent=5 // pred_fallthru
      _
  $region6: #{fcn_forward.7} parent=0 // loop_footer
    %s15 = sadd.s32 1, %s11
  $region7: #{fcn_forward.7} parent=0 // loop_footer_branch
    %10 = sbr.rel target = $region3
  $region8: #{fcn_forward.7} parent=0 // loop_exit
    _

// kernel: fcn_forward.8
$region0: #{fcn_forward.8}
  #allocation0 [shape = 'u32[]', space=smem, size = 0x4, offset = 0x4, fixed_abs, tag = 'smem constant byte address 0x4 - core index']
  #allocation1 [shape = 'u32[144,128]{1,0:T(1,128)}', space=vmem, size = 0x12000, scoped, tag = 'internal scratch']
  %s0 = inlined_call_operand.vmem [shape: f32[4,128,171], index: 0, kind: input, shape index: {}]
  %s1 = inlined_call_operand.vmem [shape: f32[1,171], index: 1, kind: input, shape index: {}]
  %s2 = inlined_call_operand.vmem [shape: f32[1,171], index: 2, kind: input, shape index: {}]
  %s3 = inlined_call_operand.vmem [shape: bf16[171,16], index: 3, kind: input, shape index: {}]
  %s4 = inlined_call_operand.vmem [shape: f32[1,16], index: 4, kind: input, shape index: {}]
  %s5 = inlined_call_operand.vmem [shape: f32[4,128,19], index: 5, kind: input, shape index: {}]
  %s6 = inlined_call_operand.vmem [shape: bf16[19,17], index: 6, kind: input, shape index: {}]
  %s7 = inlined_call_operand.vmem [shape: bf16[16,17], index: 7, kind: input, shape index: {}]
  %s8 = inlined_call_operand.vmem [shape: f32[1,17], index: 8, kind: input, shape index: {}]
  %s9 = inlined_call_operand.vmem [shape: f32[128,17], index: 9, kind: output, shape index: {}]
  %s10 = sld [smem:[#allocation0]]
  $region46: #{fcn_forward.8} parent=0
    _
  %s12 = ssub.s32 1, %s10
  %s13 = scalar_select 0, %s12, %s10
  // Predicated region
  $region2: #{fcn_forward.8} parent=0 // pred_check
    _
  $region3: #{fcn_forward.8} parent=0 // pred_check_branch
    %15 = sbr.rel (0) target = $region5
  $region4: #{fcn_forward.8} parent=0 // pred_region
    _
  $region5: #{fcn_forward.8} parent=0 // pred_fallthru
    _
  // Predicated region
  $region6: #{fcn_forward.8} parent=0 // pred_check
    _
  $region7: #{fcn_forward.8} parent=0 // pred_check_branch
    %17 = sbr.rel (0) target = $region9
  $region8: #{fcn_forward.8} parent=0 // pred_region
    _
  $region9: #{fcn_forward.8} parent=0 // pred_fallthru
    _
  // Predicated region
  $region10: #{fcn_forward.8} parent=0 // pred_check
    _
  $region11: #{fcn_forward.8} parent=0 // pred_check_branch
    %19 = sbr.rel (0) target = $region13
  $region12: #{fcn_forward.8} parent=0 // pred_region
    _
  $region13: #{fcn_forward.8} parent=0 // pred_fallthru
    _
  // Predicated region
  $region14: #{fcn_forward.8} parent=0 // pred_check
    _
  $region15: #{fcn_forward.8} parent=0 // pred_check_branch
    %21 = sbr.rel (0) target = $region17
  $region16: #{fcn_forward.8} parent=0 // pred_region
    _
  $region17: #{fcn_forward.8} parent=0 // pred_fallthru
    _
  // Predicated region
  $region18: #{fcn_forward.8} parent=0 // pred_check
    _
  $region19: #{fcn_forward.8} parent=0 // pred_check_branch
    %23 = sbr.rel (0) target = $region21
  $region20: #{fcn_forward.8} parent=0 // pred_region
    _
  $region21: #{fcn_forward.8} parent=0 // pred_fallthru
    _
  // Predicated region
  $region22: #{fcn_forward.8} parent=0 // pred_check
    _
  $region23: #{fcn_forward.8} parent=0 // pred_check_branch
    %25 = sbr.rel (0) target = $region25
  $region24: #{fcn_forward.8} parent=0 // pred_region
    _
  $region25: #{fcn_forward.8} parent=0 // pred_fallthru
    _
  // Predicated region
  $region26: #{fcn_forward.8} parent=0 // pred_check
    _
  $region27: #{fcn_forward.8} parent=0 // pred_check_branch
    %27 = sbr.rel (0) target = $region29
  $region28: #{fcn_forward.8} parent=0 // pred_region
    _
  $region29: #{fcn_forward.8} parent=0 // pred_fallthru
    _
  // Predicated region
  $region30: #{fcn_forward.8} parent=0 // pred_check
    _
  $region31: #{fcn_forward.8} parent=0 // pred_check_branch
    %29 = sbr.rel (0) target = $region33
  $region32: #{fcn_forward.8} parent=0 // pred_region
    _
  $region33: #{fcn_forward.8} parent=0 // pred_fallthru
    _
  // Predicated region
  $region34: #{fcn_forward.8} parent=0 // pred_check
    _
  $region35: #{fcn_forward.8} parent=0 // pred_check_branch
    %31 = sbr.rel (0) target = $region37
  $region36: #{fcn_forward.8} parent=0 // pred_region
    _
  $region37: #{fcn_forward.8} parent=0 // pred_fallthru
    _
  %v33 = vld [vmem:[%s0] sm:$0xff]
  %v34 = vld [vmem:[%s0 + $0x8] sm:$0xff]
  %v35 = vld [vmem:[%s0 + $0x10] sm:$0xff]
  %v36 = vld [vmem:[%s0 + $0x18] sm:$0xff]
  %v37 = vld [vmem:[%s0 + $0x20] sm:$0xff]
  %v38 = vld [vmem:[%s0 + $0x28] sm:$0xff]
  %v39 = vld [vmem:[%s0 + $0x30] sm:$0xff]
  %v40 = vld [vmem:[%s0 + $0x38] sm:$0xff]
  %v41 = vld [vmem:[%s0 + $0x40] sm:$0xff]
  %v42 = vld [vmem:[%s0 + $0x48] sm:$0xff]
  %v43 = vld [vmem:[%s0 + $0x50] sm:$0xff]
  %v44 = vld [vmem:[%s0 + $0x58] sm:$0xff]
  %v45 = vld [vmem:[%s0 + $0x60] sm:$0xff]
  %v46 = vld [vmem:[%s0 + $0x68] sm:$0xff]
  %v47 = vld [vmem:[%s0 + $0x70] sm:$0xff]
  %v48 = vld [vmem:[%s0 + $0x78] sm:$0xff]
  %v49 = vld [vmem:[%s0 + $0x80] sm:$0xff]
  %v50 = vld [vmem:[%s0 + $0x88] sm:$0xff]
  %v51 = vld [vmem:[%s0 + $0x90] sm:$0xff]
  %v52 = vld [vmem:[%s0 + $0x98] sm:$0xff]
  %v53 = vld [vmem:[%s0 + $0xa0] sm:$0xff]
  %v54 = vld [vmem:[%s0 + $0xa8] sm:$0xff]
  %v55 = vld [vmem:[%s0 + $0xb0] sm:$0xff]
  %v56 = vld [vmem:[%s0 + $0xb8] sm:$0xff]
  %v57 = vld [vmem:[%s0 + $0xc0] sm:$0xff]
  %v58 = vld [vmem:[%s0 + $0xc8] sm:$0xff]
  %v59 = vld [vmem:[%s0 + $0xd0] sm:$0xff]
  %v60 = vld [vmem:[%s0 + $0xd8] sm:$0xff]
  %v61 = vld [vmem:[%s0 + $0xe0] sm:$0xff]
  %v62 = vld [vmem:[%s0 + $0xe8] sm:$0xff]
  %v63 = vld [vmem:[%s0 + $0xf0] sm:$0xff]
  %v64 = vld [vmem:[%s0 + $0xf8] sm:$0xff]
  %v65 = vld [vmem:[%s1] sm:$0x3]
  %v67 = vlaneseq
  %v68 = vshrl.u32 %v67, 7
  %v69 = vsub.s32 0, %v68
  %v70 = vrot.slane %v65, %v69
  %v71 = vlaneseq
  %v72 = vshrl.u32 %v71, 7
  %v73 = vsub.s32 1, %v72
  %v74 = vrot.slane %v65, %v73
  %v77 = vmul.f32 %v33, %v70
  %v78 = vmul.f32 %v34, %v74
  %v79 = vmul.f32 %v35, %v70
  %v80 = vmul.f32 %v36, %v74
  %v81 = vmul.f32 %v37, %v70
  %v82 = vmul.f32 %v38, %v74
  %v83 = vmul.f32 %v39, %v70
  %v84 = vmul.f32 %v40, %v74
  %v85 = vmul.f32 %v41, %v70
  %v86 = vmul.f32 %v42, %v74
  %v87 = vmul.f32 %v43, %v70
  %v88 = vmul.f32 %v44, %v74
  %v89 = vmul.f32 %v45, %v70
  %v90 = vmul.f32 %v46, %v74
  %v91 = vmul.f32 %v47, %v70
  %v92 = vmul.f32 %v48, %v74
  %v93 = vmul.f32 %v49, %v70
  %v94 = vmul.f32 %v50, %v74
  %v95 = vmul.f32 %v51, %v70
  %v96 = vmul.f32 %v52, %v74
  %v97 = vmul.f32 %v53, %v70
  %v98 = vmul.f32 %v54, %v74
  %v99 = vmul.f32 %v55, %v70
  %v100 = vmul.f32 %v56, %v74
  %v101 = vmul.f32 %v57, %v70
  %v102 = vmul.f32 %v58, %v74
  %v103 = vmul.f32 %v59, %v70
  %v104 = vmul.f32 %v60, %v74
  %v105 = vmul.f32 %v61, %v70
  %v106 = vmul.f32 %v62, %v74
  %v107 = vmul.f32 %v63, %v70
  %v108 = vmul.f32 %v64, %v74
  %v109 = vld [vmem:[%s2] sm:$0x3]
  %v111 = vlaneseq
  %v112 = vshrl.u32 %v111, 7
  %v113 = vsub.s32 0, %v112
  %v114 = vrot.slane %v109, %v113
  %v115 = vlaneseq
  %v116 = vshrl.u32 %v115, 7
  %v117 = vsub.s32 1, %v116
  %v118 = vrot.slane %v109, %v117
  %v121 = vadd.f32 %v77, %v114
  %v122 = vadd.f32 %v78, %v118
  %v123 = vadd.f32 %v79, %v114
  %v124 = vadd.f32 %v80, %v118
  %v125 = vadd.f32 %v81, %v114
  %v126 = vadd.f32 %v82, %v118
  %v127 = vadd.f32 %v83, %v114
  %v128 = vadd.f32 %v84, %v118
  %v129 = vadd.f32 %v85, %v114
  %v130 = vadd.f32 %v86, %v118
  %v131 = vadd.f32 %v87, %v114
  %v132 = vadd.f32 %v88, %v118
  %v133 = vadd.f32 %v89, %v114
  %v134 = vadd.f32 %v90, %v118
  %v135 = vadd.f32 %v91, %v114
  %v136 = vadd.f32 %v92, %v118
  %v137 = vadd.f32 %v93, %v114
  %v138 = vadd.f32 %v94, %v118
  %v139 = vadd.f32 %v95, %v114
  %v140 = vadd.f32 %v96, %v118
  %v141 = vadd.f32 %v97, %v114
  %v142 = vadd.f32 %v98, %v118
  %v143 = vadd.f32 %v99, %v114
  %v144 = vadd.f32 %v100, %v118
  %v145 = vadd.f32 %v101, %v114
  %v146 = vadd.f32 %v102, %v118
  %v147 = vadd.f32 %v103, %v114
  %v148 = vadd.f32 %v104, %v118
  %v149 = vadd.f32 %v105, %v114
  %v150 = vadd.f32 %v106, %v118
  %v151 = vadd.f32 %v107, %v114
  %v152 = vadd.f32 %v108, %v118
  %v153 = vmax.f32 %v121, 0.0
  %v154 = vmax.f32 %v122, 0.0
  %v155 = vmax.f32 %v123, 0.0
  %v156 = vmax.f32 %v124, 0.0
  %v157 = vmax.f32 %v125, 0.0
  %v158 = vmax.f32 %v126, 0.0
  %v159 = vmax.f32 %v127, 0.0
  %v160 = vmax.f32 %v128, 0.0
  %v161 = vmax.f32 %v129, 0.0
  %v162 = vmax.f32 %v130, 0.0
  %v163 = vmax.f32 %v131, 0.0
  %v164 = vmax.f32 %v132, 0.0
  %v165 = vmax.f32 %v133, 0.0
  %v166 = vmax.f32 %v134, 0.0
  %v167 = vmax.f32 %v135, 0.0
  %v168 = vmax.f32 %v136, 0.0
  %v169 = vmax.f32 %v137, 0.0
  %v170 = vmax.f32 %v138, 0.0
  %v171 = vmax.f32 %v139, 0.0
  %v172 = vmax.f32 %v140, 0.0
  %v173 = vmax.f32 %v141, 0.0
  %v174 = vmax.f32 %v142, 0.0
  %v175 = vmax.f32 %v143, 0.0
  %v176 = vmax.f32 %v144, 0.0
  %v177 = vmax.f32 %v145, 0.0
  %v178 = vmax.f32 %v146, 0.0
  %v179 = vmax.f32 %v147, 0.0
  %v180 = vmax.f32 %v148, 0.0
  %v181 = vmax.f32 %v149, 0.0
  %v182 = vmax.f32 %v150, 0.0
  %v183 = vmax.f32 %v151, 0.0
  %v184 = vmax.f32 %v152, 0.0
  %v185 = vpack.c.bf16 %v155, %v153
  %v186 = vpack.c.bf16 %v156, %v154
  %v187 = vpack.c.bf16 %v159, %v157
  %v188 = vpack.c.bf16 %v160, %v158
  %v189 = vpack.c.bf16 %v163, %v161
  %v190 = vpack.c.bf16 %v164, %v162
  %v191 = vpack.c.bf16 %v167, %v165
  %v192 = vpack.c.bf16 %v168, %v166
  %v193 = vpack.c.bf16 %v171, %v169
  %v194 = vpack.c.bf16 %v172, %v170
  %v195 = vpack.c.bf16 %v175, %v173
  %v196 = vpack.c.bf16 %v176, %v174
  %v197 = vpack.c.bf16 %v179, %v177
  %v198 = vpack.c.bf16 %v180, %v178
  %v199 = vpack.c.bf16 %v183, %v181
  %v200 = vpack.c.bf16 %v184, %v182
  %v201 = vld [vmem:[%s3] sm:$0xf]
  %v202 = vld [vmem:[%s3 + $0x4] sm:$0xf]
  %v203 = vld [vmem:[%s3 + $0x8] sm:$0xf]
  %v204 = vld [vmem:[%s3 + $0xc] sm:$0xf]
  %v205 = vld [vmem:[%s3 + $0x10] sm:$0xf]
  %v206 = vld [vmem:[%s3 + $0x14] sm:$0xf]
  %v207 = vld [vmem:[%s3 + $0x18] sm:$0xf]
  %v208 = vld [vmem:[%s3 + $0x1c] sm:$0xf]
  %v209 = vld [vmem:[%s3 + $0x20] sm:$0xf]
  %v210 = vld [vmem:[%s3 + $0x24] sm:$0xf]
  %v211 = vld [vmem:[%s3 + $0x28] sm:$0xf]
  %v212 = vld [vmem:[%s3 + $0x2c] sm:$0xf]
  %v213 = vld [vmem:[%s3 + $0x30] sm:$0xf]
  %v214 = vld [vmem:[%s3 + $0x34] sm:$0xf]
  %v215 = vld [vmem:[%s3 + $0x38] sm:$0xf]
  %v216 = vld [vmem:[%s3 + $0x3c] sm:$0xf]
  %v217 = vld [vmem:[%s3 + $0x40] sm:$0xf]
  %v218 = vld [vmem:[%s3 + $0x44] sm:$0xf]
  %v219 = vld [vmem:[%s3 + $0x48] sm:$0xf]
  %v220 = vld [vmem:[%s3 + $0x4c] sm:$0xf]
  %v221 = vld [vmem:[%s3 + $0x50] sm:$0xf]
  %v222 = vld [vmem:[%s3 + $0x54] sm:$0x3]
  %s223 = scalar_lea.vmem %s0, 256
  %v224 = vld [vmem:[%s223] sm:$0xff]
  %v225 = vld [vmem:[%s223 + $0x8] sm:$0xff]
  %v226 = vld [vmem:[%s223 + $0x10] sm:$0xff]
  %v227 = vld [vmem:[%s223 + $0x18] sm:$0xff]
  %v228 = vld [vmem:[%s223 + $0x20] sm:$0xff]
  %v229 = vld [vmem:[%s223 + $0x28] sm:$0xff]
  %v230 = vld [vmem:[%s223 + $0x30] sm:$0xff]
  %v231 = vld [vmem:[%s223 + $0x38] sm:$0xff]
  %v232 = vld [vmem:[%s223 + $0x40] sm:$0xff]
  %v233 = vld [vmem:[%s223 + $0x48] sm:$0xff]
  %v234 = vld [vmem:[%s223 + $0x50] sm:$0xff]
  %v235 = vld [vmem:[%s223 + $0x58] sm:$0xff]
  %v236 = vld [vmem:[%s223 + $0x60] sm:$0xff]
  %v237 = vld [vmem:[%s223 + $0x68] sm:$0xff]
  %v238 = vld [vmem:[%s223 + $0x70] sm:$0xff]
  %v239 = vld [vmem:[%s223 + $0x78] sm:$0xff]
  %v240 = vld [vmem:[%s223 + $0x80] sm:$0xff]
  %v241 = vld [vmem:[%s223 + $0x88] sm:$0xff]
  %v242 = vld [vmem:[%s223 + $0x90] sm:$0xff]
  %v243 = vld [vmem:[%s223 + $0x98] sm:$0xff]
  %v244 = vld [vmem:[%s223 + $0xa0] sm:$0xff]
  %v245 = vld [vmem:[%s223 + $0xa8] sm:$0xff]
  %v246 = vld [vmem:[%s223 + $0xb0] sm:$0xff]
  %v247 = vld [vmem:[%s223 + $0xb8] sm:$0xff]
  %v248 = vld [vmem:[%s223 + $0xc0] sm:$0xff]
  %v249 = vld [vmem:[%s223 + $0xc8] sm:$0xff]
  %v250 = vld [vmem:[%s223 + $0xd0] sm:$0xff]
  %v251 = vld [vmem:[%s223 + $0xd8] sm:$0xff]
  %v252 = vld [vmem:[%s223 + $0xe0] sm:$0xff]
  %v253 = vld [vmem:[%s223 + $0xe8] sm:$0xff]
  %v254 = vld [vmem:[%s223 + $0xf0] sm:$0xff]
  %v255 = vld [vmem:[%s223 + $0xf8] sm:$0xff]
  %v256 = vmul.f32 %v224, %v70
  %v257 = vmul.f32 %v225, %v74
  %v258 = vmul.f32 %v226, %v70
  %v259 = vmul.f32 %v227, %v74
  %v260 = vmul.f32 %v228, %v70
  %v261 = vmul.f32 %v229, %v74
  %v262 = vmul.f32 %v230, %v70
  %v263 = vmul.f32 %v231, %v74
  %v264 = vmul.f32 %v232, %v70
  %v265 = vmul.f32 %v233, %v74
  %v266 = vmul.f32 %v234, %v70
  %v267 = vmul.f32 %v235, %v74
  %v268 = vmul.f32 %v236, %v70
  %v269 = vmul.f32 %v237, %v74
  %v270 = vmul.f32 %v238, %v70
  %v271 = vmul.f32 %v239, %v74
  %v272 = vmul.f32 %v240, %v70
  %v273 = vmul.f32 %v241, %v74
  %v274 = vmul.f32 %v242, %v70
  %v275 = vmul.f32 %v243, %v74
  %v276 = vmul.f32 %v244, %v70
  %v277 = vmul.f32 %v245, %v74
  %v278 = vmul.f32 %v246, %v70
  %v279 = vmul.f32 %v247, %v74
  %v280 = vmul.f32 %v248, %v70
  %v281 = vmul.f32 %v249, %v74
  %v282 = vmul.f32 %v250, %v70
  %v283 = vmul.f32 %v251, %v74
  %v284 = vmul.f32 %v252, %v70
  %v285 = vmul.f32 %v253, %v74
  %v286 = vmul.f32 %v254, %v70
  %v287 = vmul.f32 %v255, %v74
  %v288 = vadd.f32 %v256, %v114
  %v289 = vadd.f32 %v257, %v118
  %v290 = vadd.f32 %v258, %v114
  %v291 = vadd.f32 %v259, %v118
  %v292 = vadd.f32 %v260, %v114
  %v293 = vadd.f32 %v261, %v118
  %v294 = vadd.f32 %v262, %v114
  %v295 = vadd.f32 %v263, %v118
  %v296 = vadd.f32 %v264, %v114
  %v297 = vadd.f32 %v265, %v118
  %v298 = vadd.f32 %v266, %v114
  %v299 = vadd.f32 %v267, %v118
  %v300 = vadd.f32 %v268, %v114
  %v301 = vadd.f32 %v269, %v118
  %v302 = vadd.f32 %v270, %v114
  %v303 = vadd.f32 %v271, %v118
  %v304 = vadd.f32 %v272, %v114
  %v305 = vadd.f32 %v273, %v118
  %v306 = vadd.f32 %v274, %v114
  %v307 = vadd.f32 %v275, %v118
  %v308 = vadd.f32 %v276, %v114
  %v309 = vadd.f32 %v277, %v118
  %v310 = vadd.f32 %v278, %v114
  %v311 = vadd.f32 %v279, %v118
  %v312 = vadd.f32 %v280, %v114
  %v313 = vadd.f32 %v281, %v118
  %v314 = vadd.f32 %v282, %v114
  %v315 = vadd.f32 %v283, %v118
  %v316 = vadd.f32 %v284, %v114
  %v317 = vadd.f32 %v285, %v118
  %v318 = vadd.f32 %v286, %v114
  %v319 = vadd.f32 %v287, %v118
  %v320 = vmax.f32 %v288, 0.0
  %v321 = vmax.f32 %v289, 0.0
  %v322 = vmax.f32 %v290, 0.0
  %v323 = vmax.f32 %v291, 0.0
  %v324 = vmax.f32 %v292, 0.0
  %v325 = vmax.f32 %v293, 0.0
  %v326 = vmax.f32 %v294, 0.0
  %v327 = vmax.f32 %v295, 0.0
  %v328 = vmax.f32 %v296, 0.0
  %v329 = vmax.f32 %v297, 0.0
  %v330 = vmax.f32 %v298, 0.0
  %v331 = vmax.f32 %v299, 0.0
  %v332 = vmax.f32 %v300, 0.0
  %v333 = vmax.f32 %v301, 0.0
  %v334 = vmax.f32 %v302, 0.0
  %v335 = vmax.f32 %v303, 0.0
  %v336 = vmax.f32 %v304, 0.0
  %v337 = vmax.f32 %v305, 0.0
  %v338 = vmax.f32 %v306, 0.0
  %v339 = vmax.f32 %v307, 0.0
  %v340 = vmax.f32 %v308, 0.0
  %v341 = vmax.f32 %v309, 0.0
  %v342 = vmax.f32 %v310, 0.0
  %v343 = vmax.f32 %v311, 0.0
  %v344 = vmax.f32 %v312, 0.0
  %v345 = vmax.f32 %v313, 0.0
  %v346 = vmax.f32 %v314, 0.0
  %v347 = vmax.f32 %v315, 0.0
  %v348 = vmax.f32 %v316, 0.0
  %v349 = vmax.f32 %v317, 0.0
  %v350 = vmax.f32 %v318, 0.0
  %v351 = vmax.f32 %v319, 0.0
  %v352 = vpack.c.bf16 %v322, %v320
  %v353 = vpack.c.bf16 %v323, %v321
  %v354 = vpack.c.bf16 %v326, %v324
  %v355 = vpack.c.bf16 %v327, %v325
  %v356 = vpack.c.bf16 %v330, %v328
  %v357 = vpack.c.bf16 %v331, %v329
  %v358 = vpack.c.bf16 %v334, %v332
  %v359 = vpack.c.bf16 %v335, %v333
  %v360 = vpack.c.bf16 %v338, %v336
  %v361 = vpack.c.bf16 %v339, %v337
  %v362 = vpack.c.bf16 %v342, %v340
  %v363 = vpack.c.bf16 %v343, %v341
  %v364 = vpack.c.bf16 %v346, %v344
  %v365 = vpack.c.bf16 %v347, %v345
  %v366 = vpack.c.bf16 %v350, %v348
  %v367 = vpack.c.bf16 %v351, %v349
  %v390 = vunpack.c.l.b16 %v201
  %v391 = vunpack.c.l.b16 %v202
  %v392 = vunpack.c.l.b16 %v203
  %v393 = vunpack.c.l.b16 %v204
  %v394 = vunpack.c.l.b16 %v205
  %v395 = vunpack.c.l.b16 %v206
  %v396 = vunpack.c.l.b16 %v207
  %v397 = vunpack.c.l.b16 %v208
  %v398 = vunpack.c.l.b16 %v209
  %v399 = vunpack.c.l.b16 %v210
  %v400 = vunpack.c.l.b16 %v211
  %v401 = vunpack.c.l.b16 %v212
  %v402 = vunpack.c.l.b16 %v213
  %v403 = vunpack.c.l.b16 %v214
  %v404 = vunpack.c.l.b16 %v215
  %v405 = vunpack.c.l.b16 %v216
  %v406 = vunpack.c.l.b16 %v217
  %v407 = vunpack.c.l.b16 %v218
  %v408 = vunpack.c.l.b16 %v219
  %v409 = vunpack.c.l.b16 %v220
  %v410 = vunpack.c.l.b16 %v221
  %v411 = vunpack.c.l.b16 %v222
  %v412 = vpack.c.b16 %v391, %v390
  %v413 = vpack.c.b16 %v393, %v392
  %v414 = vpack.c.b16 %v395, %v394
  %v415 = vpack.c.b16 %v397, %v396
  %v416 = vpack.c.b16 %v399, %v398
  %v417 = vpack.c.b16 %v401, %v400
  %v418 = vpack.c.b16 %v403, %v402
  %v419 = vpack.c.b16 %v405, %v404
  %v420 = vpack.c.b16 %v407, %v406
  %v421 = vpack.c.b16 %v409, %v408
  %v422 = vpack.c.b16 %v411, %v410
  %vm433 = vcmask 351232
  %v435 = vsel %vm433, %v353, 0
  %v438 = vsel %vm433, %v355, 0
  %v441 = vsel %vm433, %v357, 0
  %v444 = vsel %vm433, %v359, 0
  %v447 = vsel %vm433, %v361, 0
  %v450 = vsel %vm433, %v363, 0
  %v453 = vsel %vm433, %v365, 0
  %v456 = vsel %vm433, %v367, 0
  %vm458 = vcmask 1044480
  %vm459 = vcmask 1045504
  %v460 = vsel %vm458, 4294967295, 65535
  %v461 = vsel %vm459, %v460, 0
  %v463 = vand.u32 %v422, %v461
  %465 = vmatprep.subr.bf16.mxu0 0
  %466 = vmatpush1.bf16.msra.mxu0 %v419
  %467 = vmatprep.subr.bf16.mxu0 0
  %468 = vmatpush1.bf16.msra.mxu0 %v418
  %469 = vmatprep.subr.bf16.mxu0 0
  %470 = vmatpush1.bf16.msra.mxu0 %v417
  %471 = vmatprep.subr.bf16.mxu0 0
  %472 = vmatpush1.bf16.msra.mxu0 %v416
  %473 = vmatprep.subr.bf16.mxu0 0
  %474 = vmatpush1.bf16.msra.mxu0 %v415
  %475 = vmatprep.subr.bf16.mxu0 0
  %476 = vmatpush1.bf16.msra.mxu0 %v414
  %477 = vmatprep.subr.bf16.mxu0 0
  %478 = vmatpush1.bf16.msra.mxu0 %v413
  %479 = vmatprep.subr.bf16.mxu0 0
  %480 = vmatpush1.bf16.msra.mxu0 %v412
  %481 = vmatprep.subr.bf16.mxu0 0
  %482 = vmatpush2.bf16.msra.mxu0 0
  %483 = vmatprep.subr.bf16.mxu0 0
  %484 = vmatpush2.bf16.msra.mxu0 0
  %485 = vmatprep.subr.bf16.mxu0 0
  %486 = vmatpush2.bf16.msra.mxu0 0
  %487 = vmatprep.subr.bf16.mxu0 0
  %488 = vmatpush2.bf16.msra.mxu0 0
  %489 = vmatprep.subr.bf16.mxu0 0
  %490 = vmatpush2.bf16.msra.mxu0 0
  %491 = vmatprep.subr.bf16.mxu0 0
  %492 = vmatpush2.bf16.msra.mxu0 %v463
  %493 = vmatprep.subr.bf16.mxu0 0
  %494 = vmatpush2.bf16.msra.mxu0 %v421
  %495 = vmatprep.subr.bf16.mxu0 0
  %496 = vmatpush2.bf16.msra.mxu0 %v420
  %497 = vmatprep.mubr.bf16.mxu0 %v435
  %498 = vmatmul.mubr.bf16.gmra.mxu0 %v352
  %v499 = vpop.f32.mrf.mxu0
  %v500 = vadd.f32 0.0, %v499
  %v501 = vpop.f32.mrf.mxu0
  %v502 = vpop.f32.mrf.mxu0
  %v503 = vadd.f32 0.0, %v502
  %v504 = vpop.f32.mrf.mxu0
  %505 = vmatprep.mubr.bf16.mxu0 %v438
  %506 = vmatmul.mubr.bf16.gmra.mxu0 %v354
  %v507 = vpop.f32.mrf.mxu0
  %v508 = vadd.f32 0.0, %v507
  %v509 = vpop.f32.mrf.mxu0
  %v510 = vpop.f32.mrf.mxu0
  %v511 = vadd.f32 0.0, %v510
  %v512 = vpop.f32.mrf.mxu0
  %513 = vmatprep.mubr.bf16.mxu0 %v441
  %514 = vmatmul.mubr.bf16.gmra.mxu0 %v356
  %v515 = vpop.f32.mrf.mxu0
  %v516 = vadd.f32 0.0, %v515
  %v517 = vpop.f32.mrf.mxu0
  %v518 = vpop.f32.mrf.mxu0
  %v519 = vadd.f32 0.0, %v518
  %v520 = vpop.f32.mrf.mxu0
  %521 = vmatprep.mubr.bf16.mxu0 %v444
  %522 = vmatmul.mubr.bf16.gmra.mxu0 %v358
  %v523 = vpop.f32.mrf.mxu0
  %v524 = vadd.f32 0.0, %v523
  %v525 = vpop.f32.mrf.mxu0
  %v526 = vpop.f32.mrf.mxu0
  %v527 = vadd.f32 0.0, %v526
  %v528 = vpop.f32.mrf.mxu0
  %529 = vmatprep.mubr.bf16.mxu0 %v447
  %530 = vmatmul.mubr.bf16.gmra.mxu0 %v360
  %v531 = vpop.f32.mrf.mxu0
  %v532 = vadd.f32 0.0, %v531
  %v533 = vpop.f32.mrf.mxu0
  %v534 = vpop.f32.mrf.mxu0
  %v535 = vadd.f32 0.0, %v534
  %v536 = vpop.f32.mrf.mxu0
  %537 = vmatprep.mubr.bf16.mxu0 %v450
  %538 = vmatmul.mubr.bf16.gmra.mxu0 %v362
  %v539 = vpop.f32.mrf.mxu0
  %v540 = vadd.f32 0.0, %v539
  %v541 = vpop.f32.mrf.mxu0
  %v542 = vpop.f32.mrf.mxu0
  %v543 = vadd.f32 0.0, %v542
  %v544 = vpop.f32.mrf.mxu0
  %545 = vmatprep.mubr.bf16.mxu0 %v453
  %546 = vmatmul.mubr.bf16.gmra.mxu0 %v364
  %v547 = vpop.f32.mrf.mxu0
  %v548 = vadd.f32 0.0, %v547
  %v549 = vpop.f32.mrf.mxu0
  %v550 = vpop.f32.mrf.mxu0
  %v551 = vadd.f32 0.0, %v550
  %v552 = vpop.f32.mrf.mxu0
  %553 = vmatprep.mubr.bf16.mxu0 %v456
  %554 = vmatmul.mubr.bf16.gmra.mxu0 %v366
  %v555 = vpop.f32.mrf.mxu0
  %v556 = vadd.f32 0.0, %v555
  %v557 = vpop.f32.mrf.mxu0
  %v558 = vpop.f32.mrf.mxu0
  %v559 = vadd.f32 0.0, %v558
  %v560 = vpop.f32.mrf.mxu0
  %561 = vdwg.mxu0
  %v563 = vsel %vm433, %v186, 0
  %v566 = vsel %vm433, %v188, 0
  %v569 = vsel %vm433, %v190, 0
  %v572 = vsel %vm433, %v192, 0
  %v575 = vsel %vm433, %v194, 0
  %v578 = vsel %vm433, %v196, 0
  %v581 = vsel %vm433, %v198, 0
  %v584 = vsel %vm433, %v200, 0
  %586 = vmatprep.subr.bf16.mxu0 0
  %587 = vmatpush1.bf16.msra.mxu0 %v419
  %588 = vmatprep.subr.bf16.mxu0 0
  %589 = vmatpush1.bf16.msra.mxu0 %v418
  %590 = vmatprep.subr.bf16.mxu0 0
  %591 = vmatpush1.bf16.msra.mxu0 %v417
  %592 = vmatprep.subr.bf16.mxu0 0
  %593 = vmatpush1.bf16.msra.mxu0 %v416
  %594 = vmatprep.subr.bf16.mxu0 0
  %595 = vmatpush1.bf16.msra.mxu0 %v415
  %596 = vmatprep.subr.bf16.mxu0 0
  %597 = vmatpush1.bf16.msra.mxu0 %v414
  %598 = vmatprep.subr.bf16.mxu0 0
  %599 = vmatpush1.bf16.msra.mxu0 %v413
  %600 = vmatprep.subr.bf16.mxu0 0
  %601 = vmatpush1.bf16.msra.mxu0 %v412
  %602 = vmatprep.subr.bf16.mxu0 0
  %603 = vmatpush2.bf16.msra.mxu0 0
  %604 = vmatprep.subr.bf16.mxu0 0
  %605 = vmatpush2.bf16.msra.mxu0 0
  %606 = vmatprep.subr.bf16.mxu0 0
  %607 = vmatpush2.bf16.msra.mxu0 0
  %608 = vmatprep.subr.bf16.mxu0 0
  %609 = vmatpush2.bf16.msra.mxu0 0
  %610 = vmatprep.subr.bf16.mxu0 0
  %611 = vmatpush2.bf16.msra.mxu0 0
  %612 = vmatprep.subr.bf16.mxu0 0
  %613 = vmatpush2.bf16.msra.mxu0 %v463
  %614 = vmatprep.subr.bf16.mxu0 0
  %615 = vmatpush2.bf16.msra.mxu0 %v421
  %616 = vmatprep.subr.bf16.mxu0 0
  %617 = vmatpush2.bf16.msra.mxu0 %v420
  %618 = vmatprep.mubr.bf16.mxu0 %v563
  %619 = vmatmul.mubr.bf16.gmra.mxu0 %v185
  %v620 = vpop.f32.mrf.mxu0
  %v621 = vadd.f32 %v500, %v620
  %v622 = vpop.f32.mrf.mxu0
  %v623 = vpop.f32.mrf.mxu0
  %v624 = vadd.f32 %v503, %v623
  %v625 = vpop.f32.mrf.mxu0
  %626 = vmatprep.mubr.bf16.mxu0 %v566
  %627 = vmatmul.mubr.bf16.gmra.mxu0 %v187
  %v628 = vpop.f32.mrf.mxu0
  %v629 = vadd.f32 %v508, %v628
  %v630 = vpop.f32.mrf.mxu0
  %v631 = vpop.f32.mrf.mxu0
  %v632 = vadd.f32 %v511, %v631
  %v633 = vpop.f32.mrf.mxu0
  %634 = vmatprep.mubr.bf16.mxu0 %v569
  %635 = vmatmul.mubr.bf16.gmra.mxu0 %v189
  %v636 = vpop.f32.mrf.mxu0
  %v637 = vadd.f32 %v516, %v636
  %v638 = vpop.f32.mrf.mxu0
  %v639 = vpop.f32.mrf.mxu0
  %v640 = vadd.f32 %v519, %v639
  %v641 = vpop.f32.mrf.mxu0
  %642 = vmatprep.mubr.bf16.mxu0 %v572
  %643 = vmatmul.mubr.bf16.gmra.mxu0 %v191
  %v644 = vpop.f32.mrf.mxu0
  %v645 = vadd.f32 %v524, %v644
  %v646 = vpop.f32.mrf.mxu0
  %v647 = vpop.f32.mrf.mxu0
  %v648 = vadd.f32 %v527, %v647
  %v649 = vpop.f32.mrf.mxu0
  %650 = vmatprep.mubr.bf16.mxu0 %v575
  %651 = vmatmul.mubr.bf16.gmra.mxu0 %v193
  %v652 = vpop.f32.mrf.mxu0
  %v653 = vadd.f32 %v532, %v652
  %v654 = vpop.f32.mrf.mxu0
  %v655 = vpop.f32.mrf.mxu0
  %v656 = vadd.f32 %v535, %v655
  %v657 = vpop.f32.mrf.mxu0
  %658 = vmatprep.mubr.bf16.mxu0 %v578
  %659 = vmatmul.mubr.bf16.gmra.mxu0 %v195
  %v660 = vpop.f32.mrf.mxu0
  %v661 = vadd.f32 %v540, %v660
  %v662 = vpop.f32.mrf.mxu0
  %v663 = vpop.f32.mrf.mxu0
  %v664 = vadd.f32 %v543, %v663
  %v665 = vpop.f32.mrf.mxu0
  %666 = vmatprep.mubr.bf16.mxu0 %v581
  %667 = vmatmul.mubr.bf16.gmra.mxu0 %v197
  %v668 = vpop.f32.mrf.mxu0
  %v669 = vadd.f32 %v548, %v668
  %v670 = vpop.f32.mrf.mxu0
  %v671 = vpop.f32.mrf.mxu0
  %v672 = vadd.f32 %v551, %v671
  %v673 = vpop.f32.mrf.mxu0
  %674 = vmatprep.mubr.bf16.mxu0 %v584
  %675 = vmatmul.mubr.bf16.gmra.mxu0 %v199
  %v676 = vpop.f32.mrf.mxu0
  %v677 = vadd.f32 %v556, %v676
  %v678 = vpop.f32.mrf.mxu0
  %v679 = vpop.f32.mrf.mxu0
  %v680 = vadd.f32 %v559, %v679
  %v681 = vpop.f32.mrf.mxu0
  %682 = vdwg.mxu0
  %s683 = scalar_lea.vmem %s0, 512
  %v684 = vld [vmem:[%s683] sm:$0xff]
  %v685 = vld [vmem:[%s683 + $0x8] sm:$0xff]
  %v686 = vld [vmem:[%s683 + $0x10] sm:$0xff]
  %v687 = vld [vmem:[%s683 + $0x18] sm:$0xff]
  %v688 = vld [vmem:[%s683 + $0x20] sm:$0xff]
  %v689 = vld [vmem:[%s683 + $0x28] sm:$0xff]
  %v690 = vld [vmem:[%s683 + $0x30] sm:$0xff]
  %v691 = vld [vmem:[%s683 + $0x38] sm:$0xff]
  %v692 = vld [vmem:[%s683 + $0x40] sm:$0xff]
  %v693 = vld [vmem:[%s683 + $0x48] sm:$0xff]
  %v694 = vld [vmem:[%s683 + $0x50] sm:$0xff]
  %v695 = vld [vmem:[%s683 + $0x58] sm:$0xff]
  %v696 = vld [vmem:[%s683 + $0x60] sm:$0xff]
  %v697 = vld [vmem:[%s683 + $0x68] sm:$0xff]
  %v698 = vld [vmem:[%s683 + $0x70] sm:$0xff]
  %v699 = vld [vmem:[%s683 + $0x78] sm:$0xff]
  %v700 = vld [vmem:[%s683 + $0x80] sm:$0xff]
  %v701 = vld [vmem:[%s683 + $0x88] sm:$0xff]
  %v702 = vld [vmem:[%s683 + $0x90] sm:$0xff]
  %v703 = vld [vmem:[%s683 + $0x98] sm:$0xff]
  %v704 = vld [vmem:[%s683 + $0xa0] sm:$0xff]
  %v705 = vld [vmem:[%s683 + $0xa8] sm:$0xff]
  %v706 = vld [vmem:[%s683 + $0xb0] sm:$0xff]
  %v707 = vld [vmem:[%s683 + $0xb8] sm:$0xff]
  %v708 = vld [vmem:[%s683 + $0xc0] sm:$0xff]
  %v709 = vld [vmem:[%s683 + $0xc8] sm:$0xff]
  %v710 = vld [vmem:[%s683 + $0xd0] sm:$0xff]
  %v711 = vld [vmem:[%s683 + $0xd8] sm:$0xff]
  %v712 = vld [vmem:[%s683 + $0xe0] sm:$0xff]
  %v713 = vld [vmem:[%s683 + $0xe8] sm:$0xff]
  %v714 = vld [vmem:[%s683 + $0xf0] sm:$0xff]
  %v715 = vld [vmem:[%s683 + $0xf8] sm:$0xff]
  %v716 = vmul.f32 %v684, %v70
  %v717 = vmul.f32 %v685, %v74
  %v718 = vmul.f32 %v686, %v70
  %v719 = vmul.f32 %v687, %v74
  %v720 = vmul.f32 %v688, %v70
  %v721 = vmul.f32 %v689, %v74
  %v722 = vmul.f32 %v690, %v70
  %v723 = vmul.f32 %v691, %v74
  %v724 = vmul.f32 %v692, %v70
  %v725 = vmul.f32 %v693, %v74
  %v726 = vmul.f32 %v694, %v70
  %v727 = vmul.f32 %v695, %v74
  %v728 = vmul.f32 %v696, %v70
  %v729 = vmul.f32 %v697, %v74
  %v730 = vmul.f32 %v698, %v70
  %v731 = vmul.f32 %v699, %v74
  %v732 = vmul.f32 %v700, %v70
  %v733 = vmul.f32 %v701, %v74
  %v734 = vmul.f32 %v702, %v70
  %v735 = vmul.f32 %v703, %v74
  %v736 = vmul.f32 %v704, %v70
  %v737 = vmul.f32 %v705, %v74
  %v738 = vmul.f32 %v706, %v70
  %v739 = vmul.f32 %v707, %v74
  %v740 = vmul.f32 %v708, %v70
  %v741 = vmul.f32 %v709, %v74
  %v742 = vmul.f32 %v710, %v70
  %v743 = vmul.f32 %v711, %v74
  %v744 = vmul.f32 %v712, %v70
  %v745 = vmul.f32 %v713, %v74
  %v746 = vmul.f32 %v714, %v70
  %v747 = vmul.f32 %v715, %v74
  %v748 = vadd.f32 %v716, %v114
  %v749 = vadd.f32 %v717, %v118
  %v750 = vadd.f32 %v718, %v114
  %v751 = vadd.f32 %v719, %v118
  %v752 = vadd.f32 %v720, %v114
  %v753 = vadd.f32 %v721, %v118
  %v754 = vadd.f32 %v722, %v114
  %v755 = vadd.f32 %v723, %v118
  %v756 = vadd.f32 %v724, %v114
  %v757 = vadd.f32 %v725, %v118
  %v758 = vadd.f32 %v726, %v114
  %v759 = vadd.f32 %v727, %v118
  %v760 = vadd.f32 %v728, %v114
  %v761 = vadd.f32 %v729, %v118
  %v762 = vadd.f32 %v730, %v114
  %v763 = vadd.f32 %v731, %v118
  %v764 = vadd.f32 %v732, %v114
  %v765 = vadd.f32 %v733, %v118
  %v766 = vadd.f32 %v734, %v114
  %v767 = vadd.f32 %v735, %v118
  %v768 = vadd.f32 %v736, %v114
  %v769 = vadd.f32 %v737, %v118
  %v770 = vadd.f32 %v738, %v114
  %v771 = vadd.f32 %v739, %v118
  %v772 = vadd.f32 %v740, %v114
  %v773 = vadd.f32 %v741, %v118
  %v774 = vadd.f32 %v742, %v114
  %v775 = vadd.f32 %v743, %v118
  %v776 = vadd.f32 %v744, %v114
  %v777 = vadd.f32 %v745, %v118
  %v778 = vadd.f32 %v746, %v114
  %v779 = vadd.f32 %v747, %v118
  %v780 = vmax.f32 %v748, 0.0
  %v781 = vmax.f32 %v749, 0.0
  %v782 = vmax.f32 %v750, 0.0
  %v783 = vmax.f32 %v751, 0.0
  %v784 = vmax.f32 %v752, 0.0
  %v785 = vmax.f32 %v753, 0.0
  %v786 = vmax.f32 %v754, 0.0
  %v787 = vmax.f32 %v755, 0.0
  %v788 = vmax.f32 %v756, 0.0
  %v789 = vmax.f32 %v757, 0.0
  %v790 = vmax.f32 %v758, 0.0
  %v791 = vmax.f32 %v759, 0.0
  %v792 = vmax.f32 %v760, 0.0
  %v793 = vmax.f32 %v761, 0.0
  %v794 = vmax.f32 %v762, 0.0
  %v795 = vmax.f32 %v763, 0.0
  %v796 = vmax.f32 %v764, 0.0
  %v797 = vmax.f32 %v765, 0.0
  %v798 = vmax.f32 %v766, 0.0
  %v799 = vmax.f32 %v767, 0.0
  %v800 = vmax.f32 %v768, 0.0
  %v801 = vmax.f32 %v769, 0.0
  %v802 = vmax.f32 %v770, 0.0
  %v803 = vmax.f32 %v771, 0.0
  %v804 = vmax.f32 %v772, 0.0
  %v805 = vmax.f32 %v773, 0.0
  %v806 = vmax.f32 %v774, 0.0
  %v807 = vmax.f32 %v775, 0.0
  %v808 = vmax.f32 %v776, 0.0
  %v809 = vmax.f32 %v777, 0.0
  %v810 = vmax.f32 %v778, 0.0
  %v811 = vmax.f32 %v779, 0.0
  %v812 = vpack.c.bf16 %v782, %v780
  %v813 = vpack.c.bf16 %v783, %v781
  %v814 = vpack.c.bf16 %v786, %v784
  %v815 = vpack.c.bf16 %v787, %v785
  %v816 = vpack.c.bf16 %v790, %v788
  %v817 = vpack.c.bf16 %v791, %v789
  %v818 = vpack.c.bf16 %v794, %v792
  %v819 = vpack.c.bf16 %v795, %v793
  %v820 = vpack.c.bf16 %v798, %v796
  %v821 = vpack.c.bf16 %v799, %v797
  %v822 = vpack.c.bf16 %v802, %v800
  %v823 = vpack.c.bf16 %v803, %v801
  %v824 = vpack.c.bf16 %v806, %v804
  %v825 = vpack.c.bf16 %v807, %v805
  %v826 = vpack.c.bf16 %v810, %v808
  %v827 = vpack.c.bf16 %v811, %v809
  %v829 = vsel %vm433, %v813, 0
  %v832 = vsel %vm433, %v815, 0
  %v835 = vsel %vm433, %v817, 0
  %v838 = vsel %vm433, %v819, 0
  %v841 = vsel %vm433, %v821, 0
  %v844 = vsel %vm433, %v823, 0
  %v847 = vsel %vm433, %v825, 0
  %v850 = vsel %vm433, %v827, 0
  %852 = vmatprep.subr.bf16.mxu0 0
  %853 = vmatpush1.bf16.msra.mxu0 %v419
  %854 = vmatprep.subr.bf16.mxu0 0
  %855 = vmatpush1.bf16.msra.mxu0 %v418
  %856 = vmatprep.subr.bf16.mxu0 0
  %857 = vmatpush1.bf16.msra.mxu0 %v417
  %858 = vmatprep.subr.bf16.mxu0 0
  %859 = vmatpush1.bf16.msra.mxu0 %v416
  %860 = vmatprep.subr.bf16.mxu0 0
  %861 = vmatpush1.bf16.msra.mxu0 %v415
  %862 = vmatprep.subr.bf16.mxu0 0
  %863 = vmatpush1.bf16.msra.mxu0 %v414
  %864 = vmatprep.subr.bf16.mxu0 0
  %865 = vmatpush1.bf16.msra.mxu0 %v413
  %866 = vmatprep.subr.bf16.mxu0 0
  %867 = vmatpush1.bf16.msra.mxu0 %v412
  %868 = vmatprep.subr.bf16.mxu0 0
  %869 = vmatpush2.bf16.msra.mxu0 0
  %870 = vmatprep.subr.bf16.mxu0 0
  %871 = vmatpush2.bf16.msra.mxu0 0
  %872 = vmatprep.subr.bf16.mxu0 0
  %873 = vmatpush2.bf16.msra.mxu0 0
  %874 = vmatprep.subr.bf16.mxu0 0
  %875 = vmatpush2.bf16.msra.mxu0 0
  %876 = vmatprep.subr.bf16.mxu0 0
  %877 = vmatpush2.bf16.msra.mxu0 0
  %878 = vmatprep.subr.bf16.mxu0 0
  %879 = vmatpush2.bf16.msra.mxu0 %v463
  %880 = vmatprep.subr.bf16.mxu0 0
  %881 = vmatpush2.bf16.msra.mxu0 %v421
  %882 = vmatprep.subr.bf16.mxu0 0
  %883 = vmatpush2.bf16.msra.mxu0 %v420
  %884 = vmatprep.mubr.bf16.mxu0 %v829
  %885 = vmatmul.mubr.bf16.gmra.mxu0 %v812
  %v886 = vpop.f32.mrf.mxu0
  %v887 = vadd.f32 0.0, %v886
  %v888 = vpop.f32.mrf.mxu0
  %v889 = vpop.f32.mrf.mxu0
  %v890 = vadd.f32 0.0, %v889
  %v891 = vpop.f32.mrf.mxu0
  %892 = vmatprep.mubr.bf16.mxu0 %v832
  %893 = vmatmul.mubr.bf16.gmra.mxu0 %v814
  %v894 = vpop.f32.mrf.mxu0
  %v895 = vadd.f32 0.0, %v894
  %v896 = vpop.f32.mrf.mxu0
  %v897 = vpop.f32.mrf.mxu0
  %v898 = vadd.f32 0.0, %v897
  %v899 = vpop.f32.mrf.mxu0
  %900 = vmatprep.mubr.bf16.mxu0 %v835
  %901 = vmatmul.mubr.bf16.gmra.mxu0 %v816
  %v902 = vpop.f32.mrf.mxu0
  %v903 = vadd.f32 0.0, %v902
  %v904 = vpop.f32.mrf.mxu0
  %v905 = vpop.f32.mrf.mxu0
  %v906 = vadd.f32 0.0, %v905
  %v907 = vpop.f32.mrf.mxu0
  %908 = vmatprep.mubr.bf16.mxu0 %v838
  %909 = vmatmul.mubr.bf16.gmra.mxu0 %v818
  %v910 = vpop.f32.mrf.mxu0
  %v911 = vadd.f32 0.0, %v910
  %v912 = vpop.f32.mrf.mxu0
  %v913 = vpop.f32.mrf.mxu0
  %v914 = vadd.f32 0.0, %v913
  %v915 = vpop.f32.mrf.mxu0
  %916 = vmatprep.mubr.bf16.mxu0 %v841
  %917 = vmatmul.mubr.bf16.gmra.mxu0 %v820
  %v918 = vpop.f32.mrf.mxu0
  %v919 = vadd.f32 0.0, %v918
  %v920 = vpop.f32.mrf.mxu0
  %v921 = vpop.f32.mrf.mxu0
  %v922 = vadd.f32 0.0, %v921
  %v923 = vpop.f32.mrf.mxu0
  %924 = vmatprep.mubr.bf16.mxu0 %v844
  %925 = vmatmul.mubr.bf16.gmra.mxu0 %v822
  %v926 = vpop.f32.mrf.mxu0
  %v927 = vadd.f32 0.0, %v926
  %v928 = vpop.f32.mrf.mxu0
  %v929 = vpop.f32.mrf.mxu0
  %v930 = vadd.f32 0.0, %v929
  %v931 = vpop.f32.mrf.mxu0
  %932 = vmatprep.mubr.bf16.mxu0 %v847
  %933 = vmatmul.mubr.bf16.gmra.mxu0 %v824
  %v934 = vpop.f32.mrf.mxu0
  %v935 = vadd.f32 0.0, %v934
  %v936 = vpop.f32.mrf.mxu0
  %v937 = vpop.f32.mrf.mxu0
  %v938 = vadd.f32 0.0, %v937
  %v939 = vpop.f32.mrf.mxu0
  %940 = vmatprep.mubr.bf16.mxu0 %v850
  %941 = vmatmul.mubr.bf16.gmra.mxu0 %v826
  %v942 = vpop.f32.mrf.mxu0
  %v943 = vadd.f32 0.0, %v942
  %v944 = vpop.f32.mrf.mxu0
  %v945 = vpop.f32.mrf.mxu0
  %v946 = vadd.f32 0.0, %v945
  %v947 = vpop.f32.mrf.mxu0
  %948 = vdwg.mxu0
  %v949 = vadd.f32 %v621, %v887
  %v950 = vadd.f32 %v624, %v890
  %v951 = vadd.f32 %v629, %v895
  %v952 = vadd.f32 %v632, %v898
  %v953 = vadd.f32 %v637, %v903
  %v954 = vadd.f32 %v640, %v906
  %v955 = vadd.f32 %v645, %v911
  %v956 = vadd.f32 %v648, %v914
  %v957 = vadd.f32 %v653, %v919
  %v958 = vadd.f32 %v656, %v922
  %v959 = vadd.f32 %v661, %v927
  %v960 = vadd.f32 %v664, %v930
  %v961 = vadd.f32 %v669, %v935
  %v962 = vadd.f32 %v672, %v938
  %v963 = vadd.f32 %v677, %v943
  %v964 = vadd.f32 %v680, %v946
  %s965 = scalar_lea.vmem %s0, 768
  %v966 = vld [vmem:[%s965] sm:$0xff]
  %v967 = vld [vmem:[%s965 + $0x8] sm:$0xff]
  %v968 = vld [vmem:[%s965 + $0x10] sm:$0xff]
  %v969 = vld [vmem:[%s965 + $0x18] sm:$0xff]
  %v970 = vld [vmem:[%s965 + $0x20] sm:$0xff]
  %v971 = vld [vmem:[%s965 + $0x28] sm:$0xff]
  %v972 = vld [vmem:[%s965 + $0x30] sm:$0xff]
  %v973 = vld [vmem:[%s965 + $0x38] sm:$0xff]
  %v974 = vld [vmem:[%s965 + $0x40] sm:$0xff]
  %v975 = vld [vmem:[%s965 + $0x48] sm:$0xff]
  %v976 = vld [vmem:[%s965 + $0x50] sm:$0xff]
  %v977 = vld [vmem:[%s965 + $0x58] sm:$0xff]
  %v978 = vld [vmem:[%s965 + $0x60] sm:$0xff]
  %v979 = vld [vmem:[%s965 + $0x68] sm:$0xff]
  %v980 = vld [vmem:[%s965 + $0x70] sm:$0xff]
  %v981 = vld [vmem:[%s965 + $0x78] sm:$0xff]
  %v982 = vld [vmem:[%s965 + $0x80] sm:$0xff]
  %v983 = vld [vmem:[%s965 + $0x88] sm:$0xff]
  %v984 = vld [vmem:[%s965 + $0x90] sm:$0xff]
  %v985 = vld [vmem:[%s965 + $0x98] sm:$0xff]
  %v986 = vld [vmem:[%s965 + $0xa0] sm:$0xff]
  %v987 = vld [vmem:[%s965 + $0xa8] sm:$0xff]
  %v988 = vld [vmem:[%s965 + $0xb0] sm:$0xff]
  %v989 = vld [vmem:[%s965 + $0xb8] sm:$0xff]
  %v990 = vld [vmem:[%s965 + $0xc0] sm:$0xff]
  %v991 = vld [vmem:[%s965 + $0xc8] sm:$0xff]
  %v992 = vld [vmem:[%s965 + $0xd0] sm:$0xff]
  %v993 = vld [vmem:[%s965 + $0xd8] sm:$0xff]
  %v994 = vld [vmem:[%s965 + $0xe0] sm:$0xff]
  %v995 = vld [vmem:[%s965 + $0xe8] sm:$0xff]
  %v996 = vld [vmem:[%s965 + $0xf0] sm:$0xff]
  %v997 = vld [vmem:[%s965 + $0xf8] sm:$0xff]
  %v998 = vmul.f32 %v966, %v70
  %v999 = vmul.f32 %v967, %v74
  %v1000 = vmul.f32 %v968, %v70
  %v1001 = vmul.f32 %v969, %v74
  %v1002 = vmul.f32 %v970, %v70
  %v1003 = vmul.f32 %v971, %v74
  %v1004 = vmul.f32 %v972, %v70
  %v1005 = vmul.f32 %v973, %v74
  %v1006 = vmul.f32 %v974, %v70
  %v1007 = vmul.f32 %v975, %v74
  %v1008 = vmul.f32 %v976, %v70
  %v1009 = vmul.f32 %v977, %v74
  %v1010 = vmul.f32 %v978, %v70
  %v1011 = vmul.f32 %v979, %v74
  %v1012 = vmul.f32 %v980, %v70
  %v1013 = vmul.f32 %v981, %v74
  %v1014 = vmul.f32 %v982, %v70
  %v1015 = vmul.f32 %v983, %v74
  %v1016 = vmul.f32 %v984, %v70
  %v1017 = vmul.f32 %v985, %v74
  %v1018 = vmul.f32 %v986, %v70
  %v1019 = vmul.f32 %v987, %v74
  %v1020 = vmul.f32 %v988, %v70
  %v1021 = vmul.f32 %v989, %v74
  %v1022 = vmul.f32 %v990, %v70
  %v1023 = vmul.f32 %v991, %v74
  %v1024 = vmul.f32 %v992, %v70
  %v1025 = vmul.f32 %v993, %v74
  %v1026 = vmul.f32 %v994, %v70
  %v1027 = vmul.f32 %v995, %v74
  %v1028 = vmul.f32 %v996, %v70
  %v1029 = vmul.f32 %v997, %v74
  %v1030 = vadd.f32 %v998, %v114
  %v1031 = vadd.f32 %v999, %v118
  %v1032 = vadd.f32 %v1000, %v114
  %v1033 = vadd.f32 %v1001, %v118
  %v1034 = vadd.f32 %v1002, %v114
  %v1035 = vadd.f32 %v1003, %v118
  %v1036 = vadd.f32 %v1004, %v114
  %v1037 = vadd.f32 %v1005, %v118
  %v1038 = vadd.f32 %v1006, %v114
  %v1039 = vadd.f32 %v1007, %v118
  %v1040 = vadd.f32 %v1008, %v114
  %v1041 = vadd.f32 %v1009, %v118
  %v1042 = vadd.f32 %v1010, %v114
  %v1043 = vadd.f32 %v1011, %v118
  %v1044 = vadd.f32 %v1012, %v114
  %v1045 = vadd.f32 %v1013, %v118
  %v1046 = vadd.f32 %v1014, %v114
  %v1047 = vadd.f32 %v1015, %v118
  %v1048 = vadd.f32 %v1016, %v114
  %v1049 = vadd.f32 %v1017, %v118
  %v1050 = vadd.f32 %v1018, %v114
  %v1051 = vadd.f32 %v1019, %v118
  %v1052 = vadd.f32 %v1020, %v114
  %v1053 = vadd.f32 %v1021, %v118
  %v1054 = vadd.f32 %v1022, %v114
  %v1055 = vadd.f32 %v1023, %v118
  %v1056 = vadd.f32 %v1024, %v114
  %v1057 = vadd.f32 %v1025, %v118
  %v1058 = vadd.f32 %v1026, %v114
  %v1059 = vadd.f32 %v1027, %v118
  %v1060 = vadd.f32 %v1028, %v114
  %v1061 = vadd.f32 %v1029, %v118
  %v1062 = vmax.f32 %v1030, 0.0
  %v1063 = vmax.f32 %v1031, 0.0
  %v1064 = vmax.f32 %v1032, 0.0
  %v1065 = vmax.f32 %v1033, 0.0
  %v1066 = vmax.f32 %v1034, 0.0
  %v1067 = vmax.f32 %v1035, 0.0
  %v1068 = vmax.f32 %v1036, 0.0
  %v1069 = vmax.f32 %v1037, 0.0
  %v1070 = vmax.f32 %v1038, 0.0
  %v1071 = vmax.f32 %v1039, 0.0
  %v1072 = vmax.f32 %v1040, 0.0
  %v1073 = vmax.f32 %v1041, 0.0
  %v1074 = vmax.f32 %v1042, 0.0
  %v1075 = vmax.f32 %v1043, 0.0
  %v1076 = vmax.f32 %v1044, 0.0
  %v1077 = vmax.f32 %v1045, 0.0
  %v1078 = vmax.f32 %v1046, 0.0
  %v1079 = vmax.f32 %v1047, 0.0
  %v1080 = vmax.f32 %v1048, 0.0
  %v1081 = vmax.f32 %v1049, 0.0
  %v1082 = vmax.f32 %v1050, 0.0
  %v1083 = vmax.f32 %v1051, 0.0
  %v1084 = vmax.f32 %v1052, 0.0
  %v1085 = vmax.f32 %v1053, 0.0
  %v1086 = vmax.f32 %v1054, 0.0
  %v1087 = vmax.f32 %v1055, 0.0
  %v1088 = vmax.f32 %v1056, 0.0
  %v1089 = vmax.f32 %v1057, 0.0
  %v1090 = vmax.f32 %v1058, 0.0
  %v1091 = vmax.f32 %v1059, 0.0
  %v1092 = vmax.f32 %v1060, 0.0
  %v1093 = vmax.f32 %v1061, 0.0
  %v1094 = vpack.c.bf16 %v1064, %v1062
  %v1095 = vpack.c.bf16 %v1065, %v1063
  %v1096 = vpack.c.bf16 %v1068, %v1066
  %v1097 = vpack.c.bf16 %v1069, %v1067
  %v1098 = vpack.c.bf16 %v1072, %v1070
  %v1099 = vpack.c.bf16 %v1073, %v1071
  %v1100 = vpack.c.bf16 %v1076, %v1074
  %v1101 = vpack.c.bf16 %v1077, %v1075
  %v1102 = vpack.c.bf16 %v1080, %v1078
  %v1103 = vpack.c.bf16 %v1081, %v1079
  %v1104 = vpack.c.bf16 %v1084, %v1082
  %v1105 = vpack.c.bf16 %v1085, %v1083
  %v1106 = vpack.c.bf16 %v1088, %v1086
  %v1107 = vpack.c.bf16 %v1089, %v1087
  %v1108 = vpack.c.bf16 %v1092, %v1090
  %v1109 = vpack.c.bf16 %v1093, %v1091
  %v1111 = vsel %vm433, %v1095, 0
  %v1114 = vsel %vm433, %v1097, 0
  %v1117 = vsel %vm433, %v1099, 0
  %v1120 = vsel %vm433, %v1101, 0
  %v1123 = vsel %vm433, %v1103, 0
  %v1126 = vsel %vm433, %v1105, 0
  %v1129 = vsel %vm433, %v1107, 0
  %v1132 = vsel %vm433, %v1109, 0
  %1134 = vmatprep.subr.bf16.mxu0 0
  %1135 = vmatpush1.bf16.msra.mxu0 %v419
  %1136 = vmatprep.subr.bf16.mxu0 0
  %1137 = vmatpush1.bf16.msra.mxu0 %v418
  %1138 = vmatprep.subr.bf16.mxu0 0
  %1139 = vmatpush1.bf16.msra.mxu0 %v417
  %1140 = vmatprep.subr.bf16.mxu0 0
  %1141 = vmatpush1.bf16.msra.mxu0 %v416
  %1142 = vmatprep.subr.bf16.mxu0 0
  %1143 = vmatpush1.bf16.msra.mxu0 %v415
  %1144 = vmatprep.subr.bf16.mxu0 0
  %1145 = vmatpush1.bf16.msra.mxu0 %v414
  %1146 = vmatprep.subr.bf16.mxu0 0
  %1147 = vmatpush1.bf16.msra.mxu0 %v413
  %1148 = vmatprep.subr.bf16.mxu0 0
  %1149 = vmatpush1.bf16.msra.mxu0 %v412
  %1150 = vmatprep.subr.bf16.mxu0 0
  %1151 = vmatpush2.bf16.msra.mxu0 0
  %1152 = vmatprep.subr.bf16.mxu0 0
  %1153 = vmatpush2.bf16.msra.mxu0 0
  %1154 = vmatprep.subr.bf16.mxu0 0
  %1155 = vmatpush2.bf16.msra.mxu0 0
  %1156 = vmatprep.subr.bf16.mxu0 0
  %1157 = vmatpush2.bf16.msra.mxu0 0
  %1158 = vmatprep.subr.bf16.mxu0 0
  %1159 = vmatpush2.bf16.msra.mxu0 0
  %1160 = vmatprep.subr.bf16.mxu0 0
  %1161 = vmatpush2.bf16.msra.mxu0 %v463
  %1162 = vmatprep.subr.bf16.mxu0 0
  %1163 = vmatpush2.bf16.msra.mxu0 %v421
  %1164 = vmatprep.subr.bf16.mxu0 0
  %1165 = vmatpush2.bf16.msra.mxu0 %v420
  %1166 = vmatprep.mubr.bf16.mxu0 %v1111
  %1167 = vmatmul.mubr.bf16.gmra.mxu0 %v1094
  %v1168 = vpop.f32.mrf.mxu0
  %v1169 = vadd.f32 0.0, %v1168
  %v1170 = vpop.f32.mrf.mxu0
  %v1171 = vpop.f32.mrf.mxu0
  %v1172 = vadd.f32 0.0, %v1171
  %v1173 = vpop.f32.mrf.mxu0
  %1174 = vmatprep.mubr.bf16.mxu0 %v1114
  %1175 = vmatmul.mubr.bf16.gmra.mxu0 %v1096
  %v1176 = vpop.f32.mrf.mxu0
  %v1177 = vadd.f32 0.0, %v1176
  %v1178 = vpop.f32.mrf.mxu0
  %v1179 = vpop.f32.mrf.mxu0
  %v1180 = vadd.f32 0.0, %v1179
  %v1181 = vpop.f32.mrf.mxu0
  %1182 = vmatprep.mubr.bf16.mxu0 %v1117
  %1183 = vmatmul.mubr.bf16.gmra.mxu0 %v1098
  %v1184 = vpop.f32.mrf.mxu0
  %v1185 = vadd.f32 0.0, %v1184
  %v1186 = vpop.f32.mrf.mxu0
  %v1187 = vpop.f32.mrf.mxu0
  %v1188 = vadd.f32 0.0, %v1187
  %v1189 = vpop.f32.mrf.mxu0
  %1190 = vmatprep.mubr.bf16.mxu0 %v1120
  %1191 = vmatmul.mubr.bf16.gmra.mxu0 %v1100
  %v1192 = vpop.f32.mrf.mxu0
  %v1193 = vadd.f32 0.0, %v1192
  %v1194 = vpop.f32.mrf.mxu0
  %v1195 = vpop.f32.mrf.mxu0
  %v1196 = vadd.f32 0.0, %v1195
  %v1197 = vpop.f32.mrf.mxu0
  %1198 = vmatprep.mubr.bf16.mxu0 %v1123
  %1199 = vmatmul.mubr.bf16.gmra.mxu0 %v1102
  %v1200 = vpop.f32.mrf.mxu0
  %v1201 = vadd.f32 0.0, %v1200
  %v1202 = vpop.f32.mrf.mxu0
  %v1203 = vpop.f32.mrf.mxu0
  %v1204 = vadd.f32 0.0, %v1203
  %v1205 = vpop.f32.mrf.mxu0
  %1206 = vmatprep.mubr.bf16.mxu0 %v1126
  %1207 = vmatmul.mubr.bf16.gmra.mxu0 %v1104
  %v1208 = vpop.f32.mrf.mxu0
  %v1209 = vadd.f32 0.0, %v1208
  %v1210 = vpop.f32.mrf.mxu0
  %v1211 = vpop.f32.mrf.mxu0
  %v1212 = vadd.f32 0.0, %v1211
  %v1213 = vpop.f32.mrf.mxu0
  %1214 = vmatprep.mubr.bf16.mxu0 %v1129
  %1215 = vmatmul.mubr.bf16.gmra.mxu0 %v1106
  %v1216 = vpop.f32.mrf.mxu0
  %v1217 = vadd.f32 0.0, %v1216
  %v1218 = vpop.f32.mrf.mxu0
  %v1219 = vpop.f32.mrf.mxu0
  %v1220 = vadd.f32 0.0, %v1219
  %v1221 = vpop.f32.mrf.mxu0
  %1222 = vmatprep.mubr.bf16.mxu0 %v1132
  %1223 = vmatmul.mubr.bf16.gmra.mxu0 %v1108
  %v1224 = vpop.f32.mrf.mxu0
  %v1225 = vadd.f32 0.0, %v1224
  %v1226 = vpop.f32.mrf.mxu0
  %v1227 = vpop.f32.mrf.mxu0
  %v1228 = vadd.f32 0.0, %v1227
  %v1229 = vpop.f32.mrf.mxu0
  %1230 = vdwg.mxu0
  %v1231 = vadd.f32 %v949, %v1169
  %v1232 = vadd.f32 %v950, %v1172
  %v1233 = vadd.f32 %v951, %v1177
  %v1234 = vadd.f32 %v952, %v1180
  %v1235 = vadd.f32 %v953, %v1185
  %v1236 = vadd.f32 %v954, %v1188
  %v1237 = vadd.f32 %v955, %v1193
  %v1238 = vadd.f32 %v956, %v1196
  %v1239 = vadd.f32 %v957, %v1201
  %v1240 = vadd.f32 %v958, %v1204
  %v1241 = vadd.f32 %v959, %v1209
  %v1242 = vadd.f32 %v960, %v1212
  %v1243 = vadd.f32 %v961, %v1217
  %v1244 = vadd.f32 %v962, %v1220
  %v1245 = vadd.f32 %v963, %v1225
  %v1246 = vadd.f32 %v964, %v1228
  %v1247 = vmul.f32 %v1231, 0.25
  %v1248 = vmul.f32 %v1232, 0.25
  %v1249 = vmul.f32 %v1233, 0.25
  %v1250 = vmul.f32 %v1234, 0.25
  %v1251 = vmul.f32 %v1235, 0.25
  %v1252 = vmul.f32 %v1236, 0.25
  %v1253 = vmul.f32 %v1237, 0.25
  %v1254 = vmul.f32 %v1238, 0.25
  %v1255 = vmul.f32 %v1239, 0.25
  %v1256 = vmul.f32 %v1240, 0.25
  %v1257 = vmul.f32 %v1241, 0.25
  %v1258 = vmul.f32 %v1242, 0.25
  %v1259 = vmul.f32 %v1243, 0.25
  %v1260 = vmul.f32 %v1244, 0.25
  %v1261 = vmul.f32 %v1245, 0.25
  %v1262 = vmul.f32 %v1246, 0.25
  %v1263 = vld [vmem:[%s4] sm:$0x1]
  %v1265 = vlaneseq
  %v1266 = vshrl.u32 %v1265, 7
  %v1267 = vsub.s32 0, %v1266
  %v1268 = vrot.slane %v1263, %v1267
  %v1270 = vadd.f32 %v1247, %v1268
  %v1271 = vadd.f32 %v1248, %v1268
  %v1272 = vadd.f32 %v1249, %v1268
  %v1273 = vadd.f32 %v1250, %v1268
  %v1274 = vadd.f32 %v1251, %v1268
  %v1275 = vadd.f32 %v1252, %v1268
  %v1276 = vadd.f32 %v1253, %v1268
  %v1277 = vadd.f32 %v1254, %v1268
  %v1278 = vadd.f32 %v1255, %v1268
  %v1279 = vadd.f32 %v1256, %v1268
  %v1280 = vadd.f32 %v1257, %v1268
  %v1281 = vadd.f32 %v1258, %v1268
  %v1282 = vadd.f32 %v1259, %v1268
  %v1283 = vadd.f32 %v1260, %v1268
  %v1284 = vadd.f32 %v1261, %v1268
  %v1285 = vadd.f32 %v1262, %v1268
  %v1286 = vld [vmem:[%s5] sm:$0xff]
  %v1287 = vld [vmem:[%s5 + $0x8] sm:$0xff]
  %v1288 = vld [vmem:[%s5 + $0x10] sm:$0xff]
  %v1289 = vld [vmem:[%s5 + $0x18] sm:$0xff]
  %v1290 = vld [vmem:[%s5 + $0x20] sm:$0xff]
  %v1291 = vld [vmem:[%s5 + $0x28] sm:$0xff]
  %v1292 = vld [vmem:[%s5 + $0x30] sm:$0xff]
  %v1293 = vld [vmem:[%s5 + $0x38] sm:$0xff]
  %v1294 = vld [vmem:[%s5 + $0x40] sm:$0xff]
  %v1295 = vld [vmem:[%s5 + $0x48] sm:$0xff]
  %v1296 = vld [vmem:[%s5 + $0x50] sm:$0xff]
  %v1297 = vld [vmem:[%s5 + $0x58] sm:$0xff]
  %v1298 = vld [vmem:[%s5 + $0x60] sm:$0xff]
  %v1299 = vld [vmem:[%s5 + $0x68] sm:$0xff]
  %v1300 = vld [vmem:[%s5 + $0x70] sm:$0xff]
  %v1301 = vld [vmem:[%s5 + $0x78] sm:$0xff]
  %s1302 = scalar_lea.vmem %s5, 128
  %v1303 = vld [vmem:[%s1302] sm:$0xff]
  %v1304 = vld [vmem:[%s1302 + $0x8] sm:$0xff]
  %v1305 = vld [vmem:[%s1302 + $0x10] sm:$0xff]
  %v1306 = vld [vmem:[%s1302 + $0x18] sm:$0xff]
  %v1307 = vld [vmem:[%s1302 + $0x20] sm:$0xff]
  %v1308 = vld [vmem:[%s1302 + $0x28] sm:$0xff]
  %v1309 = vld [vmem:[%s1302 + $0x30] sm:$0xff]
  %v1310 = vld [vmem:[%s1302 + $0x38] sm:$0xff]
  %v1311 = vld [vmem:[%s1302 + $0x40] sm:$0xff]
  %v1312 = vld [vmem:[%s1302 + $0x48] sm:$0xff]
  %v1313 = vld [vmem:[%s1302 + $0x50] sm:$0xff]
  %v1314 = vld [vmem:[%s1302 + $0x58] sm:$0xff]
  %v1315 = vld [vmem:[%s1302 + $0x60] sm:$0xff]
  %v1316 = vld [vmem:[%s1302 + $0x68] sm:$0xff]
  %v1317 = vld [vmem:[%s1302 + $0x70] sm:$0xff]
  %v1318 = vld [vmem:[%s1302 + $0x78] sm:$0xff]
  %v1319 = vadd.f32 %v1286, %v1303
  %v1320 = vadd.f32 %v1287, %v1304
  %v1321 = vadd.f32 %v1288, %v1305
  %v1322 = vadd.f32 %v1289, %v1306
  %v1323 = vadd.f32 %v1290, %v1307
  %v1324 = vadd.f32 %v1291, %v1308
  %v1325 = vadd.f32 %v1292, %v1309
  %v1326 = vadd.f32 %v1293, %v1310
  %v1327 = vadd.f32 %v1294, %v1311
  %v1328 = vadd.f32 %v1295, %v1312
  %v1329 = vadd.f32 %v1296, %v1313
  %v1330 = vadd.f32 %v1297, %v1314
  %v1331 = vadd.f32 %v1298, %v1315
  %v1332 = vadd.f32 %v1299, %v1316
  %v1333 = vadd.f32 %v1300, %v1317
  %v1334 = vadd.f32 %v1301, %v1318
  %s1335 = scalar_lea.vmem %s5, 256
  %v1336 = vld [vmem:[%s1335] sm:$0xff]
  %v1337 = vld [vmem:[%s1335 + $0x8] sm:$0xff]
  %v1338 = vld [vmem:[%s1335 + $0x10] sm:$0xff]
  %v1339 = vld [vmem:[%s1335 + $0x18] sm:$0xff]
  %v1340 = vld [vmem:[%s1335 + $0x20] sm:$0xff]
  %v1341 = vld [vmem:[%s1335 + $0x28] sm:$0xff]
  %v1342 = vld [vmem:[%s1335 + $0x30] sm:$0xff]
  %v1343 = vld [vmem:[%s1335 + $0x38] sm:$0xff]
  %v1344 = vld [vmem:[%s1335 + $0x40] sm:$0xff]
  %v1345 = vld [vmem:[%s1335 + $0x48] sm:$0xff]
  %v1346 = vld [vmem:[%s1335 + $0x50] sm:$0xff]
  %v1347 = vld [vmem:[%s1335 + $0x58] sm:$0xff]
  %v1348 = vld [vmem:[%s1335 + $0x60] sm:$0xff]
  %v1349 = vld [vmem:[%s1335 + $0x68] sm:$0xff]
  %v1350 = vld [vmem:[%s1335 + $0x70] sm:$0xff]
  %v1351 = vld [vmem:[%s1335 + $0x78] sm:$0xff]
  %v1352 = vadd.f32 %v1319, %v1336
  %v1353 = vadd.f32 %v1320, %v1337
  %v1354 = vadd.f32 %v1321, %v1338
  %v1355 = vadd.f32 %v1322, %v1339
  %v1356 = vadd.f32 %v1323, %v1340
  %v1357 = vadd.f32 %v1324, %v1341
  %v1358 = vadd.f32 %v1325, %v1342
  %v1359 = vadd.f32 %v1326, %v1343
  %v1360 = vadd.f32 %v1327, %v1344
  %v1361 = vadd.f32 %v1328, %v1345
  %v1362 = vadd.f32 %v1329, %v1346
  %v1363 = vadd.f32 %v1330, %v1347
  %v1364 = vadd.f32 %v1331, %v1348
  %v1365 = vadd.f32 %v1332, %v1349
  %v1366 = vadd.f32 %v1333, %v1350
  %v1367 = vadd.f32 %v1334, %v1351
  %s1368 = scalar_lea.vmem %s5, 384
  %v1369 = vld [vmem:[%s1368] sm:$0xff]
  %v1370 = vld [vmem:[%s1368 + $0x8] sm:$0xff]
  %v1371 = vld [vmem:[%s1368 + $0x10] sm:$0xff]
  %v1372 = vld [vmem:[%s1368 + $0x18] sm:$0xff]
  %v1373 = vld [vmem:[%s1368 + $0x20] sm:$0xff]
  %v1374 = vld [vmem:[%s1368 + $0x28] sm:$0xff]
  %v1375 = vld [vmem:[%s1368 + $0x30] sm:$0xff]
  %v1376 = vld [vmem:[%s1368 + $0x38] sm:$0xff]
  %v1377 = vld [vmem:[%s1368 + $0x40] sm:$0xff]
  %v1378 = vld [vmem:[%s1368 + $0x48] sm:$0xff]
  %v1379 = vld [vmem:[%s1368 + $0x50] sm:$0xff]
  %v1380 = vld [vmem:[%s1368 + $0x58] sm:$0xff]
  %v1381 = vld [vmem:[%s1368 + $0x60] sm:$0xff]
  %v1382 = vld [vmem:[%s1368 + $0x68] sm:$0xff]
  %v1383 = vld [vmem:[%s1368 + $0x70] sm:$0xff]
  %v1384 = vld [vmem:[%s1368 + $0x78] sm:$0xff]
  %v1385 = vadd.f32 %v1352, %v1369
  %v1386 = vadd.f32 %v1353, %v1370
  %v1387 = vadd.f32 %v1354, %v1371
  %v1388 = vadd.f32 %v1355, %v1372
  %v1389 = vadd.f32 %v1356, %v1373
  %v1390 = vadd.f32 %v1357, %v1374
  %v1391 = vadd.f32 %v1358, %v1375
  %v1392 = vadd.f32 %v1359, %v1376
  %v1393 = vadd.f32 %v1360, %v1377
  %v1394 = vadd.f32 %v1361, %v1378
  %v1395 = vadd.f32 %v1362, %v1379
  %v1396 = vadd.f32 %v1363, %v1380
  %v1397 = vadd.f32 %v1364, %v1381
  %v1398 = vadd.f32 %v1365, %v1382
  %v1399 = vadd.f32 %v1366, %v1383
  %v1400 = vadd.f32 %v1367, %v1384
  %v1401 = vmul.f32 %v1385, 0.25
  %v1402 = vmul.f32 %v1386, 0.25
  %v1403 = vmul.f32 %v1387, 0.25
  %v1404 = vmul.f32 %v1388, 0.25
  %v1405 = vmul.f32 %v1389, 0.25
  %v1406 = vmul.f32 %v1390, 0.25
  %v1407 = vmul.f32 %v1391, 0.25
  %v1408 = vmul.f32 %v1392, 0.25
  %v1409 = vmul.f32 %v1393, 0.25
  %v1410 = vmul.f32 %v1394, 0.25
  %v1411 = vmul.f32 %v1395, 0.25
  %v1412 = vmul.f32 %v1396, 0.25
  %v1413 = vmul.f32 %v1397, 0.25
  %v1414 = vmul.f32 %v1398, 0.25
  %v1415 = vmul.f32 %v1399, 0.25
  %v1416 = vmul.f32 %v1400, 0.25
  %v1417 = vpack.c.bf16 %v1402, %v1401
  %v1418 = vpack.c.bf16 %v1404, %v1403
  %v1419 = vpack.c.bf16 %v1406, %v1405
  %v1420 = vpack.c.bf16 %v1408, %v1407
  %v1421 = vpack.c.bf16 %v1410, %v1409
  %v1422 = vpack.c.bf16 %v1412, %v1411
  %v1423 = vpack.c.bf16 %v1414, %v1413
  %v1424 = vpack.c.bf16 %v1416, %v1415
  %v1425 = vld [vmem:[%s6] sm:$0xf]
  %v1426 = vld [vmem:[%s6 + $0x4] sm:$0xf]
  %v1427 = vld [vmem:[%s6 + $0x8] sm:$0x3]
  %v1428 = vpack.c.bf16 %v1271, %v1270
  %v1429 = vpack.c.bf16 %v1273, %v1272
  %v1430 = vpack.c.bf16 %v1275, %v1274
  %v1431 = vpack.c.bf16 %v1277, %v1276
  %v1432 = vpack.c.bf16 %v1279, %v1278
  %v1433 = vpack.c.bf16 %v1281, %v1280
  %v1434 = vpack.c.bf16 %v1283, %v1282
  %v1435 = vpack.c.bf16 %v1285, %v1284
  %v1436 = vld [vmem:[%s7] sm:$0xf]
  %v1437 = vld [vmem:[%s7 + $0x4] sm:$0xf]
  %v1440 = vunpack.c.l.b16 %v1436
  %v1441 = vunpack.c.l.b16 %v1437
  %v1442 = vpack.c.b16 %v1441, %v1440
  %vm1444 = vcmask 130048
  %v1446 = vsel %vm1444, %v1428, 0
  %v1449 = vsel %vm1444, %v1429, 0
  %v1452 = vsel %vm1444, %v1430, 0
  %v1455 = vsel %vm1444, %v1431, 0
  %v1458 = vsel %vm1444, %v1432, 0
  %v1461 = vsel %vm1444, %v1433, 0
  %v1464 = vsel %vm1444, %v1434, 0
  %v1467 = vsel %vm1444, %v1435, 0
  %1469 = vmatprep.subr.bf16.mxu0 0
  %1470 = vmatpush1.bf16.msra.mxu0 0
  %1471 = vmatprep.subr.bf16.mxu0 0
  %1472 = vmatpush1.bf16.msra.mxu0 0
  %1473 = vmatprep.subr.bf16.mxu0 0
  %1474 = vmatpush1.bf16.msra.mxu0 0
  %1475 = vmatprep.subr.bf16.mxu0 0
  %1476 = vmatpush1.bf16.msra.mxu0 0
  %1477 = vmatprep.subr.bf16.mxu0 0
  %1478 = vmatpush1.bf16.msra.mxu0 0
  %1479 = vmatprep.subr.bf16.mxu0 0
  %1480 = vmatpush1.bf16.msra.mxu0 0
  %1481 = vmatprep.subr.bf16.mxu0 0
  %1482 = vmatpush1.bf16.msra.mxu0 0
  %1483 = vmatprep.subr.bf16.mxu0 0
  %1484 = vmatpush1.bf16.msra.mxu0 %v1442
  %1485 = vmatprep.subr.bf16.mxu0 0
  %1486 = vmatpush2.bf16.msra.mxu0 0
  %1487 = vmatprep.subr.bf16.mxu0 0
  %1488 = vmatpush2.bf16.msra.mxu0 0
  %1489 = vmatprep.subr.bf16.mxu0 0
  %1490 = vmatpush2.bf16.msra.mxu0 0
  %1491 = vmatprep.subr.bf16.mxu0 0
  %1492 = vmatpush2.bf16.msra.mxu0 0
  %1493 = vmatprep.subr.bf16.mxu0 0
  %1494 = vmatpush2.bf16.msra.mxu0 0
  %1495 = vmatprep.subr.bf16.mxu0 0
  %1496 = vmatpush2.bf16.msra.mxu0 0
  %1497 = vmatprep.subr.bf16.mxu0 0
  %1498 = vmatpush2.bf16.msra.mxu0 0
  %1499 = vmatprep.subr.bf16.mxu0 0
  %1500 = vmatpush2.bf16.msra.mxu0 0
  %1501 = vmatprep.mubr.bf16.mxu0 0
  %1502 = vmatmul.mubr.bf16.gmra.mxu0 %v1446
  %v1503 = vpop.f32.mrf.mxu0
  %v1504 = vadd.f32 0.0, %v1503
  %v1505 = vpop.f32.mrf.mxu0
  %v1506 = vpop.f32.mrf.mxu0
  %v1507 = vadd.f32 0.0, %v1506
  %v1508 = vpop.f32.mrf.mxu0
  %1509 = vmatprep.mubr.bf16.mxu0 0
  %1510 = vmatmul.mubr.bf16.gmra.mxu0 %v1449
  %v1511 = vpop.f32.mrf.mxu0
  %v1512 = vadd.f32 0.0, %v1511
  %v1513 = vpop.f32.mrf.mxu0
  %v1514 = vpop.f32.mrf.mxu0
  %v1515 = vadd.f32 0.0, %v1514
  %v1516 = vpop.f32.mrf.mxu0
  %1517 = vmatprep.mubr.bf16.mxu0 0
  %1518 = vmatmul.mubr.bf16.gmra.mxu0 %v1452
  %v1519 = vpop.f32.mrf.mxu0
  %v1520 = vadd.f32 0.0, %v1519
  %v1521 = vpop.f32.mrf.mxu0
  %v1522 = vpop.f32.mrf.mxu0
  %v1523 = vadd.f32 0.0, %v1522
  %v1524 = vpop.f32.mrf.mxu0
  %1525 = vmatprep.mubr.bf16.mxu0 0
  %1526 = vmatmul.mubr.bf16.gmra.mxu0 %v1455
  %v1527 = vpop.f32.mrf.mxu0
  %v1528 = vadd.f32 0.0, %v1527
  %v1529 = vpop.f32.mrf.mxu0
  %v1530 = vpop.f32.mrf.mxu0
  %v1531 = vadd.f32 0.0, %v1530
  %v1532 = vpop.f32.mrf.mxu0
  %1533 = vmatprep.mubr.bf16.mxu0 0
  %1534 = vmatmul.mubr.bf16.gmra.mxu0 %v1458
  %v1535 = vpop.f32.mrf.mxu0
  %v1536 = vadd.f32 0.0, %v1535
  %v1537 = vpop.f32.mrf.mxu0
  %v1538 = vpop.f32.mrf.mxu0
  %v1539 = vadd.f32 0.0, %v1538
  %v1540 = vpop.f32.mrf.mxu0
  %1541 = vmatprep.mubr.bf16.mxu0 0
  %1542 = vmatmul.mubr.bf16.gmra.mxu0 %v1461
  %v1543 = vpop.f32.mrf.mxu0
  %v1544 = vadd.f32 0.0, %v1543
  %v1545 = vpop.f32.mrf.mxu0
  %v1546 = vpop.f32.mrf.mxu0
  %v1547 = vadd.f32 0.0, %v1546
  %v1548 = vpop.f32.mrf.mxu0
  %1549 = vmatprep.mubr.bf16.mxu0 0
  %1550 = vmatmul.mubr.bf16.gmra.mxu0 %v1464
  %v1551 = vpop.f32.mrf.mxu0
  %v1552 = vadd.f32 0.0, %v1551
  %v1553 = vpop.f32.mrf.mxu0
  %v1554 = vpop.f32.mrf.mxu0
  %v1555 = vadd.f32 0.0, %v1554
  %v1556 = vpop.f32.mrf.mxu0
  %1557 = vmatprep.mubr.bf16.mxu0 0
  %1558 = vmatmul.mubr.bf16.gmra.mxu0 %v1467
  %v1559 = vpop.f32.mrf.mxu0
  %v1560 = vadd.f32 0.0, %v1559
  %v1561 = vpop.f32.mrf.mxu0
  %v1562 = vpop.f32.mrf.mxu0
  %v1563 = vadd.f32 0.0, %v1562
  %v1564 = vpop.f32.mrf.mxu0
  %1565 = vdwg.mxu0
  %v1569 = vunpack.c.l.b16 %v1425
  %v1570 = vunpack.c.l.b16 %v1426
  %v1571 = vunpack.c.l.b16 %v1427
  %v1572 = vpack.c.b16 %v1570, %v1569
  %v1573 = vpack.c.b16 %v1571, %v1571
  %vm1575 = vcmask 154624
  %v1577 = vsel %vm1575, %v1417, 0
  %v1580 = vsel %vm1575, %v1418, 0
  %v1583 = vsel %vm1575, %v1419, 0
  %v1586 = vsel %vm1575, %v1420, 0
  %v1589 = vsel %vm1575, %v1421, 0
  %v1592 = vsel %vm1575, %v1422, 0
  %v1595 = vsel %vm1575, %v1423, 0
  %v1598 = vsel %vm1575, %v1424, 0
  %vm1600 = vcmask 1040384
  %vm1601 = vcmask 1041408
  %v1602 = vsel %vm1600, 4294967295, 65535
  %v1603 = vsel %vm1601, %v1602, 0
  %v1605 = vand.u32 %v1573, %v1603
  %1607 = vmatprep.subr.bf16.mxu0 0
  %1608 = vmatpush1.bf16.msra.mxu0 0
  %1609 = vmatprep.subr.bf16.mxu0 0
  %1610 = vmatpush1.bf16.msra.mxu0 0
  %1611 = vmatprep.subr.bf16.mxu0 0
  %1612 = vmatpush1.bf16.msra.mxu0 0
  %1613 = vmatprep.subr.bf16.mxu0 0
  %1614 = vmatpush1.bf16.msra.mxu0 0
  %1615 = vmatprep.subr.bf16.mxu0 0
  %1616 = vmatpush1.bf16.msra.mxu0 0
  %1617 = vmatprep.subr.bf16.mxu0 0
  %1618 = vmatpush1.bf16.msra.mxu0 0
  %1619 = vmatprep.subr.bf16.mxu0 0
  %1620 = vmatpush1.bf16.msra.mxu0 %v1605
  %1621 = vmatprep.subr.bf16.mxu0 0
  %1622 = vmatpush1.bf16.msra.mxu0 %v1572
  %1623 = vmatprep.subr.bf16.mxu0 0
  %1624 = vmatpush2.bf16.msra.mxu0 0
  %1625 = vmatprep.subr.bf16.mxu0 0
  %1626 = vmatpush2.bf16.msra.mxu0 0
  %1627 = vmatprep.subr.bf16.mxu0 0
  %1628 = vmatpush2.bf16.msra.mxu0 0
  %1629 = vmatprep.subr.bf16.mxu0 0
  %1630 = vmatpush2.bf16.msra.mxu0 0
  %1631 = vmatprep.subr.bf16.mxu0 0
  %1632 = vmatpush2.bf16.msra.mxu0 0
  %1633 = vmatprep.subr.bf16.mxu0 0
  %1634 = vmatpush2.bf16.msra.mxu0 0
  %1635 = vmatprep.subr.bf16.mxu0 0
  %1636 = vmatpush2.bf16.msra.mxu0 0
  %1637 = vmatprep.subr.bf16.mxu0 0
  %1638 = vmatpush2.bf16.msra.mxu0 0
  %1639 = vmatprep.mubr.bf16.mxu0 0
  %1640 = vmatmul.mubr.bf16.gmra.mxu0 %v1577
  %v1641 = vpop.f32.mrf.mxu0
  %v1642 = vadd.f32 %v1504, %v1641
  %v1643 = vpop.f32.mrf.mxu0
  %v1644 = vpop.f32.mrf.mxu0
  %v1645 = vadd.f32 %v1507, %v1644
  %v1646 = vpop.f32.mrf.mxu0
  %1647 = vmatprep.mubr.bf16.mxu0 0
  %1648 = vmatmul.mubr.bf16.gmra.mxu0 %v1580
  %v1649 = vpop.f32.mrf.mxu0
  %v1650 = vadd.f32 %v1512, %v1649
  %v1651 = vpop.f32.mrf.mxu0
  %v1652 = vpop.f32.mrf.mxu0
  %v1653 = vadd.f32 %v1515, %v1652
  %v1654 = vpop.f32.mrf.mxu0
  %1655 = vmatprep.mubr.bf16.mxu0 0
  %1656 = vmatmul.mubr.bf16.gmra.mxu0 %v1583
  %v1657 = vpop.f32.mrf.mxu0
  %v1658 = vadd.f32 %v1520, %v1657
  %v1659 = vpop.f32.mrf.mxu0
  %v1660 = vpop.f32.mrf.mxu0
  %v1661 = vadd.f32 %v1523, %v1660
  %v1662 = vpop.f32.mrf.mxu0
  %1663 = vmatprep.mubr.bf16.mxu0 0
  %1664 = vmatmul.mubr.bf16.gmra.mxu0 %v1586
  %v1665 = vpop.f32.mrf.mxu0
  %v1666 = vadd.f32 %v1528, %v1665
  %v1667 = vpop.f32.mrf.mxu0
  %v1668 = vpop.f32.mrf.mxu0
  %v1669 = vadd.f32 %v1531, %v1668
  %v1670 = vpop.f32.mrf.mxu0
  %1671 = vmatprep.mubr.bf16.mxu0 0
  %1672 = vmatmul.mubr.bf16.gmra.mxu0 %v1589
  %v1673 = vpop.f32.mrf.mxu0
  %v1674 = vadd.f32 %v1536, %v1673
  %v1675 = vpop.f32.mrf.mxu0
  %v1676 = vpop.f32.mrf.mxu0
  %v1677 = vadd.f32 %v1539, %v1676
  %v1678 = vpop.f32.mrf.mxu0
  %1679 = vmatprep.mubr.bf16.mxu0 0
  %1680 = vmatmul.mubr.bf16.gmra.mxu0 %v1592
  %v1681 = vpop.f32.mrf.mxu0
  %v1682 = vadd.f32 %v1544, %v1681
  %v1683 = vpop.f32.mrf.mxu0
  %v1684 = vpop.f32.mrf.mxu0
  %v1685 = vadd.f32 %v1547, %v1684
  %v1686 = vpop.f32.mrf.mxu0
  %1687 = vmatprep.mubr.bf16.mxu0 0
  %1688 = vmatmul.mubr.bf16.gmra.mxu0 %v1595
  %v1689 = vpop.f32.mrf.mxu0
  %v1690 = vadd.f32 %v1552, %v1689
  %v1691 = vpop.f32.mrf.mxu0
  %v1692 = vpop.f32.mrf.mxu0
  %v1693 = vadd.f32 %v1555, %v1692
  %v1694 = vpop.f32.mrf.mxu0
  %1695 = vmatprep.mubr.bf16.mxu0 0
  %1696 = vmatmul.mubr.bf16.gmra.mxu0 %v1598
  %v1697 = vpop.f32.mrf.mxu0
  %v1698 = vadd.f32 %v1560, %v1697
  %v1699 = vpop.f32.mrf.mxu0
  %v1700 = vpop.f32.mrf.mxu0
  %v1701 = vadd.f32 %v1563, %v1700
  %v1702 = vpop.f32.mrf.mxu0
  %1703 = vdwg.mxu0
  %v1704 = vld [vmem:[%s8] sm:$0x1]
  %v1706 = vlaneseq
  %v1707 = vshrl.u32 %v1706, 7
  %v1708 = vsub.s32 0, %v1707
  %v1709 = vrot.slane %v1704, %v1708
  %v1711 = vadd.f32 %v1642, %v1709
  %v1712 = vadd.f32 %v1645, %v1709
  %v1713 = vadd.f32 %v1650, %v1709
  %v1714 = vadd.f32 %v1653, %v1709
  %v1715 = vadd.f32 %v1658, %v1709
  %v1716 = vadd.f32 %v1661, %v1709
  %v1717 = vadd.f32 %v1666, %v1709
  %v1718 = vadd.f32 %v1669, %v1709
  %v1719 = vadd.f32 %v1674, %v1709
  %v1720 = vadd.f32 %v1677, %v1709
  %v1721 = vadd.f32 %v1682, %v1709
  %v1722 = vadd.f32 %v1685, %v1709
  %v1723 = vadd.f32 %v1690, %v1709
  %v1724 = vadd.f32 %v1693, %v1709
  %v1725 = vadd.f32 %v1698, %v1709
  %v1726 = vadd.f32 %v1701, %v1709
  %vm1727 = vcmask 138240
  %1728 = vst.msk [vmem:[%s9] sm:$0xff] %vm1727, %v1711
  %1729 = vst.msk [vmem:[%s9 + $0x8] sm:$0xff] %vm1727, %v1712
  %1730 = vst.msk [vmem:[%s9 + $0x10] sm:$0xff] %vm1727, %v1713
  %1731 = vst.msk [vmem:[%s9 + $0x18] sm:$0xff] %vm1727, %v1714
  %1732 = vst.msk [vmem:[%s9 + $0x20] sm:$0xff] %vm1727, %v1715
  %1733 = vst.msk [vmem:[%s9 + $0x28] sm:$0xff] %vm1727, %v1716
  %1734 = vst.msk [vmem:[%s9 + $0x30] sm:$0xff] %vm1727, %v1717
  %1735 = vst.msk [vmem:[%s9 + $0x38] sm:$0xff] %vm1727, %v1718
  %1736 = vst.msk [vmem:[%s9 + $0x40] sm:$0xff] %vm1727, %v1719
  %1737 = vst.msk [vmem:[%s9 + $0x48] sm:$0xff] %vm1727, %v1720
  %1738 = vst.msk [vmem:[%s9 + $0x50] sm:$0xff] %vm1727, %v1721
  %1739 = vst.msk [vmem:[%s9 + $0x58] sm:$0xff] %vm1727, %v1722
  %1740 = vst.msk [vmem:[%s9 + $0x60] sm:$0xff] %vm1727, %v1723
  %1741 = vst.msk [vmem:[%s9 + $0x68] sm:$0xff] %vm1727, %v1724
  %1742 = vst.msk [vmem:[%s9 + $0x70] sm:$0xff] %vm1727, %v1725
  %1743 = vst.msk [vmem:[%s9 + $0x78] sm:$0xff] %vm1727, %v1726
  // Predicated region
  $region38: #{fcn_forward.8} parent=0 // pred_check
    _
  $region39: #{fcn_forward.8} parent=0 // pred_check_branch
    %1745 = sbr.rel (0) target = $region41
  $region40: #{fcn_forward.8} parent=0 // pred_region
    _
  $region41: #{fcn_forward.8} parent=0 // pred_fallthru
    _
  // Predicated region
  $region42: #{fcn_forward.8} parent=0 // pred_check
    _
  $region43: #{fcn_forward.8} parent=0 // pred_check_branch
    %1747 = sbr.rel (0) target = $region45
  $region44: #{fcn_forward.8} parent=0 // pred_region
    _
  $region45: #{fcn_forward.8} parent=0 // pred_fallthru
    _

// kernel: fcn_forward.9
$region0: #{fcn_forward.9}
  #allocation0 [shape = 'u32[]', space=smem, size = 0x4, offset = 0x4, fixed_abs, tag = 'smem constant byte address 0x4 - core index']
  #allocation1 [shape = 'u32[144,128]{1,0:T(1,128)}', space=vmem, size = 0x12000, scoped, tag = 'internal scratch']
  %s0 = inlined_call_operand.vmem [shape: f32[128,153], index: 0, kind: input, shape index: {}]
  %s1 = inlined_call_operand.vmem [shape: f32[1,153], index: 1, kind: input, shape index: {}]
  %s2 = inlined_call_operand.vmem [shape: f32[1,153], index: 2, kind: input, shape index: {}]
  %s3 = inlined_call_operand.vmem [shape: bf16[153,16], index: 3, kind: input, shape index: {}]
  %s4 = inlined_call_operand.vmem [shape: f32[1,16], index: 4, kind: input, shape index: {}]
  %s5 = inlined_call_operand.vmem [shape: f32[128,16], index: 5, kind: output, shape index: {}]
  %s6 = sld [smem:[#allocation0]]
  $region30: #{fcn_forward.9} parent=0
    _
  %s8 = ssub.s32 1, %s6
  %s9 = scalar_select 0, %s8, %s6
  // Predicated region
  $region2: #{fcn_forward.9} parent=0 // pred_check
    _
  $region3: #{fcn_forward.9} parent=0 // pred_check_branch
    %11 = sbr.rel (0) target = $region5
  $region4: #{fcn_forward.9} parent=0 // pred_region
    _
  $region5: #{fcn_forward.9} parent=0 // pred_fallthru
    _
  // Predicated region
  $region6: #{fcn_forward.9} parent=0 // pred_check
    _
  $region7: #{fcn_forward.9} parent=0 // pred_check_branch
    %13 = sbr.rel (0) target = $region9
  $region8: #{fcn_forward.9} parent=0 // pred_region
    _
  $region9: #{fcn_forward.9} parent=0 // pred_fallthru
    _
  // Predicated region
  $region10: #{fcn_forward.9} parent=0 // pred_check
    _
  $region11: #{fcn_forward.9} parent=0 // pred_check_branch
    %15 = sbr.rel (0) target = $region13
  $region12: #{fcn_forward.9} parent=0 // pred_region
    _
  $region13: #{fcn_forward.9} parent=0 // pred_fallthru
    _
  // Predicated region
  $region14: #{fcn_forward.9} parent=0 // pred_check
    _
  $region15: #{fcn_forward.9} parent=0 // pred_check_branch
    %17 = sbr.rel (0) target = $region17
  $region16: #{fcn_forward.9} parent=0 // pred_region
    _
  $region17: #{fcn_forward.9} parent=0 // pred_fallthru
    _
  // Predicated region
  $region18: #{fcn_forward.9} parent=0 // pred_check
    _
  $region19: #{fcn_forward.9} parent=0 // pred_check_branch
    %19 = sbr.rel (0) target = $region21
  $region20: #{fcn_forward.9} parent=0 // pred_region
    _
  $region21: #{fcn_forward.9} parent=0 // pred_fallthru
    _
  %v21 = vld [vmem:[%s0] sm:$0xff]
  %v22 = vld [vmem:[%s0 + $0x8] sm:$0xff]
  %v23 = vld [vmem:[%s0 + $0x10] sm:$0xff]
  %v24 = vld [vmem:[%s0 + $0x18] sm:$0xff]
  %v25 = vld [vmem:[%s0 + $0x20] sm:$0xff]
  %v26 = vld [vmem:[%s0 + $0x28] sm:$0xff]
  %v27 = vld [vmem:[%s0 + $0x30] sm:$0xff]
  %v28 = vld [vmem:[%s0 + $0x38] sm:$0xff]
  %v29 = vld [vmem:[%s0 + $0x40] sm:$0xff]
  %v30 = vld [vmem:[%s0 + $0x48] sm:$0xff]
  %v31 = vld [vmem:[%s0 + $0x50] sm:$0xff]
  %v32 = vld [vmem:[%s0 + $0x58] sm:$0xff]
  %v33 = vld [vmem:[%s0 + $0x60] sm:$0xff]
  %v34 = vld [vmem:[%s0 + $0x68] sm:$0xff]
  %v35 = vld [vmem:[%s0 + $0x70] sm:$0xff]
  %v36 = vld [vmem:[%s0 + $0x78] sm:$0xff]
  %v37 = vld [vmem:[%s0 + $0x80] sm:$0xff]
  %v38 = vld [vmem:[%s0 + $0x88] sm:$0xff]
  %v39 = vld [vmem:[%s0 + $0x90] sm:$0xff]
  %v40 = vld [vmem:[%s0 + $0x98] sm:$0xff]
  %v41 = vld [vmem:[%s0 + $0xa0] sm:$0xff]
  %v42 = vld [vmem:[%s0 + $0xa8] sm:$0xff]
  %v43 = vld [vmem:[%s0 + $0xb0] sm:$0xff]
  %v44 = vld [vmem:[%s0 + $0xb8] sm:$0xff]
  %v45 = vld [vmem:[%s0 + $0xc0] sm:$0xff]
  %v46 = vld [vmem:[%s0 + $0xc8] sm:$0xff]
  %v47 = vld [vmem:[%s0 + $0xd0] sm:$0xff]
  %v48 = vld [vmem:[%s0 + $0xd8] sm:$0xff]
  %v49 = vld [vmem:[%s0 + $0xe0] sm:$0xff]
  %v50 = vld [vmem:[%s0 + $0xe8] sm:$0xff]
  %v51 = vld [vmem:[%s0 + $0xf0] sm:$0xff]
  %v52 = vld [vmem:[%s0 + $0xf8] sm:$0xff]
  %v53 = vld [vmem:[%s1] sm:$0x3]
  %v55 = vlaneseq
  %v56 = vshrl.u32 %v55, 7
  %v57 = vsub.s32 0, %v56
  %v58 = vrot.slane %v53, %v57
  %v59 = vlaneseq
  %v60 = vshrl.u32 %v59, 7
  %v61 = vsub.s32 1, %v60
  %v62 = vrot.slane %v53, %v61
  %v65 = vmul.f32 %v21, %v58
  %v66 = vmul.f32 %v22, %v62
  %v67 = vmul.f32 %v23, %v58
  %v68 = vmul.f32 %v24, %v62
  %v69 = vmul.f32 %v25, %v58
  %v70 = vmul.f32 %v26, %v62
  %v71 = vmul.f32 %v27, %v58
  %v72 = vmul.f32 %v28, %v62
  %v73 = vmul.f32 %v29, %v58
  %v74 = vmul.f32 %v30, %v62
  %v75 = vmul.f32 %v31, %v58
  %v76 = vmul.f32 %v32, %v62
  %v77 = vmul.f32 %v33, %v58
  %v78 = vmul.f32 %v34, %v62
  %v79 = vmul.f32 %v35, %v58
  %v80 = vmul.f32 %v36, %v62
  %v81 = vmul.f32 %v37, %v58
  %v82 = vmul.f32 %v38, %v62
  %v83 = vmul.f32 %v39, %v58
  %v84 = vmul.f32 %v40, %v62
  %v85 = vmul.f32 %v41, %v58
  %v86 = vmul.f32 %v42, %v62
  %v87 = vmul.f32 %v43, %v58
  %v88 = vmul.f32 %v44, %v62
  %v89 = vmul.f32 %v45, %v58
  %v90 = vmul.f32 %v46, %v62
  %v91 = vmul.f32 %v47, %v58
  %v92 = vmul.f32 %v48, %v62
  %v93 = vmul.f32 %v49, %v58
  %v94 = vmul.f32 %v50, %v62
  %v95 = vmul.f32 %v51, %v58
  %v96 = vmul.f32 %v52, %v62
  %v97 = vld [vmem:[%s2] sm:$0x3]
  %v99 = vlaneseq
  %v100 = vshrl.u32 %v99, 7
  %v101 = vsub.s32 0, %v100
  %v102 = vrot.slane %v97, %v101
  %v103 = vlaneseq
  %v104 = vshrl.u32 %v103, 7
  %v105 = vsub.s32 1, %v104
  %v106 = vrot.slane %v97, %v105
  %v109 = vadd.f32 %v65, %v102
  %v110 = vadd.f32 %v66, %v106
  %v111 = vadd.f32 %v67, %v102
  %v112 = vadd.f32 %v68, %v106
  %v113 = vadd.f32 %v69, %v102
  %v114 = vadd.f32 %v70, %v106
  %v115 = vadd.f32 %v71, %v102
  %v116 = vadd.f32 %v72, %v106
  %v117 = vadd.f32 %v73, %v102
  %v118 = vadd.f32 %v74, %v106
  %v119 = vadd.f32 %v75, %v102
  %v120 = vadd.f32 %v76, %v106
  %v121 = vadd.f32 %v77, %v102
  %v122 = vadd.f32 %v78, %v106
  %v123 = vadd.f32 %v79, %v102
  %v124 = vadd.f32 %v80, %v106
  %v125 = vadd.f32 %v81, %v102
  %v126 = vadd.f32 %v82, %v106
  %v127 = vadd.f32 %v83, %v102
  %v128 = vadd.f32 %v84, %v106
  %v129 = vadd.f32 %v85, %v102
  %v130 = vadd.f32 %v86, %v106
  %v131 = vadd.f32 %v87, %v102
  %v132 = vadd.f32 %v88, %v106
  %v133 = vadd.f32 %v89, %v102
  %v134 = vadd.f32 %v90, %v106
  %v135 = vadd.f32 %v91, %v102
  %v136 = vadd.f32 %v92, %v106
  %v137 = vadd.f32 %v93, %v102
  %v138 = vadd.f32 %v94, %v106
  %v139 = vadd.f32 %v95, %v102
  %v140 = vadd.f32 %v96, %v106
  %v141 = vmax.f32 %v109, 0.0
  %v142 = vmax.f32 %v110, 0.0
  %v143 = vmax.f32 %v111, 0.0
  %v144 = vmax.f32 %v112, 0.0
  %v145 = vmax.f32 %v113, 0.0
  %v146 = vmax.f32 %v114, 0.0
  %v147 = vmax.f32 %v115, 0.0
  %v148 = vmax.f32 %v116, 0.0
  %v149 = vmax.f32 %v117, 0.0
  %v150 = vmax.f32 %v118, 0.0
  %v151 = vmax.f32 %v119, 0.0
  %v152 = vmax.f32 %v120, 0.0
  %v153 = vmax.f32 %v121, 0.0
  %v154 = vmax.f32 %v122, 0.0
  %v155 = vmax.f32 %v123, 0.0
  %v156 = vmax.f32 %v124, 0.0
  %v157 = vmax.f32 %v125, 0.0
  %v158 = vmax.f32 %v126, 0.0
  %v159 = vmax.f32 %v127, 0.0
  %v160 = vmax.f32 %v128, 0.0
  %v161 = vmax.f32 %v129, 0.0
  %v162 = vmax.f32 %v130, 0.0
  %v163 = vmax.f32 %v131, 0.0
  %v164 = vmax.f32 %v132, 0.0
  %v165 = vmax.f32 %v133, 0.0
  %v166 = vmax.f32 %v134, 0.0
  %v167 = vmax.f32 %v135, 0.0
  %v168 = vmax.f32 %v136, 0.0
  %v169 = vmax.f32 %v137, 0.0
  %v170 = vmax.f32 %v138, 0.0
  %v171 = vmax.f32 %v139, 0.0
  %v172 = vmax.f32 %v140, 0.0
  %v173 = vpack.c.bf16 %v143, %v141
  %v174 = vpack.c.bf16 %v144, %v142
  %v175 = vpack.c.bf16 %v147, %v145
  %v176 = vpack.c.bf16 %v148, %v146
  %v177 = vpack.c.bf16 %v151, %v149
  %v178 = vpack.c.bf16 %v152, %v150
  %v179 = vpack.c.bf16 %v155, %v153
  %v180 = vpack.c.bf16 %v156, %v154
  %v181 = vpack.c.bf16 %v159, %v157
  %v182 = vpack.c.bf16 %v160, %v158
  %v183 = vpack.c.bf16 %v163, %v161
  %v184 = vpack.c.bf16 %v164, %v162
  %v185 = vpack.c.bf16 %v167, %v165
  %v186 = vpack.c.bf16 %v168, %v166
  %v187 = vpack.c.bf16 %v171, %v169
  %v188 = vpack.c.bf16 %v172, %v170
  %v189 = vld [vmem:[%s3] sm:$0xf]
  %v190 = vld [vmem:[%s3 + $0x4] sm:$0xf]
  %v191 = vld [vmem:[%s3 + $0x8] sm:$0xf]
  %v192 = vld [vmem:[%s3 + $0xc] sm:$0xf]
  %v193 = vld [vmem:[%s3 + $0x10] sm:$0xf]
  %v194 = vld [vmem:[%s3 + $0x14] sm:$0xf]
  %v195 = vld [vmem:[%s3 + $0x18] sm:$0xf]
  %v196 = vld [vmem:[%s3 + $0x1c] sm:$0xf]
  %v197 = vld [vmem:[%s3 + $0x20] sm:$0xf]
  %v198 = vld [vmem:[%s3 + $0x24] sm:$0xf]
  %v199 = vld [vmem:[%s3 + $0x28] sm:$0xf]
  %v200 = vld [vmem:[%s3 + $0x2c] sm:$0xf]
  %v201 = vld [vmem:[%s3 + $0x30] sm:$0xf]
  %v202 = vld [vmem:[%s3 + $0x34] sm:$0xf]
  %v203 = vld [vmem:[%s3 + $0x38] sm:$0xf]
  %v204 = vld [vmem:[%s3 + $0x3c] sm:$0xf]
  %v205 = vld [vmem:[%s3 + $0x40] sm:$0xf]
  %v206 = vld [vmem:[%s3 + $0x44] sm:$0xf]
  %v207 = vld [vmem:[%s3 + $0x48] sm:$0xf]
  %v208 = vld [vmem:[%s3 + $0x4c] sm:$0x1]
  %v209 = vld [vmem:[%s4] sm:$0x1]
  %v211 = vlaneseq
  %v212 = vshrl.u32 %v211, 7
  %v213 = vsub.s32 0, %v212
  %v214 = vrot.slane %v209, %v213
  %v236 = vunpack.c.l.b16 %v189
  %v237 = vunpack.c.l.b16 %v190
  %v238 = vunpack.c.l.b16 %v191
  %v239 = vunpack.c.l.b16 %v192
  %v240 = vunpack.c.l.b16 %v193
  %v241 = vunpack.c.l.b16 %v194
  %v242 = vunpack.c.l.b16 %v195
  %v243 = vunpack.c.l.b16 %v196
  %v244 = vunpack.c.l.b16 %v197
  %v245 = vunpack.c.l.b16 %v198
  %v246 = vunpack.c.l.b16 %v199
  %v247 = vunpack.c.l.b16 %v200
  %v248 = vunpack.c.l.b16 %v201
  %v249 = vunpack.c.l.b16 %v202
  %v250 = vunpack.c.l.b16 %v203
  %v251 = vunpack.c.l.b16 %v204
  %v252 = vunpack.c.l.b16 %v205
  %v253 = vunpack.c.l.b16 %v206
  %v254 = vunpack.c.l.b16 %v207
  %v255 = vunpack.c.l.b16 %v208
  %v256 = vpack.c.b16 %v237, %v236
  %v257 = vpack.c.b16 %v239, %v238
  %v258 = vpack.c.b16 %v241, %v240
  %v259 = vpack.c.b16 %v243, %v242
  %v260 = vpack.c.b16 %v245, %v244
  %v261 = vpack.c.b16 %v247, %v246
  %v262 = vpack.c.b16 %v249, %v248
  %v263 = vpack.c.b16 %v251, %v250
  %v264 = vpack.c.b16 %v253, %v252
  %v265 = vpack.c.b16 %v255, %v254
  %vm275 = vcmask 203776
  %v277 = vsel %vm275, %v174, 0
  %v280 = vsel %vm275, %v176, 0
  %v283 = vsel %vm275, %v178, 0
  %v286 = vsel %vm275, %v180, 0
  %v289 = vsel %vm275, %v182, 0
  %v292 = vsel %vm275, %v184, 0
  %v295 = vsel %vm275, %v186, 0
  %v298 = vsel %vm275, %v188, 0
  %vm300 = vcmask 1043456
  %vm301 = vcmask 1044480
  %v302 = vsel %vm300, 4294967295, 65535
  %v303 = vsel %vm301, %v302, 0
  %v305 = vand.u32 %v265, %v303
  %307 = vmatprep.subr.bf16.mxu0 0
  %308 = vmatpush1.bf16.msra.mxu0 %v263
  %309 = vmatprep.subr.bf16.mxu0 0
  %310 = vmatpush1.bf16.msra.mxu0 %v262
  %311 = vmatprep.subr.bf16.mxu0 0
  %312 = vmatpush1.bf16.msra.mxu0 %v261
  %313 = vmatprep.subr.bf16.mxu0 0
  %314 = vmatpush1.bf16.msra.mxu0 %v260
  %315 = vmatprep.subr.bf16.mxu0 0
  %316 = vmatpush1.bf16.msra.mxu0 %v259
  %317 = vmatprep.subr.bf16.mxu0 0
  %318 = vmatpush1.bf16.msra.mxu0 %v258
  %319 = vmatprep.subr.bf16.mxu0 0
  %320 = vmatpush1.bf16.msra.mxu0 %v257
  %321 = vmatprep.subr.bf16.mxu0 0
  %322 = vmatpush1.bf16.msra.mxu0 %v256
  %323 = vmatprep.subr.bf16.mxu0 0
  %324 = vmatpush2.bf16.msra.mxu0 0
  %325 = vmatprep.subr.bf16.mxu0 0
  %326 = vmatpush2.bf16.msra.mxu0 0
  %327 = vmatprep.subr.bf16.mxu0 0
  %328 = vmatpush2.bf16.msra.mxu0 0
  %329 = vmatprep.subr.bf16.mxu0 0
  %330 = vmatpush2.bf16.msra.mxu0 0
  %331 = vmatprep.subr.bf16.mxu0 0
  %332 = vmatpush2.bf16.msra.mxu0 0
  %333 = vmatprep.subr.bf16.mxu0 0
  %334 = vmatpush2.bf16.msra.mxu0 0
  %335 = vmatprep.subr.bf16.mxu0 0
  %336 = vmatpush2.bf16.msra.mxu0 %v305
  %337 = vmatprep.subr.bf16.mxu0 0
  %338 = vmatpush2.bf16.msra.mxu0 %v264
  %339 = vmatprep.mubr.bf16.mxu0 %v277
  %340 = vmatmul.mubr.bf16.gmra.mxu0 %v173
  %v341 = vpop.f32.mrf.mxu0
  %v342 = vadd.f32 %v214, %v341
  %v343 = vpop.f32.mrf.mxu0
  %v344 = vpop.f32.mrf.mxu0
  %v345 = vadd.f32 %v214, %v344
  %v346 = vpop.f32.mrf.mxu0
  %347 = vmatprep.mubr.bf16.mxu0 %v280
  %348 = vmatmul.mubr.bf16.gmra.mxu0 %v175
  %v349 = vpop.f32.mrf.mxu0
  %v350 = vadd.f32 %v214, %v349
  %v351 = vpop.f32.mrf.mxu0
  %v352 = vpop.f32.mrf.mxu0
  %v353 = vadd.f32 %v214, %v352
  %v354 = vpop.f32.mrf.mxu0
  %355 = vmatprep.mubr.bf16.mxu0 %v283
  %356 = vmatmul.mubr.bf16.gmra.mxu0 %v177
  %v357 = vpop.f32.mrf.mxu0
  %v358 = vadd.f32 %v214, %v357
  %v359 = vpop.f32.mrf.mxu0
  %v360 = vpop.f32.mrf.mxu0
  %v361 = vadd.f32 %v214, %v360
  %v362 = vpop.f32.mrf.mxu0
  %363 = vmatprep.mubr.bf16.mxu0 %v286
  %364 = vmatmul.mubr.bf16.gmra.mxu0 %v179
  %v365 = vpop.f32.mrf.mxu0
  %v366 = vadd.f32 %v214, %v365
  %v367 = vpop.f32.mrf.mxu0
  %v368 = vpop.f32.mrf.mxu0
  %v369 = vadd.f32 %v214, %v368
  %v370 = vpop.f32.mrf.mxu0
  %371 = vmatprep.mubr.bf16.mxu0 %v289
  %372 = vmatmul.mubr.bf16.gmra.mxu0 %v181
  %v373 = vpop.f32.mrf.mxu0
  %v374 = vadd.f32 %v214, %v373
  %v375 = vpop.f32.mrf.mxu0
  %v376 = vpop.f32.mrf.mxu0
  %v377 = vadd.f32 %v214, %v376
  %v378 = vpop.f32.mrf.mxu0
  %379 = vmatprep.mubr.bf16.mxu0 %v292
  %380 = vmatmul.mubr.bf16.gmra.mxu0 %v183
  %v381 = vpop.f32.mrf.mxu0
  %v382 = vadd.f32 %v214, %v381
  %v383 = vpop.f32.mrf.mxu0
  %v384 = vpop.f32.mrf.mxu0
  %v385 = vadd.f32 %v214, %v384
  %v386 = vpop.f32.mrf.mxu0
  %387 = vmatprep.mubr.bf16.mxu0 %v295
  %388 = vmatmul.mubr.bf16.gmra.mxu0 %v185
  %v389 = vpop.f32.mrf.mxu0
  %v390 = vadd.f32 %v214, %v389
  %v391 = vpop.f32.mrf.mxu0
  %v392 = vpop.f32.mrf.mxu0
  %v393 = vadd.f32 %v214, %v392
  %v394 = vpop.f32.mrf.mxu0
  %395 = vmatprep.mubr.bf16.mxu0 %v298
  %396 = vmatmul.mubr.bf16.gmra.mxu0 %v187
  %v397 = vpop.f32.mrf.mxu0
  %v398 = vadd.f32 %v214, %v397
  %v399 = vpop.f32.mrf.mxu0
  %v400 = vpop.f32.mrf.mxu0
  %v401 = vadd.f32 %v214, %v400
  %v402 = vpop.f32.mrf.mxu0
  %403 = vdwg.mxu0
  %vm404 = vcmask 130048
  %405 = vst.msk [vmem:[%s5] sm:$0xff] %vm404, %v342
  %406 = vst.msk [vmem:[%s5 + $0x8] sm:$0xff] %vm404, %v345
  %407 = vst.msk [vmem:[%s5 + $0x10] sm:$0xff] %vm404, %v350
  %408 = vst.msk [vmem:[%s5 + $0x18] sm:$0xff] %vm404, %v353
  %409 = vst.msk [vmem:[%s5 + $0x20] sm:$0xff] %vm404, %v358
  %410 = vst.msk [vmem:[%s5 + $0x28] sm:$0xff] %vm404, %v361
  %411 = vst.msk [vmem:[%s5 + $0x30] sm:$0xff] %vm404, %v366
  %412 = vst.msk [vmem:[%s5 + $0x38] sm:$0xff] %vm404, %v369
  %413 = vst.msk [vmem:[%s5 + $0x40] sm:$0xff] %vm404, %v374
  %414 = vst.msk [vmem:[%s5 + $0x48] sm:$0xff] %vm404, %v377
  %415 = vst.msk [vmem:[%s5 + $0x50] sm:$0xff] %vm404, %v382
  %416 = vst.msk [vmem:[%s5 + $0x58] sm:$0xff] %vm404, %v385
  %417 = vst.msk [vmem:[%s5 + $0x60] sm:$0xff] %vm404, %v390
  %418 = vst.msk [vmem:[%s5 + $0x68] sm:$0xff] %vm404, %v393
  %419 = vst.msk [vmem:[%s5 + $0x70] sm:$0xff] %vm404, %v398
  %420 = vst.msk [vmem:[%s5 + $0x78] sm:$0xff] %vm404, %v401
  // Predicated region
  $region22: #{fcn_forward.9} parent=0 // pred_check
    _
  $region23: #{fcn_forward.9} parent=0 // pred_check_branch
    %422 = sbr.rel (0) target = $region25
  $region24: #{fcn_forward.9} parent=0 // pred_region
    _
  $region25: #{fcn_forward.9} parent=0 // pred_fallthru
    _
  // Predicated region
  $region26: #{fcn_forward.9} parent=0 // pred_check
    _
  $region27: #{fcn_forward.9} parent=0 // pred_check_branch
    %424 = sbr.rel (0) target = $region29
  $region28: #{fcn_forward.9} parent=0 // pred_region
    _
  $region29: #{fcn_forward.9} parent=0 // pred_fallthru
    _

// kernel: fcn_forward.10
$region0: #{fcn_forward.10}
  #allocation0 [shape = 'u32[]', space=smem, size = 0x4, offset = 0x4, fixed_abs, tag = 'smem constant byte address 0x4 - core index']
  #allocation1 [shape = 'u32[144,128]{1,0:T(1,128)}', space=vmem, size = 0x12000, scoped, tag = 'internal scratch']
  %s0 = inlined_call_operand.vmem [shape: f32[4,32,297], index: 0, kind: input, shape index: {}]
  %s1 = inlined_call_operand.vmem [shape: f32[1,297], index: 1, kind: input, shape index: {}]
  %s2 = inlined_call_operand.vmem [shape: f32[1,297], index: 2, kind: input, shape index: {}]
  %s3 = inlined_call_operand.vmem [shape: bf16[297,16], index: 3, kind: input, shape index: {}]
  %s4 = inlined_call_operand.vmem [shape: f32[1,16], index: 4, kind: input, shape index: {}]
  %s5 = inlined_call_operand.vmem [shape: f32[4,32,33], index: 5, kind: input, shape index: {}]
  %s6 = inlined_call_operand.vmem [shape: f32[32,33], index: 6, kind: output, shape index: {0}]
  %s7 = inlined_call_operand.vmem [shape: f32[32,16], index: 7, kind: output, shape index: {1}]
  %8 = xla_tuple %s6, %s7
  %s9 = sld [smem:[#allocation0]]
  $region42: #{fcn_forward.10} parent=0
    _
  %s11 = ssub.s32 1, %s9
  %s12 = scalar_select 0, %s11, %s9
  // Predicated region
  $region2: #{fcn_forward.10} parent=0 // pred_check
    _
  $region3: #{fcn_forward.10} parent=0 // pred_check_branch
    %14 = sbr.rel (0) target = $region5
  $region4: #{fcn_forward.10} parent=0 // pred_region
    _
  $region5: #{fcn_forward.10} parent=0 // pred_fallthru
    _
  // Predicated region
  $region6: #{fcn_forward.10} parent=0 // pred_check
    _
  $region7: #{fcn_forward.10} parent=0 // pred_check_branch
    %16 = sbr.rel (0) target = $region9
  $region8: #{fcn_forward.10} parent=0 // pred_region
    _
  $region9: #{fcn_forward.10} parent=0 // pred_fallthru
    _
  // Predicated region
  $region10: #{fcn_forward.10} parent=0 // pred_check
    _
  $region11: #{fcn_forward.10} parent=0 // pred_check_branch
    %18 = sbr.rel (0) target = $region13
  $region12: #{fcn_forward.10} parent=0 // pred_region
    _
  $region13: #{fcn_forward.10} parent=0 // pred_fallthru
    _
  // Predicated region
  $region14: #{fcn_forward.10} parent=0 // pred_check
    _
  $region15: #{fcn_forward.10} parent=0 // pred_check_branch
    %20 = sbr.rel (0) target = $region17
  $region16: #{fcn_forward.10} parent=0 // pred_region
    _
  $region17: #{fcn_forward.10} parent=0 // pred_fallthru
    _
  // Predicated region
  $region18: #{fcn_forward.10} parent=0 // pred_check
    _
  $region19: #{fcn_forward.10} parent=0 // pred_check_branch
    %22 = sbr.rel (0) target = $region21
  $region20: #{fcn_forward.10} parent=0 // pred_region
    _
  $region21: #{fcn_forward.10} parent=0 // pred_fallthru
    _
  // Predicated region
  $region22: #{fcn_forward.10} parent=0 // pred_check
    _
  $region23: #{fcn_forward.10} parent=0 // pred_check_branch
    %24 = sbr.rel (0) target = $region25
  $region24: #{fcn_forward.10} parent=0 // pred_region
    _
  $region25: #{fcn_forward.10} parent=0 // pred_fallthru
    _
  %v26 = vld [vmem:[%s0] sm:$0xff]
  %v27 = vld [vmem:[%s0 + $0x8] sm:$0xff]
  %v28 = vld [vmem:[%s0 + $0x10] sm:$0xff]
  %v29 = vld [vmem:[%s0 + $0x18] sm:$0xff]
  %v30 = vld [vmem:[%s0 + $0x20] sm:$0xff]
  %v31 = vld [vmem:[%s0 + $0x28] sm:$0xff]
  %v32 = vld [vmem:[%s0 + $0x30] sm:$0xff]
  %v33 = vld [vmem:[%s0 + $0x38] sm:$0xff]
  %v34 = vld [vmem:[%s0 + $0x40] sm:$0xff]
  %v35 = vld [vmem:[%s0 + $0x48] sm:$0xff]
  %v36 = vld [vmem:[%s0 + $0x50] sm:$0xff]
  %v37 = vld [vmem:[%s0 + $0x58] sm:$0xff]
  %v38 = vld [vmem:[%s1] sm:$0x7]
  %v40 = vlaneseq
  %v41 = vshrl.u32 %v40, 7
  %v42 = vsub.s32 0, %v41
  %v43 = vrot.slane %v38, %v42
  %v44 = vlaneseq
  %v45 = vshrl.u32 %v44, 7
  %v46 = vsub.s32 1, %v45
  %v47 = vrot.slane %v38, %v46
  %v48 = vlaneseq
  %v49 = vshrl.u32 %v48, 7
  %v50 = vsub.s32 2, %v49
  %v51 = vrot.slane %v38, %v50
  %v55 = vmul.f32 %v26, %v43
  %v56 = vmul.f32 %v27, %v47
  %v57 = vmul.f32 %v28, %v51
  %v58 = vmul.f32 %v29, %v43
  %v59 = vmul.f32 %v30, %v47
  %v60 = vmul.f32 %v31, %v51
  %v61 = vmul.f32 %v32, %v43
  %v62 = vmul.f32 %v33, %v47
  %v63 = vmul.f32 %v34, %v51
  %v64 = vmul.f32 %v35, %v43
  %v65 = vmul.f32 %v36, %v47
  %v66 = vmul.f32 %v37, %v51
  %v67 = vld [vmem:[%s2] sm:$0x7]
  %v69 = vlaneseq
  %v70 = vshrl.u32 %v69, 7
  %v71 = vsub.s32 0, %v70
  %v72 = vrot.slane %v67, %v71
  %v73 = vlaneseq
  %v74 = vshrl.u32 %v73, 7
  %v75 = vsub.s32 1, %v74
  %v76 = vrot.slane %v67, %v75
  %v77 = vlaneseq
  %v78 = vshrl.u32 %v77, 7
  %v79 = vsub.s32 2, %v78
  %v80 = vrot.slane %v67, %v79
  %v84 = vadd.f32 %v55, %v72
  %v85 = vadd.f32 %v56, %v76
  %v86 = vadd.f32 %v57, %v80
  %v87 = vadd.f32 %v58, %v72
  %v88 = vadd.f32 %v59, %v76
  %v89 = vadd.f32 %v60, %v80
  %v90 = vadd.f32 %v61, %v72
  %v91 = vadd.f32 %v62, %v76
  %v92 = vadd.f32 %v63, %v80
  %v93 = vadd.f32 %v64, %v72
  %v94 = vadd.f32 %v65, %v76
  %v95 = vadd.f32 %v66, %v80
  %v96 = vmax.f32 %v84, 0.0
  %v97 = vmax.f32 %v85, 0.0
  %v98 = vmax.f32 %v86, 0.0
  %v99 = vmax.f32 %v87, 0.0
  %v100 = vmax.f32 %v88, 0.0
  %v101 = vmax.f32 %v89, 0.0
  %v102 = vmax.f32 %v90, 0.0
  %v103 = vmax.f32 %v91, 0.0
  %v104 = vmax.f32 %v92, 0.0
  %v105 = vmax.f32 %v93, 0.0
  %v106 = vmax.f32 %v94, 0.0
  %v107 = vmax.f32 %v95, 0.0
  %v108 = vpack.c.bf16 %v99, %v96
  %v109 = vpack.c.bf16 %v100, %v97
  %v110 = vpack.c.bf16 %v101, %v98
  %v111 = vpack.c.bf16 %v105, %v102
  %v112 = vpack.c.bf16 %v106, %v103
  %v113 = vpack.c.bf16 %v107, %v104
  %v114 = vld [vmem:[%s3] sm:$0xf]
  %v115 = vld [vmem:[%s3 + $0x4] sm:$0xf]
  %v116 = vld [vmem:[%s3 + $0x8] sm:$0xf]
  %v117 = vld [vmem:[%s3 + $0xc] sm:$0xf]
  %v118 = vld [vmem:[%s3 + $0x10] sm:$0xf]
  %v119 = vld [vmem:[%s3 + $0x14] sm:$0xf]
  %v120 = vld [vmem:[%s3 + $0x18] sm:$0xf]
  %v121 = vld [vmem:[%s3 + $0x1c] sm:$0xf]
  %v122 = vld [vmem:[%s3 + $0x20] sm:$0xf]
  %v123 = vld [vmem:[%s3 + $0x24] sm:$0xf]
  %v124 = vld [vmem:[%s3 + $0x28] sm:$0xf]
  %v125 = vld [vmem:[%s3 + $0x2c] sm:$0xf]
  %v126 = vld [vmem:[%s3 + $0x30] sm:$0xf]
  %v127 = vld [vmem:[%s3 + $0x34] sm:$0xf]
  %v128 = vld [vmem:[%s3 + $0x38] sm:$0xf]
  %v129 = vld [vmem:[%s3 + $0x3c] sm:$0xf]
  %v130 = vld [vmem:[%s3 + $0x40] sm:$0xf]
  %v131 = vld [vmem:[%s3 + $0x44] sm:$0xf]
  %v132 = vld [vmem:[%s3 + $0x48] sm:$0xf]
  %v133 = vld [vmem:[%s3 + $0x4c] sm:$0xf]
  %v134 = vld [vmem:[%s3 + $0x50] sm:$0xf]
  %v135 = vld [vmem:[%s3 + $0x54] sm:$0xf]
  %v136 = vld [vmem:[%s3 + $0x58] sm:$0xf]
  %v137 = vld [vmem:[%s3 + $0x5c] sm:$0xf]
  %v138 = vld [vmem:[%s3 + $0x60] sm:$0xf]
  %v139 = vld [vmem:[%s3 + $0x64] sm:$0xf]
  %v140 = vld [vmem:[%s3 + $0x68] sm:$0xf]
  %v141 = vld [vmem:[%s3 + $0x6c] sm:$0xf]
  %v142 = vld [vmem:[%s3 + $0x70] sm:$0xf]
  %v143 = vld [vmem:[%s3 + $0x74] sm:$0xf]
  %v144 = vld [vmem:[%s3 + $0x78] sm:$0xf]
  %v145 = vld [vmem:[%s3 + $0x7c] sm:$0xf]
  %v146 = vld [vmem:[%s3 + $0x80] sm:$0xf]
  %v147 = vld [vmem:[%s3 + $0x84] sm:$0xf]
  %v148 = vld [vmem:[%s3 + $0x88] sm:$0xf]
  %v149 = vld [vmem:[%s3 + $0x8c] sm:$0xf]
  %v150 = vld [vmem:[%s3 + $0x90] sm:$0xf]
  %v151 = vld [vmem:[%s3 + $0x94] sm:$0x1]
  %v190 = vunpack.c.l.b16 %v114
  %v191 = vunpack.c.l.b16 %v115
  %v192 = vunpack.c.l.b16 %v116
  %v193 = vunpack.c.l.b16 %v117
  %v194 = vunpack.c.l.b16 %v118
  %v195 = vunpack.c.l.b16 %v119
  %v196 = vunpack.c.l.b16 %v120
  %v197 = vunpack.c.l.b16 %v121
  %v198 = vunpack.c.l.b16 %v122
  %v199 = vunpack.c.l.b16 %v123
  %v200 = vunpack.c.l.b16 %v124
  %v201 = vunpack.c.l.b16 %v125
  %v202 = vunpack.c.l.b16 %v126
  %v203 = vunpack.c.l.b16 %v127
  %v204 = vunpack.c.l.b16 %v128
  %v205 = vunpack.c.l.b16 %v129
  %v206 = vunpack.c.l.b16 %v130
  %v207 = vunpack.c.l.b16 %v131
  %v208 = vunpack.c.l.b16 %v132
  %v209 = vunpack.c.l.b16 %v133
  %v210 = vunpack.c.l.b16 %v134
  %v211 = vunpack.c.l.b16 %v135
  %v212 = vunpack.c.l.b16 %v136
  %v213 = vunpack.c.l.b16 %v137
  %v214 = vunpack.c.l.b16 %v138
  %v215 = vunpack.c.l.b16 %v139
  %v216 = vunpack.c.l.b16 %v140
  %v217 = vunpack.c.l.b16 %v141
  %v218 = vunpack.c.l.b16 %v142
  %v219 = vunpack.c.l.b16 %v143
  %v220 = vunpack.c.l.b16 %v144
  %v221 = vunpack.c.l.b16 %v145
  %v222 = vunpack.c.l.b16 %v146
  %v223 = vunpack.c.l.b16 %v147
  %v224 = vunpack.c.l.b16 %v148
  %v225 = vunpack.c.l.b16 %v149
  %v226 = vunpack.c.l.b16 %v150
  %v227 = vunpack.c.l.b16 %v151
  %v228 = vpack.c.b16 %v191, %v190
  %v229 = vpack.c.b16 %v193, %v192
  %v230 = vpack.c.b16 %v195, %v194
  %v231 = vpack.c.b16 %v197, %v196
  %v232 = vpack.c.b16 %v199, %v198
  %v233 = vpack.c.b16 %v201, %v200
  %v234 = vpack.c.b16 %v203, %v202
  %v235 = vpack.c.b16 %v205, %v204
  %v236 = vpack.c.b16 %v207, %v206
  %v237 = vpack.c.b16 %v209, %v208
  %v238 = vpack.c.b16 %v211, %v210
  %v239 = vpack.c.b16 %v213, %v212
  %v240 = vpack.c.b16 %v215, %v214
  %v241 = vpack.c.b16 %v217, %v216
  %v242 = vpack.c.b16 %v219, %v218
  %v243 = vpack.c.b16 %v221, %v220
  %v244 = vpack.c.b16 %v223, %v222
  %v245 = vpack.c.b16 %v225, %v224
  %v246 = vpack.c.b16 %v227, %v226
  %vm265 = vcmask 334848
  %v267 = vsel %vm265, %v110, 0
  %v270 = vsel %vm265, %v113, 0
  %vm272 = vcmask 1043456
  %vm273 = vcmask 1044480
  %v274 = vsel %vm272, 4294967295, 65535
  %v275 = vsel %vm273, %v274, 0
  %v277 = vand.u32 %v246, %v275
  %279 = vmatprep.subr.bf16.mxu0 0
  %280 = vmatpush1.bf16.msra.mxu0 %v235
  %281 = vmatprep.subr.bf16.mxu0 0
  %282 = vmatpush1.bf16.msra.mxu0 %v234
  %283 = vmatprep.subr.bf16.mxu0 0
  %284 = vmatpush1.bf16.msra.mxu0 %v233
  %285 = vmatprep.subr.bf16.mxu0 0
  %286 = vmatpush1.bf16.msra.mxu0 %v232
  %287 = vmatprep.subr.bf16.mxu0 0
  %288 = vmatpush1.bf16.msra.mxu0 %v231
  %289 = vmatprep.subr.bf16.mxu0 0
  %290 = vmatpush1.bf16.msra.mxu0 %v230
  %291 = vmatprep.subr.bf16.mxu0 0
  %292 = vmatpush1.bf16.msra.mxu0 %v229
  %293 = vmatprep.subr.bf16.mxu0 0
  %294 = vmatpush1.bf16.msra.mxu0 %v228
  %295 = vmatprep.subr.bf16.mxu0 0
  %296 = vmatpush2.bf16.msra.mxu0 %v243
  %297 = vmatprep.subr.bf16.mxu0 0
  %298 = vmatpush2.bf16.msra.mxu0 %v242
  %299 = vmatprep.subr.bf16.mxu0 0
  %300 = vmatpush2.bf16.msra.mxu0 %v241
  %301 = vmatprep.subr.bf16.mxu0 0
  %302 = vmatpush2.bf16.msra.mxu0 %v240
  %303 = vmatprep.subr.bf16.mxu0 0
  %304 = vmatpush2.bf16.msra.mxu0 %v239
  %305 = vmatprep.subr.bf16.mxu0 0
  %306 = vmatpush2.bf16.msra.mxu0 %v238
  %307 = vmatprep.subr.bf16.mxu0 0
  %308 = vmatpush2.bf16.msra.mxu0 %v237
  %309 = vmatprep.subr.bf16.mxu0 0
  %310 = vmatpush2.bf16.msra.mxu0 %v236
  %311 = vmatprep.mubr.bf16.mxu0 %v109
  %312 = vmatmul.mubr.bf16.gmra.mxu0 %v108
  %v313 = vpop.f32.mrf.mxu0
  %v314 = vadd.f32 0.0, %v313
  %v315 = vpop.f32.mrf.mxu0
  %v316 = vpop.f32.mrf.mxu0
  %v317 = vadd.f32 0.0, %v316
  %v318 = vpop.f32.mrf.mxu0
  %319 = vmatprep.mubr.bf16.mxu0 %v112
  %320 = vmatmul.mubr.bf16.gmra.mxu0 %v111
  %v321 = vpop.f32.mrf.mxu0
  %v322 = vadd.f32 0.0, %v321
  %v323 = vpop.f32.mrf.mxu0
  %v324 = vpop.f32.mrf.mxu0
  %v325 = vadd.f32 0.0, %v324
  %v326 = vpop.f32.mrf.mxu0
  %327 = vdwg.mxu0
  %328 = vmatprep.subr.bf16.mxu0 0
  %329 = vmatpush1.bf16.msra.mxu0 0
  %330 = vmatprep.subr.bf16.mxu0 0
  %331 = vmatpush1.bf16.msra.mxu0 0
  %332 = vmatprep.subr.bf16.mxu0 0
  %333 = vmatpush1.bf16.msra.mxu0 0
  %334 = vmatprep.subr.bf16.mxu0 0
  %335 = vmatpush1.bf16.msra.mxu0 0
  %336 = vmatprep.subr.bf16.mxu0 0
  %337 = vmatpush1.bf16.msra.mxu0 0
  %338 = vmatprep.subr.bf16.mxu0 0
  %339 = vmatpush1.bf16.msra.mxu0 %v277
  %340 = vmatprep.subr.bf16.mxu0 0
  %341 = vmatpush1.bf16.msra.mxu0 %v245
  %342 = vmatprep.subr.bf16.mxu0 0
  %343 = vmatpush1.bf16.msra.mxu0 %v244
  %344 = vmatprep.subr.bf16.mxu0 0
  %345 = vmatpush2.bf16.msra.mxu0 0
  %346 = vmatprep.subr.bf16.mxu0 0
  %347 = vmatpush2.bf16.msra.mxu0 0
  %348 = vmatprep.subr.bf16.mxu0 0
  %349 = vmatpush2.bf16.msra.mxu0 0
  %350 = vmatprep.subr.bf16.mxu0 0
  %351 = vmatpush2.bf16.msra.mxu0 0
  %352 = vmatprep.subr.bf16.mxu0 0
  %353 = vmatpush2.bf16.msra.mxu0 0
  %354 = vmatprep.subr.bf16.mxu0 0
  %355 = vmatpush2.bf16.msra.mxu0 0
  %356 = vmatprep.subr.bf16.mxu0 0
  %357 = vmatpush2.bf16.msra.mxu0 0
  %358 = vmatprep.subr.bf16.mxu0 0
  %359 = vmatpush2.bf16.msra.mxu0 0
  %360 = vmatprep.mubr.bf16.mxu0 0
  %361 = vmatmul.mubr.bf16.gmra.mxu0 %v267
  %v362 = vpop.f32.mrf.mxu0
  %v363 = vadd.f32 %v314, %v362
  %v364 = vpop.f32.mrf.mxu0
  %v365 = vpop.f32.mrf.mxu0
  %v366 = vadd.f32 %v317, %v365
  %v367 = vpop.f32.mrf.mxu0
  %368 = vmatprep.mubr.bf16.mxu0 0
  %369 = vmatmul.mubr.bf16.gmra.mxu0 %v270
  %v370 = vpop.f32.mrf.mxu0
  %v371 = vadd.f32 %v322, %v370
  %v372 = vpop.f32.mrf.mxu0
  %v373 = vpop.f32.mrf.mxu0
  %v374 = vadd.f32 %v325, %v373
  %v375 = vpop.f32.mrf.mxu0
  %376 = vdwg.mxu0
  %s377 = scalar_lea.vmem %s0, 96
  %v378 = vld [vmem:[%s377] sm:$0xff]
  %v379 = vld [vmem:[%s377 + $0x8] sm:$0xff]
  %v380 = vld [vmem:[%s377 + $0x10] sm:$0xff]
  %v381 = vld [vmem:[%s377 + $0x18] sm:$0xff]
  %v382 = vld [vmem:[%s377 + $0x20] sm:$0xff]
  %v383 = vld [vmem:[%s377 + $0x28] sm:$0xff]
  %v384 = vld [vmem:[%s377 + $0x30] sm:$0xff]
  %v385 = vld [vmem:[%s377 + $0x38] sm:$0xff]
  %v386 = vld [vmem:[%s377 + $0x40] sm:$0xff]
  %v387 = vld [vmem:[%s377 + $0x48] sm:$0xff]
  %v388 = vld [vmem:[%s377 + $0x50] sm:$0xff]
  %v389 = vld [vmem:[%s377 + $0x58] sm:$0xff]
  %v390 = vmul.f32 %v378, %v43
  %v391 = vmul.f32 %v379, %v47
  %v392 = vmul.f32 %v380, %v51
  %v393 = vmul.f32 %v381, %v43
  %v394 = vmul.f32 %v382, %v47
  %v395 = vmul.f32 %v383, %v51
  %v396 = vmul.f32 %v384, %v43
  %v397 = vmul.f32 %v385, %v47
  %v398 = vmul.f32 %v386, %v51
  %v399 = vmul.f32 %v387, %v43
  %v400 = vmul.f32 %v388, %v47
  %v401 = vmul.f32 %v389, %v51
  %v402 = vadd.f32 %v390, %v72
  %v403 = vadd.f32 %v391, %v76
  %v404 = vadd.f32 %v392, %v80
  %v405 = vadd.f32 %v393, %v72
  %v406 = vadd.f32 %v394, %v76
  %v407 = vadd.f32 %v395, %v80
  %v408 = vadd.f32 %v396, %v72
  %v409 = vadd.f32 %v397, %v76
  %v410 = vadd.f32 %v398, %v80
  %v411 = vadd.f32 %v399, %v72
  %v412 = vadd.f32 %v400, %v76
  %v413 = vadd.f32 %v401, %v80
  %v414 = vmax.f32 %v402, 0.0
  %v415 = vmax.f32 %v403, 0.0
  %v416 = vmax.f32 %v404, 0.0
  %v417 = vmax.f32 %v405, 0.0
  %v418 = vmax.f32 %v406, 0.0
  %v419 = vmax.f32 %v407, 0.0
  %v420 = vmax.f32 %v408, 0.0
  %v421 = vmax.f32 %v409, 0.0
  %v422 = vmax.f32 %v410, 0.0
  %v423 = vmax.f32 %v411, 0.0
  %v424 = vmax.f32 %v412, 0.0
  %v425 = vmax.f32 %v413, 0.0
  %v426 = vpack.c.bf16 %v417, %v414
  %v427 = vpack.c.bf16 %v418, %v415
  %v428 = vpack.c.bf16 %v419, %v416
  %v429 = vpack.c.bf16 %v423, %v420
  %v430 = vpack.c.bf16 %v424, %v421
  %v431 = vpack.c.bf16 %v425, %v422
  %v433 = vsel %vm265, %v428, 0
  %v436 = vsel %vm265, %v431, 0
  %438 = vmatprep.subr.bf16.mxu0 0
  %439 = vmatpush1.bf16.msra.mxu0 %v235
  %440 = vmatprep.subr.bf16.mxu0 0
  %441 = vmatpush1.bf16.msra.mxu0 %v234
  %442 = vmatprep.subr.bf16.mxu0 0
  %443 = vmatpush1.bf16.msra.mxu0 %v233
  %444 = vmatprep.subr.bf16.mxu0 0
  %445 = vmatpush1.bf16.msra.mxu0 %v232
  %446 = vmatprep.subr.bf16.mxu0 0
  %447 = vmatpush1.bf16.msra.mxu0 %v231
  %448 = vmatprep.subr.bf16.mxu0 0
  %449 = vmatpush1.bf16.msra.mxu0 %v230
  %450 = vmatprep.subr.bf16.mxu0 0
  %451 = vmatpush1.bf16.msra.mxu0 %v229
  %452 = vmatprep.subr.bf16.mxu0 0
  %453 = vmatpush1.bf16.msra.mxu0 %v228
  %454 = vmatprep.subr.bf16.mxu0 0
  %455 = vmatpush2.bf16.msra.mxu0 %v243
  %456 = vmatprep.subr.bf16.mxu0 0
  %457 = vmatpush2.bf16.msra.mxu0 %v242
  %458 = vmatprep.subr.bf16.mxu0 0
  %459 = vmatpush2.bf16.msra.mxu0 %v241
  %460 = vmatprep.subr.bf16.mxu0 0
  %461 = vmatpush2.bf16.msra.mxu0 %v240
  %462 = vmatprep.subr.bf16.mxu0 0
  %463 = vmatpush2.bf16.msra.mxu0 %v239
  %464 = vmatprep.subr.bf16.mxu0 0
  %465 = vmatpush2.bf16.msra.mxu0 %v238
  %466 = vmatprep.subr.bf16.mxu0 0
  %467 = vmatpush2.bf16.msra.mxu0 %v237
  %468 = vmatprep.subr.bf16.mxu0 0
  %469 = vmatpush2.bf16.msra.mxu0 %v236
  %470 = vmatprep.mubr.bf16.mxu0 %v427
  %471 = vmatmul.mubr.bf16.gmra.mxu0 %v426
  %v472 = vpop.f32.mrf.mxu0
  %v473 = vadd.f32 0.0, %v472
  %v474 = vpop.f32.mrf.mxu0
  %v475 = vpop.f32.mrf.mxu0
  %v476 = vadd.f32 0.0, %v475
  %v477 = vpop.f32.mrf.mxu0
  %478 = vmatprep.mubr.bf16.mxu0 %v430
  %479 = vmatmul.mubr.bf16.gmra.mxu0 %v429
  %v480 = vpop.f32.mrf.mxu0
  %v481 = vadd.f32 0.0, %v480
  %v482 = vpop.f32.mrf.mxu0
  %v483 = vpop.f32.mrf.mxu0
  %v484 = vadd.f32 0.0, %v483
  %v485 = vpop.f32.mrf.mxu0
  %486 = vdwg.mxu0
  %487 = vmatprep.subr.bf16.mxu0 0
  %488 = vmatpush1.bf16.msra.mxu0 0
  %489 = vmatprep.subr.bf16.mxu0 0
  %490 = vmatpush1.bf16.msra.mxu0 0
  %491 = vmatprep.subr.bf16.mxu0 0
  %492 = vmatpush1.bf16.msra.mxu0 0
  %493 = vmatprep.subr.bf16.mxu0 0
  %494 = vmatpush1.bf16.msra.mxu0 0
  %495 = vmatprep.subr.bf16.mxu0 0
  %496 = vmatpush1.bf16.msra.mxu0 0
  %497 = vmatprep.subr.bf16.mxu0 0
  %498 = vmatpush1.bf16.msra.mxu0 %v277
  %499 = vmatprep.subr.bf16.mxu0 0
  %500 = vmatpush1.bf16.msra.mxu0 %v245
  %501 = vmatprep.subr.bf16.mxu0 0
  %502 = vmatpush1.bf16.msra.mxu0 %v244
  %503 = vmatprep.subr.bf16.mxu0 0
  %504 = vmatpush2.bf16.msra.mxu0 0
  %505 = vmatprep.subr.bf16.mxu0 0
  %506 = vmatpush2.bf16.msra.mxu0 0
  %507 = vmatprep.subr.bf16.mxu0 0
  %508 = vmatpush2.bf16.msra.mxu0 0
  %509 = vmatprep.subr.bf16.mxu0 0
  %510 = vmatpush2.bf16.msra.mxu0 0
  %511 = vmatprep.subr.bf16.mxu0 0
  %512 = vmatpush2.bf16.msra.mxu0 0
  %513 = vmatprep.subr.bf16.mxu0 0
  %514 = vmatpush2.bf16.msra.mxu0 0
  %515 = vmatprep.subr.bf16.mxu0 0
  %516 = vmatpush2.bf16.msra.mxu0 0
  %517 = vmatprep.subr.bf16.mxu0 0
  %518 = vmatpush2.bf16.msra.mxu0 0
  %519 = vmatprep.mubr.bf16.mxu0 0
  %520 = vmatmul.mubr.bf16.gmra.mxu0 %v433
  %v521 = vpop.f32.mrf.mxu0
  %v522 = vadd.f32 %v473, %v521
  %v523 = vpop.f32.mrf.mxu0
  %v524 = vpop.f32.mrf.mxu0
  %v525 = vadd.f32 %v476, %v524
  %v526 = vpop.f32.mrf.mxu0
  %527 = vmatprep.mubr.bf16.mxu0 0
  %528 = vmatmul.mubr.bf16.gmra.mxu0 %v436
  %v529 = vpop.f32.mrf.mxu0
  %v530 = vadd.f32 %v481, %v529
  %v531 = vpop.f32.mrf.mxu0
  %v532 = vpop.f32.mrf.mxu0
  %v533 = vadd.f32 %v484, %v532
  %v534 = vpop.f32.mrf.mxu0
  %535 = vdwg.mxu0
  %v536 = vmax.f32 %v363, %v522
  %v537 = vmax.f32 %v366, %v525
  %v538 = vmax.f32 %v371, %v530
  %v539 = vmax.f32 %v374, %v533
  %s540 = scalar_lea.vmem %s0, 192
  %v541 = vld [vmem:[%s540] sm:$0xff]
  %v542 = vld [vmem:[%s540 + $0x8] sm:$0xff]
  %v543 = vld [vmem:[%s540 + $0x10] sm:$0xff]
  %v544 = vld [vmem:[%s540 + $0x18] sm:$0xff]
  %v545 = vld [vmem:[%s540 + $0x20] sm:$0xff]
  %v546 = vld [vmem:[%s540 + $0x28] sm:$0xff]
  %v547 = vld [vmem:[%s540 + $0x30] sm:$0xff]
  %v548 = vld [vmem:[%s540 + $0x38] sm:$0xff]
  %v549 = vld [vmem:[%s540 + $0x40] sm:$0xff]
  %v550 = vld [vmem:[%s540 + $0x48] sm:$0xff]
  %v551 = vld [vmem:[%s540 + $0x50] sm:$0xff]
  %v552 = vld [vmem:[%s540 + $0x58] sm:$0xff]
  %v553 = vmul.f32 %v541, %v43
  %v554 = vmul.f32 %v542, %v47
  %v555 = vmul.f32 %v543, %v51
  %v556 = vmul.f32 %v544, %v43
  %v557 = vmul.f32 %v545, %v47
  %v558 = vmul.f32 %v546, %v51
  %v559 = vmul.f32 %v547, %v43
  %v560 = vmul.f32 %v548, %v47
  %v561 = vmul.f32 %v549, %v51
  %v562 = vmul.f32 %v550, %v43
  %v563 = vmul.f32 %v551, %v47
  %v564 = vmul.f32 %v552, %v51
  %v565 = vadd.f32 %v553, %v72
  %v566 = vadd.f32 %v554, %v76
  %v567 = vadd.f32 %v555, %v80
  %v568 = vadd.f32 %v556, %v72
  %v569 = vadd.f32 %v557, %v76
  %v570 = vadd.f32 %v558, %v80
  %v571 = vadd.f32 %v559, %v72
  %v572 = vadd.f32 %v560, %v76
  %v573 = vadd.f32 %v561, %v80
  %v574 = vadd.f32 %v562, %v72
  %v575 = vadd.f32 %v563, %v76
  %v576 = vadd.f32 %v564, %v80
  %v577 = vmax.f32 %v565, 0.0
  %v578 = vmax.f32 %v566, 0.0
  %v579 = vmax.f32 %v567, 0.0
  %v580 = vmax.f32 %v568, 0.0
  %v581 = vmax.f32 %v569, 0.0
  %v582 = vmax.f32 %v570, 0.0
  %v583 = vmax.f32 %v571, 0.0
  %v584 = vmax.f32 %v572, 0.0
  %v585 = vmax.f32 %v573, 0.0
  %v586 = vmax.f32 %v574, 0.0
  %v587 = vmax.f32 %v575, 0.0
  %v588 = vmax.f32 %v576, 0.0
  %v589 = vpack.c.bf16 %v580, %v577
  %v590 = vpack.c.bf16 %v581, %v578
  %v591 = vpack.c.bf16 %v582, %v579
  %v592 = vpack.c.bf16 %v586, %v583
  %v593 = vpack.c.bf16 %v587, %v584
  %v594 = vpack.c.bf16 %v588, %v585
  %v596 = vsel %vm265, %v591, 0
  %v599 = vsel %vm265, %v594, 0
  %601 = vmatprep.subr.bf16.mxu0 0
  %602 = vmatpush1.bf16.msra.mxu0 %v235
  %603 = vmatprep.subr.bf16.mxu0 0
  %604 = vmatpush1.bf16.msra.mxu0 %v234
  %605 = vmatprep.subr.bf16.mxu0 0
  %606 = vmatpush1.bf16.msra.mxu0 %v233
  %607 = vmatprep.subr.bf16.mxu0 0
  %608 = vmatpush1.bf16.msra.mxu0 %v232
  %609 = vmatprep.subr.bf16.mxu0 0
  %610 = vmatpush1.bf16.msra.mxu0 %v231
  %611 = vmatprep.subr.bf16.mxu0 0
  %612 = vmatpush1.bf16.msra.mxu0 %v230
  %613 = vmatprep.subr.bf16.mxu0 0
  %614 = vmatpush1.bf16.msra.mxu0 %v229
  %615 = vmatprep.subr.bf16.mxu0 0
  %616 = vmatpush1.bf16.msra.mxu0 %v228
  %617 = vmatprep.subr.bf16.mxu0 0
  %618 = vmatpush2.bf16.msra.mxu0 %v243
  %619 = vmatprep.subr.bf16.mxu0 0
  %620 = vmatpush2.bf16.msra.mxu0 %v242
  %621 = vmatprep.subr.bf16.mxu0 0
  %622 = vmatpush2.bf16.msra.mxu0 %v241
  %623 = vmatprep.subr.bf16.mxu0 0
  %624 = vmatpush2.bf16.msra.mxu0 %v240
  %625 = vmatprep.subr.bf16.mxu0 0
  %626 = vmatpush2.bf16.msra.mxu0 %v239
  %627 = vmatprep.subr.bf16.mxu0 0
  %628 = vmatpush2.bf16.msra.mxu0 %v238
  %629 = vmatprep.subr.bf16.mxu0 0
  %630 = vmatpush2.bf16.msra.mxu0 %v237
  %631 = vmatprep.subr.bf16.mxu0 0
  %632 = vmatpush2.bf16.msra.mxu0 %v236
  %633 = vmatprep.mubr.bf16.mxu0 %v590
  %634 = vmatmul.mubr.bf16.gmra.mxu0 %v589
  %v635 = vpop.f32.mrf.mxu0
  %v636 = vadd.f32 0.0, %v635
  %v637 = vpop.f32.mrf.mxu0
  %v638 = vpop.f32.mrf.mxu0
  %v639 = vadd.f32 0.0, %v638
  %v640 = vpop.f32.mrf.mxu0
  %641 = vmatprep.mubr.bf16.mxu0 %v593
  %642 = vmatmul.mubr.bf16.gmra.mxu0 %v592
  %v643 = vpop.f32.mrf.mxu0
  %v644 = vadd.f32 0.0, %v643
  %v645 = vpop.f32.mrf.mxu0
  %v646 = vpop.f32.mrf.mxu0
  %v647 = vadd.f32 0.0, %v646
  %v648 = vpop.f32.mrf.mxu0
  %649 = vdwg.mxu0
  %650 = vmatprep.subr.bf16.mxu0 0
  %651 = vmatpush1.bf16.msra.mxu0 0
  %652 = vmatprep.subr.bf16.mxu0 0
  %653 = vmatpush1.bf16.msra.mxu0 0
  %654 = vmatprep.subr.bf16.mxu0 0
  %655 = vmatpush1.bf16.msra.mxu0 0
  %656 = vmatprep.subr.bf16.mxu0 0
  %657 = vmatpush1.bf16.msra.mxu0 0
  %658 = vmatprep.subr.bf16.mxu0 0
  %659 = vmatpush1.bf16.msra.mxu0 0
  %660 = vmatprep.subr.bf16.mxu0 0
  %661 = vmatpush1.bf16.msra.mxu0 %v277
  %662 = vmatprep.subr.bf16.mxu0 0
  %663 = vmatpush1.bf16.msra.mxu0 %v245
  %664 = vmatprep.subr.bf16.mxu0 0
  %665 = vmatpush1.bf16.msra.mxu0 %v244
  %666 = vmatprep.subr.bf16.mxu0 0
  %667 = vmatpush2.bf16.msra.mxu0 0
  %668 = vmatprep.subr.bf16.mxu0 0
  %669 = vmatpush2.bf16.msra.mxu0 0
  %670 = vmatprep.subr.bf16.mxu0 0
  %671 = vmatpush2.bf16.msra.mxu0 0
  %672 = vmatprep.subr.bf16.mxu0 0
  %673 = vmatpush2.bf16.msra.mxu0 0
  %674 = vmatprep.subr.bf16.mxu0 0
  %675 = vmatpush2.bf16.msra.mxu0 0
  %676 = vmatprep.subr.bf16.mxu0 0
  %677 = vmatpush2.bf16.msra.mxu0 0
  %678 = vmatprep.subr.bf16.mxu0 0
  %679 = vmatpush2.bf16.msra.mxu0 0
  %680 = vmatprep.subr.bf16.mxu0 0
  %681 = vmatpush2.bf16.msra.mxu0 0
  %682 = vmatprep.mubr.bf16.mxu0 0
  %683 = vmatmul.mubr.bf16.gmra.mxu0 %v596
  %v684 = vpop.f32.mrf.mxu0
  %v685 = vadd.f32 %v636, %v684
  %v686 = vpop.f32.mrf.mxu0
  %v687 = vpop.f32.mrf.mxu0
  %v688 = vadd.f32 %v639, %v687
  %v689 = vpop.f32.mrf.mxu0
  %690 = vmatprep.mubr.bf16.mxu0 0
  %691 = vmatmul.mubr.bf16.gmra.mxu0 %v599
  %v692 = vpop.f32.mrf.mxu0
  %v693 = vadd.f32 %v644, %v692
  %v694 = vpop.f32.mrf.mxu0
  %v695 = vpop.f32.mrf.mxu0
  %v696 = vadd.f32 %v647, %v695
  %v697 = vpop.f32.mrf.mxu0
  %698 = vdwg.mxu0
  %v699 = vmax.f32 %v536, %v685
  %v700 = vmax.f32 %v537, %v688
  %v701 = vmax.f32 %v538, %v693
  %v702 = vmax.f32 %v539, %v696
  %s703 = scalar_lea.vmem %s0, 288
  %v704 = vld [vmem:[%s703] sm:$0xff]
  %v705 = vld [vmem:[%s703 + $0x8] sm:$0xff]
  %v706 = vld [vmem:[%s703 + $0x10] sm:$0xff]
  %v707 = vld [vmem:[%s703 + $0x18] sm:$0xff]
  %v708 = vld [vmem:[%s703 + $0x20] sm:$0xff]
  %v709 = vld [vmem:[%s703 + $0x28] sm:$0xff]
  %v710 = vld [vmem:[%s703 + $0x30] sm:$0xff]
  %v711 = vld [vmem:[%s703 + $0x38] sm:$0xff]
  %v712 = vld [vmem:[%s703 + $0x40] sm:$0xff]
  %v713 = vld [vmem:[%s703 + $0x48] sm:$0xff]
  %v714 = vld [vmem:[%s703 + $0x50] sm:$0xff]
  %v715 = vld [vmem:[%s703 + $0x58] sm:$0xff]
  %v716 = vmul.f32 %v704, %v43
  %v717 = vmul.f32 %v705, %v47
  %v718 = vmul.f32 %v706, %v51
  %v719 = vmul.f32 %v707, %v43
  %v720 = vmul.f32 %v708, %v47
  %v721 = vmul.f32 %v709, %v51
  %v722 = vmul.f32 %v710, %v43
  %v723 = vmul.f32 %v711, %v47
  %v724 = vmul.f32 %v712, %v51
  %v725 = vmul.f32 %v713, %v43
  %v726 = vmul.f32 %v714, %v47
  %v727 = vmul.f32 %v715, %v51
  %v728 = vadd.f32 %v716, %v72
  %v729 = vadd.f32 %v717, %v76
  %v730 = vadd.f32 %v718, %v80
  %v731 = vadd.f32 %v719, %v72
  %v732 = vadd.f32 %v720, %v76
  %v733 = vadd.f32 %v721, %v80
  %v734 = vadd.f32 %v722, %v72
  %v735 = vadd.f32 %v723, %v76
  %v736 = vadd.f32 %v724, %v80
  %v737 = vadd.f32 %v725, %v72
  %v738 = vadd.f32 %v726, %v76
  %v739 = vadd.f32 %v727, %v80
  %v740 = vmax.f32 %v728, 0.0
  %v741 = vmax.f32 %v729, 0.0
  %v742 = vmax.f32 %v730, 0.0
  %v743 = vmax.f32 %v731, 0.0
  %v744 = vmax.f32 %v732, 0.0
  %v745 = vmax.f32 %v733, 0.0
  %v746 = vmax.f32 %v734, 0.0
  %v747 = vmax.f32 %v735, 0.0
  %v748 = vmax.f32 %v736, 0.0
  %v749 = vmax.f32 %v737, 0.0
  %v750 = vmax.f32 %v738, 0.0
  %v751 = vmax.f32 %v739, 0.0
  %v752 = vpack.c.bf16 %v743, %v740
  %v753 = vpack.c.bf16 %v744, %v741
  %v754 = vpack.c.bf16 %v745, %v742
  %v755 = vpack.c.bf16 %v749, %v746
  %v756 = vpack.c.bf16 %v750, %v747
  %v757 = vpack.c.bf16 %v751, %v748
  %v759 = vsel %vm265, %v754, 0
  %v762 = vsel %vm265, %v757, 0
  %764 = vmatprep.subr.bf16.mxu0 0
  %765 = vmatpush1.bf16.msra.mxu0 %v235
  %766 = vmatprep.subr.bf16.mxu0 0
  %767 = vmatpush1.bf16.msra.mxu0 %v234
  %768 = vmatprep.subr.bf16.mxu0 0
  %769 = vmatpush1.bf16.msra.mxu0 %v233
  %770 = vmatprep.subr.bf16.mxu0 0
  %771 = vmatpush1.bf16.msra.mxu0 %v232
  %772 = vmatprep.subr.bf16.mxu0 0
  %773 = vmatpush1.bf16.msra.mxu0 %v231
  %774 = vmatprep.subr.bf16.mxu0 0
  %775 = vmatpush1.bf16.msra.mxu0 %v230
  %776 = vmatprep.subr.bf16.mxu0 0
  %777 = vmatpush1.bf16.msra.mxu0 %v229
  %778 = vmatprep.subr.bf16.mxu0 0
  %779 = vmatpush1.bf16.msra.mxu0 %v228
  %780 = vmatprep.subr.bf16.mxu0 0
  %781 = vmatpush2.bf16.msra.mxu0 %v243
  %782 = vmatprep.subr.bf16.mxu0 0
  %783 = vmatpush2.bf16.msra.mxu0 %v242
  %784 = vmatprep.subr.bf16.mxu0 0
  %785 = vmatpush2.bf16.msra.mxu0 %v241
  %786 = vmatprep.subr.bf16.mxu0 0
  %787 = vmatpush2.bf16.msra.mxu0 %v240
  %788 = vmatprep.subr.bf16.mxu0 0
  %789 = vmatpush2.bf16.msra.mxu0 %v239
  %790 = vmatprep.subr.bf16.mxu0 0
  %791 = vmatpush2.bf16.msra.mxu0 %v238
  %792 = vmatprep.subr.bf16.mxu0 0
  %793 = vmatpush2.bf16.msra.mxu0 %v237
  %794 = vmatprep.subr.bf16.mxu0 0
  %795 = vmatpush2.bf16.msra.mxu0 %v236
  %796 = vmatprep.mubr.bf16.mxu0 %v753
  %797 = vmatmul.mubr.bf16.gmra.mxu0 %v752
  %v798 = vpop.f32.mrf.mxu0
  %v799 = vadd.f32 0.0, %v798
  %v800 = vpop.f32.mrf.mxu0
  %v801 = vpop.f32.mrf.mxu0
  %v802 = vadd.f32 0.0, %v801
  %v803 = vpop.f32.mrf.mxu0
  %804 = vmatprep.mubr.bf16.mxu0 %v756
  %805 = vmatmul.mubr.bf16.gmra.mxu0 %v755
  %v806 = vpop.f32.mrf.mxu0
  %v807 = vadd.f32 0.0, %v806
  %v808 = vpop.f32.mrf.mxu0
  %v809 = vpop.f32.mrf.mxu0
  %v810 = vadd.f32 0.0, %v809
  %v811 = vpop.f32.mrf.mxu0
  %812 = vdwg.mxu0
  %813 = vmatprep.subr.bf16.mxu0 0
  %814 = vmatpush1.bf16.msra.mxu0 0
  %815 = vmatprep.subr.bf16.mxu0 0
  %816 = vmatpush1.bf16.msra.mxu0 0
  %817 = vmatprep.subr.bf16.mxu0 0
  %818 = vmatpush1.bf16.msra.mxu0 0
  %819 = vmatprep.subr.bf16.mxu0 0
  %820 = vmatpush1.bf16.msra.mxu0 0
  %821 = vmatprep.subr.bf16.mxu0 0
  %822 = vmatpush1.bf16.msra.mxu0 0
  %823 = vmatprep.subr.bf16.mxu0 0
  %824 = vmatpush1.bf16.msra.mxu0 %v277
  %825 = vmatprep.subr.bf16.mxu0 0
  %826 = vmatpush1.bf16.msra.mxu0 %v245
  %827 = vmatprep.subr.bf16.mxu0 0
  %828 = vmatpush1.bf16.msra.mxu0 %v244
  %829 = vmatprep.subr.bf16.mxu0 0
  %830 = vmatpush2.bf16.msra.mxu0 0
  %831 = vmatprep.subr.bf16.mxu0 0
  %832 = vmatpush2.bf16.msra.mxu0 0
  %833 = vmatprep.subr.bf16.mxu0 0
  %834 = vmatpush2.bf16.msra.mxu0 0
  %835 = vmatprep.subr.bf16.mxu0 0
  %836 = vmatpush2.bf16.msra.mxu0 0
  %837 = vmatprep.subr.bf16.mxu0 0
  %838 = vmatpush2.bf16.msra.mxu0 0
  %839 = vmatprep.subr.bf16.mxu0 0
  %840 = vmatpush2.bf16.msra.mxu0 0
  %841 = vmatprep.subr.bf16.mxu0 0
  %842 = vmatpush2.bf16.msra.mxu0 0
  %843 = vmatprep.subr.bf16.mxu0 0
  %844 = vmatpush2.bf16.msra.mxu0 0
  %845 = vmatprep.mubr.bf16.mxu0 0
  %846 = vmatmul.mubr.bf16.gmra.mxu0 %v759
  %v847 = vpop.f32.mrf.mxu0
  %v848 = vadd.f32 %v799, %v847
  %v849 = vpop.f32.mrf.mxu0
  %v850 = vpop.f32.mrf.mxu0
  %v851 = vadd.f32 %v802, %v850
  %v852 = vpop.f32.mrf.mxu0
  %853 = vmatprep.mubr.bf16.mxu0 0
  %854 = vmatmul.mubr.bf16.gmra.mxu0 %v762
  %v855 = vpop.f32.mrf.mxu0
  %v856 = vadd.f32 %v807, %v855
  %v857 = vpop.f32.mrf.mxu0
  %v858 = vpop.f32.mrf.mxu0
  %v859 = vadd.f32 %v810, %v858
  %v860 = vpop.f32.mrf.mxu0
  %861 = vdwg.mxu0
  %v862 = vmax.f32 %v699, %v848
  %v863 = vmax.f32 %v700, %v851
  %v864 = vmax.f32 %v701, %v856
  %v865 = vmax.f32 %v702, %v859
  %v866 = vld [vmem:[%s4] sm:$0x1]
  %v868 = vlaneseq
  %v869 = vshrl.u32 %v868, 7
  %v870 = vsub.s32 0, %v869
  %v871 = vrot.slane %v866, %v870
  %v873 = vadd.f32 %v862, %v871
  %v874 = vadd.f32 %v863, %v871
  %v875 = vadd.f32 %v864, %v871
  %v876 = vadd.f32 %v865, %v871
  %vm877 = vcmask 130048
  %878 = vst.msk [vmem:[%s7] sm:$0xff] %vm877, %v873
  %879 = vst.msk [vmem:[%s7 + $0x8] sm:$0xff] %vm877, %v874
  %880 = vst.msk [vmem:[%s7 + $0x10] sm:$0xff] %vm877, %v875
  %881 = vst.msk [vmem:[%s7 + $0x18] sm:$0xff] %vm877, %v876
  %v882 = vld [vmem:[%s5] sm:$0xff]
  %v883 = vld [vmem:[%s5 + $0x8] sm:$0xff]
  %v884 = vld [vmem:[%s5 + $0x10] sm:$0xff]
  %v885 = vld [vmem:[%s5 + $0x18] sm:$0xff]
  %s886 = scalar_lea.vmem %s5, 32
  %v887 = vld [vmem:[%s886] sm:$0xff]
  %v888 = vld [vmem:[%s886 + $0x8] sm:$0xff]
  %v889 = vld [vmem:[%s886 + $0x10] sm:$0xff]
  %v890 = vld [vmem:[%s886 + $0x18] sm:$0xff]
  %v891 = vmax.f32 %v882, %v887
  %v892 = vmax.f32 %v883, %v888
  %v893 = vmax.f32 %v884, %v889
  %v894 = vmax.f32 %v885, %v890
  %s895 = scalar_lea.vmem %s5, 64
  %v896 = vld [vmem:[%s895] sm:$0xff]
  %v897 = vld [vmem:[%s895 + $0x8] sm:$0xff]
  %v898 = vld [vmem:[%s895 + $0x10] sm:$0xff]
  %v899 = vld [vmem:[%s895 + $0x18] sm:$0xff]
  %s900 = scalar_lea.vmem %s5, 96
  %v901 = vld [vmem:[%s900] sm:$0xff]
  %v902 = vld [vmem:[%s900 + $0x8] sm:$0xff]
  %v903 = vld [vmem:[%s900 + $0x10] sm:$0xff]
  %v904 = vld [vmem:[%s900 + $0x18] sm:$0xff]
  %v905 = vmax.f32 %v896, %v901
  %v906 = vmax.f32 %v897, %v902
  %v907 = vmax.f32 %v898, %v903
  %v908 = vmax.f32 %v899, %v904
  %v909 = vmax.f32 %v891, %v905
  %v910 = vmax.f32 %v892, %v906
  %v911 = vmax.f32 %v893, %v907
  %v912 = vmax.f32 %v894, %v908
  %vm913 = vcmask 269312
  %914 = vst.msk [vmem:[%s6] sm:$0xff] %vm913, %v909
  %915 = vst.msk [vmem:[%s6 + $0x8] sm:$0xff] %vm913, %v910
  %916 = vst.msk [vmem:[%s6 + $0x10] sm:$0xff] %vm913, %v911
  %917 = vst.msk [vmem:[%s6 + $0x18] sm:$0xff] %vm913, %v912
  // Predicated region
  $region26: #{fcn_forward.10} parent=0 // pred_check
    _
  $region27: #{fcn_forward.10} parent=0 // pred_check_branch
    %919 = sbr.rel (0) target = $region29
  $region28: #{fcn_forward.10} parent=0 // pred_region
    _
  $region29: #{fcn_forward.10} parent=0 // pred_fallthru
    _
  // Predicated region
  $region30: #{fcn_forward.10} parent=0 // pred_check
    _
  $region31: #{fcn_forward.10} parent=0 // pred_check_branch
    %921 = sbr.rel (0) target = $region33
  $region32: #{fcn_forward.10} parent=0 // pred_region
    _
  $region33: #{fcn_forward.10} parent=0 // pred_fallthru
    _
  // Predicated region
  $region34: #{fcn_forward.10} parent=0 // pred_check
    _
  $region35: #{fcn_forward.10} parent=0 // pred_check_branch
    %923 = sbr.rel (0) target = $region37
  $region36: #{fcn_forward.10} parent=0 // pred_region
    _
  $region37: #{fcn_forward.10} parent=0 // pred_fallthru
    _
  // Predicated region
  $region38: #{fcn_forward.10} parent=0 // pred_check
    _
  $region39: #{fcn_forward.10} parent=0 // pred_check_branch
    %925 = sbr.rel (0) target = $region41
  $region40: #{fcn_forward.10} parent=0 // pred_region
    _
  $region41: #{fcn_forward.10} parent=0 // pred_fallthru
    _

// kernel: fcn_forward.11
$region0: #{fcn_forward.11}
  #allocation0 [shape = 'u32[]', space=smem, size = 0x4, offset = 0x4, fixed_abs, tag = 'smem constant byte address 0x4 - core index']
  #allocation1 [shape = 'u32[144,128]{1,0:T(1,128)}', space=vmem, size = 0x12000, scoped, tag = 'internal scratch']
  %s0 = inlined_call_operand.vmem [shape: f32[32,441], index: 0, kind: input, shape index: {}]
  %s1 = inlined_call_operand.vmem [shape: f32[32,49], index: 1, kind: input, shape index: {}]
  %s2 = inlined_call_operand.vmem [shape: bf16[441,49], index: 2, kind: input, shape index: {}]
  %s3 = inlined_call_operand.vmem [shape: f32[1,49], index: 3, kind: input, shape index: {}]
  %s4 = inlined_call_operand.vmem [shape: bf16[49,49], index: 4, kind: input, shape index: {}]
  %s5 = inlined_call_operand.vmem [shape: f32[1,49], index: 5, kind: input, shape index: {}]
  %s6 = inlined_call_operand.vmem [shape: bf16[49,49], index: 6, kind: input, shape index: {}]
  %s7 = inlined_call_operand.vmem [shape: f32[1,49], index: 7, kind: input, shape index: {}]
  %s8 = inlined_call_operand.vmem [shape: bf16[49,49], index: 8, kind: input, shape index: {}]
  %s9 = inlined_call_operand.vmem [shape: bf16[49,49], index: 9, kind: input, shape index: {}]
  %s10 = inlined_call_operand.vmem [shape: bf16[49,49], index: 10, kind: input, shape index: {}]
  %s11 = inlined_call_operand.vmem [shape: f32[1,49], index: 11, kind: input, shape index: {}]
  %s12 = inlined_call_operand.vmem [shape: bf16[4,49,128], index: 12, kind: input, shape index: {}]
  %s13 = inlined_call_operand.vmem [shape: f32[1,128], index: 13, kind: input, shape index: {}]
  %s14 = inlined_call_operand.vmem [shape: f32[4,32,128], index: 14, kind: output, shape index: {}]
  %s15 = sld [smem:[#allocation0]]
  $region66: #{fcn_forward.11} parent=0
    _
  %s17 = ssub.s32 1, %s15
  %s18 = scalar_select 0, %s17, %s15
  // Predicated region
  $region2: #{fcn_forward.11} parent=0 // pred_check
    _
  $region3: #{fcn_forward.11} parent=0 // pred_check_branch
    %20 = sbr.rel (0) target = $region5
  $region4: #{fcn_forward.11} parent=0 // pred_region
    _
  $region5: #{fcn_forward.11} parent=0 // pred_fallthru
    _
  // Predicated region
  $region6: #{fcn_forward.11} parent=0 // pred_check
    _
  $region7: #{fcn_forward.11} parent=0 // pred_check_branch
    %22 = sbr.rel (0) target = $region9
  $region8: #{fcn_forward.11} parent=0 // pred_region
    _
  $region9: #{fcn_forward.11} parent=0 // pred_fallthru
    _
  // Predicated region
  $region10: #{fcn_forward.11} parent=0 // pred_check
    _
  $region11: #{fcn_forward.11} parent=0 // pred_check_branch
    %24 = sbr.rel (0) target = $region13
  $region12: #{fcn_forward.11} parent=0 // pred_region
    _
  $region13: #{fcn_forward.11} parent=0 // pred_fallthru
    _
  // Predicated region
  $region14: #{fcn_forward.11} parent=0 // pred_check
    _
  $region15: #{fcn_forward.11} parent=0 // pred_check_branch
    %26 = sbr.rel (0) target = $region17
  $region16: #{fcn_forward.11} parent=0 // pred_region
    _
  $region17: #{fcn_forward.11} parent=0 // pred_fallthru
    _
  // Predicated region
  $region18: #{fcn_forward.11} parent=0 // pred_check
    _
  $region19: #{fcn_forward.11} parent=0 // pred_check_branch
    %28 = sbr.rel (0) target = $region21
  $region20: #{fcn_forward.11} parent=0 // pred_region
    _
  $region21: #{fcn_forward.11} parent=0 // pred_fallthru
    _
  // Predicated region
  $region22: #{fcn_forward.11} parent=0 // pred_check
    _
  $region23: #{fcn_forward.11} parent=0 // pred_check_branch
    %30 = sbr.rel (0) target = $region25
  $region24: #{fcn_forward.11} parent=0 // pred_region
    _
  $region25: #{fcn_forward.11} parent=0 // pred_fallthru
    _
  // Predicated region
  $region26: #{fcn_forward.11} parent=0 // pred_check
    _
  $region27: #{fcn_forward.11} parent=0 // pred_check_branch
    %32 = sbr.rel (0) target = $region29
  $region28: #{fcn_forward.11} parent=0 // pred_region
    _
  $region29: #{fcn_forward.11} parent=0 // pred_fallthru
    _
  // Predicated region
  $region30: #{fcn_forward.11} parent=0 // pred_check
    _
  $region31: #{fcn_forward.11} parent=0 // pred_check_branch
    %34 = sbr.rel (0) target = $region33
  $region32: #{fcn_forward.11} parent=0 // pred_region
    _
  $region33: #{fcn_forward.11} parent=0 // pred_fallthru
    _
  // Predicated region
  $region34: #{fcn_forward.11} parent=0 // pred_check
    _
  $region35: #{fcn_forward.11} parent=0 // pred_check_branch
    %36 = sbr.rel (0) target = $region37
  $region36: #{fcn_forward.11} parent=0 // pred_region
    _
  $region37: #{fcn_forward.11} parent=0 // pred_fallthru
    _
  // Predicated region
  $region38: #{fcn_forward.11} parent=0 // pred_check
    _
  $region39: #{fcn_forward.11} parent=0 // pred_check_branch
    %38 = sbr.rel (0) target = $region41
  $region40: #{fcn_forward.11} parent=0 // pred_region
    _
  $region41: #{fcn_forward.11} parent=0 // pred_fallthru
    _
  // Predicated region
  $region42: #{fcn_forward.11} parent=0 // pred_check
    _
  $region43: #{fcn_forward.11} parent=0 // pred_check_branch
    %40 = sbr.rel (0) target = $region45
  $region44: #{fcn_forward.11} parent=0 // pred_region
    _
  $region45: #{fcn_forward.11} parent=0 // pred_fallthru
    _
  // Predicated region
  $region46: #{fcn_forward.11} parent=0 // pred_check
    _
  $region47: #{fcn_forward.11} parent=0 // pred_check_branch
    %42 = sbr.rel (0) target = $region49
  $region48: #{fcn_forward.11} parent=0 // pred_region
    _
  $region49: #{fcn_forward.11} parent=0 // pred_fallthru
    _
  // Predicated region
  $region50: #{fcn_forward.11} parent=0 // pred_check
    _
  $region51: #{fcn_forward.11} parent=0 // pred_check_branch
    %44 = sbr.rel (0) target = $region53
  $region52: #{fcn_forward.11} parent=0 // pred_region
    _
  $region53: #{fcn_forward.11} parent=0 // pred_fallthru
    _
  // Predicated region
  $region54: #{fcn_forward.11} parent=0 // pred_check
    _
  $region55: #{fcn_forward.11} parent=0 // pred_check_branch
    %46 = sbr.rel (0) target = $region57
  $region56: #{fcn_forward.11} parent=0 // pred_region
    _
  $region57: #{fcn_forward.11} parent=0 // pred_fallthru
    _
  %v48 = vld [vmem:[%s1] sm:$0xff]
  %v49 = vld [vmem:[%s1 + $0x8] sm:$0xff]
  %v50 = vld [vmem:[%s1 + $0x10] sm:$0xff]
  %v51 = vld [vmem:[%s1 + $0x18] sm:$0xff]
  %v52 = vpack.c.bf16 %v49, %v48
  %v53 = vpack.c.bf16 %v51, %v50
  %v54 = vld [vmem:[%s0] sm:$0xff]
  %v55 = vld [vmem:[%s0 + $0x8] sm:$0xff]
  %v56 = vld [vmem:[%s0 + $0x10] sm:$0xff]
  %v57 = vld [vmem:[%s0 + $0x18] sm:$0xff]
  %v58 = vld [vmem:[%s0 + $0x20] sm:$0xff]
  %v59 = vld [vmem:[%s0 + $0x28] sm:$0xff]
  %v60 = vld [vmem:[%s0 + $0x30] sm:$0xff]
  %v61 = vld [vmem:[%s0 + $0x38] sm:$0xff]
  %v62 = vld [vmem:[%s0 + $0x40] sm:$0xff]
  %v63 = vld [vmem:[%s0 + $0x48] sm:$0xff]
  %v64 = vld [vmem:[%s0 + $0x50] sm:$0xff]
  %v65 = vld [vmem:[%s0 + $0x58] sm:$0xff]
  %v66 = vld [vmem:[%s0 + $0x60] sm:$0xff]
  %v67 = vld [vmem:[%s0 + $0x68] sm:$0xff]
  %v68 = vld [vmem:[%s0 + $0x70] sm:$0xff]
  %v69 = vld [vmem:[%s0 + $0x78] sm:$0xff]
  %v70 = vpack.c.bf16 %v58, %v54
  %v71 = vpack.c.bf16 %v59, %v55
  %v72 = vpack.c.bf16 %v60, %v56
  %v73 = vpack.c.bf16 %v61, %v57
  %v74 = vpack.c.bf16 %v66, %v62
  %v75 = vpack.c.bf16 %v67, %v63
  %v76 = vpack.c.bf16 %v68, %v64
  %v77 = vpack.c.bf16 %v69, %v65
  %v78 = vld [vmem:[%s2] sm:$0xf]
  %v79 = vld [vmem:[%s2 + $0x4] sm:$0xf]
  %v80 = vld [vmem:[%s2 + $0x8] sm:$0xf]
  %v81 = vld [vmem:[%s2 + $0xc] sm:$0xf]
  %v82 = vld [vmem:[%s2 + $0x10] sm:$0xf]
  %v83 = vld [vmem:[%s2 + $0x14] sm:$0xf]
  %v84 = vld [vmem:[%s2 + $0x18] sm:$0xf]
  %v85 = vld [vmem:[%s2 + $0x1c] sm:$0xf]
  %v86 = vld [vmem:[%s2 + $0x20] sm:$0xf]
  %v87 = vld [vmem:[%s2 + $0x24] sm:$0xf]
  %v88 = vld [vmem:[%s2 + $0x28] sm:$0xf]
  %v89 = vld [vmem:[%s2 + $0x2c] sm:$0xf]
  %v90 = vld [vmem:[%s2 + $0x30] sm:$0xf]
  %v91 = vld [vmem:[%s2 + $0x34] sm:$0xf]
  %v92 = vld [vmem:[%s2 + $0x38] sm:$0xf]
  %v93 = vld [vmem:[%s2 + $0x3c] sm:$0xf]
  %v94 = vld [vmem:[%s2 + $0x40] sm:$0xf]
  %v95 = vld [vmem:[%s2 + $0x44] sm:$0xf]
  %v96 = vld [vmem:[%s2 + $0x48] sm:$0xf]
  %v97 = vld [vmem:[%s2 + $0x4c] sm:$0xf]
  %v98 = vld [vmem:[%s2 + $0x50] sm:$0xf]
  %v99 = vld [vmem:[%s2 + $0x54] sm:$0xf]
  %v100 = vld [vmem:[%s2 + $0x58] sm:$0xf]
  %v101 = vld [vmem:[%s2 + $0x5c] sm:$0xf]
  %v102 = vld [vmem:[%s2 + $0x60] sm:$0xf]
  %v103 = vld [vmem:[%s2 + $0x64] sm:$0xf]
  %v104 = vld [vmem:[%s2 + $0x68] sm:$0xf]
  %v105 = vld [vmem:[%s2 + $0x6c] sm:$0xf]
  %v106 = vld [vmem:[%s2 + $0x70] sm:$0xf]
  %v107 = vld [vmem:[%s2 + $0x74] sm:$0xf]
  %v108 = vld [vmem:[%s2 + $0x78] sm:$0xf]
  %v109 = vld [vmem:[%s2 + $0x7c] sm:$0xf]
  %v110 = vld [vmem:[%s2 + $0x80] sm:$0xf]
  %v111 = vld [vmem:[%s2 + $0x84] sm:$0xf]
  %v112 = vld [vmem:[%s2 + $0x88] sm:$0xf]
  %v113 = vld [vmem:[%s2 + $0x8c] sm:$0xf]
  %v114 = vld [vmem:[%s2 + $0x90] sm:$0xf]
  %v115 = vld [vmem:[%s2 + $0x94] sm:$0xf]
  %v116 = vld [vmem:[%s2 + $0x98] sm:$0xf]
  %v117 = vld [vmem:[%s2 + $0x9c] sm:$0xf]
  %v118 = vld [vmem:[%s2 + $0xa0] sm:$0xf]
  %v119 = vld [vmem:[%s2 + $0xa4] sm:$0xf]
  %v120 = vld [vmem:[%s2 + $0xa8] sm:$0xf]
  %v121 = vld [vmem:[%s2 + $0xac] sm:$0xf]
  %v122 = vld [vmem:[%s2 + $0xb0] sm:$0xf]
  %v123 = vld [vmem:[%s2 + $0xb4] sm:$0xf]
  %v124 = vld [vmem:[%s2 + $0xb8] sm:$0xf]
  %v125 = vld [vmem:[%s2 + $0xbc] sm:$0xf]
  %v126 = vld [vmem:[%s2 + $0xc0] sm:$0xf]
  %v127 = vld [vmem:[%s2 + $0xc4] sm:$0xf]
  %v128 = vld [vmem:[%s2 + $0xc8] sm:$0xf]
  %v129 = vld [vmem:[%s2 + $0xcc] sm:$0xf]
  %v130 = vld [vmem:[%s2 + $0xd0] sm:$0xf]
  %v131 = vld [vmem:[%s2 + $0xd4] sm:$0xf]
  %v132 = vld [vmem:[%s2 + $0xd8] sm:$0xf]
  %v133 = vld [vmem:[%s2 + $0xdc] sm:$0x1]
  %v134 = vld [vmem:[%s3] sm:$0x1]
  %v136 = vlaneseq
  %v137 = vshrl.u32 %v136, 7
  %v138 = vsub.s32 0, %v137
  %v139 = vrot.slane %v134, %v138
  %v197 = vunpack.c.l.b16 %v78
  %v198 = vunpack.c.l.b16 %v79
  %v199 = vunpack.c.l.b16 %v80
  %v200 = vunpack.c.l.b16 %v81
  %v201 = vunpack.c.l.b16 %v82
  %v202 = vunpack.c.l.b16 %v83
  %v203 = vunpack.c.l.b16 %v84
  %v204 = vunpack.c.l.b16 %v85
  %v205 = vunpack.c.l.b16 %v86
  %v206 = vunpack.c.l.b16 %v87
  %v207 = vunpack.c.l.b16 %v88
  %v208 = vunpack.c.l.b16 %v89
  %v209 = vunpack.c.l.b16 %v90
  %v210 = vunpack.c.l.b16 %v91
  %v211 = vunpack.c.l.b16 %v92
  %v212 = vunpack.c.l.b16 %v93
  %v213 = vunpack.c.l.b16 %v94
  %v214 = vunpack.c.l.b16 %v95
  %v215 = vunpack.c.l.b16 %v96
  %v216 = vunpack.c.l.b16 %v97
  %v217 = vunpack.c.l.b16 %v98
  %v218 = vunpack.c.l.b16 %v99
  %v219 = vunpack.c.l.b16 %v100
  %v220 = vunpack.c.l.b16 %v101
  %v221 = vunpack.c.l.b16 %v102
  %v222 = vunpack.c.l.b16 %v103
  %v223 = vunpack.c.l.b16 %v104
  %v224 = vunpack.c.l.b16 %v105
  %v225 = vunpack.c.l.b16 %v106
  %v226 = vunpack.c.l.b16 %v107
  %v227 = vunpack.c.l.b16 %v108
  %v228 = vunpack.c.l.b16 %v109
  %v229 = vunpack.c.l.b16 %v110
  %v230 = vunpack.c.l.b16 %v111
  %v231 = vunpack.c.l.b16 %v112
  %v232 = vunpack.c.l.b16 %v113
  %v233 = vunpack.c.l.b16 %v114
  %v234 = vunpack.c.l.b16 %v115
  %v235 = vunpack.c.l.b16 %v116
  %v236 = vunpack.c.l.b16 %v117
  %v237 = vunpack.c.l.b16 %v118
  %v238 = vunpack.c.l.b16 %v119
  %v239 = vunpack.c.l.b16 %v120
  %v240 = vunpack.c.l.b16 %v121
  %v241 = vunpack.c.l.b16 %v122
  %v242 = vunpack.c.l.b16 %v123
  %v243 = vunpack.c.l.b16 %v124
  %v244 = vunpack.c.l.b16 %v125
  %v245 = vunpack.c.l.b16 %v126
  %v246 = vunpack.c.l.b16 %v127
  %v247 = vunpack.c.l.b16 %v128
  %v248 = vunpack.c.l.b16 %v129
  %v249 = vunpack.c.l.b16 %v130
  %v250 = vunpack.c.l.b16 %v131
  %v251 = vunpack.c.l.b16 %v132
  %v252 = vunpack.c.l.b16 %v133
  %v253 = vpack.c.b16 %v198, %v197
  %v254 = vpack.c.b16 %v200, %v199
  %v255 = vpack.c.b16 %v202, %v201
  %v256 = vpack.c.b16 %v204, %v203
  %v257 = vpack.c.b16 %v206, %v205
  %v258 = vpack.c.b16 %v208, %v207
  %v259 = vpack.c.b16 %v210, %v209
  %v260 = vpack.c.b16 %v212, %v211
  %v261 = vpack.c.b16 %v214, %v213
  %v262 = vpack.c.b16 %v216, %v215
  %v263 = vpack.c.b16 %v218, %v217
  %v264 = vpack.c.b16 %v220, %v219
  %v265 = vpack.c.b16 %v222, %v221
  %v266 = vpack.c.b16 %v224, %v223
  %v267 = vpack.c.b16 %v226, %v225
  %v268 = vpack.c.b16 %v228, %v227
  %v269 = vpack.c.b16 %v230, %v229
  %v270 = vpack.c.b16 %v232, %v231
  %v271 = vpack.c.b16 %v234, %v233
  %v272 = vpack.c.b16 %v236, %v235
  %v273 = vpack.c.b16 %v238, %v237
  %v274 = vpack.c.b16 %v240, %v239
  %v275 = vpack.c.b16 %v242, %v241
  %v276 = vpack.c.b16 %v244, %v243
  %v277 = vpack.c.b16 %v246, %v245
  %v278 = vpack.c.b16 %v248, %v247
  %v279 = vpack.c.b16 %v250, %v249
  %v280 = vpack.c.b16 %v252, %v251
  %vm308 = vcmask 465920
  %v310 = vsel %vm308, %v73, 0
  %v313 = vsel %vm308, %v77, 0
  %vm315 = vcmask 1043456
  %vm316 = vcmask 1044480
  %v317 = vsel %vm315, 4294967295, 65535
  %v318 = vsel %vm316, %v317, 0
  %v320 = vand.u32 %v280, %v318
  %322 = vmatprep.subr.bf16.mxu0 0
  %323 = vmatpush1.bf16.msra.mxu0 %v260
  %324 = vmatprep.subr.bf16.mxu0 0
  %325 = vmatpush1.bf16.msra.mxu0 %v259
  %326 = vmatprep.subr.bf16.mxu0 0
  %327 = vmatpush1.bf16.msra.mxu0 %v258
  %328 = vmatprep.subr.bf16.mxu0 0
  %329 = vmatpush1.bf16.msra.mxu0 %v257
  %330 = vmatprep.subr.bf16.mxu0 0
  %331 = vmatpush1.bf16.msra.mxu0 %v256
  %332 = vmatprep.subr.bf16.mxu0 0
  %333 = vmatpush1.bf16.msra.mxu0 %v255
  %334 = vmatprep.subr.bf16.mxu0 0
  %335 = vmatpush1.bf16.msra.mxu0 %v254
  %336 = vmatprep.subr.bf16.mxu0 0
  %337 = vmatpush1.bf16.msra.mxu0 %v253
  %338 = vmatprep.subr.bf16.mxu0 0
  %339 = vmatpush2.bf16.msra.mxu0 %v268
  %340 = vmatprep.subr.bf16.mxu0 0
  %341 = vmatpush2.bf16.msra.mxu0 %v267
  %342 = vmatprep.subr.bf16.mxu0 0
  %343 = vmatpush2.bf16.msra.mxu0 %v266
  %344 = vmatprep.subr.bf16.mxu0 0
  %345 = vmatpush2.bf16.msra.mxu0 %v265
  %346 = vmatprep.subr.bf16.mxu0 0
  %347 = vmatpush2.bf16.msra.mxu0 %v264
  %348 = vmatprep.subr.bf16.mxu0 0
  %349 = vmatpush2.bf16.msra.mxu0 %v263
  %350 = vmatprep.subr.bf16.mxu0 0
  %351 = vmatpush2.bf16.msra.mxu0 %v262
  %352 = vmatprep.subr.bf16.mxu0 0
  %353 = vmatpush2.bf16.msra.mxu0 %v261
  %354 = vmatprep.mubr.bf16.mxu0 %v71
  %355 = vmatmul.mubr.bf16.gmra.mxu0 %v70
  %v356 = vpop.f32.mrf.mxu0
  %v357 = vadd.f32 %v139, %v356
  %v358 = vpop.f32.mrf.mxu0
  %v359 = vpop.f32.mrf.mxu0
  %v360 = vadd.f32 %v139, %v359
  %v361 = vpop.f32.mrf.mxu0
  %362 = vmatprep.mubr.bf16.mxu0 %v75
  %363 = vmatmul.mubr.bf16.gmra.mxu0 %v74
  %v364 = vpop.f32.mrf.mxu0
  %v365 = vadd.f32 %v139, %v364
  %v366 = vpop.f32.mrf.mxu0
  %v367 = vpop.f32.mrf.mxu0
  %v368 = vadd.f32 %v139, %v367
  %v369 = vpop.f32.mrf.mxu0
  %370 = vdwg.mxu0
  %371 = vmatprep.subr.bf16.mxu0 0
  %372 = vmatpush1.bf16.msra.mxu0 %v276
  %373 = vmatprep.subr.bf16.mxu0 0
  %374 = vmatpush1.bf16.msra.mxu0 %v275
  %375 = vmatprep.subr.bf16.mxu0 0
  %376 = vmatpush1.bf16.msra.mxu0 %v274
  %377 = vmatprep.subr.bf16.mxu0 0
  %378 = vmatpush1.bf16.msra.mxu0 %v273
  %379 = vmatprep.subr.bf16.mxu0 0
  %380 = vmatpush1.bf16.msra.mxu0 %v272
  %381 = vmatprep.subr.bf16.mxu0 0
  %382 = vmatpush1.bf16.msra.mxu0 %v271
  %383 = vmatprep.subr.bf16.mxu0 0
  %384 = vmatpush1.bf16.msra.mxu0 %v270
  %385 = vmatprep.subr.bf16.mxu0 0
  %386 = vmatpush1.bf16.msra.mxu0 %v269
  %387 = vmatprep.subr.bf16.mxu0 0
  %388 = vmatpush2.bf16.msra.mxu0 0
  %389 = vmatprep.subr.bf16.mxu0 0
  %390 = vmatpush2.bf16.msra.mxu0 0
  %391 = vmatprep.subr.bf16.mxu0 0
  %392 = vmatpush2.bf16.msra.mxu0 0
  %393 = vmatprep.subr.bf16.mxu0 0
  %394 = vmatpush2.bf16.msra.mxu0 0
  %395 = vmatprep.subr.bf16.mxu0 0
  %396 = vmatpush2.bf16.msra.mxu0 %v320
  %397 = vmatprep.subr.bf16.mxu0 0
  %398 = vmatpush2.bf16.msra.mxu0 %v279
  %399 = vmatprep.subr.bf16.mxu0 0
  %400 = vmatpush2.bf16.msra.mxu0 %v278
  %401 = vmatprep.subr.bf16.mxu0 0
  %402 = vmatpush2.bf16.msra.mxu0 %v277
  %403 = vmatprep.mubr.bf16.mxu0 %v310
  %404 = vmatmul.mubr.bf16.gmra.mxu0 %v72
  %v405 = vpop.f32.mrf.mxu0
  %v406 = vadd.f32 %v357, %v405
  %v407 = vpop.f32.mrf.mxu0
  %v408 = vpop.f32.mrf.mxu0
  %v409 = vadd.f32 %v360, %v408
  %v410 = vpop.f32.mrf.mxu0
  %411 = vmatprep.mubr.bf16.mxu0 %v313
  %412 = vmatmul.mubr.bf16.gmra.mxu0 %v76
  %v413 = vpop.f32.mrf.mxu0
  %v414 = vadd.f32 %v365, %v413
  %v415 = vpop.f32.mrf.mxu0
  %v416 = vpop.f32.mrf.mxu0
  %v417 = vadd.f32 %v368, %v416
  %v418 = vpop.f32.mrf.mxu0
  %419 = vdwg.mxu0
  %v420 = vmax.f32 %v406, 0.0
  %v421 = vmax.f32 %v409, 0.0
  %v422 = vmax.f32 %v414, 0.0
  %v423 = vmax.f32 %v417, 0.0
  %v424 = vld [vmem:[%s4] sm:$0xf]
  %v425 = vld [vmem:[%s4 + $0x4] sm:$0xf]
  %v426 = vld [vmem:[%s4 + $0x8] sm:$0xf]
  %v427 = vld [vmem:[%s4 + $0xc] sm:$0xf]
  %v428 = vld [vmem:[%s4 + $0x10] sm:$0xf]
  %v429 = vld [vmem:[%s4 + $0x14] sm:$0xf]
  %v430 = vld [vmem:[%s4 + $0x18] sm:$0x1]
  %v431 = vld [vmem:[%s5] sm:$0x1]
  %v433 = vlaneseq
  %v434 = vshrl.u32 %v433, 7
  %v435 = vsub.s32 0, %v434
  %v436 = vrot.slane %v431, %v435
  %v445 = vunpack.c.l.b16 %v424
  %v446 = vunpack.c.l.b16 %v425
  %v447 = vunpack.c.l.b16 %v426
  %v448 = vunpack.c.l.b16 %v427
  %v449 = vunpack.c.l.b16 %v428
  %v450 = vunpack.c.l.b16 %v429
  %v451 = vunpack.c.l.b16 %v430
  %v452 = vpack.c.b16 %v446, %v445
  %v453 = vpack.c.b16 %v448, %v447
  %v454 = vpack.c.b16 %v450, %v449
  %v455 = vpack.c.b16 %v451, %v451
  %vm459 = vcmask 400384
  %v461 = vsel %vm459, %v52, 0
  %v464 = vsel %vm459, %v53, 0
  %vm466 = vcmask 1040384
  %v467 = vsel 0, 4294967295, 65535
  %v468 = vsel %vm466, %v467, 0
  %v470 = vand.u32 %v455, %v468
  %472 = vmatprep.subr.bf16.mxu0 0
  %473 = vmatpush1.bf16.msra.mxu0 0
  %474 = vmatprep.subr.bf16.mxu0 0
  %475 = vmatpush1.bf16.msra.mxu0 0
  %476 = vmatprep.subr.bf16.mxu0 0
  %477 = vmatpush1.bf16.msra.mxu0 0
  %478 = vmatprep.subr.bf16.mxu0 0
  %479 = vmatpush1.bf16.msra.mxu0 0
  %480 = vmatprep.subr.bf16.mxu0 0
  %481 = vmatpush1.bf16.msra.mxu0 %v470
  %482 = vmatprep.subr.bf16.mxu0 0
  %483 = vmatpush1.bf16.msra.mxu0 %v454
  %484 = vmatprep.subr.bf16.mxu0 0
  %485 = vmatpush1.bf16.msra.mxu0 %v453
  %486 = vmatprep.subr.bf16.mxu0 0
  %487 = vmatpush1.bf16.msra.mxu0 %v452
  %488 = vmatprep.subr.bf16.mxu0 0
  %489 = vmatpush2.bf16.msra.mxu0 0
  %490 = vmatprep.subr.bf16.mxu0 0
  %491 = vmatpush2.bf16.msra.mxu0 0
  %492 = vmatprep.subr.bf16.mxu0 0
  %493 = vmatpush2.bf16.msra.mxu0 0
  %494 = vmatprep.subr.bf16.mxu0 0
  %495 = vmatpush2.bf16.msra.mxu0 0
  %496 = vmatprep.subr.bf16.mxu0 0
  %497 = vmatpush2.bf16.msra.mxu0 0
  %498 = vmatprep.subr.bf16.mxu0 0
  %499 = vmatpush2.bf16.msra.mxu0 0
  %500 = vmatprep.subr.bf16.mxu0 0
  %501 = vmatpush2.bf16.msra.mxu0 0
  %502 = vmatprep.subr.bf16.mxu0 0
  %503 = vmatpush2.bf16.msra.mxu0 0
  %504 = vmatprep.mubr.bf16.mxu0 0
  %505 = vmatmul.mubr.bf16.gmra.mxu0 %v461
  %v506 = vpop.f32.mrf.mxu0
  %v507 = vadd.f32 %v436, %v506
  %v508 = vpop.f32.mrf.mxu0
  %v509 = vpop.f32.mrf.mxu0
  %v510 = vadd.f32 %v436, %v509
  %v511 = vpop.f32.mrf.mxu0
  %512 = vmatprep.mubr.bf16.mxu0 0
  %513 = vmatmul.mubr.bf16.gmra.mxu0 %v464
  %v514 = vpop.f32.mrf.mxu0
  %v515 = vadd.f32 %v436, %v514
  %v516 = vpop.f32.mrf.mxu0
  %v517 = vpop.f32.mrf.mxu0
  %v518 = vadd.f32 %v436, %v517
  %v519 = vpop.f32.mrf.mxu0
  %520 = vdwg.mxu0
  %v521 = vmax.f32 %v507, 0.0
  %v522 = vmax.f32 %v510, 0.0
  %v523 = vmax.f32 %v515, 0.0
  %v524 = vmax.f32 %v518, 0.0
  %v525 = vld [vmem:[%s6] sm:$0xf]
  %v526 = vld [vmem:[%s6 + $0x4] sm:$0xf]
  %v527 = vld [vmem:[%s6 + $0x8] sm:$0xf]
  %v528 = vld [vmem:[%s6 + $0xc] sm:$0xf]
  %v529 = vld [vmem:[%s6 + $0x10] sm:$0xf]
  %v530 = vld [vmem:[%s6 + $0x14] sm:$0xf]
  %v531 = vld [vmem:[%s6 + $0x18] sm:$0x1]
  %v532 = vld [vmem:[%s7] sm:$0x1]
  %v534 = vlaneseq
  %v535 = vshrl.u32 %v534, 7
  %v536 = vsub.s32 0, %v535
  %v537 = vrot.slane %v532, %v536
  %v546 = vunpack.c.l.b16 %v525
  %v547 = vunpack.c.l.b16 %v526
  %v548 = vunpack.c.l.b16 %v527
  %v549 = vunpack.c.l.b16 %v528
  %v550 = vunpack.c.l.b16 %v529
  %v551 = vunpack.c.l.b16 %v530
  %v552 = vunpack.c.l.b16 %v531
  %v553 = vpack.c.b16 %v547, %v546
  %v554 = vpack.c.b16 %v549, %v548
  %v555 = vpack.c.b16 %v551, %v550
  %v556 = vpack.c.b16 %v552, %v552
  %v561 = vand.u32 %v556, %v468
  %563 = vmatprep.subr.bf16.mxu0 0
  %564 = vmatpush1.bf16.msra.mxu0 0
  %565 = vmatprep.subr.bf16.mxu0 0
  %566 = vmatpush1.bf16.msra.mxu0 0
  %567 = vmatprep.subr.bf16.mxu0 0
  %568 = vmatpush1.bf16.msra.mxu0 0
  %569 = vmatprep.subr.bf16.mxu0 0
  %570 = vmatpush1.bf16.msra.mxu0 0
  %571 = vmatprep.subr.bf16.mxu0 0
  %572 = vmatpush1.bf16.msra.mxu0 %v561
  %573 = vmatprep.subr.bf16.mxu0 0
  %574 = vmatpush1.bf16.msra.mxu0 %v555
  %575 = vmatprep.subr.bf16.mxu0 0
  %576 = vmatpush1.bf16.msra.mxu0 %v554
  %577 = vmatprep.subr.bf16.mxu0 0
  %578 = vmatpush1.bf16.msra.mxu0 %v553
  %579 = vmatprep.subr.bf16.mxu0 0
  %580 = vmatpush2.bf16.msra.mxu0 0
  %581 = vmatprep.subr.bf16.mxu0 0
  %582 = vmatpush2.bf16.msra.mxu0 0
  %583 = vmatprep.subr.bf16.mxu0 0
  %584 = vmatpush2.bf16.msra.mxu0 0
  %585 = vmatprep.subr.bf16.mxu0 0
  %586 = vmatpush2.bf16.msra.mxu0 0
  %587 = vmatprep.subr.bf16.mxu0 0
  %588 = vmatpush2.bf16.msra.mxu0 0
  %589 = vmatprep.subr.bf16.mxu0 0
  %590 = vmatpush2.bf16.msra.mxu0 0
  %591 = vmatprep.subr.bf16.mxu0 0
  %592 = vmatpush2.bf16.msra.mxu0 0
  %593 = vmatprep.subr.bf16.mxu0 0
  %594 = vmatpush2.bf16.msra.mxu0 0
  %595 = vmatprep.mubr.bf16.mxu0 0
  %596 = vmatmul.mubr.bf16.gmra.mxu0 %v461
  %v597 = vpop.f32.mrf.mxu0
  %v598 = vadd.f32 %v537, %v597
  %v599 = vpop.f32.mrf.mxu0
  %v600 = vpop.f32.mrf.mxu0
  %v601 = vadd.f32 %v537, %v600
  %v602 = vpop.f32.mrf.mxu0
  %603 = vmatprep.mubr.bf16.mxu0 0
  %604 = vmatmul.mubr.bf16.gmra.mxu0 %v464
  %v605 = vpop.f32.mrf.mxu0
  %v606 = vadd.f32 %v537, %v605
  %v607 = vpop.f32.mrf.mxu0
  %v608 = vpop.f32.mrf.mxu0
  %v609 = vadd.f32 %v537, %v608
  %v610 = vpop.f32.mrf.mxu0
  %611 = vdwg.mxu0
  %v612 = vmax.f32 %v598, 0.0
  %v613 = vmax.f32 %v601, 0.0
  %v614 = vmax.f32 %v606, 0.0
  %v615 = vmax.f32 %v609, 0.0
  %v616 = vpack.c.bf16 %v421, %v420
  %v617 = vpack.c.bf16 %v423, %v422
  %v618 = vld [vmem:[%s8] sm:$0xf]
  %v619 = vld [vmem:[%s8 + $0x4] sm:$0xf]
  %v620 = vld [vmem:[%s8 + $0x8] sm:$0xf]
  %v621 = vld [vmem:[%s8 + $0xc] sm:$0xf]
  %v622 = vld [vmem:[%s8 + $0x10] sm:$0xf]
  %v623 = vld [vmem:[%s8 + $0x14] sm:$0xf]
  %v624 = vld [vmem:[%s8 + $0x18] sm:$0x1]
  %v625 = vpack.c.bf16 %v522, %v521
  %v626 = vpack.c.bf16 %v524, %v523
  %v627 = vld [vmem:[%s9] sm:$0xf]
  %v628 = vld [vmem:[%s9 + $0x4] sm:$0xf]
  %v629 = vld [vmem:[%s9 + $0x8] sm:$0xf]
  %v630 = vld [vmem:[%s9 + $0xc] sm:$0xf]
  %v631 = vld [vmem:[%s9 + $0x10] sm:$0xf]
  %v632 = vld [vmem:[%s9 + $0x14] sm:$0xf]
  %v633 = vld [vmem:[%s9 + $0x18] sm:$0x1]
  %v641 = vunpack.c.l.b16 %v627
  %v642 = vunpack.c.l.b16 %v628
  %v643 = vunpack.c.l.b16 %v629
  %v644 = vunpack.c.l.b16 %v630
  %v645 = vunpack.c.l.b16 %v631
  %v646 = vunpack.c.l.b16 %v632
  %v647 = vunpack.c.l.b16 %v633
  %v648 = vpack.c.b16 %v642, %v641
  %v649 = vpack.c.b16 %v644, %v643
  %v650 = vpack.c.b16 %v646, %v645
  %v651 = vpack.c.b16 %v647, %v647
  %v656 = vsel %vm459, %v625, 0
  %v659 = vsel %vm459, %v626, 0
  %v662 = vand.u32 %v651, %v468
  %664 = vmatprep.subr.bf16.mxu0 0
  %665 = vmatpush1.bf16.msra.mxu0 0
  %666 = vmatprep.subr.bf16.mxu0 0
  %667 = vmatpush1.bf16.msra.mxu0 0
  %668 = vmatprep.subr.bf16.mxu0 0
  %669 = vmatpush1.bf16.msra.mxu0 0
  %670 = vmatprep.subr.bf16.mxu0 0
  %671 = vmatpush1.bf16.msra.mxu0 0
  %672 = vmatprep.subr.bf16.mxu0 0
  %673 = vmatpush1.bf16.msra.mxu0 %v662
  %674 = vmatprep.subr.bf16.mxu0 0
  %675 = vmatpush1.bf16.msra.mxu0 %v650
  %676 = vmatprep.subr.bf16.mxu0 0
  %677 = vmatpush1.bf16.msra.mxu0 %v649
  %678 = vmatprep.subr.bf16.mxu0 0
  %679 = vmatpush1.bf16.msra.mxu0 %v648
  %680 = vmatprep.subr.bf16.mxu0 0
  %681 = vmatpush2.bf16.msra.mxu0 0
  %682 = vmatprep.subr.bf16.mxu0 0
  %683 = vmatpush2.bf16.msra.mxu0 0
  %684 = vmatprep.subr.bf16.mxu0 0
  %685 = vmatpush2.bf16.msra.mxu0 0
  %686 = vmatprep.subr.bf16.mxu0 0
  %687 = vmatpush2.bf16.msra.mxu0 0
  %688 = vmatprep.subr.bf16.mxu0 0
  %689 = vmatpush2.bf16.msra.mxu0 0
  %690 = vmatprep.subr.bf16.mxu0 0
  %691 = vmatpush2.bf16.msra.mxu0 0
  %692 = vmatprep.subr.bf16.mxu0 0
  %693 = vmatpush2.bf16.msra.mxu0 0
  %694 = vmatprep.subr.bf16.mxu0 0
  %695 = vmatpush2.bf16.msra.mxu0 0
  %696 = vmatprep.mubr.bf16.mxu0 0
  %697 = vmatmul.mubr.bf16.gmra.mxu0 %v656
  %v698 = vpop.f32.mrf.mxu0
  %v699 = vadd.f32 0.0, %v698
  %v700 = vpop.f32.mrf.mxu0
  %v701 = vpop.f32.mrf.mxu0
  %v702 = vadd.f32 0.0, %v701
  %v703 = vpop.f32.mrf.mxu0
  %704 = vmatprep.mubr.bf16.mxu0 0
  %705 = vmatmul.mubr.bf16.gmra.mxu0 %v659
  %v706 = vpop.f32.mrf.mxu0
  %v707 = vadd.f32 0.0, %v706
  %v708 = vpop.f32.mrf.mxu0
  %v709 = vpop.f32.mrf.mxu0
  %v710 = vadd.f32 0.0, %v709
  %v711 = vpop.f32.mrf.mxu0
  %712 = vdwg.mxu0
  %v720 = vunpack.c.l.b16 %v618
  %v721 = vunpack.c.l.b16 %v619
  %v722 = vunpack.c.l.b16 %v620
  %v723 = vunpack.c.l.b16 %v621
  %v724 = vunpack.c.l.b16 %v622
  %v725 = vunpack.c.l.b16 %v623
  %v726 = vunpack.c.l.b16 %v624
  %v727 = vpack.c.b16 %v721, %v720
  %v728 = vpack.c.b16 %v723, %v722
  %v729 = vpack.c.b16 %v725, %v724
  %v730 = vpack.c.b16 %v726, %v726
  %v735 = vsel %vm459, %v616, 0
  %v738 = vsel %vm459, %v617, 0
  %v741 = vand.u32 %v730, %v468
  %743 = vmatprep.subr.bf16.mxu0 0
  %744 = vmatpush1.bf16.msra.mxu0 0
  %745 = vmatprep.subr.bf16.mxu0 0
  %746 = vmatpush1.bf16.msra.mxu0 0
  %747 = vmatprep.subr.bf16.mxu0 0
  %748 = vmatpush1.bf16.msra.mxu0 0
  %749 = vmatprep.subr.bf16.mxu0 0
  %750 = vmatpush1.bf16.msra.mxu0 0
  %751 = vmatprep.subr.bf16.mxu0 0
  %752 = vmatpush1.bf16.msra.mxu0 %v741
  %753 = vmatprep.subr.bf16.mxu0 0
  %754 = vmatpush1.bf16.msra.mxu0 %v729
  %755 = vmatprep.subr.bf16.mxu0 0
  %756 = vmatpush1.bf16.msra.mxu0 %v728
  %757 = vmatprep.subr.bf16.mxu0 0
  %758 = vmatpush1.bf16.msra.mxu0 %v727
  %759 = vmatprep.subr.bf16.mxu0 0
  %760 = vmatpush2.bf16.msra.mxu0 0
  %761 = vmatprep.subr.bf16.mxu0 0
  %762 = vmatpush2.bf16.msra.mxu0 0
  %763 = vmatprep.subr.bf16.mxu0 0
  %764 = vmatpush2.bf16.msra.mxu0 0
  %765 = vmatprep.subr.bf16.mxu0 0
  %766 = vmatpush2.bf16.msra.mxu0 0
  %767 = vmatprep.subr.bf16.mxu0 0
  %768 = vmatpush2.bf16.msra.mxu0 0
  %769 = vmatprep.subr.bf16.mxu0 0
  %770 = vmatpush2.bf16.msra.mxu0 0
  %771 = vmatprep.subr.bf16.mxu0 0
  %772 = vmatpush2.bf16.msra.mxu0 0
  %773 = vmatprep.subr.bf16.mxu0 0
  %774 = vmatpush2.bf16.msra.mxu0 0
  %775 = vmatprep.mubr.bf16.mxu0 0
  %776 = vmatmul.mubr.bf16.gmra.mxu0 %v735
  %v777 = vpop.f32.mrf.mxu0
  %v778 = vadd.f32 %v699, %v777
  %v779 = vpop.f32.mrf.mxu0
  %v780 = vpop.f32.mrf.mxu0
  %v781 = vadd.f32 %v702, %v780
  %v782 = vpop.f32.mrf.mxu0
  %783 = vmatprep.mubr.bf16.mxu0 0
  %784 = vmatmul.mubr.bf16.gmra.mxu0 %v738
  %v785 = vpop.f32.mrf.mxu0
  %v786 = vadd.f32 %v707, %v785
  %v787 = vpop.f32.mrf.mxu0
  %v788 = vpop.f32.mrf.mxu0
  %v789 = vadd.f32 %v710, %v788
  %v790 = vpop.f32.mrf.mxu0
  %791 = vdwg.mxu0
  %v792 = vpack.c.bf16 %v613, %v612
  %v793 = vpack.c.bf16 %v615, %v614
  %v794 = vld [vmem:[%s10] sm:$0xf]
  %v795 = vld [vmem:[%s10 + $0x4] sm:$0xf]
  %v796 = vld [vmem:[%s10 + $0x8] sm:$0xf]
  %v797 = vld [vmem:[%s10 + $0xc] sm:$0xf]
  %v798 = vld [vmem:[%s10 + $0x10] sm:$0xf]
  %v799 = vld [vmem:[%s10 + $0x14] sm:$0xf]
  %v800 = vld [vmem:[%s10 + $0x18] sm:$0x1]
  %v808 = vunpack.c.l.b16 %v794
  %v809 = vunpack.c.l.b16 %v795
  %v810 = vunpack.c.l.b16 %v796
  %v811 = vunpack.c.l.b16 %v797
  %v812 = vunpack.c.l.b16 %v798
  %v813 = vunpack.c.l.b16 %v799
  %v814 = vunpack.c.l.b16 %v800
  %v815 = vpack.c.b16 %v809, %v808
  %v816 = vpack.c.b16 %v811, %v810
  %v817 = vpack.c.b16 %v813, %v812
  %v818 = vpack.c.b16 %v814, %v814
  %v823 = vsel %vm459, %v792, 0
  %v826 = vsel %vm459, %v793, 0
  %v829 = vand.u32 %v818, %v468
  %831 = vmatprep.subr.bf16.mxu0 0
  %832 = vmatpush1.bf16.msra.mxu0 0
  %833 = vmatprep.subr.bf16.mxu0 0
  %834 = vmatpush1.bf16.msra.mxu0 0
  %835 = vmatprep.subr.bf16.mxu0 0
  %836 = vmatpush1.bf16.msra.mxu0 0
  %837 = vmatprep.subr.bf16.mxu0 0
  %838 = vmatpush1.bf16.msra.mxu0 0
  %839 = vmatprep.subr.bf16.mxu0 0
  %840 = vmatpush1.bf16.msra.mxu0 %v829
  %841 = vmatprep.subr.bf16.mxu0 0
  %842 = vmatpush1.bf16.msra.mxu0 %v817
  %843 = vmatprep.subr.bf16.mxu0 0
  %844 = vmatpush1.bf16.msra.mxu0 %v816
  %845 = vmatprep.subr.bf16.mxu0 0
  %846 = vmatpush1.bf16.msra.mxu0 %v815
  %847 = vmatprep.subr.bf16.mxu0 0
  %848 = vmatpush2.bf16.msra.mxu0 0
  %849 = vmatprep.subr.bf16.mxu0 0
  %850 = vmatpush2.bf16.msra.mxu0 0
  %851 = vmatprep.subr.bf16.mxu0 0
  %852 = vmatpush2.bf16.msra.mxu0 0
  %853 = vmatprep.subr.bf16.mxu0 0
  %854 = vmatpush2.bf16.msra.mxu0 0
  %855 = vmatprep.subr.bf16.mxu0 0
  %856 = vmatpush2.bf16.msra.mxu0 0
  %857 = vmatprep.subr.bf16.mxu0 0
  %858 = vmatpush2.bf16.msra.mxu0 0
  %859 = vmatprep.subr.bf16.mxu0 0
  %860 = vmatpush2.bf16.msra.mxu0 0
  %861 = vmatprep.subr.bf16.mxu0 0
  %862 = vmatpush2.bf16.msra.mxu0 0
  %863 = vmatprep.mubr.bf16.mxu0 0
  %864 = vmatmul.mubr.bf16.gmra.mxu0 %v823
  %v865 = vpop.f32.mrf.mxu0
  %v866 = vadd.f32 0.0, %v865
  %v867 = vpop.f32.mrf.mxu0
  %v868 = vpop.f32.mrf.mxu0
  %v869 = vadd.f32 0.0, %v868
  %v870 = vpop.f32.mrf.mxu0
  %871 = vmatprep.mubr.bf16.mxu0 0
  %872 = vmatmul.mubr.bf16.gmra.mxu0 %v826
  %v873 = vpop.f32.mrf.mxu0
  %v874 = vadd.f32 0.0, %v873
  %v875 = vpop.f32.mrf.mxu0
  %v876 = vpop.f32.mrf.mxu0
  %v877 = vadd.f32 0.0, %v876
  %v878 = vpop.f32.mrf.mxu0
  %879 = vdwg.mxu0
  %v880 = vadd.f32 %v778, %v866
  %v881 = vadd.f32 %v781, %v869
  %v882 = vadd.f32 %v786, %v874
  %v883 = vadd.f32 %v789, %v877
  %v884 = vld [vmem:[%s11] sm:$0x1]
  %v886 = vlaneseq
  %v887 = vshrl.u32 %v886, 7
  %v888 = vsub.s32 0, %v887
  %v889 = vrot.slane %v884, %v888
  %v891 = vadd.f32 %v880, %v889
  %v892 = vadd.f32 %v881, %v889
  %v893 = vadd.f32 %v882, %v889
  %v894 = vadd.f32 %v883, %v889
  %v895 = vpack.c.bf16 %v892, %v891
  %v896 = vpack.c.bf16 %v894, %v893
  %v897 = vld [vmem:[%s12] sm:$0xf]
  %v898 = vld [vmem:[%s12 + $0x4] sm:$0xf]
  %v899 = vld [vmem:[%s12 + $0x8] sm:$0xf]
  %v900 = vld [vmem:[%s12 + $0xc] sm:$0xf]
  %v901 = vld [vmem:[%s12 + $0x10] sm:$0xf]
  %v902 = vld [vmem:[%s12 + $0x14] sm:$0xf]
  %v903 = vld [vmem:[%s12 + $0x18] sm:$0x1]
  %v904 = vld [vmem:[%s13] sm:$0x1]
  %v906 = vlaneseq
  %v907 = vshrl.u32 %v906, 7
  %v908 = vsub.s32 0, %v907
  %v909 = vrot.slane %v904, %v908
  %v918 = vunpack.c.l.b16 %v897
  %v919 = vunpack.c.l.b16 %v898
  %v920 = vunpack.c.l.b16 %v899
  %v921 = vunpack.c.l.b16 %v900
  %v922 = vunpack.c.l.b16 %v901
  %v923 = vunpack.c.l.b16 %v902
  %v924 = vunpack.c.l.b16 %v903
  %v925 = vpack.c.b16 %v919, %v918
  %v926 = vpack.c.b16 %v921, %v920
  %v927 = vpack.c.b16 %v923, %v922
  %v928 = vpack.c.b16 %v924, %v924
  %v933 = vsel %vm459, %v895, 0
  %v936 = vsel %vm459, %v896, 0
  %v939 = vand.u32 %v928, %v468
  %941 = vmatprep.subr.bf16.mxu0 0
  %942 = vmatpush1.bf16.msra.mxu0 0
  %943 = vmatprep.subr.bf16.mxu0 0
  %944 = vmatpush1.bf16.msra.mxu0 0
  %945 = vmatprep.subr.bf16.mxu0 0
  %946 = vmatpush1.bf16.msra.mxu0 0
  %947 = vmatprep.subr.bf16.mxu0 0
  %948 = vmatpush1.bf16.msra.mxu0 0
  %949 = vmatprep.subr.bf16.mxu0 0
  %950 = vmatpush1.bf16.msra.mxu0 %v939
  %951 = vmatprep.subr.bf16.mxu0 0
  %952 = vmatpush1.bf16.msra.mxu0 %v927
  %953 = vmatprep.subr.bf16.mxu0 0
  %954 = vmatpush1.bf16.msra.mxu0 %v926
  %955 = vmatprep.subr.bf16.mxu0 0
  %956 = vmatpush1.bf16.msra.mxu0 %v925
  %957 = vmatprep.subr.bf16.mxu0 0
  %958 = vmatpush2.bf16.msra.mxu0 0
  %959 = vmatprep.subr.bf16.mxu0 0
  %960 = vmatpush2.bf16.msra.mxu0 0
  %961 = vmatprep.subr.bf16.mxu0 0
  %962 = vmatpush2.bf16.msra.mxu0 0
  %963 = vmatprep.subr.bf16.mxu0 0
  %964 = vmatpush2.bf16.msra.mxu0 0
  %965 = vmatprep.subr.bf16.mxu0 0
  %966 = vmatpush2.bf16.msra.mxu0 0
  %967 = vmatprep.subr.bf16.mxu0 0
  %968 = vmatpush2.bf16.msra.mxu0 0
  %969 = vmatprep.subr.bf16.mxu0 0
  %970 = vmatpush2.bf16.msra.mxu0 0
  %971 = vmatprep.subr.bf16.mxu0 0
  %972 = vmatpush2.bf16.msra.mxu0 0
  %973 = vmatprep.mubr.bf16.mxu0 0
  %974 = vmatmul.mubr.bf16.gmra.mxu0 %v933
  %v975 = vpop.f32.mrf.mxu0
  %v976 = vadd.f32 %v909, %v975
  %v977 = vpop.f32.mrf.mxu0
  %v978 = vpop.f32.mrf.mxu0
  %v979 = vadd.f32 %v909, %v978
  %v980 = vpop.f32.mrf.mxu0
  %981 = vmatprep.mubr.bf16.mxu0 0
  %982 = vmatmul.mubr.bf16.gmra.mxu0 %v936
  %v983 = vpop.f32.mrf.mxu0
  %v984 = vadd.f32 %v909, %v983
  %v985 = vpop.f32.mrf.mxu0
  %v986 = vpop.f32.mrf.mxu0
  %v987 = vadd.f32 %v909, %v986
  %v988 = vpop.f32.mrf.mxu0
  %989 = vdwg.mxu0
  %v990 = vmax.f32 %v976, 0.0
  %v991 = vmax.f32 %v979, 0.0
  %v992 = vmax.f32 %v984, 0.0
  %v993 = vmax.f32 %v987, 0.0
  %994 = vst [vmem:[%s14] sm:$0xff] %v990
  %995 = vst [vmem:[%s14 + $0x8] sm:$0xff] %v991
  %996 = vst [vmem:[%s14 + $0x10] sm:$0xff] %v992
  %997 = vst [vmem:[%s14 + $0x18] sm:$0xff] %v993
  %s998 = scalar_lea.vmem %s12, 28
  %v999 = vld [vmem:[%s998] sm:$0xf]
  %v1000 = vld [vmem:[%s998 + $0x4] sm:$0xf]
  %v1001 = vld [vmem:[%s998 + $0x8] sm:$0xf]
  %v1002 = vld [vmem:[%s998 + $0xc] sm:$0xf]
  %v1003 = vld [vmem:[%s998 + $0x10] sm:$0xf]
  %v1004 = vld [vmem:[%s998 + $0x14] sm:$0xf]
  %v1005 = vld [vmem:[%s998 + $0x18] sm:$0x1]
  %v1006 = vld [vmem:[%s13] sm:$0x1]
  %v1008 = vlaneseq
  %v1009 = vshrl.u32 %v1008, 7
  %v1010 = vsub.s32 0, %v1009
  %v1011 = vrot.slane %v1006, %v1010
  %v1020 = vunpack.c.l.b16 %v999
  %v1021 = vunpack.c.l.b16 %v1000
  %v1022 = vunpack.c.l.b16 %v1001
  %v1023 = vunpack.c.l.b16 %v1002
  %v1024 = vunpack.c.l.b16 %v1003
  %v1025 = vunpack.c.l.b16 %v1004
  %v1026 = vunpack.c.l.b16 %v1005
  %v1027 = vpack.c.b16 %v1021, %v1020
  %v1028 = vpack.c.b16 %v1023, %v1022
  %v1029 = vpack.c.b16 %v1025, %v1024
  %v1030 = vpack.c.b16 %v1026, %v1026
  %v1035 = vand.u32 %v1030, %v468
  %1037 = vmatprep.subr.bf16.mxu0 0
  %1038 = vmatpush1.bf16.msra.mxu0 0
  %1039 = vmatprep.subr.bf16.mxu0 0
  %1040 = vmatpush1.bf16.msra.mxu0 0
  %1041 = vmatprep.subr.bf16.mxu0 0
  %1042 = vmatpush1.bf16.msra.mxu0 0
  %1043 = vmatprep.subr.bf16.mxu0 0
  %1044 = vmatpush1.bf16.msra.mxu0 0
  %1045 = vmatprep.subr.bf16.mxu0 0
  %1046 = vmatpush1.bf16.msra.mxu0 %v1035
  %1047 = vmatprep.subr.bf16.mxu0 0
  %1048 = vmatpush1.bf16.msra.mxu0 %v1029
  %1049 = vmatprep.subr.bf16.mxu0 0
  %1050 = vmatpush1.bf16.msra.mxu0 %v1028
  %1051 = vmatprep.subr.bf16.mxu0 0
  %1052 = vmatpush1.bf16.msra.mxu0 %v1027
  %1053 = vmatprep.subr.bf16.mxu0 0
  %1054 = vmatpush2.bf16.msra.mxu0 0
  %1055 = vmatprep.subr.bf16.mxu0 0
  %1056 = vmatpush2.bf16.msra.mxu0 0
  %1057 = vmatprep.subr.bf16.mxu0 0
  %1058 = vmatpush2.bf16.msra.mxu0 0
  %1059 = vmatprep.subr.bf16.mxu0 0
  %1060 = vmatpush2.bf16.msra.mxu0 0
  %1061 = vmatprep.subr.bf16.mxu0 0
  %1062 = vmatpush2.bf16.msra.mxu0 0
  %1063 = vmatprep.subr.bf16.mxu0 0
  %1064 = vmatpush2.bf16.msra.mxu0 0
  %1065 = vmatprep.subr.bf16.mxu0 0
  %1066 = vmatpush2.bf16.msra.mxu0 0
  %1067 = vmatprep.subr.bf16.mxu0 0
  %1068 = vmatpush2.bf16.msra.mxu0 0
  %1069 = vmatprep.mubr.bf16.mxu0 0
  %1070 = vmatmul.mubr.bf16.gmra.mxu0 %v933
  %v1071 = vpop.f32.mrf.mxu0
  %v1072 = vadd.f32 %v1011, %v1071
  %v1073 = vpop.f32.mrf.mxu0
  %v1074 = vpop.f32.mrf.mxu0
  %v1075 = vadd.f32 %v1011, %v1074
  %v1076 = vpop.f32.mrf.mxu0
  %1077 = vmatprep.mubr.bf16.mxu0 0
  %1078 = vmatmul.mubr.bf16.gmra.mxu0 %v936
  %v1079 = vpop.f32.mrf.mxu0
  %v1080 = vadd.f32 %v1011, %v1079
  %v1081 = vpop.f32.mrf.mxu0
  %v1082 = vpop.f32.mrf.mxu0
  %v1083 = vadd.f32 %v1011, %v1082
  %v1084 = vpop.f32.mrf.mxu0
  %1085 = vdwg.mxu0
  %v1086 = vmax.f32 %v1072, 0.0
  %v1087 = vmax.f32 %v1075, 0.0
  %v1088 = vmax.f32 %v1080, 0.0
  %v1089 = vmax.f32 %v1083, 0.0
  %s1090 = scalar_lea.vmem %s14, 32
  %1091 = vst [vmem:[%s1090] sm:$0xff] %v1086
  %1092 = vst [vmem:[%s1090 + $0x8] sm:$0xff] %v1087
  %1093 = vst [vmem:[%s1090 + $0x10] sm:$0xff] %v1088
  %1094 = vst [vmem:[%s1090 + $0x18] sm:$0xff] %v1089
  %s1095 = scalar_lea.vmem %s12, 56
  %v1096 = vld [vmem:[%s1095] sm:$0xf]
  %v1097 = vld [vmem:[%s1095 + $0x4] sm:$0xf]
  %v1098 = vld [vmem:[%s1095 + $0x8] sm:$0xf]
  %v1099 = vld [vmem:[%s1095 + $0xc] sm:$0xf]
  %v1100 = vld [vmem:[%s1095 + $0x10] sm:$0xf]
  %v1101 = vld [vmem:[%s1095 + $0x14] sm:$0xf]
  %v1102 = vld [vmem:[%s1095 + $0x18] sm:$0x1]
  %v1103 = vld [vmem:[%s13] sm:$0x1]
  %v1105 = vlaneseq
  %v1106 = vshrl.u32 %v1105, 7
  %v1107 = vsub.s32 0, %v1106
  %v1108 = vrot.slane %v1103, %v1107
  %v1117 = vunpack.c.l.b16 %v1096
  %v1118 = vunpack.c.l.b16 %v1097
  %v1119 = vunpack.c.l.b16 %v1098
  %v1120 = vunpack.c.l.b16 %v1099
  %v1121 = vunpack.c.l.b16 %v1100
  %v1122 = vunpack.c.l.b16 %v1101
  %v1123 = vunpack.c.l.b16 %v1102
  %v1124 = vpack.c.b16 %v1118, %v1117
  %v1125 = vpack.c.b16 %v1120, %v1119
  %v1126 = vpack.c.b16 %v1122, %v1121
  %v1127 = vpack.c.b16 %v1123, %v1123
  %v1132 = vand.u32 %v1127, %v468
  %1134 = vmatprep.subr.bf16.mxu0 0
  %1135 = vmatpush1.bf16.msra.mxu0 0
  %1136 = vmatprep.subr.bf16.mxu0 0
  %1137 = vmatpush1.bf16.msra.mxu0 0
  %1138 = vmatprep.subr.bf16.mxu0 0
  %1139 = vmatpush1.bf16.msra.mxu0 0
  %1140 = vmatprep.subr.bf16.mxu0 0
  %1141 = vmatpush1.bf16.msra.mxu0 0
  %1142 = vmatprep.subr.bf16.mxu0 0
  %1143 = vmatpush1.bf16.msra.mxu0 %v1132
  %1144 = vmatprep.subr.bf16.mxu0 0
  %1145 = vmatpush1.bf16.msra.mxu0 %v1126
  %1146 = vmatprep.subr.bf16.mxu0 0
  %1147 = vmatpush1.bf16.msra.mxu0 %v1125
  %1148 = vmatprep.subr.bf16.mxu0 0
  %1149 = vmatpush1.bf16.msra.mxu0 %v1124
  %1150 = vmatprep.subr.bf16.mxu0 0
  %1151 = vmatpush2.bf16.msra.mxu0 0
  %1152 = vmatprep.subr.bf16.mxu0 0
  %1153 = vmatpush2.bf16.msra.mxu0 0
  %1154 = vmatprep.subr.bf16.mxu0 0
  %1155 = vmatpush2.bf16.msra.mxu0 0
  %1156 = vmatprep.subr.bf16.mxu0 0
  %1157 = vmatpush2.bf16.msra.mxu0 0
  %1158 = vmatprep.subr.bf16.mxu0 0
  %1159 = vmatpush2.bf16.msra.mxu0 0
  %1160 = vmatprep.subr.bf16.mxu0 0
  %1161 = vmatpush2.bf16.msra.mxu0 0
  %1162 = vmatprep.subr.bf16.mxu0 0
  %1163 = vmatpush2.bf16.msra.mxu0 0
  %1164 = vmatprep.subr.bf16.mxu0 0
  %1165 = vmatpush2.bf16.msra.mxu0 0
  %1166 = vmatprep.mubr.bf16.mxu0 0
  %1167 = vmatmul.mubr.bf16.gmra.mxu0 %v933
  %v1168 = vpop.f32.mrf.mxu0
  %v1169 = vadd.f32 %v1108, %v1168
  %v1170 = vpop.f32.mrf.mxu0
  %v1171 = vpop.f32.mrf.mxu0
  %v1172 = vadd.f32 %v1108, %v1171
  %v1173 = vpop.f32.mrf.mxu0
  %1174 = vmatprep.mubr.bf16.mxu0 0
  %1175 = vmatmul.mubr.bf16.gmra.mxu0 %v936
  %v1176 = vpop.f32.mrf.mxu0
  %v1177 = vadd.f32 %v1108, %v1176
  %v1178 = vpop.f32.mrf.mxu0
  %v1179 = vpop.f32.mrf.mxu0
  %v1180 = vadd.f32 %v1108, %v1179
  %v1181 = vpop.f32.mrf.mxu0
  %1182 = vdwg.mxu0
  %v1183 = vmax.f32 %v1169, 0.0
  %v1184 = vmax.f32 %v1172, 0.0
  %v1185 = vmax.f32 %v1177, 0.0
  %v1186 = vmax.f32 %v1180, 0.0
  %s1187 = scalar_lea.vmem %s14, 64
  %1188 = vst [vmem:[%s1187] sm:$0xff] %v1183
  %1189 = vst [vmem:[%s1187 + $0x8] sm:$0xff] %v1184
  %1190 = vst [vmem:[%s1187 + $0x10] sm:$0xff] %v1185
  %1191 = vst [vmem:[%s1187 + $0x18] sm:$0xff] %v1186
  %s1192 = scalar_lea.vmem %s12, 84
  %v1193 = vld [vmem:[%s1192] sm:$0xf]
  %v1194 = vld [vmem:[%s1192 + $0x4] sm:$0xf]
  %v1195 = vld [vmem:[%s1192 + $0x8] sm:$0xf]
  %v1196 = vld [vmem:[%s1192 + $0xc] sm:$0xf]
  %v1197 = vld [vmem:[%s1192 + $0x10] sm:$0xf]
  %v1198 = vld [vmem:[%s1192 + $0x14] sm:$0xf]
  %v1199 = vld [vmem:[%s1192 + $0x18] sm:$0x1]
  %v1200 = vld [vmem:[%s13] sm:$0x1]
  %v1202 = vlaneseq
  %v1203 = vshrl.u32 %v1202, 7
  %v1204 = vsub.s32 0, %v1203
  %v1205 = vrot.slane %v1200, %v1204
  %v1214 = vunpack.c.l.b16 %v1193
  %v1215 = vunpack.c.l.b16 %v1194
  %v1216 = vunpack.c.l.b16 %v1195
  %v1217 = vunpack.c.l.b16 %v1196
  %v1218 = vunpack.c.l.b16 %v1197
  %v1219 = vunpack.c.l.b16 %v1198
  %v1220 = vunpack.c.l.b16 %v1199
  %v1221 = vpack.c.b16 %v1215, %v1214
  %v1222 = vpack.c.b16 %v1217, %v1216
  %v1223 = vpack.c.b16 %v1219, %v1218
  %v1224 = vpack.c.b16 %v1220, %v1220
  %v1229 = vand.u32 %v1224, %v468
  %1231 = vmatprep.subr.bf16.mxu0 0
  %1232 = vmatpush1.bf16.msra.mxu0 0
  %1233 = vmatprep.subr.bf16.mxu0 0
  %1234 = vmatpush1.bf16.msra.mxu0 0
  %1235 = vmatprep.subr.bf16.mxu0 0
  %1236 = vmatpush1.bf16.msra.mxu0 0
  %1237 = vmatprep.subr.bf16.mxu0 0
  %1238 = vmatpush1.bf16.msra.mxu0 0
  %1239 = vmatprep.subr.bf16.mxu0 0
  %1240 = vmatpush1.bf16.msra.mxu0 %v1229
  %1241 = vmatprep.subr.bf16.mxu0 0
  %1242 = vmatpush1.bf16.msra.mxu0 %v1223
  %1243 = vmatprep.subr.bf16.mxu0 0
  %1244 = vmatpush1.bf16.msra.mxu0 %v1222
  %1245 = vmatprep.subr.bf16.mxu0 0
  %1246 = vmatpush1.bf16.msra.mxu0 %v1221
  %1247 = vmatprep.subr.bf16.mxu0 0
  %1248 = vmatpush2.bf16.msra.mxu0 0
  %1249 = vmatprep.subr.bf16.mxu0 0
  %1250 = vmatpush2.bf16.msra.mxu0 0
  %1251 = vmatprep.subr.bf16.mxu0 0
  %1252 = vmatpush2.bf16.msra.mxu0 0
  %1253 = vmatprep.subr.bf16.mxu0 0
  %1254 = vmatpush2.bf16.msra.mxu0 0
  %1255 = vmatprep.subr.bf16.mxu0 0
  %1256 = vmatpush2.bf16.msra.mxu0 0
  %1257 = vmatprep.subr.bf16.mxu0 0
  %1258 = vmatpush2.bf16.msra.mxu0 0
  %1259 = vmatprep.subr.bf16.mxu0 0
  %1260 = vmatpush2.bf16.msra.mxu0 0
  %1261 = vmatprep.subr.bf16.mxu0 0
  %1262 = vmatpush2.bf16.msra.mxu0 0
  %1263 = vmatprep.mubr.bf16.mxu0 0
  %1264 = vmatmul.mubr.bf16.gmra.mxu0 %v933
  %v1265 = vpop.f32.mrf.mxu0
  %v1266 = vadd.f32 %v1205, %v1265
  %v1267 = vpop.f32.mrf.mxu0
  %v1268 = vpop.f32.mrf.mxu0
  %v1269 = vadd.f32 %v1205, %v1268
  %v1270 = vpop.f32.mrf.mxu0
  %1271 = vmatprep.mubr.bf16.mxu0 0
  %1272 = vmatmul.mubr.bf16.gmra.mxu0 %v936
  %v1273 = vpop.f32.mrf.mxu0
  %v1274 = vadd.f32 %v1205, %v1273
  %v1275 = vpop.f32.mrf.mxu0
  %v1276 = vpop.f32.mrf.mxu0
  %v1277 = vadd.f32 %v1205, %v1276
  %v1278 = vpop.f32.mrf.mxu0
  %1279 = vdwg.mxu0
  %v1280 = vmax.f32 %v1266, 0.0
  %v1281 = vmax.f32 %v1269, 0.0
  %v1282 = vmax.f32 %v1274, 0.0
  %v1283 = vmax.f32 %v1277, 0.0
  %s1284 = scalar_lea.vmem %s14, 96
  %1285 = vst [vmem:[%s1284] sm:$0xff] %v1280
  %1286 = vst [vmem:[%s1284 + $0x8] sm:$0xff] %v1281
  %1287 = vst [vmem:[%s1284 + $0x10] sm:$0xff] %v1282
  %1288 = vst [vmem:[%s1284 + $0x18] sm:$0xff] %v1283
  // Predicated region
  $region58: #{fcn_forward.11} parent=0 // pred_check
    _
  $region59: #{fcn_forward.11} parent=0 // pred_check_branch
    %1290 = sbr.rel (0) target = $region61
  $region60: #{fcn_forward.11} parent=0 // pred_region
    _
  $region61: #{fcn_forward.11} parent=0 // pred_fallthru
    _
  // Predicated region
  $region62: #{fcn_forward.11} parent=0 // pred_check
    _
  $region63: #{fcn_forward.11} parent=0 // pred_check_branch
    %1292 = sbr.rel (0) target = $region65
  $region64: #{fcn_forward.11} parent=0 // pred_region
    _
  $region65: #{fcn_forward.11} parent=0 // pred_fallthru
    _

// kernel: fcn_forward.12
$region0: #{fcn_forward.12}
  #allocation0 [shape = 'u32[]', space=smem, size = 0x4, offset = 0x4, fixed_abs, tag = 'smem constant byte address 0x4 - core index']
  #allocation1 [shape = 'u32[144,128]{1,0:T(1,128)}', space=vmem, size = 0x12000, scoped, tag = 'internal scratch']
  %s0 = inlined_call_operand.vmem [shape: f32[128,1152], index: 0, kind: input, shape index: {}]
  %s1 = inlined_call_operand.vmem [shape: bf16[1152,128], index: 1, kind: input, shape index: {}]
  %s2 = inlined_call_operand.vmem [shape: f32[1,128], index: 2, kind: input, shape index: {}]
  %s3 = inlined_call_operand.vmem [shape: f32[128,128], index: 3, kind: output, shape index: {}]
  %s4 = sld [smem:[#allocation0]]
  $region22: #{fcn_forward.12} parent=0
    _
  %s6 = ssub.s32 1, %s4
  %s7 = scalar_select 0, %s6, %s4
  // Predicated region
  $region2: #{fcn_forward.12} parent=0 // pred_check
    _
  $region3: #{fcn_forward.12} parent=0 // pred_check_branch
    %9 = sbr.rel (0) target = $region5
  $region4: #{fcn_forward.12} parent=0 // pred_region
    _
  $region5: #{fcn_forward.12} parent=0 // pred_fallthru
    _
  // Predicated region
  $region6: #{fcn_forward.12} parent=0 // pred_check
    _
  $region7: #{fcn_forward.12} parent=0 // pred_check_branch
    %11 = sbr.rel (0) target = $region9
  $region8: #{fcn_forward.12} parent=0 // pred_region
    _
  $region9: #{fcn_forward.12} parent=0 // pred_fallthru
    _
  // Predicated region
  $region10: #{fcn_forward.12} parent=0 // pred_check
    _
  $region11: #{fcn_forward.12} parent=0 // pred_check_branch
    %13 = sbr.rel (0) target = $region13
  $region12: #{fcn_forward.12} parent=0 // pred_region
    _
  $region13: #{fcn_forward.12} parent=0 // pred_fallthru
    _
  %v15 = vld [vmem:[%s0] sm:$0xff]
  %v16 = vld [vmem:[%s0 + $0x8] sm:$0xff]
  %v17 = vld [vmem:[%s0 + $0x10] sm:$0xff]
  %v18 = vld [vmem:[%s0 + $0x18] sm:$0xff]
  %v19 = vld [vmem:[%s0 + $0x20] sm:$0xff]
  %v20 = vld [vmem:[%s0 + $0x28] sm:$0xff]
  %v21 = vld [vmem:[%s0 + $0x30] sm:$0xff]
  %v22 = vld [vmem:[%s0 + $0x38] sm:$0xff]
  %v23 = vld [vmem:[%s0 + $0x40] sm:$0xff]
  %v24 = vld [vmem:[%s0 + $0x48] sm:$0xff]
  %v25 = vld [vmem:[%s0 + $0x50] sm:$0xff]
  %v26 = vld [vmem:[%s0 + $0x58] sm:$0xff]
  %v27 = vld [vmem:[%s0 + $0x60] sm:$0xff]
  %v28 = vld [vmem:[%s0 + $0x68] sm:$0xff]
  %v29 = vld [vmem:[%s0 + $0x70] sm:$0xff]
  %v30 = vld [vmem:[%s0 + $0x78] sm:$0xff]
  %v31 = vld [vmem:[%s0 + $0x80] sm:$0xff]
  %v32 = vld [vmem:[%s0 + $0x88] sm:$0xff]
  %v33 = vld [vmem:[%s0 + $0x90] sm:$0xff]
  %v34 = vld [vmem:[%s0 + $0x98] sm:$0xff]
  %v35 = vld [vmem:[%s0 + $0xa0] sm:$0xff]
  %v36 = vld [vmem:[%s0 + $0xa8] sm:$0xff]
  %v37 = vld [vmem:[%s0 + $0xb0] sm:$0xff]
  %v38 = vld [vmem:[%s0 + $0xb8] sm:$0xff]
  %v39 = vld [vmem:[%s0 + $0xc0] sm:$0xff]
  %v40 = vld [vmem:[%s0 + $0xc8] sm:$0xff]
  %v41 = vld [vmem:[%s0 + $0xd0] sm:$0xff]
  %v42 = vld [vmem:[%s0 + $0xd8] sm:$0xff]
  %v43 = vld [vmem:[%s0 + $0xe0] sm:$0xff]
  %v44 = vld [vmem:[%s0 + $0xe8] sm:$0xff]
  %v45 = vld [vmem:[%s0 + $0xf0] sm:$0xff]
  %v46 = vld [vmem:[%s0 + $0xf8] sm:$0xff]
  %v47 = vld [vmem:[%s0 + $0x100] sm:$0xff]
  %v48 = vld [vmem:[%s0 + $0x108] sm:$0xff]
  %v49 = vld [vmem:[%s0 + $0x110] sm:$0xff]
  %v50 = vld [vmem:[%s0 + $0x118] sm:$0xff]
  %v51 = vld [vmem:[%s0 + $0x120] sm:$0xff]
  %v52 = vld [vmem:[%s0 + $0x128] sm:$0xff]
  %v53 = vld [vmem:[%s0 + $0x130] sm:$0xff]
  %v54 = vld [vmem:[%s0 + $0x138] sm:$0xff]
  %v55 = vld [vmem:[%s0 + $0x140] sm:$0xff]
  %v56 = vld [vmem:[%s0 + $0x148] sm:$0xff]
  %v57 = vld [vmem:[%s0 + $0x150] sm:$0xff]
  %v58 = vld [vmem:[%s0 + $0x158] sm:$0xff]
  %v59 = vld [vmem:[%s0 + $0x160] sm:$0xff]
  %v60 = vld [vmem:[%s0 + $0x168] sm:$0xff]
  %v61 = vld [vmem:[%s0 + $0x170] sm:$0xff]
  %v62 = vld [vmem:[%s0 + $0x178] sm:$0xff]
  %v63 = vld [vmem:[%s0 + $0x180] sm:$0xff]
  %v64 = vld [vmem:[%s0 + $0x188] sm:$0xff]
  %v65 = vld [vmem:[%s0 + $0x190] sm:$0xff]
  %v66 = vld [vmem:[%s0 + $0x198] sm:$0xff]
  %v67 = vld [vmem:[%s0 + $0x1a0] sm:$0xff]
  %v68 = vld [vmem:[%s0 + $0x1a8] sm:$0xff]
  %v69 = vld [vmem:[%s0 + $0x1b0] sm:$0xff]
  %v70 = vld [vmem:[%s0 + $0x1b8] sm:$0xff]
  %v71 = vld [vmem:[%s0 + $0x1c0] sm:$0xff]
  %v72 = vld [vmem:[%s0 + $0x1c8] sm:$0xff]
  %v73 = vld [vmem:[%s0 + $0x1d0] sm:$0xff]
  %v74 = vld [vmem:[%s0 + $0x1d8] sm:$0xff]
  %v75 = vld [vmem:[%s0 + $0x1e0] sm:$0xff]
  %v76 = vld [vmem:[%s0 + $0x1e8] sm:$0xff]
  %v77 = vld [vmem:[%s0 + $0x1f0] sm:$0xff]
  %v78 = vld [vmem:[%s0 + $0x1f8] sm:$0xff]
  %v79 = vld [vmem:[%s0 + $0x200] sm:$0xff]
  %v80 = vld [vmem:[%s0 + $0x208] sm:$0xff]
  %v81 = vld [vmem:[%s0 + $0x210] sm:$0xff]
  %v82 = vld [vmem:[%s0 + $0x218] sm:$0xff]
  %v83 = vld [vmem:[%s0 + $0x220] sm:$0xff]
  %v84 = vld [vmem:[%s0 + $0x228] sm:$0xff]
  %v85 = vld [vmem:[%s0 + $0x230] sm:$0xff]
  %v86 = vld [vmem:[%s0 + $0x238] sm:$0xff]
  %v87 = vld [vmem:[%s0 + $0x240] sm:$0xff]
  %v88 = vld [vmem:[%s0 + $0x248] sm:$0xff]
  %v89 = vld [vmem:[%s0 + $0x250] sm:$0xff]
  %v90 = vld [vmem:[%s0 + $0x258] sm:$0xff]
  %v91 = vld [vmem:[%s0 + $0x260] sm:$0xff]
  %v92 = vld [vmem:[%s0 + $0x268] sm:$0xff]
  %v93 = vld [vmem:[%s0 + $0x270] sm:$0xff]
  %v94 = vld [vmem:[%s0 + $0x278] sm:$0xff]
  %v95 = vld [vmem:[%s0 + $0x280] sm:$0xff]
  %v96 = vld [vmem:[%s0 + $0x288] sm:$0xff]
  %v97 = vld [vmem:[%s0 + $0x290] sm:$0xff]
  %v98 = vld [vmem:[%s0 + $0x298] sm:$0xff]
  %v99 = vld [vmem:[%s0 + $0x2a0] sm:$0xff]
  %v100 = vld [vmem:[%s0 + $0x2a8] sm:$0xff]
  %v101 = vld [vmem:[%s0 + $0x2b0] sm:$0xff]
  %v102 = vld [vmem:[%s0 + $0x2b8] sm:$0xff]
  %v103 = vld [vmem:[%s0 + $0x2c0] sm:$0xff]
  %v104 = vld [vmem:[%s0 + $0x2c8] sm:$0xff]
  %v105 = vld [vmem:[%s0 + $0x2d0] sm:$0xff]
  %v106 = vld [vmem:[%s0 + $0x2d8] sm:$0xff]
  %v107 = vld [vmem:[%s0 + $0x2e0] sm:$0xff]
  %v108 = vld [vmem:[%s0 + $0x2e8] sm:$0xff]
  %v109 = vld [vmem:[%s0 + $0x2f0] sm:$0xff]
  %v110 = vld [vmem:[%s0 + $0x2f8] sm:$0xff]
  %v111 = vld [vmem:[%s0 + $0x300] sm:$0xff]
  %v112 = vld [vmem:[%s0 + $0x308] sm:$0xff]
  %v113 = vld [vmem:[%s0 + $0x310] sm:$0xff]
  %v114 = vld [vmem:[%s0 + $0x318] sm:$0xff]
  %v115 = vld [vmem:[%s0 + $0x320] sm:$0xff]
  %v116 = vld [vmem:[%s0 + $0x328] sm:$0xff]
  %v117 = vld [vmem:[%s0 + $0x330] sm:$0xff]
  %v118 = vld [vmem:[%s0 + $0x338] sm:$0xff]
  %v119 = vld [vmem:[%s0 + $0x340] sm:$0xff]
  %v120 = vld [vmem:[%s0 + $0x348] sm:$0xff]
  %v121 = vld [vmem:[%s0 + $0x350] sm:$0xff]
  %v122 = vld [vmem:[%s0 + $0x358] sm:$0xff]
  %v123 = vld [vmem:[%s0 + $0x360] sm:$0xff]
  %v124 = vld [vmem:[%s0 + $0x368] sm:$0xff]
  %v125 = vld [vmem:[%s0 + $0x370] sm:$0xff]
  %v126 = vld [vmem:[%s0 + $0x378] sm:$0xff]
  %v127 = vld [vmem:[%s0 + $0x380] sm:$0xff]
  %v128 = vld [vmem:[%s0 + $0x388] sm:$0xff]
  %v129 = vld [vmem:[%s0 + $0x390] sm:$0xff]
  %v130 = vld [vmem:[%s0 + $0x398] sm:$0xff]
  %v131 = vld [vmem:[%s0 + $0x3a0] sm:$0xff]
  %v132 = vld [vmem:[%s0 + $0x3a8] sm:$0xff]
  %v133 = vld [vmem:[%s0 + $0x3b0] sm:$0xff]
  %v134 = vld [vmem:[%s0 + $0x3b8] sm:$0xff]
  %v135 = vld [vmem:[%s0 + $0x3c0] sm:$0xff]
  %v136 = vld [vmem:[%s0 + $0x3c8] sm:$0xff]
  %v137 = vld [vmem:[%s0 + $0x3d0] sm:$0xff]
  %v138 = vld [vmem:[%s0 + $0x3d8] sm:$0xff]
  %v139 = vld [vmem:[%s0 + $0x3e0] sm:$0xff]
  %v140 = vld [vmem:[%s0 + $0x3e8] sm:$0xff]
  %v141 = vld [vmem:[%s0 + $0x3f0] sm:$0xff]
  %v142 = vld [vmem:[%s0 + $0x3f8] sm:$0xff]
  %v143 = vld [vmem:[%s0 + $0x400] sm:$0xff]
  %v144 = vld [vmem:[%s0 + $0x408] sm:$0xff]
  %v145 = vld [vmem:[%s0 + $0x410] sm:$0xff]
  %v146 = vld [vmem:[%s0 + $0x418] sm:$0xff]
  %v147 = vld [vmem:[%s0 + $0x420] sm:$0xff]
  %v148 = vld [vmem:[%s0 + $0x428] sm:$0xff]
  %v149 = vld [vmem:[%s0 + $0x430] sm:$0xff]
  %v150 = vld [vmem:[%s0 + $0x438] sm:$0xff]
  %v151 = vld [vmem:[%s0 + $0x440] sm:$0xff]
  %v152 = vld [vmem:[%s0 + $0x448] sm:$0xff]
  %v153 = vld [vmem:[%s0 + $0x450] sm:$0xff]
  %v154 = vld [vmem:[%s0 + $0x458] sm:$0xff]
  %v155 = vld [vmem:[%s0 + $0x460] sm:$0xff]
  %v156 = vld [vmem:[%s0 + $0x468] sm:$0xff]
  %v157 = vld [vmem:[%s0 + $0x470] sm:$0xff]
  %v158 = vld [vmem:[%s0 + $0x478] sm:$0xff]
  %v159 = vpack.c.bf16 %v24, %v15
  %v160 = vpack.c.bf16 %v25, %v16
  %v161 = vpack.c.bf16 %v26, %v17
  %v162 = vpack.c.bf16 %v27, %v18
  %v163 = vpack.c.bf16 %v28, %v19
  %v164 = vpack.c.bf16 %v29, %v20
  %v165 = vpack.c.bf16 %v30, %v21
  %v166 = vpack.c.bf16 %v31, %v22
  %v167 = vpack.c.bf16 %v32, %v23
  %v168 = vpack.c.bf16 %v42, %v33
  %v169 = vpack.c.bf16 %v43, %v34
  %v170 = vpack.c.bf16 %v44, %v35
  %v171 = vpack.c.bf16 %v45, %v36
  %v172 = vpack.c.bf16 %v46, %v37
  %v173 = vpack.c.bf16 %v47, %v38
  %v174 = vpack.c.bf16 %v48, %v39
  %v175 = vpack.c.bf16 %v49, %v40
  %v176 = vpack.c.bf16 %v50, %v41
  %v177 = vpack.c.bf16 %v60, %v51
  %v178 = vpack.c.bf16 %v61, %v52
  %v179 = vpack.c.bf16 %v62, %v53
  %v180 = vpack.c.bf16 %v63, %v54
  %v181 = vpack.c.bf16 %v64, %v55
  %v182 = vpack.c.bf16 %v65, %v56
  %v183 = vpack.c.bf16 %v66, %v57
  %v184 = vpack.c.bf16 %v67, %v58
  %v185 = vpack.c.bf16 %v68, %v59
  %v186 = vpack.c.bf16 %v78, %v69
  %v187 = vpack.c.bf16 %v79, %v70
  %v188 = vpack.c.bf16 %v80, %v71
  %v189 = vpack.c.bf16 %v81, %v72
  %v190 = vpack.c.bf16 %v82, %v73
  %v191 = vpack.c.bf16 %v83, %v74
  %v192 = vpack.c.bf16 %v84, %v75
  %v193 = vpack.c.bf16 %v85, %v76
  %v194 = vpack.c.bf16 %v86, %v77
  %v195 = vpack.c.bf16 %v96, %v87
  %v196 = vpack.c.bf16 %v97, %v88
  %v197 = vpack.c.bf16 %v98, %v89
  %v198 = vpack.c.bf16 %v99, %v90
  %v199 = vpack.c.bf16 %v100, %v91
  %v200 = vpack.c.bf16 %v101, %v92
  %v201 = vpack.c.bf16 %v102, %v93
  %v202 = vpack.c.bf16 %v103, %v94
  %v203 = vpack.c.bf16 %v104, %v95
  %v204 = vpack.c.bf16 %v114, %v105
  %v205 = vpack.c.bf16 %v115, %v106
  %v206 = vpack.c.bf16 %v116, %v107
  %v207 = vpack.c.bf16 %v117, %v108
  %v208 = vpack.c.bf16 %v118, %v109
  %v209 = vpack.c.bf16 %v119, %v110
  %v210 = vpack.c.bf16 %v120, %v111
  %v211 = vpack.c.bf16 %v121, %v112
  %v212 = vpack.c.bf16 %v122, %v113
  %v213 = vpack.c.bf16 %v132, %v123
  %v214 = vpack.c.bf16 %v133, %v124
  %v215 = vpack.c.bf16 %v134, %v125
  %v216 = vpack.c.bf16 %v135, %v126
  %v217 = vpack.c.bf16 %v136, %v127
  %v218 = vpack.c.bf16 %v137, %v128
  %v219 = vpack.c.bf16 %v138, %v129
  %v220 = vpack.c.bf16 %v139, %v130
  %v221 = vpack.c.bf16 %v140, %v131
  %v222 = vpack.c.bf16 %v150, %v141
  %v223 = vpack.c.bf16 %v151, %v142
  %v224 = vpack.c.bf16 %v152, %v143
  %v225 = vpack.c.bf16 %v153, %v144
  %v226 = vpack.c.bf16 %v154, %v145
  %v227 = vpack.c.bf16 %v155, %v146
  %v228 = vpack.c.bf16 %v156, %v147
  %v229 = vpack.c.bf16 %v157, %v148
  %v230 = vpack.c.bf16 %v158, %v149
  %v231 = vld [vmem:[%s1] sm:$0xf]
  %v232 = vld [vmem:[%s1 + $0x4] sm:$0xf]
  %v233 = vld [vmem:[%s1 + $0x8] sm:$0xf]
  %v234 = vld [vmem:[%s1 + $0xc] sm:$0xf]
  %v235 = vld [vmem:[%s1 + $0x10] sm:$0xf]
  %v236 = vld [vmem:[%s1 + $0x14] sm:$0xf]
  %v237 = vld [vmem:[%s1 + $0x18] sm:$0xf]
  %v238 = vld [vmem:[%s1 + $0x1c] sm:$0xf]
  %v239 = vld [vmem:[%s1 + $0x20] sm:$0xf]
  %v240 = vld [vmem:[%s1 + $0x24] sm:$0xf]
  %v241 = vld [vmem:[%s1 + $0x28] sm:$0xf]
  %v242 = vld [vmem:[%s1 + $0x2c] sm:$0xf]
  %v243 = vld [vmem:[%s1 + $0x30] sm:$0xf]
  %v244 = vld [vmem:[%s1 + $0x34] sm:$0xf]
  %v245 = vld [vmem:[%s1 + $0x38] sm:$0xf]
  %v246 = vld [vmem:[%s1 + $0x3c] sm:$0xf]
  %v247 = vld [vmem:[%s1 + $0x40] sm:$0xf]
  %v248 = vld [vmem:[%s1 + $0x44] sm:$0xf]
  %v249 = vld [vmem:[%s1 + $0x48] sm:$0xf]
  %v250 = vld [vmem:[%s1 + $0x4c] sm:$0xf]
  %v251 = vld [vmem:[%s1 + $0x50] sm:$0xf]
  %v252 = vld [vmem:[%s1 + $0x54] sm:$0xf]
  %v253 = vld [vmem:[%s1 + $0x58] sm:$0xf]
  %v254 = vld [vmem:[%s1 + $0x5c] sm:$0xf]
  %v255 = vld [vmem:[%s1 + $0x60] sm:$0xf]
  %v256 = vld [vmem:[%s1 + $0x64] sm:$0xf]
  %v257 = vld [vmem:[%s1 + $0x68] sm:$0xf]
  %v258 = vld [vmem:[%s1 + $0x6c] sm:$0xf]
  %v259 = vld [vmem:[%s1 + $0x70] sm:$0xf]
  %v260 = vld [vmem:[%s1 + $0x74] sm:$0xf]
  %v261 = vld [vmem:[%s1 + $0x78] sm:$0xf]
  %v262 = vld [vmem:[%s1 + $0x7c] sm:$0xf]
  %v263 = vld [vmem:[%s1 + $0x80] sm:$0xf]
  %v264 = vld [vmem:[%s1 + $0x84] sm:$0xf]
  %v265 = vld [vmem:[%s1 + $0x88] sm:$0xf]
  %v266 = vld [vmem:[%s1 + $0x8c] sm:$0xf]
  %v267 = vld [vmem:[%s1 + $0x90] sm:$0xf]
  %v268 = vld [vmem:[%s1 + $0x94] sm:$0xf]
  %v269 = vld [vmem:[%s1 + $0x98] sm:$0xf]
  %v270 = vld [vmem:[%s1 + $0x9c] sm:$0xf]
  %v271 = vld [vmem:[%s1 + $0xa0] sm:$0xf]
  %v272 = vld [vmem:[%s1 + $0xa4] sm:$0xf]
  %v273 = vld [vmem:[%s1 + $0xa8] sm:$0xf]
  %v274 = vld [vmem:[%s1 + $0xac] sm:$0xf]
  %v275 = vld [vmem:[%s1 + $0xb0] sm:$0xf]
  %v276 = vld [vmem:[%s1 + $0xb4] sm:$0xf]
  %v277 = vld [vmem:[%s1 + $0xb8] sm:$0xf]
  %v278 = vld [vmem:[%s1 + $0xbc] sm:$0xf]
  %v279 = vld [vmem:[%s1 + $0xc0] sm:$0xf]
  %v280 = vld [vmem:[%s1 + $0xc4] sm:$0xf]
  %v281 = vld [vmem:[%s1 + $0xc8] sm:$0xf]
  %v282 = vld [vmem:[%s1 + $0xcc] sm:$0xf]
  %v283 = vld [vmem:[%s1 + $0xd0] sm:$0xf]
  %v284 = vld [vmem:[%s1 + $0xd4] sm:$0xf]
  %v285 = vld [vmem:[%s1 + $0xd8] sm:$0xf]
  %v286 = vld [vmem:[%s1 + $0xdc] sm:$0xf]
  %v287 = vld [vmem:[%s1 + $0xe0] sm:$0xf]
  %v288 = vld [vmem:[%s1 + $0xe4] sm:$0xf]
  %v289 = vld [vmem:[%s1 + $0xe8] sm:$0xf]
  %v290 = vld [vmem:[%s1 + $0xec] sm:$0xf]
  %v291 = vld [vmem:[%s1 + $0xf0] sm:$0xf]
  %v292 = vld [vmem:[%s1 + $0xf4] sm:$0xf]
  %v293 = vld [vmem:[%s1 + $0xf8] sm:$0xf]
  %v294 = vld [vmem:[%s1 + $0xfc] sm:$0xf]
  %v295 = vld [vmem:[%s1 + $0x100] sm:$0xf]
  %v296 = vld [vmem:[%s1 + $0x104] sm:$0xf]
  %v297 = vld [vmem:[%s1 + $0x108] sm:$0xf]
  %v298 = vld [vmem:[%s1 + $0x10c] sm:$0xf]
  %v299 = vld [vmem:[%s1 + $0x110] sm:$0xf]
  %v300 = vld [vmem:[%s1 + $0x114] sm:$0xf]
  %v301 = vld [vmem:[%s1 + $0x118] sm:$0xf]
  %v302 = vld [vmem:[%s1 + $0x11c] sm:$0xf]
  %v303 = vld [vmem:[%s1 + $0x120] sm:$0xf]
  %v304 = vld [vmem:[%s1 + $0x124] sm:$0xf]
  %v305 = vld [vmem:[%s1 + $0x128] sm:$0xf]
  %v306 = vld [vmem:[%s1 + $0x12c] sm:$0xf]
  %v307 = vld [vmem:[%s1 + $0x130] sm:$0xf]
  %v308 = vld [vmem:[%s1 + $0x134] sm:$0xf]
  %v309 = vld [vmem:[%s1 + $0x138] sm:$0xf]
  %v310 = vld [vmem:[%s1 + $0x13c] sm:$0xf]
  %v311 = vld [vmem:[%s1 + $0x140] sm:$0xf]
  %v312 = vld [vmem:[%s1 + $0x144] sm:$0xf]
  %v313 = vld [vmem:[%s1 + $0x148] sm:$0xf]
  %v314 = vld [vmem:[%s1 + $0x14c] sm:$0xf]
  %v315 = vld [vmem:[%s1 + $0x150] sm:$0xf]
  %v316 = vld [vmem:[%s1 + $0x154] sm:$0xf]
  %v317 = vld [vmem:[%s1 + $0x158] sm:$0xf]
  %v318 = vld [vmem:[%s1 + $0x15c] sm:$0xf]
  %v319 = vld [vmem:[%s1 + $0x160] sm:$0xf]
  %v320 = vld [vmem:[%s1 + $0x164] sm:$0xf]
  %v321 = vld [vmem:[%s1 + $0x168] sm:$0xf]
  %v322 = vld [vmem:[%s1 + $0x16c] sm:$0xf]
  %v323 = vld [vmem:[%s1 + $0x170] sm:$0xf]
  %v324 = vld [vmem:[%s1 + $0x174] sm:$0xf]
  %v325 = vld [vmem:[%s1 + $0x178] sm:$0xf]
  %v326 = vld [vmem:[%s1 + $0x17c] sm:$0xf]
  %v327 = vld [vmem:[%s1 + $0x180] sm:$0xf]
  %v328 = vld [vmem:[%s1 + $0x184] sm:$0xf]
  %v329 = vld [vmem:[%s1 + $0x188] sm:$0xf]
  %v330 = vld [vmem:[%s1 + $0x18c] sm:$0xf]
  %v331 = vld [vmem:[%s1 + $0x190] sm:$0xf]
  %v332 = vld [vmem:[%s1 + $0x194] sm:$0xf]
  %v333 = vld [vmem:[%s1 + $0x198] sm:$0xf]
  %v334 = vld [vmem:[%s1 + $0x19c] sm:$0xf]
  %v335 = vld [vmem:[%s1 + $0x1a0] sm:$0xf]
  %v336 = vld [vmem:[%s1 + $0x1a4] sm:$0xf]
  %v337 = vld [vmem:[%s1 + $0x1a8] sm:$0xf]
  %v338 = vld [vmem:[%s1 + $0x1ac] sm:$0xf]
  %v339 = vld [vmem:[%s1 + $0x1b0] sm:$0xf]
  %v340 = vld [vmem:[%s1 + $0x1b4] sm:$0xf]
  %v341 = vld [vmem:[%s1 + $0x1b8] sm:$0xf]
  %v342 = vld [vmem:[%s1 + $0x1bc] sm:$0xf]
  %v343 = vld [vmem:[%s1 + $0x1c0] sm:$0xf]
  %v344 = vld [vmem:[%s1 + $0x1c4] sm:$0xf]
  %v345 = vld [vmem:[%s1 + $0x1c8] sm:$0xf]
  %v346 = vld [vmem:[%s1 + $0x1cc] sm:$0xf]
  %v347 = vld [vmem:[%s1 + $0x1d0] sm:$0xf]
  %v348 = vld [vmem:[%s1 + $0x1d4] sm:$0xf]
  %v349 = vld [vmem:[%s1 + $0x1d8] sm:$0xf]
  %v350 = vld [vmem:[%s1 + $0x1dc] sm:$0xf]
  %v351 = vld [vmem:[%s1 + $0x1e0] sm:$0xf]
  %v352 = vld [vmem:[%s1 + $0x1e4] sm:$0xf]
  %v353 = vld [vmem:[%s1 + $0x1e8] sm:$0xf]
  %v354 = vld [vmem:[%s1 + $0x1ec] sm:$0xf]
  %v355 = vld [vmem:[%s1 + $0x1f0] sm:$0xf]
  %v356 = vld [vmem:[%s1 + $0x1f4] sm:$0xf]
  %v357 = vld [vmem:[%s1 + $0x1f8] sm:$0xf]
  %v358 = vld [vmem:[%s1 + $0x1fc] sm:$0xf]
  %v359 = vld [vmem:[%s1 + $0x200] sm:$0xf]
  %v360 = vld [vmem:[%s1 + $0x204] sm:$0xf]
  %v361 = vld [vmem:[%s1 + $0x208] sm:$0xf]
  %v362 = vld [vmem:[%s1 + $0x20c] sm:$0xf]
  %v363 = vld [vmem:[%s1 + $0x210] sm:$0xf]
  %v364 = vld [vmem:[%s1 + $0x214] sm:$0xf]
  %v365 = vld [vmem:[%s1 + $0x218] sm:$0xf]
  %v366 = vld [vmem:[%s1 + $0x21c] sm:$0xf]
  %v367 = vld [vmem:[%s1 + $0x220] sm:$0xf]
  %v368 = vld [vmem:[%s1 + $0x224] sm:$0xf]
  %v369 = vld [vmem:[%s1 + $0x228] sm:$0xf]
  %v370 = vld [vmem:[%s1 + $0x22c] sm:$0xf]
  %v371 = vld [vmem:[%s1 + $0x230] sm:$0xf]
  %v372 = vld [vmem:[%s1 + $0x234] sm:$0xf]
  %v373 = vld [vmem:[%s1 + $0x238] sm:$0xf]
  %v374 = vld [vmem:[%s1 + $0x23c] sm:$0xf]
  %v375 = vld [vmem:[%s2] sm:$0x1]
  %v377 = vlaneseq
  %v378 = vshrl.u32 %v377, 7
  %v379 = vsub.s32 0, %v378
  %v380 = vrot.slane %v375, %v379
  %v526 = vunpack.c.l.b16 %v231
  %v527 = vunpack.c.l.b16 %v232
  %v528 = vunpack.c.l.b16 %v233
  %v529 = vunpack.c.l.b16 %v234
  %v530 = vunpack.c.l.b16 %v235
  %v531 = vunpack.c.l.b16 %v236
  %v532 = vunpack.c.l.b16 %v237
  %v533 = vunpack.c.l.b16 %v238
  %v534 = vunpack.c.l.b16 %v239
  %v535 = vunpack.c.l.b16 %v240
  %v536 = vunpack.c.l.b16 %v241
  %v537 = vunpack.c.l.b16 %v242
  %v538 = vunpack.c.l.b16 %v243
  %v539 = vunpack.c.l.b16 %v244
  %v540 = vunpack.c.l.b16 %v245
  %v541 = vunpack.c.l.b16 %v246
  %v542 = vunpack.c.l.b16 %v247
  %v543 = vunpack.c.l.b16 %v248
  %v544 = vunpack.c.l.b16 %v249
  %v545 = vunpack.c.l.b16 %v250
  %v546 = vunpack.c.l.b16 %v251
  %v547 = vunpack.c.l.b16 %v252
  %v548 = vunpack.c.l.b16 %v253
  %v549 = vunpack.c.l.b16 %v254
  %v550 = vunpack.c.l.b16 %v255
  %v551 = vunpack.c.l.b16 %v256
  %v552 = vunpack.c.l.b16 %v257
  %v553 = vunpack.c.l.b16 %v258
  %v554 = vunpack.c.l.b16 %v259
  %v555 = vunpack.c.l.b16 %v260
  %v556 = vunpack.c.l.b16 %v261
  %v557 = vunpack.c.l.b16 %v262
  %v558 = vunpack.c.l.b16 %v263
  %v559 = vunpack.c.l.b16 %v264
  %v560 = vunpack.c.l.b16 %v265
  %v561 = vunpack.c.l.b16 %v266
  %v562 = vunpack.c.l.b16 %v267
  %v563 = vunpack.c.l.b16 %v268
  %v564 = vunpack.c.l.b16 %v269
  %v565 = vunpack.c.l.b16 %v270
  %v566 = vunpack.c.l.b16 %v271
  %v567 = vunpack.c.l.b16 %v272
  %v568 = vunpack.c.l.b16 %v273
  %v569 = vunpack.c.l.b16 %v274
  %v570 = vunpack.c.l.b16 %v275
  %v571 = vunpack.c.l.b16 %v276
  %v572 = vunpack.c.l.b16 %v277
  %v573 = vunpack.c.l.b16 %v278
  %v574 = vunpack.c.l.b16 %v279
  %v575 = vunpack.c.l.b16 %v280
  %v576 = vunpack.c.l.b16 %v281
  %v577 = vunpack.c.l.b16 %v282
  %v578 = vunpack.c.l.b16 %v283
  %v579 = vunpack.c.l.b16 %v284
  %v580 = vunpack.c.l.b16 %v285
  %v581 = vunpack.c.l.b16 %v286
  %v582 = vunpack.c.l.b16 %v287
  %v583 = vunpack.c.l.b16 %v288
  %v584 = vunpack.c.l.b16 %v289
  %v585 = vunpack.c.l.b16 %v290
  %v586 = vunpack.c.l.b16 %v291
  %v587 = vunpack.c.l.b16 %v292
  %v588 = vunpack.c.l.b16 %v293
  %v589 = vunpack.c.l.b16 %v294
  %v590 = vunpack.c.l.b16 %v295
  %v591 = vunpack.c.l.b16 %v296
  %v592 = vunpack.c.l.b16 %v297
  %v593 = vunpack.c.l.b16 %v298
  %v594 = vunpack.c.l.b16 %v299
  %v595 = vunpack.c.l.b16 %v300
  %v596 = vunpack.c.l.b16 %v301
  %v597 = vunpack.c.l.b16 %v302
  %v598 = vunpack.c.l.b16 %v303
  %v599 = vunpack.c.l.b16 %v304
  %v600 = vunpack.c.l.b16 %v305
  %v601 = vunpack.c.l.b16 %v306
  %v602 = vunpack.c.l.b16 %v307
  %v603 = vunpack.c.l.b16 %v308
  %v604 = vunpack.c.l.b16 %v309
  %v605 = vunpack.c.l.b16 %v310
  %v606 = vunpack.c.l.b16 %v311
  %v607 = vunpack.c.l.b16 %v312
  %v608 = vunpack.c.l.b16 %v313
  %v609 = vunpack.c.l.b16 %v314
  %v610 = vunpack.c.l.b16 %v315
  %v611 = vunpack.c.l.b16 %v316
  %v612 = vunpack.c.l.b16 %v317
  %v613 = vunpack.c.l.b16 %v318
  %v614 = vunpack.c.l.b16 %v319
  %v615 = vunpack.c.l.b16 %v320
  %v616 = vunpack.c.l.b16 %v321
  %v617 = vunpack.c.l.b16 %v322
  %v618 = vunpack.c.l.b16 %v323
  %v619 = vunpack.c.l.b16 %v324
  %v620 = vunpack.c.l.b16 %v325
  %v621 = vunpack.c.l.b16 %v326
  %v622 = vunpack.c.l.b16 %v327
  %v623 = vunpack.c.l.b16 %v328
  %v624 = vunpack.c.l.b16 %v329
  %v625 = vunpack.c.l.b16 %v330
  %v626 = vunpack.c.l.b16 %v331
  %v627 = vunpack.c.l.b16 %v332
  %v628 = vunpack.c.l.b16 %v333
  %v629 = vunpack.c.l.b16 %v334
  %v630 = vunpack.c.l.b16 %v335
  %v631 = vunpack.c.l.b16 %v336
  %v632 = vunpack.c.l.b16 %v337
  %v633 = vunpack.c.l.b16 %v338
  %v634 = vunpack.c.l.b16 %v339
  %v635 = vunpack.c.l.b16 %v340
  %v636 = vunpack.c.l.b16 %v341
  %v637 = vunpack.c.l.b16 %v342
  %v638 = vunpack.c.l.b16 %v343
  %v639 = vunpack.c.l.b16 %v344
  %v640 = vunpack.c.l.b16 %v345
  %v641 = vunpack.c.l.b16 %v346
  %v642 = vunpack.c.l.b16 %v347
  %v643 = vunpack.c.l.b16 %v348
  %v644 = vunpack.c.l.b16 %v349
  %v645 = vunpack.c.l.b16 %v350
  %v646 = vunpack.c.l.b16 %v351
  %v647 = vunpack.c.l.b16 %v352
  %v648 = vunpack.c.l.b16 %v353
  %v649 = vunpack.c.l.b16 %v354
  %v650 = vunpack.c.l.b16 %v355
  %v651 = vunpack.c.l.b16 %v356
  %v652 = vunpack.c.l.b16 %v357
  %v653 = vunpack.c.l.b16 %v358
  %v654 = vunpack.c.l.b16 %v359
  %v655 = vunpack.c.l.b16 %v360
  %v656 = vunpack.c.l.b16 %v361
  %v657 = vunpack.c.l.b16 %v362
  %v658 = vunpack.c.l.b16 %v363
  %v659 = vunpack.c.l.b16 %v364
  %v660 = vunpack.c.l.b16 %v365
  %v661 = vunpack.c.l.b16 %v366
  %v662 = vunpack.c.l.b16 %v367
  %v663 = vunpack.c.l.b16 %v368
  %v664 = vunpack.c.l.b16 %v369
  %v665 = vunpack.c.l.b16 %v370
  %v666 = vunpack.c.l.b16 %v371
  %v667 = vunpack.c.l.b16 %v372
  %v668 = vunpack.c.l.b16 %v373
  %v669 = vunpack.c.l.b16 %v374
  %v670 = vpack.c.b16 %v527, %v526
  %v671 = vpack.c.b16 %v529, %v528
  %v672 = vpack.c.b16 %v531, %v530
  %v673 = vpack.c.b16 %v533, %v532
  %v674 = vpack.c.b16 %v535, %v534
  %v675 = vpack.c.b16 %v537, %v536
  %v676 = vpack.c.b16 %v539, %v538
  %v677 = vpack.c.b16 %v541, %v540
  %v678 = vpack.c.b16 %v543, %v542
  %v679 = vpack.c.b16 %v545, %v544
  %v680 = vpack.c.b16 %v547, %v546
  %v681 = vpack.c.b16 %v549, %v548
  %v682 = vpack.c.b16 %v551, %v550
  %v683 = vpack.c.b16 %v553, %v552
  %v684 = vpack.c.b16 %v555, %v554
  %v685 = vpack.c.b16 %v557, %v556
  %v686 = vpack.c.b16 %v559, %v558
  %v687 = vpack.c.b16 %v561, %v560
  %v688 = vpack.c.b16 %v563, %v562
  %v689 = vpack.c.b16 %v565, %v564
  %v690 = vpack.c.b16 %v567, %v566
  %v691 = vpack.c.b16 %v569, %v568
  %v692 = vpack.c.b16 %v571, %v570
  %v693 = vpack.c.b16 %v573, %v572
  %v694 = vpack.c.b16 %v575, %v574
  %v695 = vpack.c.b16 %v577, %v576
  %v696 = vpack.c.b16 %v579, %v578
  %v697 = vpack.c.b16 %v581, %v580
  %v698 = vpack.c.b16 %v583, %v582
  %v699 = vpack.c.b16 %v585, %v584
  %v700 = vpack.c.b16 %v587, %v586
  %v701 = vpack.c.b16 %v589, %v588
  %v702 = vpack.c.b16 %v591, %v590
  %v703 = vpack.c.b16 %v593, %v592
  %v704 = vpack.c.b16 %v595, %v594
  %v705 = vpack.c.b16 %v597, %v596
  %v706 = vpack.c.b16 %v599, %v598
  %v707 = vpack.c.b16 %v601, %v600
  %v708 = vpack.c.b16 %v603, %v602
  %v709 = vpack.c.b16 %v605, %v604
  %v710 = vpack.c.b16 %v607, %v606
  %v711 = vpack.c.b16 %v609, %v608
  %v712 = vpack.c.b16 %v611, %v610
  %v713 = vpack.c.b16 %v613, %v612
  %v714 = vpack.c.b16 %v615, %v614
  %v715 = vpack.c.b16 %v617, %v616
  %v716 = vpack.c.b16 %v619, %v618
  %v717 = vpack.c.b16 %v621, %v620
  %v718 = vpack.c.b16 %v623, %v622
  %v719 = vpack.c.b16 %v625, %v624
  %v720 = vpack.c.b16 %v627, %v626
  %v721 = vpack.c.b16 %v629, %v628
  %v722 = vpack.c.b16 %v631, %v630
  %v723 = vpack.c.b16 %v633, %v632
  %v724 = vpack.c.b16 %v635, %v634
  %v725 = vpack.c.b16 %v637, %v636
  %v726 = vpack.c.b16 %v639, %v638
  %v727 = vpack.c.b16 %v641, %v640
  %v728 = vpack.c.b16 %v643, %v642
  %v729 = vpack.c.b16 %v645, %v644
  %v730 = vpack.c.b16 %v647, %v646
  %v731 = vpack.c.b16 %v649, %v648
  %v732 = vpack.c.b16 %v651, %v650
  %v733 = vpack.c.b16 %v653, %v652
  %v734 = vpack.c.b16 %v655, %v654
  %v735 = vpack.c.b16 %v657, %v656
  %v736 = vpack.c.b16 %v659, %v658
  %v737 = vpack.c.b16 %v661, %v660
  %v738 = vpack.c.b16 %v663, %v662
  %v739 = vpack.c.b16 %v665, %v664
  %v740 = vpack.c.b16 %v667, %v666
  %v741 = vpack.c.b16 %v669, %v668
  %814 = vmatprep.subr.bf16.mxu0 0
  %815 = vmatpush1.bf16.msra.mxu0 %v677
  %816 = vmatprep.subr.bf16.mxu0 0
  %817 = vmatpush1.bf16.msra.mxu0 %v676
  %818 = vmatprep.subr.bf16.mxu0 0
  %819 = vmatpush1.bf16.msra.mxu0 %v675
  %820 = vmatprep.subr.bf16.mxu0 0
  %821 = vmatpush1.bf16.msra.mxu0 %v674
  %822 = vmatprep.subr.bf16.mxu0 0
  %823 = vmatpush1.bf16.msra.mxu0 %v673
  %824 = vmatprep.subr.bf16.mxu0 0
  %825 = vmatpush1.bf16.msra.mxu0 %v672
  %826 = vmatprep.subr.bf16.mxu0 0
  %827 = vmatpush1.bf16.msra.mxu0 %v671
  %828 = vmatprep.subr.bf16.mxu0 0
  %829 = vmatpush1.bf16.msra.mxu0 %v670
  %830 = vmatprep.subr.bf16.mxu0 0
  %831 = vmatpush2.bf16.msra.mxu0 %v685
  %832 = vmatprep.subr.bf16.mxu0 0
  %833 = vmatpush2.bf16.msra.mxu0 %v684
  %834 = vmatprep.subr.bf16.mxu0 0
  %835 = vmatpush2.bf16.msra.mxu0 %v683
  %836 = vmatprep.subr.bf16.mxu0 0
  %837 = vmatpush2.bf16.msra.mxu0 %v682
  %838 = vmatprep.subr.bf16.mxu0 0
  %839 = vmatpush2.bf16.msra.mxu0 %v681
  %840 = vmatprep.subr.bf16.mxu0 0
  %841 = vmatpush2.bf16.msra.mxu0 %v680
  %842 = vmatprep.subr.bf16.mxu0 0
  %843 = vmatpush2.bf16.msra.mxu0 %v679
  %844 = vmatprep.subr.bf16.mxu0 0
  %845 = vmatpush2.bf16.msra.mxu0 %v678
  %846 = vmatprep.mubr.bf16.mxu0 %v160
  %847 = vmatmul.mubr.bf16.gmra.mxu0 %v159
  %v848 = vpop.f32.mrf.mxu0
  %v849 = vadd.f32 %v380, %v848
  %v850 = vpop.f32.mrf.mxu0
  %v851 = vpop.f32.mrf.mxu0
  %v852 = vadd.f32 %v380, %v851
  %v853 = vpop.f32.mrf.mxu0
  %854 = vmatprep.mubr.bf16.mxu0 %v169
  %855 = vmatmul.mubr.bf16.gmra.mxu0 %v168
  %v856 = vpop.f32.mrf.mxu0
  %v857 = vadd.f32 %v380, %v856
  %v858 = vpop.f32.mrf.mxu0
  %v859 = vpop.f32.mrf.mxu0
  %v860 = vadd.f32 %v380, %v859
  %v861 = vpop.f32.mrf.mxu0
  %862 = vmatprep.mubr.bf16.mxu0 %v178
  %863 = vmatmul.mubr.bf16.gmra.mxu0 %v177
  %v864 = vpop.f32.mrf.mxu0
  %v865 = vadd.f32 %v380, %v864
  %v866 = vpop.f32.mrf.mxu0
  %v867 = vpop.f32.mrf.mxu0
  %v868 = vadd.f32 %v380, %v867
  %v869 = vpop.f32.mrf.mxu0
  %870 = vmatprep.mubr.bf16.mxu0 %v187
  %871 = vmatmul.mubr.bf16.gmra.mxu0 %v186
  %v872 = vpop.f32.mrf.mxu0
  %v873 = vadd.f32 %v380, %v872
  %v874 = vpop.f32.mrf.mxu0
  %v875 = vpop.f32.mrf.mxu0
  %v876 = vadd.f32 %v380, %v875
  %v877 = vpop.f32.mrf.mxu0
  %878 = vmatprep.mubr.bf16.mxu0 %v196
  %879 = vmatmul.mubr.bf16.gmra.mxu0 %v195
  %v880 = vpop.f32.mrf.mxu0
  %v881 = vadd.f32 %v380, %v880
  %v882 = vpop.f32.mrf.mxu0
  %v883 = vpop.f32.mrf.mxu0
  %v884 = vadd.f32 %v380, %v883
  %v885 = vpop.f32.mrf.mxu0
  %886 = vmatprep.mubr.bf16.mxu0 %v205
  %887 = vmatmul.mubr.bf16.gmra.mxu0 %v204
  %v888 = vpop.f32.mrf.mxu0
  %v889 = vadd.f32 %v380, %v888
  %v890 = vpop.f32.mrf.mxu0
  %v891 = vpop.f32.mrf.mxu0
  %v892 = vadd.f32 %v380, %v891
  %v893 = vpop.f32.mrf.mxu0
  %894 = vmatprep.mubr.bf16.mxu0 %v214
  %895 = vmatmul.mubr.bf16.gmra.mxu0 %v213
  %v896 = vpop.f32.mrf.mxu0
  %v897 = vadd.f32 %v380, %v896
  %v898 = vpop.f32.mrf.mxu0
  %v899 = vpop.f32.mrf.mxu0
  %v900 = vadd.f32 %v380, %v899
  %v901 = vpop.f32.mrf.mxu0
  %902 = vmatprep.mubr.bf16.mxu0 %v223
  %903 = vmatmul.mubr.bf16.gmra.mxu0 %v222
  %v904 = vpop.f32.mrf.mxu0
  %v905 = vadd.f32 %v380, %v904
  %v906 = vpop.f32.mrf.mxu0
  %v907 = vpop.f32.mrf.mxu0
  %v908 = vadd.f32 %v380, %v907
  %v909 = vpop.f32.mrf.mxu0
  %910 = vdwg.mxu0
  %911 = vmatprep.subr.bf16.mxu0 0
  %912 = vmatpush1.bf16.msra.mxu0 %v693
  %913 = vmatprep.subr.bf16.mxu0 0
  %914 = vmatpush1.bf16.msra.mxu0 %v692
  %915 = vmatprep.subr.bf16.mxu0 0
  %916 = vmatpush1.bf16.msra.mxu0 %v691
  %917 = vmatprep.subr.bf16.mxu0 0
  %918 = vmatpush1.bf16.msra.mxu0 %v690
  %919 = vmatprep.subr.bf16.mxu0 0
  %920 = vmatpush1.bf16.msra.mxu0 %v689
  %921 = vmatprep.subr.bf16.mxu0 0
  %922 = vmatpush1.bf16.msra.mxu0 %v688
  %923 = vmatprep.subr.bf16.mxu0 0
  %924 = vmatpush1.bf16.msra.mxu0 %v687
  %925 = vmatprep.subr.bf16.mxu0 0
  %926 = vmatpush1.bf16.msra.mxu0 %v686
  %927 = vmatprep.subr.bf16.mxu0 0
  %928 = vmatpush2.bf16.msra.mxu0 %v701
  %929 = vmatprep.subr.bf16.mxu0 0
  %930 = vmatpush2.bf16.msra.mxu0 %v700
  %931 = vmatprep.subr.bf16.mxu0 0
  %932 = vmatpush2.bf16.msra.mxu0 %v699
  %933 = vmatprep.subr.bf16.mxu0 0
  %934 = vmatpush2.bf16.msra.mxu0 %v698
  %935 = vmatprep.subr.bf16.mxu0 0
  %936 = vmatpush2.bf16.msra.mxu0 %v697
  %937 = vmatprep.subr.bf16.mxu0 0
  %938 = vmatpush2.bf16.msra.mxu0 %v696
  %939 = vmatprep.subr.bf16.mxu0 0
  %940 = vmatpush2.bf16.msra.mxu0 %v695
  %941 = vmatprep.subr.bf16.mxu0 0
  %942 = vmatpush2.bf16.msra.mxu0 %v694
  %943 = vmatprep.mubr.bf16.mxu0 %v162
  %944 = vmatmul.mubr.bf16.gmra.mxu0 %v161
  %v945 = vpop.f32.mrf.mxu0
  %v946 = vadd.f32 %v849, %v945
  %v947 = vpop.f32.mrf.mxu0
  %v948 = vpop.f32.mrf.mxu0
  %v949 = vadd.f32 %v852, %v948
  %v950 = vpop.f32.mrf.mxu0
  %951 = vmatprep.mubr.bf16.mxu0 %v171
  %952 = vmatmul.mubr.bf16.gmra.mxu0 %v170
  %v953 = vpop.f32.mrf.mxu0
  %v954 = vadd.f32 %v857, %v953
  %v955 = vpop.f32.mrf.mxu0
  %v956 = vpop.f32.mrf.mxu0
  %v957 = vadd.f32 %v860, %v956
  %v958 = vpop.f32.mrf.mxu0
  %959 = vmatprep.mubr.bf16.mxu0 %v180
  %960 = vmatmul.mubr.bf16.gmra.mxu0 %v179
  %v961 = vpop.f32.mrf.mxu0
  %v962 = vadd.f32 %v865, %v961
  %v963 = vpop.f32.mrf.mxu0
  %v964 = vpop.f32.mrf.mxu0
  %v965 = vadd.f32 %v868, %v964
  %v966 = vpop.f32.mrf.mxu0
  %967 = vmatprep.mubr.bf16.mxu0 %v189
  %968 = vmatmul.mubr.bf16.gmra.mxu0 %v188
  %v969 = vpop.f32.mrf.mxu0
  %v970 = vadd.f32 %v873, %v969
  %v971 = vpop.f32.mrf.mxu0
  %v972 = vpop.f32.mrf.mxu0
  %v973 = vadd.f32 %v876, %v972
  %v974 = vpop.f32.mrf.mxu0
  %975 = vmatprep.mubr.bf16.mxu0 %v198
  %976 = vmatmul.mubr.bf16.gmra.mxu0 %v197
  %v977 = vpop.f32.mrf.mxu0
  %v978 = vadd.f32 %v881, %v977
  %v979 = vpop.f32.mrf.mxu0
  %v980 = vpop.f32.mrf.mxu0
  %v981 = vadd.f32 %v884, %v980
  %v982 = vpop.f32.mrf.mxu0
  %983 = vmatprep.mubr.bf16.mxu0 %v207
  %984 = vmatmul.mubr.bf16.gmra.mxu0 %v206
  %v985 = vpop.f32.mrf.mxu0
  %v986 = vadd.f32 %v889, %v985
  %v987 = vpop.f32.mrf.mxu0
  %v988 = vpop.f32.mrf.mxu0
  %v989 = vadd.f32 %v892, %v988
  %v990 = vpop.f32.mrf.mxu0
  %991 = vmatprep.mubr.bf16.mxu0 %v216
  %992 = vmatmul.mubr.bf16.gmra.mxu0 %v215
  %v993 = vpop.f32.mrf.mxu0
  %v994 = vadd.f32 %v897, %v993
  %v995 = vpop.f32.mrf.mxu0
  %v996 = vpop.f32.mrf.mxu0
  %v997 = vadd.f32 %v900, %v996
  %v998 = vpop.f32.mrf.mxu0
  %999 = vmatprep.mubr.bf16.mxu0 %v225
  %1000 = vmatmul.mubr.bf16.gmra.mxu0 %v224
  %v1001 = vpop.f32.mrf.mxu0
  %v1002 = vadd.f32 %v905, %v1001
  %v1003 = vpop.f32.mrf.mxu0
  %v1004 = vpop.f32.mrf.mxu0
  %v1005 = vadd.f32 %v908, %v1004
  %v1006 = vpop.f32.mrf.mxu0
  %1007 = vdwg.mxu0
  %1008 = vmatprep.subr.bf16.mxu0 0
  %1009 = vmatpush1.bf16.msra.mxu0 %v709
  %1010 = vmatprep.subr.bf16.mxu0 0
  %1011 = vmatpush1.bf16.msra.mxu0 %v708
  %1012 = vmatprep.subr.bf16.mxu0 0
  %1013 = vmatpush1.bf16.msra.mxu0 %v707
  %1014 = vmatprep.subr.bf16.mxu0 0
  %1015 = vmatpush1.bf16.msra.mxu0 %v706
  %1016 = vmatprep.subr.bf16.mxu0 0
  %1017 = vmatpush1.bf16.msra.mxu0 %v705
  %1018 = vmatprep.subr.bf16.mxu0 0
  %1019 = vmatpush1.bf16.msra.mxu0 %v704
  %1020 = vmatprep.subr.bf16.mxu0 0
  %1021 = vmatpush1.bf16.msra.mxu0 %v703
  %1022 = vmatprep.subr.bf16.mxu0 0
  %1023 = vmatpush1.bf16.msra.mxu0 %v702
  %1024 = vmatprep.subr.bf16.mxu0 0
  %1025 = vmatpush2.bf16.msra.mxu0 %v717
  %1026 = vmatprep.subr.bf16.mxu0 0
  %1027 = vmatpush2.bf16.msra.mxu0 %v716
  %1028 = vmatprep.subr.bf16.mxu0 0
  %1029 = vmatpush2.bf16.msra.mxu0 %v715
  %1030 = vmatprep.subr.bf16.mxu0 0
  %1031 = vmatpush2.bf16.msra.mxu0 %v714
  %1032 = vmatprep.subr.bf16.mxu0 0
  %1033 = vmatpush2.bf16.msra.mxu0 %v713
  %1034 = vmatprep.subr.bf16.mxu0 0
  %1035 = vmatpush2.bf16.msra.mxu0 %v712
  %1036 = vmatprep.subr.bf16.mxu0 0
  %1037 = vmatpush2.bf16.msra.mxu0 %v711
  %1038 = vmatprep.subr.bf16.mxu0 0
  %1039 = vmatpush2.bf16.msra.mxu0 %v710
  %1040 = vmatprep.mubr.bf16.mxu0 %v164
  %1041 = vmatmul.mubr.bf16.gmra.mxu0 %v163
  %v1042 = vpop.f32.mrf.mxu0
  %v1043 = vadd.f32 %v946, %v1042
  %v1044 = vpop.f32.mrf.mxu0
  %v1045 = vpop.f32.mrf.mxu0
  %v1046 = vadd.f32 %v949, %v1045
  %v1047 = vpop.f32.mrf.mxu0
  %1048 = vmatprep.mubr.bf16.mxu0 %v173
  %1049 = vmatmul.mubr.bf16.gmra.mxu0 %v172
  %v1050 = vpop.f32.mrf.mxu0
  %v1051 = vadd.f32 %v954, %v1050
  %v1052 = vpop.f32.mrf.mxu0
  %v1053 = vpop.f32.mrf.mxu0
  %v1054 = vadd.f32 %v957, %v1053
  %v1055 = vpop.f32.mrf.mxu0
  %1056 = vmatprep.mubr.bf16.mxu0 %v182
  %1057 = vmatmul.mubr.bf16.gmra.mxu0 %v181
  %v1058 = vpop.f32.mrf.mxu0
  %v1059 = vadd.f32 %v962, %v1058
  %v1060 = vpop.f32.mrf.mxu0
  %v1061 = vpop.f32.mrf.mxu0
  %v1062 = vadd.f32 %v965, %v1061
  %v1063 = vpop.f32.mrf.mxu0
  %1064 = vmatprep.mubr.bf16.mxu0 %v191
  %1065 = vmatmul.mubr.bf16.gmra.mxu0 %v190
  %v1066 = vpop.f32.mrf.mxu0
  %v1067 = vadd.f32 %v970, %v1066
  %v1068 = vpop.f32.mrf.mxu0
  %v1069 = vpop.f32.mrf.mxu0
  %v1070 = vadd.f32 %v973, %v1069
  %v1071 = vpop.f32.mrf.mxu0
  %1072 = vmatprep.mubr.bf16.mxu0 %v200
  %1073 = vmatmul.mubr.bf16.gmra.mxu0 %v199
  %v1074 = vpop.f32.mrf.mxu0
  %v1075 = vadd.f32 %v978, %v1074
  %v1076 = vpop.f32.mrf.mxu0
  %v1077 = vpop.f32.mrf.mxu0
  %v1078 = vadd.f32 %v981, %v1077
  %v1079 = vpop.f32.mrf.mxu0
  %1080 = vmatprep.mubr.bf16.mxu0 %v209
  %1081 = vmatmul.mubr.bf16.gmra.mxu0 %v208
  %v1082 = vpop.f32.mrf.mxu0
  %v1083 = vadd.f32 %v986, %v1082
  %v1084 = vpop.f32.mrf.mxu0
  %v1085 = vpop.f32.mrf.mxu0
  %v1086 = vadd.f32 %v989, %v1085
  %v1087 = vpop.f32.mrf.mxu0
  %1088 = vmatprep.mubr.bf16.mxu0 %v218
  %1089 = vmatmul.mubr.bf16.gmra.mxu0 %v217
  %v1090 = vpop.f32.mrf.mxu0
  %v1091 = vadd.f32 %v994, %v1090
  %v1092 = vpop.f32.mrf.mxu0
  %v1093 = vpop.f32.mrf.mxu0
  %v1094 = vadd.f32 %v997, %v1093
  %v1095 = vpop.f32.mrf.mxu0
  %1096 = vmatprep.mubr.bf16.mxu0 %v227
  %1097 = vmatmul.mubr.bf16.gmra.mxu0 %v226
  %v1098 = vpop.f32.mrf.mxu0
  %v1099 = vadd.f32 %v1002, %v1098
  %v1100 = vpop.f32.mrf.mxu0
  %v1101 = vpop.f32.mrf.mxu0
  %v1102 = vadd.f32 %v1005, %v1101
  %v1103 = vpop.f32.mrf.mxu0
  %1104 = vdwg.mxu0
  %1105 = vmatprep.subr.bf16.mxu0 0
  %1106 = vmatpush1.bf16.msra.mxu0 %v725
  %1107 = vmatprep.subr.bf16.mxu0 0
  %1108 = vmatpush1.bf16.msra.mxu0 %v724
  %1109 = vmatprep.subr.bf16.mxu0 0
  %1110 = vmatpush1.bf16.msra.mxu0 %v723
  %1111 = vmatprep.subr.bf16.mxu0 0
  %1112 = vmatpush1.bf16.msra.mxu0 %v722
  %1113 = vmatprep.subr.bf16.mxu0 0
  %1114 = vmatpush1.bf16.msra.mxu0 %v721
  %1115 = vmatprep.subr.bf16.mxu0 0
  %1116 = vmatpush1.bf16.msra.mxu0 %v720
  %1117 = vmatprep.subr.bf16.mxu0 0
  %1118 = vmatpush1.bf16.msra.mxu0 %v719
  %1119 = vmatprep.subr.bf16.mxu0 0
  %1120 = vmatpush1.bf16.msra.mxu0 %v718
  %1121 = vmatprep.subr.bf16.mxu0 0
  %1122 = vmatpush2.bf16.msra.mxu0 %v733
  %1123 = vmatprep.subr.bf16.mxu0 0
  %1124 = vmatpush2.bf16.msra.mxu0 %v732
  %1125 = vmatprep.subr.bf16.mxu0 0
  %1126 = vmatpush2.bf16.msra.mxu0 %v731
  %1127 = vmatprep.subr.bf16.mxu0 0
  %1128 = vmatpush2.bf16.msra.mxu0 %v730
  %1129 = vmatprep.subr.bf16.mxu0 0
  %1130 = vmatpush2.bf16.msra.mxu0 %v729
  %1131 = vmatprep.subr.bf16.mxu0 0
  %1132 = vmatpush2.bf16.msra.mxu0 %v728
  %1133 = vmatprep.subr.bf16.mxu0 0
  %1134 = vmatpush2.bf16.msra.mxu0 %v727
  %1135 = vmatprep.subr.bf16.mxu0 0
  %1136 = vmatpush2.bf16.msra.mxu0 %v726
  %1137 = vmatprep.mubr.bf16.mxu0 %v166
  %1138 = vmatmul.mubr.bf16.gmra.mxu0 %v165
  %v1139 = vpop.f32.mrf.mxu0
  %v1140 = vadd.f32 %v1043, %v1139
  %v1141 = vpop.f32.mrf.mxu0
  %v1142 = vpop.f32.mrf.mxu0
  %v1143 = vadd.f32 %v1046, %v1142
  %v1144 = vpop.f32.mrf.mxu0
  %1145 = vmatprep.mubr.bf16.mxu0 %v175
  %1146 = vmatmul.mubr.bf16.gmra.mxu0 %v174
  %v1147 = vpop.f32.mrf.mxu0
  %v1148 = vadd.f32 %v1051, %v1147
  %v1149 = vpop.f32.mrf.mxu0
  %v1150 = vpop.f32.mrf.mxu0
  %v1151 = vadd.f32 %v1054, %v1150
  %v1152 = vpop.f32.mrf.mxu0
  %1153 = vmatprep.mubr.bf16.mxu0 %v184
  %1154 = vmatmul.mubr.bf16.gmra.mxu0 %v183
  %v1155 = vpop.f32.mrf.mxu0
  %v1156 = vadd.f32 %v1059, %v1155
  %v1157 = vpop.f32.mrf.mxu0
  %v1158 = vpop.f32.mrf.mxu0
  %v1159 = vadd.f32 %v1062, %v1158
  %v1160 = vpop.f32.mrf.mxu0
  %1161 = vmatprep.mubr.bf16.mxu0 %v193
  %1162 = vmatmul.mubr.bf16.gmra.mxu0 %v192
  %v1163 = vpop.f32.mrf.mxu0
  %v1164 = vadd.f32 %v1067, %v1163
  %v1165 = vpop.f32.mrf.mxu0
  %v1166 = vpop.f32.mrf.mxu0
  %v1167 = vadd.f32 %v1070, %v1166
  %v1168 = vpop.f32.mrf.mxu0
  %1169 = vmatprep.mubr.bf16.mxu0 %v202
  %1170 = vmatmul.mubr.bf16.gmra.mxu0 %v201
  %v1171 = vpop.f32.mrf.mxu0
  %v1172 = vadd.f32 %v1075, %v1171
  %v1173 = vpop.f32.mrf.mxu0
  %v1174 = vpop.f32.mrf.mxu0
  %v1175 = vadd.f32 %v1078, %v1174
  %v1176 = vpop.f32.mrf.mxu0
  %1177 = vmatprep.mubr.bf16.mxu0 %v211
  %1178 = vmatmul.mubr.bf16.gmra.mxu0 %v210
  %v1179 = vpop.f32.mrf.mxu0
  %v1180 = vadd.f32 %v1083, %v1179
  %v1181 = vpop.f32.mrf.mxu0
  %v1182 = vpop.f32.mrf.mxu0
  %v1183 = vadd.f32 %v1086, %v1182
  %v1184 = vpop.f32.mrf.mxu0
  %1185 = vmatprep.mubr.bf16.mxu0 %v220
  %1186 = vmatmul.mubr.bf16.gmra.mxu0 %v219
  %v1187 = vpop.f32.mrf.mxu0
  %v1188 = vadd.f32 %v1091, %v1187
  %v1189 = vpop.f32.mrf.mxu0
  %v1190 = vpop.f32.mrf.mxu0
  %v1191 = vadd.f32 %v1094, %v1190
  %v1192 = vpop.f32.mrf.mxu0
  %1193 = vmatprep.mubr.bf16.mxu0 %v229
  %1194 = vmatmul.mubr.bf16.gmra.mxu0 %v228
  %v1195 = vpop.f32.mrf.mxu0
  %v1196 = vadd.f32 %v1099, %v1195
  %v1197 = vpop.f32.mrf.mxu0
  %v1198 = vpop.f32.mrf.mxu0
  %v1199 = vadd.f32 %v1102, %v1198
  %v1200 = vpop.f32.mrf.mxu0
  %1201 = vdwg.mxu0
  %1202 = vmatprep.subr.bf16.mxu0 0
  %1203 = vmatpush1.bf16.msra.mxu0 %v741
  %1204 = vmatprep.subr.bf16.mxu0 0
  %1205 = vmatpush1.bf16.msra.mxu0 %v740
  %1206 = vmatprep.subr.bf16.mxu0 0
  %1207 = vmatpush1.bf16.msra.mxu0 %v739
  %1208 = vmatprep.subr.bf16.mxu0 0
  %1209 = vmatpush1.bf16.msra.mxu0 %v738
  %1210 = vmatprep.subr.bf16.mxu0 0
  %1211 = vmatpush1.bf16.msra.mxu0 %v737
  %1212 = vmatprep.subr.bf16.mxu0 0
  %1213 = vmatpush1.bf16.msra.mxu0 %v736
  %1214 = vmatprep.subr.bf16.mxu0 0
  %1215 = vmatpush1.bf16.msra.mxu0 %v735
  %1216 = vmatprep.subr.bf16.mxu0 0
  %1217 = vmatpush1.bf16.msra.mxu0 %v734
  %1218 = vmatprep.subr.bf16.mxu0 0
  %1219 = vmatpush2.bf16.msra.mxu0 0
  %1220 = vmatprep.subr.bf16.mxu0 0
  %1221 = vmatpush2.bf16.msra.mxu0 0
  %1222 = vmatprep.subr.bf16.mxu0 0
  %1223 = vmatpush2.bf16.msra.mxu0 0
  %1224 = vmatprep.subr.bf16.mxu0 0
  %1225 = vmatpush2.bf16.msra.mxu0 0
  %1226 = vmatprep.subr.bf16.mxu0 0
  %1227 = vmatpush2.bf16.msra.mxu0 0
  %1228 = vmatprep.subr.bf16.mxu0 0
  %1229 = vmatpush2.bf16.msra.mxu0 0
  %1230 = vmatprep.subr.bf16.mxu0 0
  %1231 = vmatpush2.bf16.msra.mxu0 0
  %1232 = vmatprep.subr.bf16.mxu0 0
  %1233 = vmatpush2.bf16.msra.mxu0 0
  %1234 = vmatprep.mubr.bf16.mxu0 0
  %1235 = vmatmul.mubr.bf16.gmra.mxu0 %v167
  %v1236 = vpop.f32.mrf.mxu0
  %v1237 = vadd.f32 %v1140, %v1236
  %v1238 = vpop.f32.mrf.mxu0
  %v1239 = vpop.f32.mrf.mxu0
  %v1240 = vadd.f32 %v1143, %v1239
  %v1241 = vpop.f32.mrf.mxu0
  %1242 = vmatprep.mubr.bf16.mxu0 0
  %1243 = vmatmul.mubr.bf16.gmra.mxu0 %v176
  %v1244 = vpop.f32.mrf.mxu0
  %v1245 = vadd.f32 %v1148, %v1244
  %v1246 = vpop.f32.mrf.mxu0
  %v1247 = vpop.f32.mrf.mxu0
  %v1248 = vadd.f32 %v1151, %v1247
  %v1249 = vpop.f32.mrf.mxu0
  %1250 = vmatprep.mubr.bf16.mxu0 0
  %1251 = vmatmul.mubr.bf16.gmra.mxu0 %v185
  %v1252 = vpop.f32.mrf.mxu0
  %v1253 = vadd.f32 %v1156, %v1252
  %v1254 = vpop.f32.mrf.mxu0
  %v1255 = vpop.f32.mrf.mxu0
  %v1256 = vadd.f32 %v1159, %v1255
  %v1257 = vpop.f32.mrf.mxu0
  %1258 = vmatprep.mubr.bf16.mxu0 0
  %1259 = vmatmul.mubr.bf16.gmra.mxu0 %v194
  %v1260 = vpop.f32.mrf.mxu0
  %v1261 = vadd.f32 %v1164, %v1260
  %v1262 = vpop.f32.mrf.mxu0
  %v1263 = vpop.f32.mrf.mxu0
  %v1264 = vadd.f32 %v1167, %v1263
  %v1265 = vpop.f32.mrf.mxu0
  %1266 = vmatprep.mubr.bf16.mxu0 0
  %1267 = vmatmul.mubr.bf16.gmra.mxu0 %v203
  %v1268 = vpop.f32.mrf.mxu0
  %v1269 = vadd.f32 %v1172, %v1268
  %v1270 = vpop.f32.mrf.mxu0
  %v1271 = vpop.f32.mrf.mxu0
  %v1272 = vadd.f32 %v1175, %v1271
  %v1273 = vpop.f32.mrf.mxu0
  %1274 = vmatprep.mubr.bf16.mxu0 0
  %1275 = vmatmul.mubr.bf16.gmra.mxu0 %v212
  %v1276 = vpop.f32.mrf.mxu0
  %v1277 = vadd.f32 %v1180, %v1276
  %v1278 = vpop.f32.mrf.mxu0
  %v1279 = vpop.f32.mrf.mxu0
  %v1280 = vadd.f32 %v1183, %v1279
  %v1281 = vpop.f32.mrf.mxu0
  %1282 = vmatprep.mubr.bf16.mxu0 0
  %1283 = vmatmul.mubr.bf16.gmra.mxu0 %v221
  %v1284 = vpop.f32.mrf.mxu0
  %v1285 = vadd.f32 %v1188, %v1284
  %v1286 = vpop.f32.mrf.mxu0
  %v1287 = vpop.f32.mrf.mxu0
  %v1288 = vadd.f32 %v1191, %v1287
  %v1289 = vpop.f32.mrf.mxu0
  %1290 = vmatprep.mubr.bf16.mxu0 0
  %1291 = vmatmul.mubr.bf16.gmra.mxu0 %v230
  %v1292 = vpop.f32.mrf.mxu0
  %v1293 = vadd.f32 %v1196, %v1292
  %v1294 = vpop.f32.mrf.mxu0
  %v1295 = vpop.f32.mrf.mxu0
  %v1296 = vadd.f32 %v1199, %v1295
  %v1297 = vpop.f32.mrf.mxu0
  %1298 = vdwg.mxu0
  %v1299 = vmax.f32 %v1237, 0.0
  %v1300 = vmax.f32 %v1240, 0.0
  %v1301 = vmax.f32 %v1245, 0.0
  %v1302 = vmax.f32 %v1248, 0.0
  %v1303 = vmax.f32 %v1253, 0.0
  %v1304 = vmax.f32 %v1256, 0.0
  %v1305 = vmax.f32 %v1261, 0.0
  %v1306 = vmax.f32 %v1264, 0.0
  %v1307 = vmax.f32 %v1269, 0.0
  %v1308 = vmax.f32 %v1272, 0.0
  %v1309 = vmax.f32 %v1277, 0.0
  %v1310 = vmax.f32 %v1280, 0.0
  %v1311 = vmax.f32 %v1285, 0.0
  %v1312 = vmax.f32 %v1288, 0.0
  %v1313 = vmax.f32 %v1293, 0.0
  %v1314 = vmax.f32 %v1296, 0.0
  %1315 = vst [vmem:[%s3] sm:$0xff] %v1299
  %1316 = vst [vmem:[%s3 + $0x8] sm:$0xff] %v1300
  %1317 = vst [vmem:[%s3 + $0x10] sm:$0xff] %v1301
  %1318 = vst [vmem:[%s3 + $0x18] sm:$0xff] %v1302
  %1319 = vst [vmem:[%s3 + $0x20] sm:$0xff] %v1303
  %1320 = vst [vmem:[%s3 + $0x28] sm:$0xff] %v1304
  %1321 = vst [vmem:[%s3 + $0x30] sm:$0xff] %v1305
  %1322 = vst [vmem:[%s3 + $0x38] sm:$0xff] %v1306
  %1323 = vst [vmem:[%s3 + $0x40] sm:$0xff] %v1307
  %1324 = vst [vmem:[%s3 + $0x48] sm:$0xff] %v1308
  %1325 = vst [vmem:[%s3 + $0x50] sm:$0xff] %v1309
  %1326 = vst [vmem:[%s3 + $0x58] sm:$0xff] %v1310
  %1327 = vst [vmem:[%s3 + $0x60] sm:$0xff] %v1311
  %1328 = vst [vmem:[%s3 + $0x68] sm:$0xff] %v1312
  %1329 = vst [vmem:[%s3 + $0x70] sm:$0xff] %v1313
  %1330 = vst [vmem:[%s3 + $0x78] sm:$0xff] %v1314
  // Predicated region
  $region14: #{fcn_forward.12} parent=0 // pred_check
    _
  $region15: #{fcn_forward.12} parent=0 // pred_check_branch
    %1332 = sbr.rel (0) target = $region17
  $region16: #{fcn_forward.12} parent=0 // pred_region
    _
  $region17: #{fcn_forward.12} parent=0 // pred_fallthru
    _
  // Predicated region
  $region18: #{fcn_forward.12} parent=0 // pred_check
    _
  $region19: #{fcn_forward.12} parent=0 // pred_check_branch
    %1334 = sbr.rel (0) target = $region21
  $region20: #{fcn_forward.12} parent=0 // pred_region
    _
  $region21: #{fcn_forward.12} parent=0 // pred_fallthru
    _

// kernel: fcn_forward.13
$region0: #{fcn_forward.13}
  #allocation0 [shape = 'u32[]', space=smem, size = 0x4, offset = 0x4, fixed_abs, tag = 'smem constant byte address 0x4 - core index']
  #allocation1 [shape = 'u32[144,128]{1,0:T(1,128)}', space=vmem, size = 0x12000, scoped, tag = 'internal scratch']
  %s0 = inlined_call_operand.vmem [shape: f32[128,1152], index: 0, kind: input, shape index: {}]
  %s1 = inlined_call_operand.vmem [shape: bf16[1152,128], index: 1, kind: input, shape index: {}]
  %s2 = inlined_call_operand.vmem [shape: f32[1,128], index: 2, kind: input, shape index: {}]
  %s3 = inlined_call_operand.vmem [shape: bf16[128,4], index: 3, kind: input, shape index: {}]
  %s4 = inlined_call_operand.vmem [shape: f32[1,4], index: 4, kind: input, shape index: {}]
  %s5 = inlined_call_operand.vmem [shape: f32[128,4], index: 5, kind: output, shape index: {}]
  %s6 = sld [smem:[#allocation0]]
  $region30: #{fcn_forward.13} parent=0
    _
  %s8 = ssub.s32 1, %s6
  %s9 = scalar_select 0, %s8, %s6
  // Predicated region
  $region2: #{fcn_forward.13} parent=0 // pred_check
    _
  $region3: #{fcn_forward.13} parent=0 // pred_check_branch
    %11 = sbr.rel (0) target = $region5
  $region4: #{fcn_forward.13} parent=0 // pred_region
    _
  $region5: #{fcn_forward.13} parent=0 // pred_fallthru
    _
  // Predicated region
  $region6: #{fcn_forward.13} parent=0 // pred_check
    _
  $region7: #{fcn_forward.13} parent=0 // pred_check_branch
    %13 = sbr.rel (0) target = $region9
  $region8: #{fcn_forward.13} parent=0 // pred_region
    _
  $region9: #{fcn_forward.13} parent=0 // pred_fallthru
    _
  // Predicated region
  $region10: #{fcn_forward.13} parent=0 // pred_check
    _
  $region11: #{fcn_forward.13} parent=0 // pred_check_branch
    %15 = sbr.rel (0) target = $region13
  $region12: #{fcn_forward.13} parent=0 // pred_region
    _
  $region13: #{fcn_forward.13} parent=0 // pred_fallthru
    _
  // Predicated region
  $region14: #{fcn_forward.13} parent=0 // pred_check
    _
  $region15: #{fcn_forward.13} parent=0 // pred_check_branch
    %17 = sbr.rel (0) target = $region17
  $region16: #{fcn_forward.13} parent=0 // pred_region
    _
  $region17: #{fcn_forward.13} parent=0 // pred_fallthru
    _
  // Predicated region
  $region18: #{fcn_forward.13} parent=0 // pred_check
    _
  $region19: #{fcn_forward.13} parent=0 // pred_check_branch
    %19 = sbr.rel (0) target = $region21
  $region20: #{fcn_forward.13} parent=0 // pred_region
    _
  $region21: #{fcn_forward.13} parent=0 // pred_fallthru
    _
  %v21 = vld [vmem:[%s0] sm:$0xff]
  %v22 = vld [vmem:[%s0 + $0x8] sm:$0xff]
  %v23 = vld [vmem:[%s0 + $0x10] sm:$0xff]
  %v24 = vld [vmem:[%s0 + $0x18] sm:$0xff]
  %v25 = vld [vmem:[%s0 + $0x20] sm:$0xff]
  %v26 = vld [vmem:[%s0 + $0x28] sm:$0xff]
  %v27 = vld [vmem:[%s0 + $0x30] sm:$0xff]
  %v28 = vld [vmem:[%s0 + $0x38] sm:$0xff]
  %v29 = vld [vmem:[%s0 + $0x40] sm:$0xff]
  %v30 = vld [vmem:[%s0 + $0x48] sm:$0xff]
  %v31 = vld [vmem:[%s0 + $0x50] sm:$0xff]
  %v32 = vld [vmem:[%s0 + $0x58] sm:$0xff]
  %v33 = vld [vmem:[%s0 + $0x60] sm:$0xff]
  %v34 = vld [vmem:[%s0 + $0x68] sm:$0xff]
  %v35 = vld [vmem:[%s0 + $0x70] sm:$0xff]
  %v36 = vld [vmem:[%s0 + $0x78] sm:$0xff]
  %v37 = vld [vmem:[%s0 + $0x80] sm:$0xff]
  %v38 = vld [vmem:[%s0 + $0x88] sm:$0xff]
  %v39 = vld [vmem:[%s0 + $0x90] sm:$0xff]
  %v40 = vld [vmem:[%s0 + $0x98] sm:$0xff]
  %v41 = vld [vmem:[%s0 + $0xa0] sm:$0xff]
  %v42 = vld [vmem:[%s0 + $0xa8] sm:$0xff]
  %v43 = vld [vmem:[%s0 + $0xb0] sm:$0xff]
  %v44 = vld [vmem:[%s0 + $0xb8] sm:$0xff]
  %v45 = vld [vmem:[%s0 + $0xc0] sm:$0xff]
  %v46 = vld [vmem:[%s0 + $0xc8] sm:$0xff]
  %v47 = vld [vmem:[%s0 + $0xd0] sm:$0xff]
  %v48 = vld [vmem:[%s0 + $0xd8] sm:$0xff]
  %v49 = vld [vmem:[%s0 + $0xe0] sm:$0xff]
  %v50 = vld [vmem:[%s0 + $0xe8] sm:$0xff]
  %v51 = vld [vmem:[%s0 + $0xf0] sm:$0xff]
  %v52 = vld [vmem:[%s0 + $0xf8] sm:$0xff]
  %v53 = vld [vmem:[%s0 + $0x100] sm:$0xff]
  %v54 = vld [vmem:[%s0 + $0x108] sm:$0xff]
  %v55 = vld [vmem:[%s0 + $0x110] sm:$0xff]
  %v56 = vld [vmem:[%s0 + $0x118] sm:$0xff]
  %v57 = vld [vmem:[%s0 + $0x120] sm:$0xff]
  %v58 = vld [vmem:[%s0 + $0x128] sm:$0xff]
  %v59 = vld [vmem:[%s0 + $0x130] sm:$0xff]
  %v60 = vld [vmem:[%s0 + $0x138] sm:$0xff]
  %v61 = vld [vmem:[%s0 + $0x140] sm:$0xff]
  %v62 = vld [vmem:[%s0 + $0x148] sm:$0xff]
  %v63 = vld [vmem:[%s0 + $0x150] sm:$0xff]
  %v64 = vld [vmem:[%s0 + $0x158] sm:$0xff]
  %v65 = vld [vmem:[%s0 + $0x160] sm:$0xff]
  %v66 = vld [vmem:[%s0 + $0x168] sm:$0xff]
  %v67 = vld [vmem:[%s0 + $0x170] sm:$0xff]
  %v68 = vld [vmem:[%s0 + $0x178] sm:$0xff]
  %v69 = vld [vmem:[%s0 + $0x180] sm:$0xff]
  %v70 = vld [vmem:[%s0 + $0x188] sm:$0xff]
  %v71 = vld [vmem:[%s0 + $0x190] sm:$0xff]
  %v72 = vld [vmem:[%s0 + $0x198] sm:$0xff]
  %v73 = vld [vmem:[%s0 + $0x1a0] sm:$0xff]
  %v74 = vld [vmem:[%s0 + $0x1a8] sm:$0xff]
  %v75 = vld [vmem:[%s0 + $0x1b0] sm:$0xff]
  %v76 = vld [vmem:[%s0 + $0x1b8] sm:$0xff]
  %v77 = vld [vmem:[%s0 + $0x1c0] sm:$0xff]
  %v78 = vld [vmem:[%s0 + $0x1c8] sm:$0xff]
  %v79 = vld [vmem:[%s0 + $0x1d0] sm:$0xff]
  %v80 = vld [vmem:[%s0 + $0x1d8] sm:$0xff]
  %v81 = vld [vmem:[%s0 + $0x1e0] sm:$0xff]
  %v82 = vld [vmem:[%s0 + $0x1e8] sm:$0xff]
  %v83 = vld [vmem:[%s0 + $0x1f0] sm:$0xff]
  %v84 = vld [vmem:[%s0 + $0x1f8] sm:$0xff]
  %v85 = vld [vmem:[%s0 + $0x200] sm:$0xff]
  %v86 = vld [vmem:[%s0 + $0x208] sm:$0xff]
  %v87 = vld [vmem:[%s0 + $0x210] sm:$0xff]
  %v88 = vld [vmem:[%s0 + $0x218] sm:$0xff]
  %v89 = vld [vmem:[%s0 + $0x220] sm:$0xff]
  %v90 = vld [vmem:[%s0 + $0x228] sm:$0xff]
  %v91 = vld [vmem:[%s0 + $0x230] sm:$0xff]
  %v92 = vld [vmem:[%s0 + $0x238] sm:$0xff]
  %v93 = vld [vmem:[%s0 + $0x240] sm:$0xff]
  %v94 = vld [vmem:[%s0 + $0x248] sm:$0xff]
  %v95 = vld [vmem:[%s0 + $0x250] sm:$0xff]
  %v96 = vld [vmem:[%s0 + $0x258] sm:$0xff]
  %v97 = vld [vmem:[%s0 + $0x260] sm:$0xff]
  %v98 = vld [vmem:[%s0 + $0x268] sm:$0xff]
  %v99 = vld [vmem:[%s0 + $0x270] sm:$0xff]
  %v100 = vld [vmem:[%s0 + $0x278] sm:$0xff]
  %v101 = vld [vmem:[%s0 + $0x280] sm:$0xff]
  %v102 = vld [vmem:[%s0 + $0x288] sm:$0xff]
  %v103 = vld [vmem:[%s0 + $0x290] sm:$0xff]
  %v104 = vld [vmem:[%s0 + $0x298] sm:$0xff]
  %v105 = vld [vmem:[%s0 + $0x2a0] sm:$0xff]
  %v106 = vld [vmem:[%s0 + $0x2a8] sm:$0xff]
  %v107 = vld [vmem:[%s0 + $0x2b0] sm:$0xff]
  %v108 = vld [vmem:[%s0 + $0x2b8] sm:$0xff]
  %v109 = vld [vmem:[%s0 + $0x2c0] sm:$0xff]
  %v110 = vld [vmem:[%s0 + $0x2c8] sm:$0xff]
  %v111 = vld [vmem:[%s0 + $0x2d0] sm:$0xff]
  %v112 = vld [vmem:[%s0 + $0x2d8] sm:$0xff]
  %v113 = vld [vmem:[%s0 + $0x2e0] sm:$0xff]
  %v114 = vld [vmem:[%s0 + $0x2e8] sm:$0xff]
  %v115 = vld [vmem:[%s0 + $0x2f0] sm:$0xff]
  %v116 = vld [vmem:[%s0 + $0x2f8] sm:$0xff]
  %v117 = vld [vmem:[%s0 + $0x300] sm:$0xff]
  %v118 = vld [vmem:[%s0 + $0x308] sm:$0xff]
  %v119 = vld [vmem:[%s0 + $0x310] sm:$0xff]
  %v120 = vld [vmem:[%s0 + $0x318] sm:$0xff]
  %v121 = vld [vmem:[%s0 + $0x320] sm:$0xff]
  %v122 = vld [vmem:[%s0 + $0x328] sm:$0xff]
  %v123 = vld [vmem:[%s0 + $0x330] sm:$0xff]
  %v124 = vld [vmem:[%s0 + $0x338] sm:$0xff]
  %v125 = vld [vmem:[%s0 + $0x340] sm:$0xff]
  %v126 = vld [vmem:[%s0 + $0x348] sm:$0xff]
  %v127 = vld [vmem:[%s0 + $0x350] sm:$0xff]
  %v128 = vld [vmem:[%s0 + $0x358] sm:$0xff]
  %v129 = vld [vmem:[%s0 + $0x360] sm:$0xff]
  %v130 = vld [vmem:[%s0 + $0x368] sm:$0xff]
  %v131 = vld [vmem:[%s0 + $0x370] sm:$0xff]
  %v132 = vld [vmem:[%s0 + $0x378] sm:$0xff]
  %v133 = vld [vmem:[%s0 + $0x380] sm:$0xff]
  %v134 = vld [vmem:[%s0 + $0x388] sm:$0xff]
  %v135 = vld [vmem:[%s0 + $0x390] sm:$0xff]
  %v136 = vld [vmem:[%s0 + $0x398] sm:$0xff]
  %v137 = vld [vmem:[%s0 + $0x3a0] sm:$0xff]
  %v138 = vld [vmem:[%s0 + $0x3a8] sm:$0xff]
  %v139 = vld [vmem:[%s0 + $0x3b0] sm:$0xff]
  %v140 = vld [vmem:[%s0 + $0x3b8] sm:$0xff]
  %v141 = vld [vmem:[%s0 + $0x3c0] sm:$0xff]
  %v142 = vld [vmem:[%s0 + $0x3c8] sm:$0xff]
  %v143 = vld [vmem:[%s0 + $0x3d0] sm:$0xff]
  %v144 = vld [vmem:[%s0 + $0x3d8] sm:$0xff]
  %v145 = vld [vmem:[%s0 + $0x3e0] sm:$0xff]
  %v146 = vld [vmem:[%s0 + $0x3e8] sm:$0xff]
  %v147 = vld [vmem:[%s0 + $0x3f0] sm:$0xff]
  %v148 = vld [vmem:[%s0 + $0x3f8] sm:$0xff]
  %v149 = vld [vmem:[%s0 + $0x400] sm:$0xff]
  %v150 = vld [vmem:[%s0 + $0x408] sm:$0xff]
  %v151 = vld [vmem:[%s0 + $0x410] sm:$0xff]
  %v152 = vld [vmem:[%s0 + $0x418] sm:$0xff]
  %v153 = vld [vmem:[%s0 + $0x420] sm:$0xff]
  %v154 = vld [vmem:[%s0 + $0x428] sm:$0xff]
  %v155 = vld [vmem:[%s0 + $0x430] sm:$0xff]
  %v156 = vld [vmem:[%s0 + $0x438] sm:$0xff]
  %v157 = vld [vmem:[%s0 + $0x440] sm:$0xff]
  %v158 = vld [vmem:[%s0 + $0x448] sm:$0xff]
  %v159 = vld [vmem:[%s0 + $0x450] sm:$0xff]
  %v160 = vld [vmem:[%s0 + $0x458] sm:$0xff]
  %v161 = vld [vmem:[%s0 + $0x460] sm:$0xff]
  %v162 = vld [vmem:[%s0 + $0x468] sm:$0xff]
  %v163 = vld [vmem:[%s0 + $0x470] sm:$0xff]
  %v164 = vld [vmem:[%s0 + $0x478] sm:$0xff]
  %v165 = vpack.c.bf16 %v30, %v21
  %v166 = vpack.c.bf16 %v31, %v22
  %v167 = vpack.c.bf16 %v32, %v23
  %v168 = vpack.c.bf16 %v33, %v24
  %v169 = vpack.c.bf16 %v34, %v25
  %v170 = vpack.c.bf16 %v35, %v26
  %v171 = vpack.c.bf16 %v36, %v27
  %v172 = vpack.c.bf16 %v37, %v28
  %v173 = vpack.c.bf16 %v38, %v29
  %v174 = vpack.c.bf16 %v48, %v39
  %v175 = vpack.c.bf16 %v49, %v40
  %v176 = vpack.c.bf16 %v50, %v41
  %v177 = vpack.c.bf16 %v51, %v42
  %v178 = vpack.c.bf16 %v52, %v43
  %v179 = vpack.c.bf16 %v53, %v44
  %v180 = vpack.c.bf16 %v54, %v45
  %v181 = vpack.c.bf16 %v55, %v46
  %v182 = vpack.c.bf16 %v56, %v47
  %v183 = vpack.c.bf16 %v66, %v57
  %v184 = vpack.c.bf16 %v67, %v58
  %v185 = vpack.c.bf16 %v68, %v59
  %v186 = vpack.c.bf16 %v69, %v60
  %v187 = vpack.c.bf16 %v70, %v61
  %v188 = vpack.c.bf16 %v71, %v62
  %v189 = vpack.c.bf16 %v72, %v63
  %v190 = vpack.c.bf16 %v73, %v64
  %v191 = vpack.c.bf16 %v74, %v65
  %v192 = vpack.c.bf16 %v84, %v75
  %v193 = vpack.c.bf16 %v85, %v76
  %v194 = vpack.c.bf16 %v86, %v77
  %v195 = vpack.c.bf16 %v87, %v78
  %v196 = vpack.c.bf16 %v88, %v79
  %v197 = vpack.c.bf16 %v89, %v80
  %v198 = vpack.c.bf16 %v90, %v81
  %v199 = vpack.c.bf16 %v91, %v82
  %v200 = vpack.c.bf16 %v92, %v83
  %v201 = vpack.c.bf16 %v102, %v93
  %v202 = vpack.c.bf16 %v103, %v94
  %v203 = vpack.c.bf16 %v104, %v95
  %v204 = vpack.c.bf16 %v105, %v96
  %v205 = vpack.c.bf16 %v106, %v97
  %v206 = vpack.c.bf16 %v107, %v98
  %v207 = vpack.c.bf16 %v108, %v99
  %v208 = vpack.c.bf16 %v109, %v100
  %v209 = vpack.c.bf16 %v110, %v101
  %v210 = vpack.c.bf16 %v120, %v111
  %v211 = vpack.c.bf16 %v121, %v112
  %v212 = vpack.c.bf16 %v122, %v113
  %v213 = vpack.c.bf16 %v123, %v114
  %v214 = vpack.c.bf16 %v124, %v115
  %v215 = vpack.c.bf16 %v125, %v116
  %v216 = vpack.c.bf16 %v126, %v117
  %v217 = vpack.c.bf16 %v127, %v118
  %v218 = vpack.c.bf16 %v128, %v119
  %v219 = vpack.c.bf16 %v138, %v129
  %v220 = vpack.c.bf16 %v139, %v130
  %v221 = vpack.c.bf16 %v140, %v131
  %v222 = vpack.c.bf16 %v141, %v132
  %v223 = vpack.c.bf16 %v142, %v133
  %v224 = vpack.c.bf16 %v143, %v134
  %v225 = vpack.c.bf16 %v144, %v135
  %v226 = vpack.c.bf16 %v145, %v136
  %v227 = vpack.c.bf16 %v146, %v137
  %v228 = vpack.c.bf16 %v156, %v147
  %v229 = vpack.c.bf16 %v157, %v148
  %v230 = vpack.c.bf16 %v158, %v149
  %v231 = vpack.c.bf16 %v159, %v150
  %v232 = vpack.c.bf16 %v160, %v151
  %v233 = vpack.c.bf16 %v161, %v152
  %v234 = vpack.c.bf16 %v162, %v153
  %v235 = vpack.c.bf16 %v163, %v154
  %v236 = vpack.c.bf16 %v164, %v155
  %v237 = vld [vmem:[%s1] sm:$0xf]
  %v238 = vld [vmem:[%s1 + $0x4] sm:$0xf]
  %v239 = vld [vmem:[%s1 + $0x8] sm:$0xf]
  %v240 = vld [vmem:[%s1 + $0xc] sm:$0xf]
  %v241 = vld [vmem:[%s1 + $0x10] sm:$0xf]
  %v242 = vld [vmem:[%s1 + $0x14] sm:$0xf]
  %v243 = vld [vmem:[%s1 + $0x18] sm:$0xf]
  %v244 = vld [vmem:[%s1 + $0x1c] sm:$0xf]
  %v245 = vld [vmem:[%s1 + $0x20] sm:$0xf]
  %v246 = vld [vmem:[%s1 + $0x24] sm:$0xf]
  %v247 = vld [vmem:[%s1 + $0x28] sm:$0xf]
  %v248 = vld [vmem:[%s1 + $0x2c] sm:$0xf]
  %v249 = vld [vmem:[%s1 + $0x30] sm:$0xf]
  %v250 = vld [vmem:[%s1 + $0x34] sm:$0xf]
  %v251 = vld [vmem:[%s1 + $0x38] sm:$0xf]
  %v252 = vld [vmem:[%s1 + $0x3c] sm:$0xf]
  %v253 = vld [vmem:[%s1 + $0x40] sm:$0xf]
  %v254 = vld [vmem:[%s1 + $0x44] sm:$0xf]
  %v255 = vld [vmem:[%s1 + $0x48] sm:$0xf]
  %v256 = vld [vmem:[%s1 + $0x4c] sm:$0xf]
  %v257 = vld [vmem:[%s1 + $0x50] sm:$0xf]
  %v258 = vld [vmem:[%s1 + $0x54] sm:$0xf]
  %v259 = vld [vmem:[%s1 + $0x58] sm:$0xf]
  %v260 = vld [vmem:[%s1 + $0x5c] sm:$0xf]
  %v261 = vld [vmem:[%s1 + $0x60] sm:$0xf]
  %v262 = vld [vmem:[%s1 + $0x64] sm:$0xf]
  %v263 = vld [vmem:[%s1 + $0x68] sm:$0xf]
  %v264 = vld [vmem:[%s1 + $0x6c] sm:$0xf]
  %v265 = vld [vmem:[%s1 + $0x70] sm:$0xf]
  %v266 = vld [vmem:[%s1 + $0x74] sm:$0xf]
  %v267 = vld [vmem:[%s1 + $0x78] sm:$0xf]
  %v268 = vld [vmem:[%s1 + $0x7c] sm:$0xf]
  %v269 = vld [vmem:[%s1 + $0x80] sm:$0xf]
  %v270 = vld [vmem:[%s1 + $0x84] sm:$0xf]
  %v271 = vld [vmem:[%s1 + $0x88] sm:$0xf]
  %v272 = vld [vmem:[%s1 + $0x8c] sm:$0xf]
  %v273 = vld [vmem:[%s1 + $0x90] sm:$0xf]
  %v274 = vld [vmem:[%s1 + $0x94] sm:$0xf]
  %v275 = vld [vmem:[%s1 + $0x98] sm:$0xf]
  %v276 = vld [vmem:[%s1 + $0x9c] sm:$0xf]
  %v277 = vld [vmem:[%s1 + $0xa0] sm:$0xf]
  %v278 = vld [vmem:[%s1 + $0xa4] sm:$0xf]
  %v279 = vld [vmem:[%s1 + $0xa8] sm:$0xf]
  %v280 = vld [vmem:[%s1 + $0xac] sm:$0xf]
  %v281 = vld [vmem:[%s1 + $0xb0] sm:$0xf]
  %v282 = vld [vmem:[%s1 + $0xb4] sm:$0xf]
  %v283 = vld [vmem:[%s1 + $0xb8] sm:$0xf]
  %v284 = vld [vmem:[%s1 + $0xbc] sm:$0xf]
  %v285 = vld [vmem:[%s1 + $0xc0] sm:$0xf]
  %v286 = vld [vmem:[%s1 + $0xc4] sm:$0xf]
  %v287 = vld [vmem:[%s1 + $0xc8] sm:$0xf]
  %v288 = vld [vmem:[%s1 + $0xcc] sm:$0xf]
  %v289 = vld [vmem:[%s1 + $0xd0] sm:$0xf]
  %v290 = vld [vmem:[%s1 + $0xd4] sm:$0xf]
  %v291 = vld [vmem:[%s1 + $0xd8] sm:$0xf]
  %v292 = vld [vmem:[%s1 + $0xdc] sm:$0xf]
  %v293 = vld [vmem:[%s1 + $0xe0] sm:$0xf]
  %v294 = vld [vmem:[%s1 + $0xe4] sm:$0xf]
  %v295 = vld [vmem:[%s1 + $0xe8] sm:$0xf]
  %v296 = vld [vmem:[%s1 + $0xec] sm:$0xf]
  %v297 = vld [vmem:[%s1 + $0xf0] sm:$0xf]
  %v298 = vld [vmem:[%s1 + $0xf4] sm:$0xf]
  %v299 = vld [vmem:[%s1 + $0xf8] sm:$0xf]
  %v300 = vld [vmem:[%s1 + $0xfc] sm:$0xf]
  %v301 = vld [vmem:[%s1 + $0x100] sm:$0xf]
  %v302 = vld [vmem:[%s1 + $0x104] sm:$0xf]
  %v303 = vld [vmem:[%s1 + $0x108] sm:$0xf]
  %v304 = vld [vmem:[%s1 + $0x10c] sm:$0xf]
  %v305 = vld [vmem:[%s1 + $0x110] sm:$0xf]
  %v306 = vld [vmem:[%s1 + $0x114] sm:$0xf]
  %v307 = vld [vmem:[%s1 + $0x118] sm:$0xf]
  %v308 = vld [vmem:[%s1 + $0x11c] sm:$0xf]
  %v309 = vld [vmem:[%s1 + $0x120] sm:$0xf]
  %v310 = vld [vmem:[%s1 + $0x124] sm:$0xf]
  %v311 = vld [vmem:[%s1 + $0x128] sm:$0xf]
  %v312 = vld [vmem:[%s1 + $0x12c] sm:$0xf]
  %v313 = vld [vmem:[%s1 + $0x130] sm:$0xf]
  %v314 = vld [vmem:[%s1 + $0x134] sm:$0xf]
  %v315 = vld [vmem:[%s1 + $0x138] sm:$0xf]
  %v316 = vld [vmem:[%s1 + $0x13c] sm:$0xf]
  %v317 = vld [vmem:[%s1 + $0x140] sm:$0xf]
  %v318 = vld [vmem:[%s1 + $0x144] sm:$0xf]
  %v319 = vld [vmem:[%s1 + $0x148] sm:$0xf]
  %v320 = vld [vmem:[%s1 + $0x14c] sm:$0xf]
  %v321 = vld [vmem:[%s1 + $0x150] sm:$0xf]
  %v322 = vld [vmem:[%s1 + $0x154] sm:$0xf]
  %v323 = vld [vmem:[%s1 + $0x158] sm:$0xf]
  %v324 = vld [vmem:[%s1 + $0x15c] sm:$0xf]
  %v325 = vld [vmem:[%s1 + $0x160] sm:$0xf]
  %v326 = vld [vmem:[%s1 + $0x164] sm:$0xf]
  %v327 = vld [vmem:[%s1 + $0x168] sm:$0xf]
  %v328 = vld [vmem:[%s1 + $0x16c] sm:$0xf]
  %v329 = vld [vmem:[%s1 + $0x170] sm:$0xf]
  %v330 = vld [vmem:[%s1 + $0x174] sm:$0xf]
  %v331 = vld [vmem:[%s1 + $0x178] sm:$0xf]
  %v332 = vld [vmem:[%s1 + $0x17c] sm:$0xf]
  %v333 = vld [vmem:[%s1 + $0x180] sm:$0xf]
  %v334 = vld [vmem:[%s1 + $0x184] sm:$0xf]
  %v335 = vld [vmem:[%s1 + $0x188] sm:$0xf]
  %v336 = vld [vmem:[%s1 + $0x18c] sm:$0xf]
  %v337 = vld [vmem:[%s1 + $0x190] sm:$0xf]
  %v338 = vld [vmem:[%s1 + $0x194] sm:$0xf]
  %v339 = vld [vmem:[%s1 + $0x198] sm:$0xf]
  %v340 = vld [vmem:[%s1 + $0x19c] sm:$0xf]
  %v341 = vld [vmem:[%s1 + $0x1a0] sm:$0xf]
  %v342 = vld [vmem:[%s1 + $0x1a4] sm:$0xf]
  %v343 = vld [vmem:[%s1 + $0x1a8] sm:$0xf]
  %v344 = vld [vmem:[%s1 + $0x1ac] sm:$0xf]
  %v345 = vld [vmem:[%s1 + $0x1b0] sm:$0xf]
  %v346 = vld [vmem:[%s1 + $0x1b4] sm:$0xf]
  %v347 = vld [vmem:[%s1 + $0x1b8] sm:$0xf]
  %v348 = vld [vmem:[%s1 + $0x1bc] sm:$0xf]
  %v349 = vld [vmem:[%s1 + $0x1c0] sm:$0xf]
  %v350 = vld [vmem:[%s1 + $0x1c4] sm:$0xf]
  %v351 = vld [vmem:[%s1 + $0x1c8] sm:$0xf]
  %v352 = vld [vmem:[%s1 + $0x1cc] sm:$0xf]
  %v353 = vld [vmem:[%s1 + $0x1d0] sm:$0xf]
  %v354 = vld [vmem:[%s1 + $0x1d4] sm:$0xf]
  %v355 = vld [vmem:[%s1 + $0x1d8] sm:$0xf]
  %v356 = vld [vmem:[%s1 + $0x1dc] sm:$0xf]
  %v357 = vld [vmem:[%s1 + $0x1e0] sm:$0xf]
  %v358 = vld [vmem:[%s1 + $0x1e4] sm:$0xf]
  %v359 = vld [vmem:[%s1 + $0x1e8] sm:$0xf]
  %v360 = vld [vmem:[%s1 + $0x1ec] sm:$0xf]
  %v361 = vld [vmem:[%s1 + $0x1f0] sm:$0xf]
  %v362 = vld [vmem:[%s1 + $0x1f4] sm:$0xf]
  %v363 = vld [vmem:[%s1 + $0x1f8] sm:$0xf]
  %v364 = vld [vmem:[%s1 + $0x1fc] sm:$0xf]
  %v365 = vld [vmem:[%s1 + $0x200] sm:$0xf]
  %v366 = vld [vmem:[%s1 + $0x204] sm:$0xf]
  %v367 = vld [vmem:[%s1 + $0x208] sm:$0xf]
  %v368 = vld [vmem:[%s1 + $0x20c] sm:$0xf]
  %v369 = vld [vmem:[%s1 + $0x210] sm:$0xf]
  %v370 = vld [vmem:[%s1 + $0x214] sm:$0xf]
  %v371 = vld [vmem:[%s1 + $0x218] sm:$0xf]
  %v372 = vld [vmem:[%s1 + $0x21c] sm:$0xf]
  %v373 = vld [vmem:[%s1 + $0x220] sm:$0xf]
  %v374 = vld [vmem:[%s1 + $0x224] sm:$0xf]
  %v375 = vld [vmem:[%s1 + $0x228] sm:$0xf]
  %v376 = vld [vmem:[%s1 + $0x22c] sm:$0xf]
  %v377 = vld [vmem:[%s1 + $0x230] sm:$0xf]
  %v378 = vld [vmem:[%s1 + $0x234] sm:$0xf]
  %v379 = vld [vmem:[%s1 + $0x238] sm:$0xf]
  %v380 = vld [vmem:[%s1 + $0x23c] sm:$0xf]
  %v381 = vld [vmem:[%s2] sm:$0x1]
  %v383 = vlaneseq
  %v384 = vshrl.u32 %v383, 7
  %v385 = vsub.s32 0, %v384
  %v386 = vrot.slane %v381, %v385
  %v532 = vunpack.c.l.b16 %v237
  %v533 = vunpack.c.l.b16 %v238
  %v534 = vunpack.c.l.b16 %v239
  %v535 = vunpack.c.l.b16 %v240
  %v536 = vunpack.c.l.b16 %v241
  %v537 = vunpack.c.l.b16 %v242
  %v538 = vunpack.c.l.b16 %v243
  %v539 = vunpack.c.l.b16 %v244
  %v540 = vunpack.c.l.b16 %v245
  %v541 = vunpack.c.l.b16 %v246
  %v542 = vunpack.c.l.b16 %v247
  %v543 = vunpack.c.l.b16 %v248
  %v544 = vunpack.c.l.b16 %v249
  %v545 = vunpack.c.l.b16 %v250
  %v546 = vunpack.c.l.b16 %v251
  %v547 = vunpack.c.l.b16 %v252
  %v548 = vunpack.c.l.b16 %v253
  %v549 = vunpack.c.l.b16 %v254
  %v550 = vunpack.c.l.b16 %v255
  %v551 = vunpack.c.l.b16 %v256
  %v552 = vunpack.c.l.b16 %v257
  %v553 = vunpack.c.l.b16 %v258
  %v554 = vunpack.c.l.b16 %v259
  %v555 = vunpack.c.l.b16 %v260
  %v556 = vunpack.c.l.b16 %v261
  %v557 = vunpack.c.l.b16 %v262
  %v558 = vunpack.c.l.b16 %v263
  %v559 = vunpack.c.l.b16 %v264
  %v560 = vunpack.c.l.b16 %v265
  %v561 = vunpack.c.l.b16 %v266
  %v562 = vunpack.c.l.b16 %v267
  %v563 = vunpack.c.l.b16 %v268
  %v564 = vunpack.c.l.b16 %v269
  %v565 = vunpack.c.l.b16 %v270
  %v566 = vunpack.c.l.b16 %v271
  %v567 = vunpack.c.l.b16 %v272
  %v568 = vunpack.c.l.b16 %v273
  %v569 = vunpack.c.l.b16 %v274
  %v570 = vunpack.c.l.b16 %v275
  %v571 = vunpack.c.l.b16 %v276
  %v572 = vunpack.c.l.b16 %v277
  %v573 = vunpack.c.l.b16 %v278
  %v574 = vunpack.c.l.b16 %v279
  %v575 = vunpack.c.l.b16 %v280
  %v576 = vunpack.c.l.b16 %v281
  %v577 = vunpack.c.l.b16 %v282
  %v578 = vunpack.c.l.b16 %v283
  %v579 = vunpack.c.l.b16 %v284
  %v580 = vunpack.c.l.b16 %v285
  %v581 = vunpack.c.l.b16 %v286
  %v582 = vunpack.c.l.b16 %v287
  %v583 = vunpack.c.l.b16 %v288
  %v584 = vunpack.c.l.b16 %v289
  %v585 = vunpack.c.l.b16 %v290
  %v586 = vunpack.c.l.b16 %v291
  %v587 = vunpack.c.l.b16 %v292
  %v588 = vunpack.c.l.b16 %v293
  %v589 = vunpack.c.l.b16 %v294
  %v590 = vunpack.c.l.b16 %v295
  %v591 = vunpack.c.l.b16 %v296
  %v592 = vunpack.c.l.b16 %v297
  %v593 = vunpack.c.l.b16 %v298
  %v594 = vunpack.c.l.b16 %v299
  %v595 = vunpack.c.l.b16 %v300
  %v596 = vunpack.c.l.b16 %v301
  %v597 = vunpack.c.l.b16 %v302
  %v598 = vunpack.c.l.b16 %v303
  %v599 = vunpack.c.l.b16 %v304
  %v600 = vunpack.c.l.b16 %v305
  %v601 = vunpack.c.l.b16 %v306
  %v602 = vunpack.c.l.b16 %v307
  %v603 = vunpack.c.l.b16 %v308
  %v604 = vunpack.c.l.b16 %v309
  %v605 = vunpack.c.l.b16 %v310
  %v606 = vunpack.c.l.b16 %v311
  %v607 = vunpack.c.l.b16 %v312
  %v608 = vunpack.c.l.b16 %v313
  %v609 = vunpack.c.l.b16 %v314
  %v610 = vunpack.c.l.b16 %v315
  %v611 = vunpack.c.l.b16 %v316
  %v612 = vunpack.c.l.b16 %v317
  %v613 = vunpack.c.l.b16 %v318
  %v614 = vunpack.c.l.b16 %v319
  %v615 = vunpack.c.l.b16 %v320
  %v616 = vunpack.c.l.b16 %v321
  %v617 = vunpack.c.l.b16 %v322
  %v618 = vunpack.c.l.b16 %v323
  %v619 = vunpack.c.l.b16 %v324
  %v620 = vunpack.c.l.b16 %v325
  %v621 = vunpack.c.l.b16 %v326
  %v622 = vunpack.c.l.b16 %v327
  %v623 = vunpack.c.l.b16 %v328
  %v624 = vunpack.c.l.b16 %v329
  %v625 = vunpack.c.l.b16 %v330
  %v626 = vunpack.c.l.b16 %v331
  %v627 = vunpack.c.l.b16 %v332
  %v628 = vunpack.c.l.b16 %v333
  %v629 = vunpack.c.l.b16 %v334
  %v630 = vunpack.c.l.b16 %v335
  %v631 = vunpack.c.l.b16 %v336
  %v632 = vunpack.c.l.b16 %v337
  %v633 = vunpack.c.l.b16 %v338
  %v634 = vunpack.c.l.b16 %v339
  %v635 = vunpack.c.l.b16 %v340
  %v636 = vunpack.c.l.b16 %v341
  %v637 = vunpack.c.l.b16 %v342
  %v638 = vunpack.c.l.b16 %v343
  %v639 = vunpack.c.l.b16 %v344
  %v640 = vunpack.c.l.b16 %v345
  %v641 = vunpack.c.l.b16 %v346
  %v642 = vunpack.c.l.b16 %v347
  %v643 = vunpack.c.l.b16 %v348
  %v644 = vunpack.c.l.b16 %v349
  %v645 = vunpack.c.l.b16 %v350
  %v646 = vunpack.c.l.b16 %v351
  %v647 = vunpack.c.l.b16 %v352
  %v648 = vunpack.c.l.b16 %v353
  %v649 = vunpack.c.l.b16 %v354
  %v650 = vunpack.c.l.b16 %v355
  %v651 = vunpack.c.l.b16 %v356
  %v652 = vunpack.c.l.b16 %v357
  %v653 = vunpack.c.l.b16 %v358
  %v654 = vunpack.c.l.b16 %v359
  %v655 = vunpack.c.l.b16 %v360
  %v656 = vunpack.c.l.b16 %v361
  %v657 = vunpack.c.l.b16 %v362
  %v658 = vunpack.c.l.b16 %v363
  %v659 = vunpack.c.l.b16 %v364
  %v660 = vunpack.c.l.b16 %v365
  %v661 = vunpack.c.l.b16 %v366
  %v662 = vunpack.c.l.b16 %v367
  %v663 = vunpack.c.l.b16 %v368
  %v664 = vunpack.c.l.b16 %v369
  %v665 = vunpack.c.l.b16 %v370
  %v666 = vunpack.c.l.b16 %v371
  %v667 = vunpack.c.l.b16 %v372
  %v668 = vunpack.c.l.b16 %v373
  %v669 = vunpack.c.l.b16 %v374
  %v670 = vunpack.c.l.b16 %v375
  %v671 = vunpack.c.l.b16 %v376
  %v672 = vunpack.c.l.b16 %v377
  %v673 = vunpack.c.l.b16 %v378
  %v674 = vunpack.c.l.b16 %v379
  %v675 = vunpack.c.l.b16 %v380
  %v676 = vpack.c.b16 %v533, %v532
  %v677 = vpack.c.b16 %v535, %v534
  %v678 = vpack.c.b16 %v537, %v536
  %v679 = vpack.c.b16 %v539, %v538
  %v680 = vpack.c.b16 %v541, %v540
  %v681 = vpack.c.b16 %v543, %v542
  %v682 = vpack.c.b16 %v545, %v544
  %v683 = vpack.c.b16 %v547, %v546
  %v684 = vpack.c.b16 %v549, %v548
  %v685 = vpack.c.b16 %v551, %v550
  %v686 = vpack.c.b16 %v553, %v552
  %v687 = vpack.c.b16 %v555, %v554
  %v688 = vpack.c.b16 %v557, %v556
  %v689 = vpack.c.b16 %v559, %v558
  %v690 = vpack.c.b16 %v561, %v560
  %v691 = vpack.c.b16 %v563, %v562
  %v692 = vpack.c.b16 %v565, %v564
  %v693 = vpack.c.b16 %v567, %v566
  %v694 = vpack.c.b16 %v569, %v568
  %v695 = vpack.c.b16 %v571, %v570
  %v696 = vpack.c.b16 %v573, %v572
  %v697 = vpack.c.b16 %v575, %v574
  %v698 = vpack.c.b16 %v577, %v576
  %v699 = vpack.c.b16 %v579, %v578
  %v700 = vpack.c.b16 %v581, %v580
  %v701 = vpack.c.b16 %v583, %v582
  %v702 = vpack.c.b16 %v585, %v584
  %v703 = vpack.c.b16 %v587, %v586
  %v704 = vpack.c.b16 %v589, %v588
  %v705 = vpack.c.b16 %v591, %v590
  %v706 = vpack.c.b16 %v593, %v592
  %v707 = vpack.c.b16 %v595, %v594
  %v708 = vpack.c.b16 %v597, %v596
  %v709 = vpack.c.b16 %v599, %v598
  %v710 = vpack.c.b16 %v601, %v600
  %v711 = vpack.c.b16 %v603, %v602
  %v712 = vpack.c.b16 %v605, %v604
  %v713 = vpack.c.b16 %v607, %v606
  %v714 = vpack.c.b16 %v609, %v608
  %v715 = vpack.c.b16 %v611, %v610
  %v716 = vpack.c.b16 %v613, %v612
  %v717 = vpack.c.b16 %v615, %v614
  %v718 = vpack.c.b16 %v617, %v616
  %v719 = vpack.c.b16 %v619, %v618
  %v720 = vpack.c.b16 %v621, %v620
  %v721 = vpack.c.b16 %v623, %v622
  %v722 = vpack.c.b16 %v625, %v624
  %v723 = vpack.c.b16 %v627, %v626
  %v724 = vpack.c.b16 %v629, %v628
  %v725 = vpack.c.b16 %v631, %v630
  %v726 = vpack.c.b16 %v633, %v632
  %v727 = vpack.c.b16 %v635, %v634
  %v728 = vpack.c.b16 %v637, %v636
  %v729 = vpack.c.b16 %v639, %v638
  %v730 = vpack.c.b16 %v641, %v640
  %v731 = vpack.c.b16 %v643, %v642
  %v732 = vpack.c.b16 %v645, %v644
  %v733 = vpack.c.b16 %v647, %v646
  %v734 = vpack.c.b16 %v649, %v648
  %v735 = vpack.c.b16 %v651, %v650
  %v736 = vpack.c.b16 %v653, %v652
  %v737 = vpack.c.b16 %v655, %v654
  %v738 = vpack.c.b16 %v657, %v656
  %v739 = vpack.c.b16 %v659, %v658
  %v740 = vpack.c.b16 %v661, %v660
  %v741 = vpack.c.b16 %v663, %v662
  %v742 = vpack.c.b16 %v665, %v664
  %v743 = vpack.c.b16 %v667, %v666
  %v744 = vpack.c.b16 %v669, %v668
  %v745 = vpack.c.b16 %v671, %v670
  %v746 = vpack.c.b16 %v673, %v672
  %v747 = vpack.c.b16 %v675, %v674
  %820 = vmatprep.subr.bf16.mxu0 0
  %821 = vmatpush1.bf16.msra.mxu0 %v683
  %822 = vmatprep.subr.bf16.mxu0 0
  %823 = vmatpush1.bf16.msra.mxu0 %v682
  %824 = vmatprep.subr.bf16.mxu0 0
  %825 = vmatpush1.bf16.msra.mxu0 %v681
  %826 = vmatprep.subr.bf16.mxu0 0
  %827 = vmatpush1.bf16.msra.mxu0 %v680
  %828 = vmatprep.subr.bf16.mxu0 0
  %829 = vmatpush1.bf16.msra.mxu0 %v679
  %830 = vmatprep.subr.bf16.mxu0 0
  %831 = vmatpush1.bf16.msra.mxu0 %v678
  %832 = vmatprep.subr.bf16.mxu0 0
  %833 = vmatpush1.bf16.msra.mxu0 %v677
  %834 = vmatprep.subr.bf16.mxu0 0
  %835 = vmatpush1.bf16.msra.mxu0 %v676
  %836 = vmatprep.subr.bf16.mxu0 0
  %837 = vmatpush2.bf16.msra.mxu0 %v691
  %838 = vmatprep.subr.bf16.mxu0 0
  %839 = vmatpush2.bf16.msra.mxu0 %v690
  %840 = vmatprep.subr.bf16.mxu0 0
  %841 = vmatpush2.bf16.msra.mxu0 %v689
  %842 = vmatprep.subr.bf16.mxu0 0
  %843 = vmatpush2.bf16.msra.mxu0 %v688
  %844 = vmatprep.subr.bf16.mxu0 0
  %845 = vmatpush2.bf16.msra.mxu0 %v687
  %846 = vmatprep.subr.bf16.mxu0 0
  %847 = vmatpush2.bf16.msra.mxu0 %v686
  %848 = vmatprep.subr.bf16.mxu0 0
  %849 = vmatpush2.bf16.msra.mxu0 %v685
  %850 = vmatprep.subr.bf16.mxu0 0
  %851 = vmatpush2.bf16.msra.mxu0 %v684
  %852 = vmatprep.mubr.bf16.mxu0 %v166
  %853 = vmatmul.mubr.bf16.gmra.mxu0 %v165
  %v854 = vpop.f32.mrf.mxu0
  %v855 = vadd.f32 %v386, %v854
  %v856 = vpop.f32.mrf.mxu0
  %v857 = vpop.f32.mrf.mxu0
  %v858 = vadd.f32 %v386, %v857
  %v859 = vpop.f32.mrf.mxu0
  %860 = vmatprep.mubr.bf16.mxu0 %v175
  %861 = vmatmul.mubr.bf16.gmra.mxu0 %v174
  %v862 = vpop.f32.mrf.mxu0
  %v863 = vadd.f32 %v386, %v862
  %v864 = vpop.f32.mrf.mxu0
  %v865 = vpop.f32.mrf.mxu0
  %v866 = vadd.f32 %v386, %v865
  %v867 = vpop.f32.mrf.mxu0
  %868 = vmatprep.mubr.bf16.mxu0 %v184
  %869 = vmatmul.mubr.bf16.gmra.mxu0 %v183
  %v870 = vpop.f32.mrf.mxu0
  %v871 = vadd.f32 %v386, %v870
  %v872 = vpop.f32.mrf.mxu0
  %v873 = vpop.f32.mrf.mxu0
  %v874 = vadd.f32 %v386, %v873
  %v875 = vpop.f32.mrf.mxu0
  %876 = vmatprep.mubr.bf16.mxu0 %v193
  %877 = vmatmul.mubr.bf16.gmra.mxu0 %v192
  %v878 = vpop.f32.mrf.mxu0
  %v879 = vadd.f32 %v386, %v878
  %v880 = vpop.f32.mrf.mxu0
  %v881 = vpop.f32.mrf.mxu0
  %v882 = vadd.f32 %v386, %v881
  %v883 = vpop.f32.mrf.mxu0
  %884 = vmatprep.mubr.bf16.mxu0 %v202
  %885 = vmatmul.mubr.bf16.gmra.mxu0 %v201
  %v886 = vpop.f32.mrf.mxu0
  %v887 = vadd.f32 %v386, %v886
  %v888 = vpop.f32.mrf.mxu0
  %v889 = vpop.f32.mrf.mxu0
  %v890 = vadd.f32 %v386, %v889
  %v891 = vpop.f32.mrf.mxu0
  %892 = vmatprep.mubr.bf16.mxu0 %v211
  %893 = vmatmul.mubr.bf16.gmra.mxu0 %v210
  %v894 = vpop.f32.mrf.mxu0
  %v895 = vadd.f32 %v386, %v894
  %v896 = vpop.f32.mrf.mxu0
  %v897 = vpop.f32.mrf.mxu0
  %v898 = vadd.f32 %v386, %v897
  %v899 = vpop.f32.mrf.mxu0
  %900 = vmatprep.mubr.bf16.mxu0 %v220
  %901 = vmatmul.mubr.bf16.gmra.mxu0 %v219
  %v902 = vpop.f32.mrf.mxu0
  %v903 = vadd.f32 %v386, %v902
  %v904 = vpop.f32.mrf.mxu0
  %v905 = vpop.f32.mrf.mxu0
  %v906 = vadd.f32 %v386, %v905
  %v907 = vpop.f32.mrf.mxu0
  %908 = vmatprep.mubr.bf16.mxu0 %v229
  %909 = vmatmul.mubr.bf16.gmra.mxu0 %v228
  %v910 = vpop.f32.mrf.mxu0
  %v911 = vadd.f32 %v386, %v910
  %v912 = vpop.f32.mrf.mxu0
  %v913 = vpop.f32.mrf.mxu0
  %v914 = vadd.f32 %v386, %v913
  %v915 = vpop.f32.mrf.mxu0
  %916 = vdwg.mxu0
  %917 = vmatprep.subr.bf16.mxu0 0
  %918 = vmatpush1.bf16.msra.mxu0 %v699
  %919 = vmatprep.subr.bf16.mxu0 0
  %920 = vmatpush1.bf16.msra.mxu0 %v698
  %921 = vmatprep.subr.bf16.mxu0 0
  %922 = vmatpush1.bf16.msra.mxu0 %v697
  %923 = vmatprep.subr.bf16.mxu0 0
  %924 = vmatpush1.bf16.msra.mxu0 %v696
  %925 = vmatprep.subr.bf16.mxu0 0
  %926 = vmatpush1.bf16.msra.mxu0 %v695
  %927 = vmatprep.subr.bf16.mxu0 0
  %928 = vmatpush1.bf16.msra.mxu0 %v694
  %929 = vmatprep.subr.bf16.mxu0 0
  %930 = vmatpush1.bf16.msra.mxu0 %v693
  %931 = vmatprep.subr.bf16.mxu0 0
  %932 = vmatpush1.bf16.msra.mxu0 %v692
  %933 = vmatprep.subr.bf16.mxu0 0
  %934 = vmatpush2.bf16.msra.mxu0 %v707
  %935 = vmatprep.subr.bf16.mxu0 0
  %936 = vmatpush2.bf16.msra.mxu0 %v706
  %937 = vmatprep.subr.bf16.mxu0 0
  %938 = vmatpush2.bf16.msra.mxu0 %v705
  %939 = vmatprep.subr.bf16.mxu0 0
  %940 = vmatpush2.bf16.msra.mxu0 %v704
  %941 = vmatprep.subr.bf16.mxu0 0
  %942 = vmatpush2.bf16.msra.mxu0 %v703
  %943 = vmatprep.subr.bf16.mxu0 0
  %944 = vmatpush2.bf16.msra.mxu0 %v702
  %945 = vmatprep.subr.bf16.mxu0 0
  %946 = vmatpush2.bf16.msra.mxu0 %v701
  %947 = vmatprep.subr.bf16.mxu0 0
  %948 = vmatpush2.bf16.msra.mxu0 %v700
  %949 = vmatprep.mubr.bf16.mxu0 %v168
  %950 = vmatmul.mubr.bf16.gmra.mxu0 %v167
  %v951 = vpop.f32.mrf.mxu0
  %v952 = vadd.f32 %v855, %v951
  %v953 = vpop.f32.mrf.mxu0
  %v954 = vpop.f32.mrf.mxu0
  %v955 = vadd.f32 %v858, %v954
  %v956 = vpop.f32.mrf.mxu0
  %957 = vmatprep.mubr.bf16.mxu0 %v177
  %958 = vmatmul.mubr.bf16.gmra.mxu0 %v176
  %v959 = vpop.f32.mrf.mxu0
  %v960 = vadd.f32 %v863, %v959
  %v961 = vpop.f32.mrf.mxu0
  %v962 = vpop.f32.mrf.mxu0
  %v963 = vadd.f32 %v866, %v962
  %v964 = vpop.f32.mrf.mxu0
  %965 = vmatprep.mubr.bf16.mxu0 %v186
  %966 = vmatmul.mubr.bf16.gmra.mxu0 %v185
  %v967 = vpop.f32.mrf.mxu0
  %v968 = vadd.f32 %v871, %v967
  %v969 = vpop.f32.mrf.mxu0
  %v970 = vpop.f32.mrf.mxu0
  %v971 = vadd.f32 %v874, %v970
  %v972 = vpop.f32.mrf.mxu0
  %973 = vmatprep.mubr.bf16.mxu0 %v195
  %974 = vmatmul.mubr.bf16.gmra.mxu0 %v194
  %v975 = vpop.f32.mrf.mxu0
  %v976 = vadd.f32 %v879, %v975
  %v977 = vpop.f32.mrf.mxu0
  %v978 = vpop.f32.mrf.mxu0
  %v979 = vadd.f32 %v882, %v978
  %v980 = vpop.f32.mrf.mxu0
  %981 = vmatprep.mubr.bf16.mxu0 %v204
  %982 = vmatmul.mubr.bf16.gmra.mxu0 %v203
  %v983 = vpop.f32.mrf.mxu0
  %v984 = vadd.f32 %v887, %v983
  %v985 = vpop.f32.mrf.mxu0
  %v986 = vpop.f32.mrf.mxu0
  %v987 = vadd.f32 %v890, %v986
  %v988 = vpop.f32.mrf.mxu0
  %989 = vmatprep.mubr.bf16.mxu0 %v213
  %990 = vmatmul.mubr.bf16.gmra.mxu0 %v212
  %v991 = vpop.f32.mrf.mxu0
  %v992 = vadd.f32 %v895, %v991
  %v993 = vpop.f32.mrf.mxu0
  %v994 = vpop.f32.mrf.mxu0
  %v995 = vadd.f32 %v898, %v994
  %v996 = vpop.f32.mrf.mxu0
  %997 = vmatprep.mubr.bf16.mxu0 %v222
  %998 = vmatmul.mubr.bf16.gmra.mxu0 %v221
  %v999 = vpop.f32.mrf.mxu0
  %v1000 = vadd.f32 %v903, %v999
  %v1001 = vpop.f32.mrf.mxu0
  %v1002 = vpop.f32.mrf.mxu0
  %v1003 = vadd.f32 %v906, %v1002
  %v1004 = vpop.f32.mrf.mxu0
  %1005 = vmatprep.mubr.bf16.mxu0 %v231
  %1006 = vmatmul.mubr.bf16.gmra.mxu0 %v230
  %v1007 = vpop.f32.mrf.mxu0
  %v1008 = vadd.f32 %v911, %v1007
  %v1009 = vpop.f32.mrf.mxu0
  %v1010 = vpop.f32.mrf.mxu0
  %v1011 = vadd.f32 %v914, %v1010
  %v1012 = vpop.f32.mrf.mxu0
  %1013 = vdwg.mxu0
  %1014 = vmatprep.subr.bf16.mxu0 0
  %1015 = vmatpush1.bf16.msra.mxu0 %v715
  %1016 = vmatprep.subr.bf16.mxu0 0
  %1017 = vmatpush1.bf16.msra.mxu0 %v714
  %1018 = vmatprep.subr.bf16.mxu0 0
  %1019 = vmatpush1.bf16.msra.mxu0 %v713
  %1020 = vmatprep.subr.bf16.mxu0 0
  %1021 = vmatpush1.bf16.msra.mxu0 %v712
  %1022 = vmatprep.subr.bf16.mxu0 0
  %1023 = vmatpush1.bf16.msra.mxu0 %v711
  %1024 = vmatprep.subr.bf16.mxu0 0
  %1025 = vmatpush1.bf16.msra.mxu0 %v710
  %1026 = vmatprep.subr.bf16.mxu0 0
  %1027 = vmatpush1.bf16.msra.mxu0 %v709
  %1028 = vmatprep.subr.bf16.mxu0 0
  %1029 = vmatpush1.bf16.msra.mxu0 %v708
  %1030 = vmatprep.subr.bf16.mxu0 0
  %1031 = vmatpush2.bf16.msra.mxu0 %v723
  %1032 = vmatprep.subr.bf16.mxu0 0
  %1033 = vmatpush2.bf16.msra.mxu0 %v722
  %1034 = vmatprep.subr.bf16.mxu0 0
  %1035 = vmatpush2.bf16.msra.mxu0 %v721
  %1036 = vmatprep.subr.bf16.mxu0 0
  %1037 = vmatpush2.bf16.msra.mxu0 %v720
  %1038 = vmatprep.subr.bf16.mxu0 0
  %1039 = vmatpush2.bf16.msra.mxu0 %v719
  %1040 = vmatprep.subr.bf16.mxu0 0
  %1041 = vmatpush2.bf16.msra.mxu0 %v718
  %1042 = vmatprep.subr.bf16.mxu0 0
  %1043 = vmatpush2.bf16.msra.mxu0 %v717
  %1044 = vmatprep.subr.bf16.mxu0 0
  %1045 = vmatpush2.bf16.msra.mxu0 %v716
  %1046 = vmatprep.mubr.bf16.mxu0 %v170
  %1047 = vmatmul.mubr.bf16.gmra.mxu0 %v169
  %v1048 = vpop.f32.mrf.mxu0
  %v1049 = vadd.f32 %v952, %v1048
  %v1050 = vpop.f32.mrf.mxu0
  %v1051 = vpop.f32.mrf.mxu0
  %v1052 = vadd.f32 %v955, %v1051
  %v1053 = vpop.f32.mrf.mxu0
  %1054 = vmatprep.mubr.bf16.mxu0 %v179
  %1055 = vmatmul.mubr.bf16.gmra.mxu0 %v178
  %v1056 = vpop.f32.mrf.mxu0
  %v1057 = vadd.f32 %v960, %v1056
  %v1058 = vpop.f32.mrf.mxu0
  %v1059 = vpop.f32.mrf.mxu0
  %v1060 = vadd.f32 %v963, %v1059
  %v1061 = vpop.f32.mrf.mxu0
  %1062 = vmatprep.mubr.bf16.mxu0 %v188
  %1063 = vmatmul.mubr.bf16.gmra.mxu0 %v187
  %v1064 = vpop.f32.mrf.mxu0
  %v1065 = vadd.f32 %v968, %v1064
  %v1066 = vpop.f32.mrf.mxu0
  %v1067 = vpop.f32.mrf.mxu0
  %v1068 = vadd.f32 %v971, %v1067
  %v1069 = vpop.f32.mrf.mxu0
  %1070 = vmatprep.mubr.bf16.mxu0 %v197
  %1071 = vmatmul.mubr.bf16.gmra.mxu0 %v196
  %v1072 = vpop.f32.mrf.mxu0
  %v1073 = vadd.f32 %v976, %v1072
  %v1074 = vpop.f32.mrf.mxu0
  %v1075 = vpop.f32.mrf.mxu0
  %v1076 = vadd.f32 %v979, %v1075
  %v1077 = vpop.f32.mrf.mxu0
  %1078 = vmatprep.mubr.bf16.mxu0 %v206
  %1079 = vmatmul.mubr.bf16.gmra.mxu0 %v205
  %v1080 = vpop.f32.mrf.mxu0
  %v1081 = vadd.f32 %v984, %v1080
  %v1082 = vpop.f32.mrf.mxu0
  %v1083 = vpop.f32.mrf.mxu0
  %v1084 = vadd.f32 %v987, %v1083
  %v1085 = vpop.f32.mrf.mxu0
  %1086 = vmatprep.mubr.bf16.mxu0 %v215
  %1087 = vmatmul.mubr.bf16.gmra.mxu0 %v214
  %v1088 = vpop.f32.mrf.mxu0
  %v1089 = vadd.f32 %v992, %v1088
  %v1090 = vpop.f32.mrf.mxu0
  %v1091 = vpop.f32.mrf.mxu0
  %v1092 = vadd.f32 %v995, %v1091
  %v1093 = vpop.f32.mrf.mxu0
  %1094 = vmatprep.mubr.bf16.mxu0 %v224
  %1095 = vmatmul.mubr.bf16.gmra.mxu0 %v223
  %v1096 = vpop.f32.mrf.mxu0
  %v1097 = vadd.f32 %v1000, %v1096
  %v1098 = vpop.f32.mrf.mxu0
  %v1099 = vpop.f32.mrf.mxu0
  %v1100 = vadd.f32 %v1003, %v1099
  %v1101 = vpop.f32.mrf.mxu0
  %1102 = vmatprep.mubr.bf16.mxu0 %v233
  %1103 = vmatmul.mubr.bf16.gmra.mxu0 %v232
  %v1104 = vpop.f32.mrf.mxu0
  %v1105 = vadd.f32 %v1008, %v1104
  %v1106 = vpop.f32.mrf.mxu0
  %v1107 = vpop.f32.mrf.mxu0
  %v1108 = vadd.f32 %v1011, %v1107
  %v1109 = vpop.f32.mrf.mxu0
  %1110 = vdwg.mxu0
  %1111 = vmatprep.subr.bf16.mxu0 0
  %1112 = vmatpush1.bf16.msra.mxu0 %v731
  %1113 = vmatprep.subr.bf16.mxu0 0
  %1114 = vmatpush1.bf16.msra.mxu0 %v730
  %1115 = vmatprep.subr.bf16.mxu0 0
  %1116 = vmatpush1.bf16.msra.mxu0 %v729
  %1117 = vmatprep.subr.bf16.mxu0 0
  %1118 = vmatpush1.bf16.msra.mxu0 %v728
  %1119 = vmatprep.subr.bf16.mxu0 0
  %1120 = vmatpush1.bf16.msra.mxu0 %v727
  %1121 = vmatprep.subr.bf16.mxu0 0
  %1122 = vmatpush1.bf16.msra.mxu0 %v726
  %1123 = vmatprep.subr.bf16.mxu0 0
  %1124 = vmatpush1.bf16.msra.mxu0 %v725
  %1125 = vmatprep.subr.bf16.mxu0 0
  %1126 = vmatpush1.bf16.msra.mxu0 %v724
  %1127 = vmatprep.subr.bf16.mxu0 0
  %1128 = vmatpush2.bf16.msra.mxu0 %v739
  %1129 = vmatprep.subr.bf16.mxu0 0
  %1130 = vmatpush2.bf16.msra.mxu0 %v738
  %1131 = vmatprep.subr.bf16.mxu0 0
  %1132 = vmatpush2.bf16.msra.mxu0 %v737
  %1133 = vmatprep.subr.bf16.mxu0 0
  %1134 = vmatpush2.bf16.msra.mxu0 %v736
  %1135 = vmatprep.subr.bf16.mxu0 0
  %1136 = vmatpush2.bf16.msra.mxu0 %v735
  %1137 = vmatprep.subr.bf16.mxu0 0
  %1138 = vmatpush2.bf16.msra.mxu0 %v734
  %1139 = vmatprep.subr.bf16.mxu0 0
  %1140 = vmatpush2.bf16.msra.mxu0 %v733
  %1141 = vmatprep.subr.bf16.mxu0 0
  %1142 = vmatpush2.bf16.msra.mxu0 %v732
  %1143 = vmatprep.mubr.bf16.mxu0 %v172
  %1144 = vmatmul.mubr.bf16.gmra.mxu0 %v171
  %v1145 = vpop.f32.mrf.mxu0
  %v1146 = vadd.f32 %v1049, %v1145
  %v1147 = vpop.f32.mrf.mxu0
  %v1148 = vpop.f32.mrf.mxu0
  %v1149 = vadd.f32 %v1052, %v1148
  %v1150 = vpop.f32.mrf.mxu0
  %1151 = vmatprep.mubr.bf16.mxu0 %v181
  %1152 = vmatmul.mubr.bf16.gmra.mxu0 %v180
  %v1153 = vpop.f32.mrf.mxu0
  %v1154 = vadd.f32 %v1057, %v1153
  %v1155 = vpop.f32.mrf.mxu0
  %v1156 = vpop.f32.mrf.mxu0
  %v1157 = vadd.f32 %v1060, %v1156
  %v1158 = vpop.f32.mrf.mxu0
  %1159 = vmatprep.mubr.bf16.mxu0 %v190
  %1160 = vmatmul.mubr.bf16.gmra.mxu0 %v189
  %v1161 = vpop.f32.mrf.mxu0
  %v1162 = vadd.f32 %v1065, %v1161
  %v1163 = vpop.f32.mrf.mxu0
  %v1164 = vpop.f32.mrf.mxu0
  %v1165 = vadd.f32 %v1068, %v1164
  %v1166 = vpop.f32.mrf.mxu0
  %1167 = vmatprep.mubr.bf16.mxu0 %v199
  %1168 = vmatmul.mubr.bf16.gmra.mxu0 %v198
  %v1169 = vpop.f32.mrf.mxu0
  %v1170 = vadd.f32 %v1073, %v1169
  %v1171 = vpop.f32.mrf.mxu0
  %v1172 = vpop.f32.mrf.mxu0
  %v1173 = vadd.f32 %v1076, %v1172
  %v1174 = vpop.f32.mrf.mxu0
  %1175 = vmatprep.mubr.bf16.mxu0 %v208
  %1176 = vmatmul.mubr.bf16.gmra.mxu0 %v207
  %v1177 = vpop.f32.mrf.mxu0
  %v1178 = vadd.f32 %v1081, %v1177
  %v1179 = vpop.f32.mrf.mxu0
  %v1180 = vpop.f32.mrf.mxu0
  %v1181 = vadd.f32 %v1084, %v1180
  %v1182 = vpop.f32.mrf.mxu0
  %1183 = vmatprep.mubr.bf16.mxu0 %v217
  %1184 = vmatmul.mubr.bf16.gmra.mxu0 %v216
  %v1185 = vpop.f32.mrf.mxu0
  %v1186 = vadd.f32 %v1089, %v1185
  %v1187 = vpop.f32.mrf.mxu0
  %v1188 = vpop.f32.mrf.mxu0
  %v1189 = vadd.f32 %v1092, %v1188
  %v1190 = vpop.f32.mrf.mxu0
  %1191 = vmatprep.mubr.bf16.mxu0 %v226
  %1192 = vmatmul.mubr.bf16.gmra.mxu0 %v225
  %v1193 = vpop.f32.mrf.mxu0
  %v1194 = vadd.f32 %v1097, %v1193
  %v1195 = vpop.f32.mrf.mxu0
  %v1196 = vpop.f32.mrf.mxu0
  %v1197 = vadd.f32 %v1100, %v1196
  %v1198 = vpop.f32.mrf.mxu0
  %1199 = vmatprep.mubr.bf16.mxu0 %v235
  %1200 = vmatmul.mubr.bf16.gmra.mxu0 %v234
  %v1201 = vpop.f32.mrf.mxu0
  %v1202 = vadd.f32 %v1105, %v1201
  %v1203 = vpop.f32.mrf.mxu0
  %v1204 = vpop.f32.mrf.mxu0
  %v1205 = vadd.f32 %v1108, %v1204
  %v1206 = vpop.f32.mrf.mxu0
  %1207 = vdwg.mxu0
  %1208 = vmatprep.subr.bf16.mxu0 0
  %1209 = vmatpush1.bf16.msra.mxu0 %v747
  %1210 = vmatprep.subr.bf16.mxu0 0
  %1211 = vmatpush1.bf16.msra.mxu0 %v746
  %1212 = vmatprep.subr.bf16.mxu0 0
  %1213 = vmatpush1.bf16.msra.mxu0 %v745
  %1214 = vmatprep.subr.bf16.mxu0 0
  %1215 = vmatpush1.bf16.msra.mxu0 %v744
  %1216 = vmatprep.subr.bf16.mxu0 0
  %1217 = vmatpush1.bf16.msra.mxu0 %v743
  %1218 = vmatprep.subr.bf16.mxu0 0
  %1219 = vmatpush1.bf16.msra.mxu0 %v742
  %1220 = vmatprep.subr.bf16.mxu0 0
  %1221 = vmatpush1.bf16.msra.mxu0 %v741
  %1222 = vmatprep.subr.bf16.mxu0 0
  %1223 = vmatpush1.bf16.msra.mxu0 %v740
  %1224 = vmatprep.subr.bf16.mxu0 0
  %1225 = vmatpush2.bf16.msra.mxu0 0
  %1226 = vmatprep.subr.bf16.mxu0 0
  %1227 = vmatpush2.bf16.msra.mxu0 0
  %1228 = vmatprep.subr.bf16.mxu0 0
  %1229 = vmatpush2.bf16.msra.mxu0 0
  %1230 = vmatprep.subr.bf16.mxu0 0
  %1231 = vmatpush2.bf16.msra.mxu0 0
  %1232 = vmatprep.subr.bf16.mxu0 0
  %1233 = vmatpush2.bf16.msra.mxu0 0
  %1234 = vmatprep.subr.bf16.mxu0 0
  %1235 = vmatpush2.bf16.msra.mxu0 0
  %1236 = vmatprep.subr.bf16.mxu0 0
  %1237 = vmatpush2.bf16.msra.mxu0 0
  %1238 = vmatprep.subr.bf16.mxu0 0
  %1239 = vmatpush2.bf16.msra.mxu0 0
  %1240 = vmatprep.mubr.bf16.mxu0 0
  %1241 = vmatmul.mubr.bf16.gmra.mxu0 %v173
  %v1242 = vpop.f32.mrf.mxu0
  %v1243 = vadd.f32 %v1146, %v1242
  %v1244 = vpop.f32.mrf.mxu0
  %v1245 = vpop.f32.mrf.mxu0
  %v1246 = vadd.f32 %v1149, %v1245
  %v1247 = vpop.f32.mrf.mxu0
  %1248 = vmatprep.mubr.bf16.mxu0 0
  %1249 = vmatmul.mubr.bf16.gmra.mxu0 %v182
  %v1250 = vpop.f32.mrf.mxu0
  %v1251 = vadd.f32 %v1154, %v1250
  %v1252 = vpop.f32.mrf.mxu0
  %v1253 = vpop.f32.mrf.mxu0
  %v1254 = vadd.f32 %v1157, %v1253
  %v1255 = vpop.f32.mrf.mxu0
  %1256 = vmatprep.mubr.bf16.mxu0 0
  %1257 = vmatmul.mubr.bf16.gmra.mxu0 %v191
  %v1258 = vpop.f32.mrf.mxu0
  %v1259 = vadd.f32 %v1162, %v1258
  %v1260 = vpop.f32.mrf.mxu0
  %v1261 = vpop.f32.mrf.mxu0
  %v1262 = vadd.f32 %v1165, %v1261
  %v1263 = vpop.f32.mrf.mxu0
  %1264 = vmatprep.mubr.bf16.mxu0 0
  %1265 = vmatmul.mubr.bf16.gmra.mxu0 %v200
  %v1266 = vpop.f32.mrf.mxu0
  %v1267 = vadd.f32 %v1170, %v1266
  %v1268 = vpop.f32.mrf.mxu0
  %v1269 = vpop.f32.mrf.mxu0
  %v1270 = vadd.f32 %v1173, %v1269
  %v1271 = vpop.f32.mrf.mxu0
  %1272 = vmatprep.mubr.bf16.mxu0 0
  %1273 = vmatmul.mubr.bf16.gmra.mxu0 %v209
  %v1274 = vpop.f32.mrf.mxu0
  %v1275 = vadd.f32 %v1178, %v1274
  %v1276 = vpop.f32.mrf.mxu0
  %v1277 = vpop.f32.mrf.mxu0
  %v1278 = vadd.f32 %v1181, %v1277
  %v1279 = vpop.f32.mrf.mxu0
  %1280 = vmatprep.mubr.bf16.mxu0 0
  %1281 = vmatmul.mubr.bf16.gmra.mxu0 %v218
  %v1282 = vpop.f32.mrf.mxu0
  %v1283 = vadd.f32 %v1186, %v1282
  %v1284 = vpop.f32.mrf.mxu0
  %v1285 = vpop.f32.mrf.mxu0
  %v1286 = vadd.f32 %v1189, %v1285
  %v1287 = vpop.f32.mrf.mxu0
  %1288 = vmatprep.mubr.bf16.mxu0 0
  %1289 = vmatmul.mubr.bf16.gmra.mxu0 %v227
  %v1290 = vpop.f32.mrf.mxu0
  %v1291 = vadd.f32 %v1194, %v1290
  %v1292 = vpop.f32.mrf.mxu0
  %v1293 = vpop.f32.mrf.mxu0
  %v1294 = vadd.f32 %v1197, %v1293
  %v1295 = vpop.f32.mrf.mxu0
  %1296 = vmatprep.mubr.bf16.mxu0 0
  %1297 = vmatmul.mubr.bf16.gmra.mxu0 %v236
  %v1298 = vpop.f32.mrf.mxu0
  %v1299 = vadd.f32 %v1202, %v1298
  %v1300 = vpop.f32.mrf.mxu0
  %v1301 = vpop.f32.mrf.mxu0
  %v1302 = vadd.f32 %v1205, %v1301
  %v1303 = vpop.f32.mrf.mxu0
  %1304 = vdwg.mxu0
  %v1305 = vmax.f32 %v1243, 0.0
  %v1306 = vmax.f32 %v1246, 0.0
  %v1307 = vmax.f32 %v1251, 0.0
  %v1308 = vmax.f32 %v1254, 0.0
  %v1309 = vmax.f32 %v1259, 0.0
  %v1310 = vmax.f32 %v1262, 0.0
  %v1311 = vmax.f32 %v1267, 0.0
  %v1312 = vmax.f32 %v1270, 0.0
  %v1313 = vmax.f32 %v1275, 0.0
  %v1314 = vmax.f32 %v1278, 0.0
  %v1315 = vmax.f32 %v1283, 0.0
  %v1316 = vmax.f32 %v1286, 0.0
  %v1317 = vmax.f32 %v1291, 0.0
  %v1318 = vmax.f32 %v1294, 0.0
  %v1319 = vmax.f32 %v1299, 0.0
  %v1320 = vmax.f32 %v1302, 0.0
  %v1321 = vpack.c.bf16 %v1306, %v1305
  %v1322 = vpack.c.bf16 %v1308, %v1307
  %v1323 = vpack.c.bf16 %v1310, %v1309
  %v1324 = vpack.c.bf16 %v1312, %v1311
  %v1325 = vpack.c.bf16 %v1314, %v1313
  %v1326 = vpack.c.bf16 %v1316, %v1315
  %v1327 = vpack.c.bf16 %v1318, %v1317
  %v1328 = vpack.c.bf16 %v1320, %v1319
  %v1329 = vld [vmem:[%s3] sm:$0xf]
  %v1330 = vld [vmem:[%s3 + $0x4] sm:$0xf]
  %v1331 = vld [vmem:[%s3 + $0x8] sm:$0xf]
  %v1332 = vld [vmem:[%s3 + $0xc] sm:$0xf]
  %v1333 = vld [vmem:[%s3 + $0x10] sm:$0xf]
  %v1334 = vld [vmem:[%s3 + $0x14] sm:$0xf]
  %v1335 = vld [vmem:[%s3 + $0x18] sm:$0xf]
  %v1336 = vld [vmem:[%s3 + $0x1c] sm:$0xf]
  %v1337 = vld [vmem:[%s3 + $0x20] sm:$0xf]
  %v1338 = vld [vmem:[%s3 + $0x24] sm:$0xf]
  %v1339 = vld [vmem:[%s3 + $0x28] sm:$0xf]
  %v1340 = vld [vmem:[%s3 + $0x2c] sm:$0xf]
  %v1341 = vld [vmem:[%s3 + $0x30] sm:$0xf]
  %v1342 = vld [vmem:[%s3 + $0x34] sm:$0xf]
  %v1343 = vld [vmem:[%s3 + $0x38] sm:$0xf]
  %v1344 = vld [vmem:[%s3 + $0x3c] sm:$0xf]
  %v1345 = vld [vmem:[%s4] sm:$0x1]
  %v1347 = vlaneseq
  %v1348 = vshrl.u32 %v1347, 7
  %v1349 = vsub.s32 0, %v1348
  %v1350 = vrot.slane %v1345, %v1349
  %v1368 = vunpack.c.l.b16 %v1329
  %v1369 = vunpack.c.l.b16 %v1330
  %v1370 = vunpack.c.l.b16 %v1331
  %v1371 = vunpack.c.l.b16 %v1332
  %v1372 = vunpack.c.l.b16 %v1333
  %v1373 = vunpack.c.l.b16 %v1334
  %v1374 = vunpack.c.l.b16 %v1335
  %v1375 = vunpack.c.l.b16 %v1336
  %v1376 = vunpack.c.l.b16 %v1337
  %v1377 = vunpack.c.l.b16 %v1338
  %v1378 = vunpack.c.l.b16 %v1339
  %v1379 = vunpack.c.l.b16 %v1340
  %v1380 = vunpack.c.l.b16 %v1341
  %v1381 = vunpack.c.l.b16 %v1342
  %v1382 = vunpack.c.l.b16 %v1343
  %v1383 = vunpack.c.l.b16 %v1344
  %v1384 = vpack.c.b16 %v1369, %v1368
  %v1385 = vpack.c.b16 %v1371, %v1370
  %v1386 = vpack.c.b16 %v1373, %v1372
  %v1387 = vpack.c.b16 %v1375, %v1374
  %v1388 = vpack.c.b16 %v1377, %v1376
  %v1389 = vpack.c.b16 %v1379, %v1378
  %v1390 = vpack.c.b16 %v1381, %v1380
  %v1391 = vpack.c.b16 %v1383, %v1382
  %1400 = vmatprep.subr.bf16.mxu0 0
  %1401 = vmatpush1.bf16.msra.mxu0 %v1391
  %1402 = vmatprep.subr.bf16.mxu0 0
  %1403 = vmatpush1.bf16.msra.mxu0 %v1390
  %1404 = vmatprep.subr.bf16.mxu0 0
  %1405 = vmatpush1.bf16.msra.mxu0 %v1389
  %1406 = vmatprep.subr.bf16.mxu0 0
  %1407 = vmatpush1.bf16.msra.mxu0 %v1388
  %1408 = vmatprep.subr.bf16.mxu0 0
  %1409 = vmatpush1.bf16.msra.mxu0 %v1387
  %1410 = vmatprep.subr.bf16.mxu0 0
  %1411 = vmatpush1.bf16.msra.mxu0 %v1386
  %1412 = vmatprep.subr.bf16.mxu0 0
  %1413 = vmatpush1.bf16.msra.mxu0 %v1385
  %1414 = vmatprep.subr.bf16.mxu0 0
  %1415 = vmatpush1.bf16.msra.mxu0 %v1384
  %1416 = vmatprep.subr.bf16.mxu0 0
  %1417 = vmatpush2.bf16.msra.mxu0 0
  %1418 = vmatprep.subr.bf16.mxu0 0
  %1419 = vmatpush2.bf16.msra.mxu0 0
  %1420 = vmatprep.subr.bf16.mxu0 0
  %1421 = vmatpush2.bf16.msra.mxu0 0
  %1422 = vmatprep.subr.bf16.mxu0 0
  %1423 = vmatpush2.bf16.msra.mxu0 0
  %1424 = vmatprep.subr.bf16.mxu0 0
  %1425 = vmatpush2.bf16.msra.mxu0 0
  %1426 = vmatprep.subr.bf16.mxu0 0
  %1427 = vmatpush2.bf16.msra.mxu0 0
  %1428 = vmatprep.subr.bf16.mxu0 0
  %1429 = vmatpush2.bf16.msra.mxu0 0
  %1430 = vmatprep.subr.bf16.mxu0 0
  %1431 = vmatpush2.bf16.msra.mxu0 0
  %1432 = vmatprep.mubr.bf16.mxu0 0
  %1433 = vmatmul.mubr.bf16.gmra.mxu0 %v1321
  %v1434 = vpop.f32.mrf.mxu0
  %v1435 = vadd.f32 %v1350, %v1434
  %v1436 = vpop.f32.mrf.mxu0
  %v1437 = vpop.f32.mrf.mxu0
  %v1438 = vadd.f32 %v1350, %v1437
  %v1439 = vpop.f32.mrf.mxu0
  %1440 = vmatprep.mubr.bf16.mxu0 0
  %1441 = vmatmul.mubr.bf16.gmra.mxu0 %v1322
  %v1442 = vpop.f32.mrf.mxu0
  %v1443 = vadd.f32 %v1350, %v1442
  %v1444 = vpop.f32.mrf.mxu0
  %v1445 = vpop.f32.mrf.mxu0
  %v1446 = vadd.f32 %v1350, %v1445
  %v1447 = vpop.f32.mrf.mxu0
  %1448 = vmatprep.mubr.bf16.mxu0 0
  %1449 = vmatmul.mubr.bf16.gmra.mxu0 %v1323
  %v1450 = vpop.f32.mrf.mxu0
  %v1451 = vadd.f32 %v1350, %v1450
  %v1452 = vpop.f32.mrf.mxu0
  %v1453 = vpop.f32.mrf.mxu0
  %v1454 = vadd.f32 %v1350, %v1453
  %v1455 = vpop.f32.mrf.mxu0
  %1456 = vmatprep.mubr.bf16.mxu0 0
  %1457 = vmatmul.mubr.bf16.gmra.mxu0 %v1324
  %v1458 = vpop.f32.mrf.mxu0
  %v1459 = vadd.f32 %v1350, %v1458
  %v1460 = vpop.f32.mrf.mxu0
  %v1461 = vpop.f32.mrf.mxu0
  %v1462 = vadd.f32 %v1350, %v1461
  %v1463 = vpop.f32.mrf.mxu0
  %1464 = vmatprep.mubr.bf16.mxu0 0
  %1465 = vmatmul.mubr.bf16.gmra.mxu0 %v1325
  %v1466 = vpop.f32.mrf.mxu0
  %v1467 = vadd.f32 %v1350, %v1466
  %v1468 = vpop.f32.mrf.mxu0
  %v1469 = vpop.f32.mrf.mxu0
  %v1470 = vadd.f32 %v1350, %v1469
  %v1471 = vpop.f32.mrf.mxu0
  %1472 = vmatprep.mubr.bf16.mxu0 0
  %1473 = vmatmul.mubr.bf16.gmra.mxu0 %v1326
  %v1474 = vpop.f32.mrf.mxu0
  %v1475 = vadd.f32 %v1350, %v1474
  %v1476 = vpop.f32.mrf.mxu0
  %v1477 = vpop.f32.mrf.mxu0
  %v1478 = vadd.f32 %v1350, %v1477
  %v1479 = vpop.f32.mrf.mxu0
  %1480 = vmatprep.mubr.bf16.mxu0 0
  %1481 = vmatmul.mubr.bf16.gmra.mxu0 %v1327
  %v1482 = vpop.f32.mrf.mxu0
  %v1483 = vadd.f32 %v1350, %v1482
  %v1484 = vpop.f32.mrf.mxu0
  %v1485 = vpop.f32.mrf.mxu0
  %v1486 = vadd.f32 %v1350, %v1485
  %v1487 = vpop.f32.mrf.mxu0
  %1488 = vmatprep.mubr.bf16.mxu0 0
  %1489 = vmatmul.mubr.bf16.gmra.mxu0 %v1328
  %v1490 = vpop.f32.mrf.mxu0
  %v1491 = vadd.f32 %v1350, %v1490
  %v1492 = vpop.f32.mrf.mxu0
  %v1493 = vpop.f32.mrf.mxu0
  %v1494 = vadd.f32 %v1350, %v1493
  %v1495 = vpop.f32.mrf.mxu0
  %1496 = vdwg.mxu0
  %vm1497 = vcmask 31744
  %1498 = vst.msk [vmem:[%s5] sm:$0xff] %vm1497, %v1435
  %1499 = vst.msk [vmem:[%s5 + $0x8] sm:$0xff] %vm1497, %v1438
  %1500 = vst.msk [vmem:[%s5 + $0x10] sm:$0xff] %vm1497, %v1443
  %1501 = vst.msk [vmem:[%s5 + $0x18] sm:$0xff] %vm1497, %v1446
  %1502 = vst.msk [vmem:[%s5 + $0x20] sm:$0xff] %vm1497, %v1451
  %1503 = vst.msk [vmem:[%s5 + $0x28] sm:$0xff] %vm1497, %v1454
  %1504 = vst.msk [vmem:[%s5 + $0x30] sm:$0xff] %vm1497, %v1459
  %1505 = vst.msk [vmem:[%s5 + $0x38] sm:$0xff] %vm1497, %v1462
  %1506 = vst.msk [vmem:[%s5 + $0x40] sm:$0xff] %vm1497, %v1467
  %1507 = vst.msk [vmem:[%s5 + $0x48] sm:$0xff] %vm1497, %v1470
  %1508 = vst.msk [vmem:[%s5 + $0x50] sm:$0xff] %vm1497, %v1475
  %1509 = vst.msk [vmem:[%s5 + $0x58] sm:$0xff] %vm1497, %v1478
  %1510 = vst.msk [vmem:[%s5 + $0x60] sm:$0xff] %vm1497, %v1483
  %1511 = vst.msk [vmem:[%s5 + $0x68] sm:$0xff] %vm1497, %v1486
  %1512 = vst.msk [vmem:[%s5 + $0x70] sm:$0xff] %vm1497, %v1491
  %1513 = vst.msk [vmem:[%s5 + $0x78] sm:$0xff] %vm1497, %v1494
  // Predicated region
  $region22: #{fcn_forward.13} parent=0 // pred_check
    _
  $region23: #{fcn_forward.13} parent=0 // pred_check_branch
    %1515 = sbr.rel (0) target = $region25
  $region24: #{fcn_forward.13} parent=0 // pred_region
    _
  $region25: #{fcn_forward.13} parent=0 // pred_fallthru
    _
  // Predicated region
  $region26: #{fcn_forward.13} parent=0 // pred_check
    _
  $region27: #{fcn_forward.13} parent=0 // pred_check_branch
    %1517 = sbr.rel (0) target = $region29
  $region28: #{fcn_forward.13} parent=0 // pred_region
    _
  $region29: #{fcn_forward.13} parent=0 // pred_fallthru
    _

</llo_original>
